<compile_context>
chip_gen: v5e
topology: v5e:2x2
jax: 0.10.0
libtpu: 0.0.40
codegen_flags: <defaults>
</compile_context>

<pallas_src>
import functools

import jax
import jax.numpy as jnp
from jax.experimental import pallas as pl
from jax.experimental.pallas import tpu as pltpu

EPS = 1e-5
FC1_NBLK = 256          # fc1 output-column tile: 512 = 2 * 256 -> grid of 2

_row = lambda v: v.reshape(1, -1).astype(jnp.float32)


def _const_spec(shape):
    """BlockSpec for a constant-index operand; single-buffered when supported."""
    idx = lambda *args: (0,) * len(shape)
    if hasattr(pl, "Buffered"):
        try:
            return pl.BlockSpec(shape, idx, pipeline_mode=pl.Buffered(1))
        except Exception:  # older jax: no pipeline_mode kwarg / different ctor
            pass
    return pl.BlockSpec(shape, idx)


# ---------------------------------------------------------------------------
# Kernel A: fused conv stage.  One grid step handles BB batch elements with
# the batch dim merged into the row (sublane / MXU-M) axis: row = b*L + l.
# ---------------------------------------------------------------------------
def conv_stage_kernel(x_ref, w1_ref, b1_ref, s1_ref, t1_ref,
                      w2_ref, b2_ref, s2_ref, t2_ref,
                      out_ref, xp_ref, h1_ref, yp_ref, g_ref, *, length):
    """conv1(k=3,p=1)+ReLU+BN+pool2 -> conv2(k=3,p=1)+ReLU+BN+pool2.

    x_ref : (BB*L, 17)    merged-row NLC input block
    w1    : (3, 17, 64)   [tap, cin, cout];  w2: (3, 64, 128)
    b*/s*/t*: (1, C)      conv bias / folded-BN scale / folded-BN shift
    out   : (BB*L/4, 128)
    xp/yp : zero-offset copies used for the +-1 tap reads (pad rows are
            don't-care: boundary rows are masked before the dots).
    h1/g  : pre-pool scratch, read back with stride-2 for MaxPool1d(2,2).
    """
    N1 = h1_ref.shape[0]                      # BB * L
    N2 = g_ref.shape[0]                       # BB * L / 2
    L2 = length // 2

    # ---- conv1: 3 taps of K=17, batch merged into M = N1 rows -------------
    x = x_ref[...]                            # (N1, 17) f32
    xp_ref[pl.ds(1, N1), :] = x               # xp[1+r] = x[r]
    l1 = jax.lax.broadcasted_iota(jnp.int32, (N1, 1), 0) % length
    # tap x[l-1]: zero where l == 0 (also kills cross-element leakage);
    # tap x[l+1]: zero where l == L-1.
    t_lo = jnp.where(l1 == 0, 0.0, xp_ref[pl.ds(0, N1), :])
    t_hi = jnp.where(l1 == length - 1, 0.0, xp_ref[pl.ds(2, N1), :])

    h = jnp.dot(t_lo, w1_ref[0], preferred_element_type=jnp.float32)
    h = h + jnp.dot(x, w1_ref[1], preferred_element_type=jnp.float32)
    h = h + jnp.dot(t_hi, w1_ref[2], preferred_element_type=jnp.float32)
    h = jnp.maximum(h + b1_ref[...], 0.0) * s1_ref[...] + t1_ref[...]
    h1_ref[...] = h

    # ---- MaxPool1d(2, 2): stride-2 pairs never cross elements (L even) ----
    y = jnp.maximum(h1_ref[pl.ds(0, N2, stride=2), :],
                    h1_ref[pl.ds(1, N2, stride=2), :])        # (N2, 64)

    # ---- conv2: 3 taps of K=64 ---------------------------------------------
    yp_ref[pl.ds(1, N2), :] = y
    l2 = jax.lax.broadcasted_iota(jnp.int32, (N2, 1), 0) % L2
    u_lo = jnp.where(l2 == 0, 0.0, yp_ref[pl.ds(0, N2), :])
    u_hi = jnp.where(l2 == L2 - 1, 0.0, yp_ref[pl.ds(2, N2), :])

    g = jnp.dot(u_lo, w2_ref[0], preferred_element_type=jnp.float32)
    g = g + jnp.dot(y, w2_ref[1], preferred_element_type=jnp.float32)
    g = g + jnp.dot(u_hi, w2_ref[2], preferred_element_type=jnp.float32)
    g = jnp.maximum(g + b2_ref[...], 0.0) * s2_ref[...] + t2_ref[...]
    g_ref[...] = g

    # ---- MaxPool1d(2, 2) ----------------------------------------------------
    out_ref[...] = jnp.maximum(g_ref[pl.ds(0, N2 // 2, stride=2), :],
                               g_ref[pl.ds(1, N2 // 2, stride=2), :])


# ---------------------------------------------------------------------------
# Kernel B: fused FC stage.  fc1 is tiled over its 512 output columns
# (grid = 2) so its weight DMA pipelines; fc2/fc3/sigmoid run on the last step.
# ---------------------------------------------------------------------------
def fc_stage_kernel(x_ref, w1_ref, b1_ref, s1_ref, t1_ref,
                    w2_ref, b2_ref, s2_ref, t2_ref,
                    w3_ref, b3_ref, out_ref, h1_ref, *, n_blk, n_steps):
    j = pl.program_id(0)

    part = jnp.dot(x_ref[...].astype(jnp.bfloat16), w1_ref[...],
                   preferred_element_type=jnp.float32)         # (B, n_blk)
    for jj in range(n_steps):                                  # static slices
        @pl.when(j == jj)
        def _(jj=jj):
            h1_ref[:, jj * n_blk:(jj + 1) * n_blk] = part

    @pl.when(j == n_steps - 1)
    def _():
        h1 = jnp.maximum(h1_ref[...] + b1_ref[...], 0.0)
        h1 = h1 * s1_ref[...] + t1_ref[...]
        h2 = jnp.dot(h1.astype(jnp.bfloat16), w2_ref[...],
                     preferred_element_type=jnp.float32)
        h2 = jnp.maximum(h2 + b2_ref[...], 0.0)
        h2 = h2 * s2_ref[...] + t2_ref[...]
        h3 = jnp.dot(h2.astype(jnp.bfloat16), w3_ref[...],
                     preferred_element_type=jnp.float32)
        out_ref[...] = jax.nn.sigmoid(h3 + b3_ref[...])


# ---------------------------------------------------------------------------
# Wrappers
# ---------------------------------------------------------------------------
def conv_stage(xt, w1, b1, s1, t1, w2, b2, s2, t2, *, length, batch):
    """xt: (B*L, 17) merged-row NLC input.  Returns (B*L/4, 128)."""
    _, C0 = xt.shape
    C1 = w1.shape[2]
    C2 = w2.shape[2]
    # Batch block per grid step.  BB*L and BB*L/4 must be multiples of 8 or
    # equal the full dim; BB=8 (or the whole batch) satisfies both.
    BB = 8 if (batch % 8 == 0) else batch
    NB = BB * length
    Lout = length // 4
    return pl.pallas_call(
        functools.partial(conv_stage_kernel, length=length),
        out_shape=jax.ShapeDtypeStruct((batch * Lout, C2), jnp.float32),
        grid_spec=pltpu.PrefetchScalarGridSpec(
            num_scalar_prefetch=0,
            grid=(batch // BB,),
            in_specs=[
                pl.BlockSpec((NB, C0), lambda i: (i, 0)),
                _const_spec((3, C0, C1)),
                _const_spec((1, C1)), _const_spec((1, C1)), _const_spec((1, C1)),
                _const_spec((3, C1, C2)),
                _const_spec((1, C2)), _const_spec((1, C2)), _const_spec((1, C2)),
            ],
            out_specs=pl.BlockSpec((BB * Lout, C2), lambda i: (i, 0)),
            scratch_shapes=[
                pltpu.VMEM((NB + 2, C0), jnp.float32),        # padded input copy
                pltpu.VMEM((NB, C1), jnp.float32),            # conv1 pre-pool
                pltpu.VMEM((NB // 2 + 2, C1), jnp.float32),   # padded pooled conv1
                pltpu.VMEM((NB // 2, C2), jnp.float32),       # conv2 pre-pool
            ]),
        # TODO(synk): on v7x, pltpu.CORE_PARALLEL here shards the batch grid
        # across the 2 TensorCores; "parallel" is kept for portability.
        compiler_params=pltpu.CompilerParams(
            dimension_semantics=("parallel",)),
    )(xt, w1, _row(b1), _row(s1), _row(t1), w2, _row(b2), _row(s2), _row(t2))


def fc_stage(x, w1, b1, s1, t1, w2, b2, s2, t2, w3, b3, *, n_blk=FC1_NBLK):
    """x: (B, 3200).  Returns (B, Dout3)."""
    B, Din = x.shape
    D1, D2, D3 = w1.shape[1], w2.shape[1], w3.shape[1]
    assert D1 % n_blk == 0
    n_steps = D1 // n_blk
    return pl.pallas_call(
        functools.partial(fc_stage_kernel, n_blk=n_blk, n_steps=n_steps),
        out_shape=jax.ShapeDtypeStruct((B, D3), jnp.float32),
        grid_spec=pltpu.PrefetchScalarGridSpec(
            num_scalar_prefetch=0,
            grid=(n_steps,),
            in_specs=[
                _const_spec((B, Din)),                        # activations (small)
                pl.BlockSpec((Din, n_blk), lambda j: (0, j)), # fc1 weight, pipelined
                _const_spec((1, D1)), _const_spec((1, D1)), _const_spec((1, D1)),
                _const_spec((D1, D2)),
                _const_spec((1, D2)), _const_spec((1, D2)), _const_spec((1, D2)),
                _const_spec((D2, D3)),
                _const_spec((1, D3)),
            ],
            out_specs=pl.BlockSpec((B, D3), lambda j: (0, 0)),
            scratch_shapes=[pltpu.VMEM((B, D1), jnp.float32)]),
        compiler_params=pltpu.CompilerParams(
            dimension_semantics=("arbitrary",),
            vmem_limit_bytes=32 * 1024 * 1024),
    )(x, w1, _row(b1), _row(s1), _row(t1),
      w2, _row(b2), _row(s2), _row(t2), w3, _row(b3))


# ---------------------------------------------------------------------------
# Model
# ---------------------------------------------------------------------------
def init_params(key, resolution):
    def u(k, shape, fan_in, dtype=jnp.float32):
        bound = 1.0 / float(fan_in) ** 0.5
        return jax.random.uniform(k, shape, jnp.float32, -bound, bound).astype(dtype)

    ks = jax.random.split(key, 10)
    p = {}
    # conv1: Conv1d(17, 64, k=3).  Stored (3, 17, 64) = torch_w.transpose(2, 1, 0).
    p["w1"], p["b1"] = u(ks[0], (3, 17, 64), 17 * 3), u(ks[1], (64,), 17 * 3)
    p["g1"], p["be1"] = jnp.ones((64,), jnp.float32), jnp.zeros((64,), jnp.float32)
    p["m1"], p["v1"] = jnp.zeros((64,), jnp.float32), jnp.ones((64,), jnp.float32)
    # conv2: Conv1d(64, 128, k=3).  Stored (3, 64, 128) = torch_w.transpose(2, 1, 0).
    p["w2"], p["b2"] = u(ks[2], (3, 64, 128), 64 * 3), u(ks[3], (128,), 64 * 3)
    p["g2"], p["be2"] = jnp.ones((128,), jnp.float32), jnp.zeros((128,), jnp.float32)
    p["m2"], p["v2"] = jnp.zeros((128,), jnp.float32), jnp.ones((128,), jnp.float32)
    # fc1: Linear(128*25, 512), bf16, rows permuted to NLC-flatten order:
    # fw1[l*128 + c, :] = torch_w.T[c*25 + l, :]  (absorbs channel-major flatten).
    p["fw1"] = u(ks[4], (128 * 25, 512), 128 * 25, jnp.bfloat16)
    p["fb1"] = u(ks[5], (512,), 128 * 25)
    p["fg1"], p["fbe1"] = jnp.ones((512,), jnp.float32), jnp.zeros((512,), jnp.float32)
    p["fm1"], p["fv1"] = jnp.zeros((512,), jnp.float32), jnp.ones((512,), jnp.float32)
    # fc2: Linear(512, 256), stored (Din, Dout) bf16.
    p["fw2"], p["fb2"] = u(ks[6], (512, 256), 512, jnp.bfloat16), u(ks[7], (256,), 512)
    p["fg2"], p["fbe2"] = jnp.ones((256,), jnp.float32), jnp.zeros((256,), jnp.float32)
    p["fm2"], p["fv2"] = jnp.zeros((256,), jnp.float32), jnp.ones((256,), jnp.float32)
    # fc3: Linear(256, 3*res*res), stored (Din, Dout) bf16.
    dout = 3 * resolution * resolution
    p["fw3"] = u(ks[8], (256, dout), 256, jnp.bfloat16)
    p["fb3"] = u(ks[9], (dout,), 256)
    return p


def _bn_fold(gamma, beta, mean, var):
    scale = gamma * jax.lax.rsqrt(var + EPS)
    return scale, beta - mean * scale


@functools.partial(jax.jit, static_argnames=("resolution",))
def regression_model_forward(p, x, resolution):
    """x: (B, 17, 100) in PyTorch NCW layout."""
    B, _, L = x.shape
    assert (L // 4) * p["w2"].shape[2] == p["fw1"].shape[0]
    # Only pre-pass: NCW -> NLC transpose, then a free merged-row reshape.
    xt = jnp.transpose(x, (0, 2, 1)).astype(jnp.float32).reshape(B * L, -1)

    s1, t1 = _bn_fold(p["g1"], p["be1"], p["m1"], p["v1"])
    s2, t2 = _bn_fold(p["g2"], p["be2"], p["m2"], p["v2"])
    h = conv_stage(xt, p["w1"], p["b1"], s1, t1,
                   p["w2"], p["b2"], s2, t2, length=L, batch=B)   # (B*25, 128)

    # Channel-major flatten is absorbed into fw1's row order -> free reshape.
    h = h.reshape(B, -1)                                          # (B, 3200)

    fs1, ft1 = _bn_fold(p["fg1"], p["fbe1"], p["fm1"], p["fv1"])
    fs2, ft2 = _bn_fold(p["fg2"], p["fbe2"], p["fm2"], p["fv2"])
    out = fc_stage(h, p["fw1"], p["fb1"], fs1, ft1,
                   p["fw2"], p["fb2"], fs2, ft2, p["fw3"], p["fb3"])
    return out.reshape(-1, 3, resolution, resolution)


# ---------------------------------------------------------------------------
# Pure-JAX reference (same stored weight layouts, eval-mode BN)
# ---------------------------------------------------------------------------
def reference_forward(p, x, resolution):
    B = x.shape[0]
    h = jnp.transpose(x, (0, 2, 1)).astype(jnp.float32)           # (B, 100, 17)

    def conv_block(h, w3d, b, g, be, m, v):
        L = h.shape[1]
        hp = jnp.pad(h, ((0, 0), (1, 1), (0, 0)))
        y = sum(jnp.einsum("blc,cd->bld", hp[:, k:k + L, :], w3d[k])
                for k in range(3))
        y = jnp.maximum(y + b, 0.0)
        y = (y - m) * jax.lax.rsqrt(v + EPS) * g + be
        return jnp.max(y.reshape(B, L // 2, 2, -1), axis=2)

    h = conv_block(h, p["w1"], p["b1"], p["g1"], p["be1"], p["m1"], p["v1"])
    h = conv_block(h, p["w2"], p["b2"], p["g2"], p["be2"], p["m2"], p["v2"])
    h = h.reshape(B, -1)

    def fc_bn(h, w, b, g, be, m, v):
        y = jnp.maximum(h @ w.astype(jnp.float32) + b, 0.0)
        return (y - m) * jax.lax.rsqrt(v + EPS) * g + be

    h = fc_bn(h, p["fw1"], p["fb1"], p["fg1"], p["fbe1"], p["fm1"], p["fv1"])
    h = fc_bn(h, p["fw2"], p["fb2"], p["fg2"], p["fbe2"], p["fm2"], p["fv2"])
    h = jax.nn.sigmoid(h @ p["fw3"].astype(jnp.float32) + p["fb3"])
    return h.reshape(-1, 3, resolution, resolution)


if __name__ == "__main__":
    resolution = 16          # constructor arg (PyTorch default is 64)
    B = 2
    key = jax.random.PRNGKey(0)
    k_x, k_p = jax.random.split(key)
    # Conv1d(17, ...) + Linear(128*25, ...) imply input (B, 17, 100) NCW.
    x = jax.random.normal(k_x, (B, 17, 100), jnp.float32)
    params = init_params(k_p, resolution)

    out = regression_model_forward(params, x, resolution)
    out = jax.block_until_ready(out)

    assert out.shape == (B, 3, resolution, resolution), out.shape
    assert out.dtype == jnp.float32
    assert bool(jnp.all((out >= 0.0) & (out <= 1.0)))              # sigmoid range

    ref = reference_forward(params, x, resolution)
    err = float(jnp.max(jnp.abs(out - ref)))
    assert err < 2e-2, f"max |pallas - reference| = {err}"
    print("KERNEL_OK")
</pallas_src>

<mosaic_0001>
module attributes {stable_mosaic.version = 11 : i64} {
  func.func @conv_stage_kernel(%arg0: i32, %arg1: memref<200x17xf32, #tpu.memory_space<vmem>>, %arg2: memref<3x17x64xf32, #tpu.memory_space<vmem>>, %arg3: memref<1x64xf32, #tpu.memory_space<vmem>>, %arg4: memref<1x64xf32, #tpu.memory_space<vmem>>, %arg5: memref<1x64xf32, #tpu.memory_space<vmem>>, %arg6: memref<3x64x128xf32, #tpu.memory_space<vmem>>, %arg7: memref<1x128xf32, #tpu.memory_space<vmem>>, %arg8: memref<1x128xf32, #tpu.memory_space<vmem>>, %arg9: memref<1x128xf32, #tpu.memory_space<vmem>>, %arg10: memref<50x128xf32, #tpu.memory_space<vmem>>, %arg11: memref<202x17xf32, #tpu.memory_space<vmem>>, %arg12: memref<200x64xf32, #tpu.memory_space<vmem>>, %arg13: memref<102x64xf32, #tpu.memory_space<vmem>>, %arg14: memref<100x128xf32, #tpu.memory_space<vmem>>) attributes {dimension_semantics = [#tpu.dimension_semantics<parallel>], iteration_bounds = array<i64: 1>, scalar_prefetch = 0 : i64, scratch_operands = 4 : i64, tpu.core_type = #tpu.core_type<tc>, window_params = [{transform_indices = @transform_0, window_bounds = array<i64: 200, 17>}, {pipeline_mode = #tpu.pipeline_mode<synchronous>, transform_indices = @transform_1, window_bounds = array<i64: 3, 17, 64>}, {pipeline_mode = #tpu.pipeline_mode<synchronous>, transform_indices = @transform_2, window_bounds = array<i64: 1, 64>}, {pipeline_mode = #tpu.pipeline_mode<synchronous>, transform_indices = @transform_3, window_bounds = array<i64: 1, 64>}, {pipeline_mode = #tpu.pipeline_mode<synchronous>, transform_indices = @transform_4, window_bounds = array<i64: 1, 64>}, {pipeline_mode = #tpu.pipeline_mode<synchronous>, transform_indices = @transform_5, window_bounds = array<i64: 3, 64, 128>}, {pipeline_mode = #tpu.pipeline_mode<synchronous>, transform_indices = @transform_6, window_bounds = array<i64: 1, 128>}, {pipeline_mode = #tpu.pipeline_mode<synchronous>, transform_indices = @transform_7, window_bounds = array<i64: 1, 128>}, {pipeline_mode = #tpu.pipeline_mode<synchronous>, transform_indices = @transform_8, window_bounds = array<i64: 1, 128>}, {transform_indices = @transform_9, window_bounds = array<i64: 50, 128>}]} {
    %c0 = arith.constant 0 : index
    %c0_0 = arith.constant 0 : index
    %0 = vector.load %arg1[%c0, %c0_0] : memref<200x17xf32, #tpu.memory_space<vmem>>, vector<200x17xf32>
    %c1 = arith.constant 1 : index
    %c0_1 = arith.constant 0 : index
    %1 = vector.load %arg11[%c1, %c0_1] : memref<202x17xf32, #tpu.memory_space<vmem>>, vector<200x17xf32>
    tpu.vector_store %arg11[%c1, %c0_1], %0 {strides = array<i32>} : memref<202x17xf32, #tpu.memory_space<vmem>>, vector<200x17xf32>,
    %2 = tpu.iota {dimensions = array<i32: 0>} : vector<200x1xi32>
    %c100_i32 = arith.constant 100 : i32
    %c0_i32 = arith.constant 0 : i32
    %3 = arith.cmpi eq, %c100_i32, %c0_i32 : i32
    %c1_i32 = arith.constant 1 : i32
    %4 = arith.select %3, %c1_i32, %c100_i32 : i32
    %5 = vector.broadcast %4 : i32 to vector<200x1xi32>
    %6 = arith.remsi %2, %5 : vector<200x1xi32>
    %c0_i32_2 = arith.constant 0 : i32
    %7 = vector.broadcast %c0_i32_2 : i32 to vector<200x1xi32>
    %8 = arith.cmpi ne, %6, %7 : vector<200x1xi32>
    %c0_i32_3 = arith.constant 0 : i32
    %9 = vector.broadcast %c0_i32_3 : i32 to vector<200x1xi32>
    %10 = arith.cmpi slt, %6, %9 : vector<200x1xi32>
    %c0_i32_4 = arith.constant 0 : i32
    %11 = arith.cmpi slt, %4, %c0_i32_4 : i32
    %12 = vector.broadcast %11 : i1 to vector<200x1xi1>
    %13 = vector.broadcast %12 : vector<200x1xi1> to vector<200x1xi1>
    %14 = arith.xori %10, %13 : vector<200x1xi1>
    %15 = arith.andi %14, %8 : vector<200x1xi1>
    %16 = vector.broadcast %4 : i32 to vector<200x1xi32>
    %17 = arith.addi %6, %16 : vector<200x1xi32>
    %18 = arith.select %15, %17, %6 : vector<200x1xi1>, vector<200x1xi32>
    %c0_i32_5 = arith.constant 0 : i32
    %19 = vector.broadcast %c0_i32_5 : i32 to vector<200x1xi32>
    %20 = arith.cmpi eq, %18, %19 : vector<200x1xi32>
    %c0_6 = arith.constant 0 : index
    %c0_7 = arith.constant 0 : index
    %21 = vector.load %arg11[%c0_6, %c0_7] : memref<202x17xf32, #tpu.memory_space<vmem>>, vector<200x17xf32>
    %cst = arith.constant 0.000000e+00 : f32
    %22 = vector.shape_cast %20 : vector<200x1xi1> to vector<200x1xi1>
    %23 = vector.broadcast %22 : vector<200x1xi1> to vector<200x17xi1>
    %24 = vector.broadcast %cst : f32 to vector<200x17xf32>
    %25 = arith.select %23, %24, %21 : vector<200x17xi1>, vector<200x17xf32>
    %c99_i32 = arith.constant 99 : i32
    %26 = vector.broadcast %c99_i32 : i32 to vector<200x1xi32>
    %27 = arith.cmpi eq, %18, %26 : vector<200x1xi32>
    %c2 = arith.constant 2 : index
    %c0_8 = arith.constant 0 : index
    %28 = vector.load %arg11[%c2, %c0_8] : memref<202x17xf32, #tpu.memory_space<vmem>>, vector<200x17xf32>
    %cst_9 = arith.constant 0.000000e+00 : f32
    %29 = vector.shape_cast %27 : vector<200x1xi1> to vector<200x1xi1>
    %30 = vector.broadcast %29 : vector<200x1xi1> to vector<200x17xi1>
    %31 = vector.broadcast %cst_9 : f32 to vector<200x17xf32>
    %32 = arith.select %30, %31, %28 : vector<200x17xi1>, vector<200x17xf32>
    %c0_10 = arith.constant 0 : index
    %c0_11 = arith.constant 0 : index
    %c0_12 = arith.constant 0 : index
    %33 = vector.load %arg2[%c0_10, %c0_11, %c0_12] : memref<3x17x64xf32, #tpu.memory_space<vmem>>, vector<1x17x64xf32>
    %34 = vector.shape_cast %33 : vector<1x17x64xf32> to vector<17x64xf32>
    %cst_13 = arith.constant dense<0.000000e+00> : vector<200x64xf32>
    %35 = tpu.matmul %25, %34, %cst_13 {dimension_numbers = #tpu.dot_dimension_numbers<[1], [0], [0], [1], [0, 0, 1, 1], [], []>} : vector<200x17xf32>, vector<17x64xf32>, vector<200x64xf32> -> vector<200x64xf32>
    %c1_14 = arith.constant 1 : index
    %c0_15 = arith.constant 0 : index
    %c0_16 = arith.constant 0 : index
    %36 = vector.load %arg2[%c1_14, %c0_15, %c0_16] : memref<3x17x64xf32, #tpu.memory_space<vmem>>, vector<1x17x64xf32>
    %37 = vector.shape_cast %36 : vector<1x17x64xf32> to vector<17x64xf32>
    %cst_17 = arith.constant dense<0.000000e+00> : vector<200x64xf32>
    %38 = tpu.matmul %0, %37, %cst_17 {dimension_numbers = #tpu.dot_dimension_numbers<[1], [0], [0], [1], [0, 0, 1, 1], [], []>} : vector<200x17xf32>, vector<17x64xf32>, vector<200x64xf32> -> vector<200x64xf32>
    %39 = arith.addf %35, %38 : vector<200x64xf32>
    %c2_18 = arith.constant 2 : index
    %c0_19 = arith.constant 0 : index
    %c0_20 = arith.constant 0 : index
    %40 = vector.load %arg2[%c2_18, %c0_19, %c0_20] : memref<3x17x64xf32, #tpu.memory_space<vmem>>, vector<1x17x64xf32>
    %41 = vector.shape_cast %40 : vector<1x17x64xf32> to vector<17x64xf32>
    %cst_21 = arith.constant dense<0.000000e+00> : vector<200x64xf32>
    %42 = tpu.matmul %32, %41, %cst_21 {dimension_numbers = #tpu.dot_dimension_numbers<[1], [0], [0], [1], [0, 0, 1, 1], [], []>} : vector<200x17xf32>, vector<17x64xf32>, vector<200x64xf32> -> vector<200x64xf32>
    %43 = arith.addf %39, %42 : vector<200x64xf32>
    %c0_22 = arith.constant 0 : index
    %c0_23 = arith.constant 0 : index
    %44 = vector.load %arg3[%c0_22, %c0_23] : memref<1x64xf32, #tpu.memory_space<vmem>>, vector<1x64xf32>
    %45 = vector.broadcast %44 : vector<1x64xf32> to vector<200x64xf32>
    %46 = arith.addf %43, %45 : vector<200x64xf32>
    %cst_24 = arith.constant 0.000000e+00 : f32
    %47 = vector.broadcast %cst_24 : f32 to vector<200x64xf32>
    %48 = arith.maximumf %46, %47 : vector<200x64xf32>
    %c0_25 = arith.constant 0 : index
    %c0_26 = arith.constant 0 : index
    %49 = vector.load %arg4[%c0_25, %c0_26] : memref<1x64xf32, #tpu.memory_space<vmem>>, vector<1x64xf32>
    %50 = vector.broadcast %49 : vector<1x64xf32> to vector<200x64xf32>
    %51 = arith.mulf %48, %50 : vector<200x64xf32>
    %c0_27 = arith.constant 0 : index
    %c0_28 = arith.constant 0 : index
    %52 = vector.load %arg5[%c0_27, %c0_28] : memref<1x64xf32, #tpu.memory_space<vmem>>, vector<1x64xf32>
    %53 = vector.broadcast %52 : vector<1x64xf32> to vector<200x64xf32>
    %54 = arith.addf %51, %53 : vector<200x64xf32>
    %c0_29 = arith.constant 0 : index
    %c0_30 = arith.constant 0 : index
    %55 = vector.load %arg12[%c0_29, %c0_30] : memref<200x64xf32, #tpu.memory_space<vmem>>, vector<200x64xf32>
    tpu.vector_store %arg12[%c0_29, %c0_30], %54 {strides = array<i32>} : memref<200x64xf32, #tpu.memory_space<vmem>>, vector<200x64xf32>,
    %c0_31 = arith.constant 0 : index
    %c0_32 = arith.constant 0 : index
    %56 = tpu.strided_load %arg12[%c0_31, %c0_32] {strides = array<i32: 2, 1>} : memref<200x64xf32, #tpu.memory_space<vmem>>, vector<100x64xf32>
    %c1_33 = arith.constant 1 : index
    %c0_34 = arith.constant 0 : index
    %57 = tpu.strided_load %arg12[%c1_33, %c0_34] {strides = array<i32: 2, 1>} : memref<200x64xf32, #tpu.memory_space<vmem>>, vector<100x64xf32>
    %58 = arith.maximumf %56, %57 : vector<100x64xf32>
    %c1_35 = arith.constant 1 : index
    %c0_36 = arith.constant 0 : index
    %59 = vector.load %arg13[%c1_35, %c0_36] : memref<102x64xf32, #tpu.memory_space<vmem>>, vector<100x64xf32>
    tpu.vector_store %arg13[%c1_35, %c0_36], %58 {strides = array<i32>} : memref<102x64xf32, #tpu.memory_space<vmem>>, vector<100x64xf32>,
    %60 = tpu.iota {dimensions = array<i32: 0>} : vector<100x1xi32>
    %c50_i32 = arith.constant 50 : i32
    %c0_i32_37 = arith.constant 0 : i32
    %61 = arith.cmpi eq, %c50_i32, %c0_i32_37 : i32
    %c1_i32_38 = arith.constant 1 : i32
    %62 = arith.select %61, %c1_i32_38, %c50_i32 : i32
    %63 = vector.broadcast %62 : i32 to vector<100x1xi32>
    %64 = arith.remsi %60, %63 : vector<100x1xi32>
    %c0_i32_39 = arith.constant 0 : i32
    %65 = vector.broadcast %c0_i32_39 : i32 to vector<100x1xi32>
    %66 = arith.cmpi ne, %64, %65 : vector<100x1xi32>
    %c0_i32_40 = arith.constant 0 : i32
    %67 = vector.broadcast %c0_i32_40 : i32 to vector<100x1xi32>
    %68 = arith.cmpi slt, %64, %67 : vector<100x1xi32>
    %c0_i32_41 = arith.constant 0 : i32
    %69 = arith.cmpi slt, %62, %c0_i32_41 : i32
    %70 = vector.broadcast %69 : i1 to vector<100x1xi1>
    %71 = vector.broadcast %70 : vector<100x1xi1> to vector<100x1xi1>
    %72 = arith.xori %68, %71 : vector<100x1xi1>
    %73 = arith.andi %72, %66 : vector<100x1xi1>
    %74 = vector.broadcast %62 : i32 to vector<100x1xi32>
    %75 = arith.addi %64, %74 : vector<100x1xi32>
    %76 = arith.select %73, %75, %64 : vector<100x1xi1>, vector<100x1xi32>
    %c0_i32_42 = arith.constant 0 : i32
    %77 = vector.broadcast %c0_i32_42 : i32 to vector<100x1xi32>
    %78 = arith.cmpi eq, %76, %77 : vector<100x1xi32>
    %c0_43 = arith.constant 0 : index
    %c0_44 = arith.constant 0 : index
    %79 = vector.load %arg13[%c0_43, %c0_44] : memref<102x64xf32, #tpu.memory_space<vmem>>, vector<100x64xf32>
    %cst_45 = arith.constant 0.000000e+00 : f32
    %80 = vector.shape_cast %78 : vector<100x1xi1> to vector<100x1xi1>
    %81 = vector.broadcast %80 : vector<100x1xi1> to vector<100x64xi1>
    %82 = vector.broadcast %cst_45 : f32 to vector<100x64xf32>
    %83 = arith.select %81, %82, %79 : vector<100x64xi1>, vector<100x64xf32>
    %c49_i32 = arith.constant 49 : i32
    %84 = vector.broadcast %c49_i32 : i32 to vector<100x1xi32>
    %85 = arith.cmpi eq, %76, %84 : vector<100x1xi32>
    %c2_46 = arith.constant 2 : index
    %c0_47 = arith.constant 0 : index
    %86 = vector.load %arg13[%c2_46, %c0_47] : memref<102x64xf32, #tpu.memory_space<vmem>>, vector<100x64xf32>
    %cst_48 = arith.constant 0.000000e+00 : f32
    %87 = vector.shape_cast %85 : vector<100x1xi1> to vector<100x1xi1>
    %88 = vector.broadcast %87 : vector<100x1xi1> to vector<100x64xi1>
    %89 = vector.broadcast %cst_48 : f32 to vector<100x64xf32>
    %90 = arith.select %88, %89, %86 : vector<100x64xi1>, vector<100x64xf32>
    %c0_49 = arith.constant 0 : index
    %c0_50 = arith.constant 0 : index
    %c0_51 = arith.constant 0 : index
    %91 = vector.load %arg6[%c0_49, %c0_50, %c0_51] : memref<3x64x128xf32, #tpu.memory_space<vmem>>, vector<1x64x128xf32>
    %92 = vector.shape_cast %91 : vector<1x64x128xf32> to vector<64x128xf32>
    %cst_52 = arith.constant dense<0.000000e+00> : vector<100x128xf32>
    %93 = tpu.matmul %83, %92, %cst_52 {dimension_numbers = #tpu.dot_dimension_numbers<[1], [0], [0], [1], [0, 0, 1, 1], [], []>} : vector<100x64xf32>, vector<64x128xf32>, vector<100x128xf32> -> vector<100x128xf32>
    %c1_53 = arith.constant 1 : index
    %c0_54 = arith.constant 0 : index
    %c0_55 = arith.constant 0 : index
    %94 = vector.load %arg6[%c1_53, %c0_54, %c0_55] : memref<3x64x128xf32, #tpu.memory_space<vmem>>, vector<1x64x128xf32>
    %95 = vector.shape_cast %94 : vector<1x64x128xf32> to vector<64x128xf32>
    %cst_56 = arith.constant dense<0.000000e+00> : vector<100x128xf32>
    %96 = tpu.matmul %58, %95, %cst_56 {dimension_numbers = #tpu.dot_dimension_numbers<[1], [0], [0], [1], [0, 0, 1, 1], [], []>} : vector<100x64xf32>, vector<64x128xf32>, vector<100x128xf32> -> vector<100x128xf32>
    %97 = arith.addf %93, %96 : vector<100x128xf32>
    %c2_57 = arith.constant 2 : index
    %c0_58 = arith.constant 0 : index
    %c0_59 = arith.constant 0 : index
    %98 = vector.load %arg6[%c2_57, %c0_58, %c0_59] : memref<3x64x128xf32, #tpu.memory_space<vmem>>, vector<1x64x128xf32>
    %99 = vector.shape_cast %98 : vector<1x64x128xf32> to vector<64x128xf32>
    %cst_60 = arith.constant dense<0.000000e+00> : vector<100x128xf32>
    %100 = tpu.matmul %90, %99, %cst_60 {dimension_numbers = #tpu.dot_dimension_numbers<[1], [0], [0], [1], [0, 0, 1, 1], [], []>} : vector<100x64xf32>, vector<64x128xf32>, vector<100x128xf32> -> vector<100x128xf32>
    %101 = arith.addf %97, %100 : vector<100x128xf32>
    %c0_61 = arith.constant 0 : index
    %c0_62 = arith.constant 0 : index
    %102 = vector.load %arg7[%c0_61, %c0_62] : memref<1x128xf32, #tpu.memory_space<vmem>>, vector<1x128xf32>
    %103 = vector.broadcast %102 : vector<1x128xf32> to vector<100x128xf32>
    %104 = arith.addf %101, %103 : vector<100x128xf32>
    %cst_63 = arith.constant 0.000000e+00 : f32
    %105 = vector.broadcast %cst_63 : f32 to vector<100x128xf32>
    %106 = arith.maximumf %104, %105 : vector<100x128xf32>
    %c0_64 = arith.constant 0 : index
    %c0_65 = arith.constant 0 : index
    %107 = vector.load %arg8[%c0_64, %c0_65] : memref<1x128xf32, #tpu.memory_space<vmem>>, vector<1x128xf32>
    %108 = vector.broadcast %107 : vector<1x128xf32> to vector<100x128xf32>
    %109 = arith.mulf %106, %108 : vector<100x128xf32>
    %c0_66 = arith.constant 0 : index
    %c0_67 = arith.constant 0 : index
    %110 = vector.load %arg9[%c0_66, %c0_67] : memref<1x128xf32, #tpu.memory_space<vmem>>, vector<1x128xf32>
    %111 = vector.broadcast %110 : vector<1x128xf32> to vector<100x128xf32>
    %112 = arith.addf %109, %111 : vector<100x128xf32>
    %c0_68 = arith.constant 0 : index
    %c0_69 = arith.constant 0 : index
    %113 = vector.load %arg14[%c0_68, %c0_69] : memref<100x128xf32, #tpu.memory_space<vmem>>, vector<100x128xf32>
    tpu.vector_store %arg14[%c0_68, %c0_69], %112 {strides = array<i32>} : memref<100x128xf32, #tpu.memory_space<vmem>>, vector<100x128xf32>,
    %c0_70 = arith.constant 0 : index
    %c0_71 = arith.constant 0 : index
    %114 = tpu.strided_load %arg14[%c0_70, %c0_71] {strides = array<i32: 2, 1>} : memref<100x128xf32, #tpu.memory_space<vmem>>, vector<50x128xf32>
    %c1_72 = arith.constant 1 : index
    %c0_73 = arith.constant 0 : index
    %115 = tpu.strided_load %arg14[%c1_72, %c0_73] {strides = array<i32: 2, 1>} : memref<100x128xf32, #tpu.memory_space<vmem>>, vector<50x128xf32>
    %116 = arith.maximumf %114, %115 : vector<50x128xf32>
    %c0_74 = arith.constant 0 : index
    %c0_75 = arith.constant 0 : index
    %117 = vector.load %arg10[%c0_74, %c0_75] : memref<50x128xf32, #tpu.memory_space<vmem>>, vector<50x128xf32>
    tpu.vector_store %arg10[%c0_74, %c0_75], %116 {strides = array<i32>} : memref<50x128xf32, #tpu.memory_space<vmem>>, vector<50x128xf32>,
    return
  }
  func.func @transform_0(%arg0: i32) -> (i32, i32) {
    %c0_i32 = arith.constant 0 : i32
    %c0_i32_0 = arith.constant 0 : i32
    return %arg0, %c0_i32 : i32, i32
  }
  func.func @transform_1(%arg0: i32) -> (i32, i32, i32) {
    %c0_i32 = arith.constant 0 : i32
    %c0_i32_0 = arith.constant 0 : i32
    %c0_i32_1 = arith.constant 0 : i32
    %c0_i32_2 = arith.constant 0 : i32
    return %c0_i32, %c0_i32_0, %c0_i32_1 : i32, i32, i32
  }
  func.func @transform_2(%arg0: i32) -> (i32, i32) {
    %c0_i32 = arith.constant 0 : i32
    %c0_i32_0 = arith.constant 0 : i32
    %c0_i32_1 = arith.constant 0 : i32
    return %c0_i32, %c0_i32_0 : i32, i32
  }
  func.func @transform_3(%arg0: i32) -> (i32, i32) {
    %c0_i32 = arith.constant 0 : i32
    %c0_i32_0 = arith.constant 0 : i32
    %c0_i32_1 = arith.constant 0 : i32
    return %c0_i32, %c0_i32_0 : i32, i32
  }
  func.func @transform_4(%arg0: i32) -> (i32, i32) {
    %c0_i32 = arith.constant 0 : i32
    %c0_i32_0 = arith.constant 0 : i32
    %c0_i32_1 = arith.constant 0 : i32
    return %c0_i32, %c0_i32_0 : i32, i32
  }
  func.func @transform_5(%arg0: i32) -> (i32, i32, i32) {
    %c0_i32 = arith.constant 0 : i32
    %c0_i32_0 = arith.constant 0 : i32
    %c0_i32_1 = arith.constant 0 : i32
    %c0_i32_2 = arith.constant 0 : i32
    return %c0_i32, %c0_i32_0, %c0_i32_1 : i32, i32, i32
  }
  func.func @transform_6(%arg0: i32) -> (i32, i32) {
    %c0_i32 = arith.constant 0 : i32
    %c0_i32_0 = arith.constant 0 : i32
    %c0_i32_1 = arith.constant 0 : i32
    return %c0_i32, %c0_i32_0 : i32, i32
  }
  func.func @transform_7(%arg0: i32) -> (i32, i32) {
    %c0_i32 = arith.constant 0 : i32
    %c0_i32_0 = arith.constant 0 : i32
    %c0_i32_1 = arith.constant 0 : i32
    return %c0_i32, %c0_i32_0 : i32, i32
  }
  func.func @transform_8(%arg0: i32) -> (i32, i32) {
    %c0_i32 = arith.constant 0 : i32
    %c0_i32_0 = arith.constant 0 : i32
    %c0_i32_1 = arith.constant 0 : i32
    return %c0_i32, %c0_i32_0 : i32, i32
  }
  func.func @transform_9(%arg0: i32) -> (i32, i32) {
    %c0_i32 = arith.constant 0 : i32
    %c0_i32_0 = arith.constant 0 : i32
    return %arg0, %c0_i32 : i32, i32
  }
}

module attributes {stable_mosaic.version = 11 : i64} {
  func.func @fc_stage_kernel(%arg0: i32, %arg1: memref<2x3200xf32, #tpu.memory_space<vmem>>, %arg2: memref<3200x256xbf16, #tpu.memory_space<vmem>>, %arg3: memref<1x512xf32, #tpu.memory_space<vmem>>, %arg4: memref<1x512xf32, #tpu.memory_space<vmem>>, %arg5: memref<1x512xf32, #tpu.memory_space<vmem>>, %arg6: memref<512x256xbf16, #tpu.memory_space<vmem>>, %arg7: memref<1x256xf32, #tpu.memory_space<vmem>>, %arg8: memref<1x256xf32, #tpu.memory_space<vmem>>, %arg9: memref<1x256xf32, #tpu.memory_space<vmem>>, %arg10: memref<256x768xbf16, #tpu.memory_space<vmem>>, %arg11: memref<1x768xf32, #tpu.memory_space<vmem>>, %arg12: memref<2x768xf32, #tpu.memory_space<vmem>>, %arg13: memref<2x512xf32, #tpu.memory_space<vmem>>) attributes {dimension_semantics = [#tpu.dimension_semantics<arbitrary>], iteration_bounds = array<i64: 2>, scalar_prefetch = 0 : i64, scratch_operands = 1 : i64, tpu.core_type = #tpu.core_type<tc>, window_params = [{pipeline_mode = #tpu.pipeline_mode<synchronous>, transform_indices = @transform_0, window_bounds = array<i64: 2, 3200>}, {transform_indices = @transform_1, window_bounds = array<i64: 3200, 256>}, {pipeline_mode = #tpu.pipeline_mode<synchronous>, transform_indices = @transform_2, window_bounds = array<i64: 1, 512>}, {pipeline_mode = #tpu.pipeline_mode<synchronous>, transform_indices = @transform_3, window_bounds = array<i64: 1, 512>}, {pipeline_mode = #tpu.pipeline_mode<synchronous>, transform_indices = @transform_4, window_bounds = array<i64: 1, 512>}, {pipeline_mode = #tpu.pipeline_mode<synchronous>, transform_indices = @transform_5, window_bounds = array<i64: 512, 256>}, {pipeline_mode = #tpu.pipeline_mode<synchronous>, transform_indices = @transform_6, window_bounds = array<i64: 1, 256>}, {pipeline_mode = #tpu.pipeline_mode<synchronous>, transform_indices = @transform_7, window_bounds = array<i64: 1, 256>}, {pipeline_mode = #tpu.pipeline_mode<synchronous>, transform_indices = @transform_8, window_bounds = array<i64: 1, 256>}, {pipeline_mode = #tpu.pipeline_mode<synchronous>, transform_indices = @transform_9, window_bounds = array<i64: 256, 768>}, {pipeline_mode = #tpu.pipeline_mode<synchronous>, transform_indices = @transform_10, window_bounds = array<i64: 1, 768>}, {pipeline_mode = #tpu.pipeline_mode<synchronous>, transform_indices = @transform_11, window_bounds = array<i64: 2, 768>}]} {
    %c0 = arith.constant 0 : index
    %c0_0 = arith.constant 0 : index
    %0 = vector.load %arg1[%c0, %c0_0] : memref<2x3200xf32, #tpu.memory_space<vmem>>, vector<2x3200xf32>
    %1 = arith.truncf %0 : vector<2x3200xf32> to vector<2x3200xbf16>
    %c0_1 = arith.constant 0 : index
    %c0_2 = arith.constant 0 : index
    %2 = vector.load %arg2[%c0_1, %c0_2] : memref<3200x256xbf16, #tpu.memory_space<vmem>>, vector<3200x256xbf16>
    %cst = arith.constant dense<0.000000e+00> : vector<2x256xf32>
    %3 = tpu.matmul %1, %2, %cst {dimension_numbers = #tpu.dot_dimension_numbers<[1], [0], [0], [1], [0, 0, 1, 1], [], []>} : vector<2x3200xbf16>, vector<3200x256xbf16>, vector<2x256xf32> -> vector<2x256xf32>
    %c0_i32 = arith.constant 0 : i32
    %4 = arith.cmpi eq, %arg0, %c0_i32 : i32
    %5 = arith.extui %4 : i1 to i32
    %c0_i32_3 = arith.constant 0 : i32
    %6 = arith.cmpi ne, %5, %c0_i32_3 : i32
    scf.if %6 {
      %c0_7 = arith.constant 0 : index
      %c0_8 = arith.constant 0 : index
      %13 = vector.load %arg13[%c0_7, %c0_8] : memref<2x512xf32, #tpu.memory_space<vmem>>, vector<2x256xf32>
      tpu.vector_store %arg13[%c0_7, %c0_8], %3 {strides = array<i32>} : memref<2x512xf32, #tpu.memory_space<vmem>>, vector<2x256xf32>,
    } else {
    }
    %c1_i32 = arith.constant 1 : i32
    %7 = arith.cmpi eq, %arg0, %c1_i32 : i32
    %8 = arith.extui %7 : i1 to i32
    %c0_i32_4 = arith.constant 0 : i32
    %9 = arith.cmpi ne, %8, %c0_i32_4 : i32
    scf.if %9 {
      %c0_7 = arith.constant 0 : index
      %c256 = arith.constant 256 : index
      %13 = vector.load %arg13[%c0_7, %c256] : memref<2x512xf32, #tpu.memory_space<vmem>>, vector<2x256xf32>
      tpu.vector_store %arg13[%c0_7, %c256], %3 {strides = array<i32>} : memref<2x512xf32, #tpu.memory_space<vmem>>, vector<2x256xf32>,
    } else {
    }
    %c1_i32_5 = arith.constant 1 : i32
    %10 = arith.cmpi eq, %arg0, %c1_i32_5 : i32
    %11 = arith.extui %10 : i1 to i32
    %c0_i32_6 = arith.constant 0 : i32
    %12 = arith.cmpi ne, %11, %c0_i32_6 : i32
    scf.if %12 {
      %c0_7 = arith.constant 0 : index
      %c0_8 = arith.constant 0 : index
      %13 = vector.load %arg13[%c0_7, %c0_8] : memref<2x512xf32, #tpu.memory_space<vmem>>, vector<2x512xf32>
      %c0_9 = arith.constant 0 : index
      %c0_10 = arith.constant 0 : index
      %14 = vector.load %arg3[%c0_9, %c0_10] : memref<1x512xf32, #tpu.memory_space<vmem>>, vector<1x512xf32>
      %15 = vector.broadcast %14 : vector<1x512xf32> to vector<2x512xf32>
      %16 = arith.addf %13, %15 : vector<2x512xf32>
      %cst_11 = arith.constant 0.000000e+00 : f32
      %17 = vector.broadcast %cst_11 : f32 to vector<2x512xf32>
      %18 = arith.maximumf %16, %17 : vector<2x512xf32>
      %c0_12 = arith.constant 0 : index
      %c0_13 = arith.constant 0 : index
      %19 = vector.load %arg4[%c0_12, %c0_13] : memref<1x512xf32, #tpu.memory_space<vmem>>, vector<1x512xf32>
      %20 = vector.broadcast %19 : vector<1x512xf32> to vector<2x512xf32>
      %21 = arith.mulf %18, %20 : vector<2x512xf32>
      %c0_14 = arith.constant 0 : index
      %c0_15 = arith.constant 0 : index
      %22 = vector.load %arg5[%c0_14, %c0_15] : memref<1x512xf32, #tpu.memory_space<vmem>>, vector<1x512xf32>
      %23 = vector.broadcast %22 : vector<1x512xf32> to vector<2x512xf32>
      %24 = arith.addf %21, %23 : vector<2x512xf32>
      %25 = arith.truncf %24 : vector<2x512xf32> to vector<2x512xbf16>
      %c0_16 = arith.constant 0 : index
      %c0_17 = arith.constant 0 : index
      %26 = vector.load %arg6[%c0_16, %c0_17] : memref<512x256xbf16, #tpu.memory_space<vmem>>, vector<512x256xbf16>
      %cst_18 = arith.constant dense<0.000000e+00> : vector<2x256xf32>
      %27 = tpu.matmul %25, %26, %cst_18 {dimension_numbers = #tpu.dot_dimension_numbers<[1], [0], [0], [1], [0, 0, 1, 1], [], []>} : vector<2x512xbf16>, vector<512x256xbf16>, vector<2x256xf32> -> vector<2x256xf32>
      %c0_19 = arith.constant 0 : index
      %c0_20 = arith.constant 0 : index
      %28 = vector.load %arg7[%c0_19, %c0_20] : memref<1x256xf32, #tpu.memory_space<vmem>>, vector<1x256xf32>
      %29 = vector.broadcast %28 : vector<1x256xf32> to vector<2x256xf32>
      %30 = arith.addf %27, %29 : vector<2x256xf32>
      %cst_21 = arith.constant 0.000000e+00 : f32
      %31 = vector.broadcast %cst_21 : f32 to vector<2x256xf32>
      %32 = arith.maximumf %30, %31 : vector<2x256xf32>
      %c0_22 = arith.constant 0 : index
      %c0_23 = arith.constant 0 : index
      %33 = vector.load %arg8[%c0_22, %c0_23] : memref<1x256xf32, #tpu.memory_space<vmem>>, vector<1x256xf32>
      %34 = vector.broadcast %33 : vector<1x256xf32> to vector<2x256xf32>
      %35 = arith.mulf %32, %34 : vector<2x256xf32>
      %c0_24 = arith.constant 0 : index
      %c0_25 = arith.constant 0 : index
      %36 = vector.load %arg9[%c0_24, %c0_25] : memref<1x256xf32, #tpu.memory_space<vmem>>, vector<1x256xf32>
      %37 = vector.broadcast %36 : vector<1x256xf32> to vector<2x256xf32>
      %38 = arith.addf %35, %37 : vector<2x256xf32>
      %39 = arith.truncf %38 : vector<2x256xf32> to vector<2x256xbf16>
      %c0_26 = arith.constant 0 : index
      %c0_27 = arith.constant 0 : index
      %40 = vector.load %arg10[%c0_26, %c0_27] : memref<256x768xbf16, #tpu.memory_space<vmem>>, vector<256x768xbf16>
      %cst_28 = arith.constant dense<0.000000e+00> : vector<2x768xf32>
      %41 = tpu.matmul %39, %40, %cst_28 {dimension_numbers = #tpu.dot_dimension_numbers<[1], [0], [0], [1], [0, 0, 1, 1], [], []>} : vector<2x256xbf16>, vector<256x768xbf16>, vector<2x768xf32> -> vector<2x768xf32>
      %c0_29 = arith.constant 0 : index
      %c0_30 = arith.constant 0 : index
      %42 = vector.load %arg11[%c0_29, %c0_30] : memref<1x768xf32, #tpu.memory_space<vmem>>, vector<1x768xf32>
      %43 = vector.broadcast %42 : vector<1x768xf32> to vector<2x768xf32>
      %44 = arith.addf %41, %43 : vector<2x768xf32>
      %45 = arith.negf %44 : vector<2x768xf32>
      %46 = math.exp %45 : vector<2x768xf32>
      %cst_31 = arith.constant 1.000000e+00 : f32
      %47 = vector.broadcast %cst_31 : f32 to vector<2x768xf32>
      %48 = arith.addf %47, %46 : vector<2x768xf32>
      %49 = arith.divf %47, %48 : vector<2x768xf32>
      %c0_32 = arith.constant 0 : index
      %c0_33 = arith.constant 0 : index
      %50 = vector.load %arg12[%c0_32, %c0_33] : memref<2x768xf32, #tpu.memory_space<vmem>>, vector<2x768xf32>
      tpu.vector_store %arg12[%c0_32, %c0_33], %49 {strides = array<i32>} : memref<2x768xf32, #tpu.memory_space<vmem>>, vector<2x768xf32>,
    } else {
    }
    return
  }
  func.func @transform_0(%arg0: i32) -> (i32, i32) {
    %c0_i32 = arith.constant 0 : i32
    %c0_i32_0 = arith.constant 0 : i32
    %c0_i32_1 = arith.constant 0 : i32
    return %c0_i32, %c0_i32_0 : i32, i32
  }
  func.func @transform_1(%arg0: i32) -> (i32, i32) {
    %c0_i32 = arith.constant 0 : i32
    %c0_i32_0 = arith.constant 0 : i32
    return %c0_i32, %arg0 : i32, i32
  }
  func.func @transform_2(%arg0: i32) -> (i32, i32) {
    %c0_i32 = arith.constant 0 : i32
    %c0_i32_0 = arith.constant 0 : i32
    %c0_i32_1 = arith.constant 0 : i32
    return %c0_i32, %c0_i32_0 : i32, i32
  }
  func.func @transform_3(%arg0: i32) -> (i32, i32) {
    %c0_i32 = arith.constant 0 : i32
    %c0_i32_0 = arith.constant 0 : i32
    %c0_i32_1 = arith.constant 0 : i32
    return %c0_i32, %c0_i32_0 : i32, i32
  }
  func.func @transform_4(%arg0: i32) -> (i32, i32) {
    %c0_i32 = arith.constant 0 : i32
    %c0_i32_0 = arith.constant 0 : i32
    %c0_i32_1 = arith.constant 0 : i32
    return %c0_i32, %c0_i32_0 : i32, i32
  }
  func.func @transform_5(%arg0: i32) -> (i32, i32) {
    %c0_i32 = arith.constant 0 : i32
    %c0_i32_0 = arith.constant 0 : i32
    %c0_i32_1 = arith.constant 0 : i32
    return %c0_i32, %c0_i32_0 : i32, i32
  }
  func.func @transform_6(%arg0: i32) -> (i32, i32) {
    %c0_i32 = arith.constant 0 : i32
    %c0_i32_0 = arith.constant 0 : i32
    %c0_i32_1 = arith.constant 0 : i32
    return %c0_i32, %c0_i32_0 : i32, i32
  }
  func.func @transform_7(%arg0: i32) -> (i32, i32) {
    %c0_i32 = arith.constant 0 : i32
    %c0_i32_0 = arith.constant 0 : i32
    %c0_i32_1 = arith.constant 0 : i32
    return %c0_i32, %c0_i32_0 : i32, i32
  }
  func.func @transform_8(%arg0: i32) -> (i32, i32) {
    %c0_i32 = arith.constant 0 : i32
    %c0_i32_0 = arith.constant 0 : i32
    %c0_i32_1 = arith.constant 0 : i32
    return %c0_i32, %c0_i32_0 : i32, i32
  }
  func.func @transform_9(%arg0: i32) -> (i32, i32) {
    %c0_i32 = arith.constant 0 : i32
    %c0_i32_0 = arith.constant 0 : i32
    %c0_i32_1 = arith.constant 0 : i32
    return %c0_i32, %c0_i32_0 : i32, i32
  }
  func.func @transform_10(%arg0: i32) -> (i32, i32) {
    %c0_i32 = arith.constant 0 : i32
    %c0_i32_0 = arith.constant 0 : i32
    %c0_i32_1 = arith.constant 0 : i32
    return %c0_i32, %c0_i32_0 : i32, i32
  }
  func.func @transform_11(%arg0: i32) -> (i32, i32) {
    %c0_i32 = arith.constant 0 : i32
    %c0_i32_0 = arith.constant 0 : i32
    %c0_i32_1 = arith.constant 0 : i32
    return %c0_i32, %c0_i32_0 : i32, i32
  }
}

</mosaic_0001>

<llo_original>
// kernel: regression_model_forward.2
$region0: #{regression_model_forward.2}
  #allocation0 [shape = 'u32[]', space=smem, size = 0x4, offset = 0x4, fixed_abs, tag = 'smem constant byte address 0x4 - core index']
  #allocation1 [shape = 'u32[72,128]{1,0:T(1,128)}', space=vmem, size = 0x9000, scoped, tag = 'internal scratch']
  #allocation2 [shape = 'f32[202,17]{1,0:T(8,128)}', space=vmem, size = 0x1a000, scoped, tag = 'scratch operand']
  #allocation3 [shape = 'f32[200,64]{1,0:T(8,128)}', space=vmem, size = 0x19000, scoped, tag = 'scratch operand']
  #allocation4 [shape = 'f32[102,64]{1,0:T(8,128)}', space=vmem, size = 0xd000, scoped, tag = 'scratch operand']
  #allocation5 [shape = 'f32[100,128]{1,0:T(8,128)}', space=vmem, size = 0xd000, scoped, tag = 'scratch operand']
  %s0 = inlined_call_operand.vmem [shape: f32[200,17], index: 0, kind: input, shape index: {}]
  %s1 = inlined_call_operand.vmem [shape: f32[3,17,64], index: 1, kind: input, shape index: {}]
  %s2 = inlined_call_operand.hbm [shape: f32[1,64], index: 2, kind: input, shape index: {}]
  %s3 = inlined_call_operand.vmem [shape: f32[1,64], index: 3, kind: input, shape index: {}]
  %s4 = inlined_call_operand.vmem [shape: f32[1,64], index: 4, kind: input, shape index: {}]
  %s5 = inlined_call_operand.hbm [shape: f32[3,64,128], index: 5, kind: input, shape index: {}]
  %s6 = inlined_call_operand.hbm [shape: f32[1,128], index: 6, kind: input, shape index: {}]
  %s7 = inlined_call_operand.vmem [shape: f32[1,128], index: 7, kind: input, shape index: {}]
  %s8 = inlined_call_operand.vmem [shape: f32[1,128], index: 8, kind: input, shape index: {}]
  %s9 = inlined_call_operand.vmem [shape: f32[50,128], index: 9, kind: output, shape index: {}]
  %s10 = sld [smem:[#allocation0]]
  $region58: #{regression_model_forward.2} parent=0
    _
  %s12 = ssub.s32 1, %s10
  %s13 = scalar_select 0, %s12, %s10
  $region1: #{regression_model_forward.2} parent=0
    #allocation6 [shape = 'u8[512]{0}', space=vmem, size = 0x400, scoped, tag = 'input window, operand 2, single buffered']
    #allocation7 [shape = 's32[1]{0}', space=sflag, size = 0x4, scoped, tag = 'scoped memory for regression_model_forward.2']
    #allocation8 [shape = 'u8[98304]{0}', space=vmem, size = 0x18000, scoped, tag = 'input window, operand 5, single buffered']
    #allocation9 [shape = 's32[1]{0}', space=sflag, size = 0x4, scoped, tag = 'scoped memory for regression_model_forward.2']
    #allocation10 [shape = 'u8[512]{0}', space=vmem, size = 0x400, scoped, tag = 'input window, operand 6, single buffered']
    %14 = vsyncpa [#allocation7], 0
    %15 = vsyncpa [#allocation9], 0
    // Predicated region
    $region2: #{regression_model_forward.2} parent=1 // pred_check
      _
    $region3: #{regression_model_forward.2} parent=1 // pred_check_branch
      %17 = sbr.rel (0) target = $region5
    $region4: #{regression_model_forward.2} parent=1 // pred_region
      _
    $region5: #{regression_model_forward.2} parent=1 // pred_fallthru
      _
    // Predicated region
    $region6: #{regression_model_forward.2} parent=1 // pred_check
      _
    $region7: #{regression_model_forward.2} parent=1 // pred_check_branch
      %19 = sbr.rel (0) target = $region9
    $region8: #{regression_model_forward.2} parent=1 // pred_region
      _
    $region9: #{regression_model_forward.2} parent=1 // pred_fallthru
      _
    // Predicated region
    $region10: #{regression_model_forward.2} parent=1 // pred_check
      _
    $region11: #{regression_model_forward.2} parent=1 // pred_check_branch
      %21 = sbr.rel (0) target = $region13
    $region12: #{regression_model_forward.2} parent=1 // pred_region
      %23 = vsyncadd [#allocation7], 0
      %s25 = sshll.u32 %s2, 4
      %s26 = int_to_ptr.hbm [resolvable:$true] %s25
      %s27 = sshll.u32 [#allocation6], 4
      %s28 = int_to_ptr.vmem [resolvable:$true] %s27
      %30 = dma.hbm_to_vmem [thread:$0]  %s26, 16, %s28, [#allocation7]
    $region13: #{regression_model_forward.2} parent=1 // pred_fallthru
      _
    // Predicated region
    $region14: #{regression_model_forward.2} parent=1 // pred_check
      _
    $region15: #{regression_model_forward.2} parent=1 // pred_check_branch
      %32 = sbr.rel (0) target = $region17
    $region16: #{regression_model_forward.2} parent=1 // pred_region
      _
    $region17: #{regression_model_forward.2} parent=1 // pred_fallthru
      _
    // Predicated region
    $region18: #{regression_model_forward.2} parent=1 // pred_check
      _
    $region19: #{regression_model_forward.2} parent=1 // pred_check_branch
      %34 = sbr.rel (0) target = $region21
    $region20: #{regression_model_forward.2} parent=1 // pred_region
      _
    $region21: #{regression_model_forward.2} parent=1 // pred_fallthru
      _
    // Predicated region
    $region22: #{regression_model_forward.2} parent=1 // pred_check
      _
    $region23: #{regression_model_forward.2} parent=1 // pred_check_branch
      %36 = sbr.rel (0) target = $region25
    $region24: #{regression_model_forward.2} parent=1 // pred_region
      %38 = vsyncadd [#allocation9], 0
      %s39 = sshll.u32 %s5, 4
      %s40 = int_to_ptr.hbm [resolvable:$true] %s39
      %s41 = sshll.u32 [#allocation8], 4
      %s42 = int_to_ptr.vmem [resolvable:$true] %s41
      %47 = dma.hbm_to_vmem [thread:$0]  %s40, 3072, %s42, [#allocation9], 128, 128, 8
    $region25: #{regression_model_forward.2} parent=1 // pred_fallthru
      _
    // Predicated region
    $region26: #{regression_model_forward.2} parent=1 // pred_check
      _
    $region27: #{regression_model_forward.2} parent=1 // pred_check_branch
      %49 = sbr.rel (0) target = $region29
    $region28: #{regression_model_forward.2} parent=1 // pred_region
      %51 = vsyncadd [#allocation9], 0
      %s53 = sshll.u32 %s6, 4
      %s54 = int_to_ptr.hbm [resolvable:$true] %s53
      %s55 = sshll.u32 [#allocation10], 4
      %s56 = int_to_ptr.vmem [resolvable:$true] %s55
      %58 = dma.hbm_to_vmem [thread:$0]  %s54, 16, %s56, [#allocation9]
    $region29: #{regression_model_forward.2} parent=1 // pred_fallthru
      _
    // Predicated region
    $region30: #{regression_model_forward.2} parent=1 // pred_check
      _
    $region31: #{regression_model_forward.2} parent=1 // pred_check_branch
      %60 = sbr.rel (0) target = $region33
    $region32: #{regression_model_forward.2} parent=1 // pred_region
      _
    $region33: #{regression_model_forward.2} parent=1 // pred_fallthru
      _
    // Predicated region
    $region34: #{regression_model_forward.2} parent=1 // pred_check
      _
    $region35: #{regression_model_forward.2} parent=1 // pred_check_branch
      %62 = sbr.rel (0) target = $region37
    $region36: #{regression_model_forward.2} parent=1 // pred_region
      _
    $region37: #{regression_model_forward.2} parent=1 // pred_fallthru
      _
    // Predicated region
    $region38: #{regression_model_forward.2} parent=1 // pred_check
      _
    $region39: #{regression_model_forward.2} parent=1 // pred_check_branch
      %64 = sbr.rel (0) target = $region41
    $region40: #{regression_model_forward.2} parent=1 // pred_region
      %66 = dma.done [#allocation7], 16
    $region41: #{regression_model_forward.2} parent=1 // pred_fallthru
      _
    // Predicated region
    $region42: #{regression_model_forward.2} parent=1 // pred_check
      _
    $region43: #{regression_model_forward.2} parent=1 // pred_check_branch
      %68 = sbr.rel (0) target = $region45
    $region44: #{regression_model_forward.2} parent=1 // pred_region
      %70 = dma.done [#allocation9], 3072
    $region45: #{regression_model_forward.2} parent=1 // pred_fallthru
      _
    // Predicated region
    $region46: #{regression_model_forward.2} parent=1 // pred_check
      _
    $region47: #{regression_model_forward.2} parent=1 // pred_check_branch
      %72 = sbr.rel (0) target = $region49
    $region48: #{regression_model_forward.2} parent=1 // pred_region
      %74 = dma.done [#allocation9], 16
    $region49: #{regression_model_forward.2} parent=1 // pred_fallthru
      _
    %v75 = vld [vmem:[%s0] sm:$0xff]
    %v76 = vld [vmem:[%s0 + $0x8] sm:$0xff]
    %v77 = vld [vmem:[%s0 + $0x10] sm:$0xff]
    %v78 = vld [vmem:[%s0 + $0x18] sm:$0xff]
    %v79 = vld [vmem:[%s0 + $0x20] sm:$0xff]
    %v80 = vld [vmem:[%s0 + $0x28] sm:$0xff]
    %v81 = vld [vmem:[%s0 + $0x30] sm:$0xff]
    %v82 = vld [vmem:[%s0 + $0x38] sm:$0xff]
    %v83 = vld [vmem:[%s0 + $0x40] sm:$0xff]
    %v84 = vld [vmem:[%s0 + $0x48] sm:$0xff]
    %v85 = vld [vmem:[%s0 + $0x50] sm:$0xff]
    %v86 = vld [vmem:[%s0 + $0x58] sm:$0xff]
    %v87 = vld [vmem:[%s0 + $0x60] sm:$0xff]
    %v88 = vld [vmem:[%s0 + $0x68] sm:$0xff]
    %v89 = vld [vmem:[%s0 + $0x70] sm:$0xff]
    %v90 = vld [vmem:[%s0 + $0x78] sm:$0xff]
    %v91 = vld [vmem:[%s0 + $0x80] sm:$0xff]
    %v92 = vld [vmem:[%s0 + $0x88] sm:$0xff]
    %v93 = vld [vmem:[%s0 + $0x90] sm:$0xff]
    %v94 = vld [vmem:[%s0 + $0x98] sm:$0xff]
    %v95 = vld [vmem:[%s0 + $0xa0] sm:$0xff]
    %v96 = vld [vmem:[%s0 + $0xa8] sm:$0xff]
    %v97 = vld [vmem:[%s0 + $0xb0] sm:$0xff]
    %v98 = vld [vmem:[%s0 + $0xb8] sm:$0xff]
    %v99 = vld [vmem:[%s0 + $0xc0] sm:$0xff]
    %vm100 = vcmask 138240
    %101 = vst.msk [vmem:[#allocation2 + $0x1] sm:$0xff] %vm100, %v75
    %102 = vst.msk [vmem:[#allocation2 + $0x9] sm:$0xff] %vm100, %v76
    %103 = vst.msk [vmem:[#allocation2 + $0x11] sm:$0xff] %vm100, %v77
    %104 = vst.msk [vmem:[#allocation2 + $0x19] sm:$0xff] %vm100, %v78
    %105 = vst.msk [vmem:[#allocation2 + $0x21] sm:$0xff] %vm100, %v79
    %106 = vst.msk [vmem:[#allocation2 + $0x29] sm:$0xff] %vm100, %v80
    %107 = vst.msk [vmem:[#allocation2 + $0x31] sm:$0xff] %vm100, %v81
    %108 = vst.msk [vmem:[#allocation2 + $0x39] sm:$0xff] %vm100, %v82
    %109 = vst.msk [vmem:[#allocation2 + $0x41] sm:$0xff] %vm100, %v83
    %110 = vst.msk [vmem:[#allocation2 + $0x49] sm:$0xff] %vm100, %v84
    %111 = vst.msk [vmem:[#allocation2 + $0x51] sm:$0xff] %vm100, %v85
    %112 = vst.msk [vmem:[#allocation2 + $0x59] sm:$0xff] %vm100, %v86
    %113 = vst.msk [vmem:[#allocation2 + $0x61] sm:$0xff] %vm100, %v87
    %114 = vst.msk [vmem:[#allocation2 + $0x69] sm:$0xff] %vm100, %v88
    %115 = vst.msk [vmem:[#allocation2 + $0x71] sm:$0xff] %vm100, %v89
    %116 = vst.msk [vmem:[#allocation2 + $0x79] sm:$0xff] %vm100, %v90
    %117 = vst.msk [vmem:[#allocation2 + $0x81] sm:$0xff] %vm100, %v91
    %118 = vst.msk [vmem:[#allocation2 + $0x89] sm:$0xff] %vm100, %v92
    %119 = vst.msk [vmem:[#allocation2 + $0x91] sm:$0xff] %vm100, %v93
    %120 = vst.msk [vmem:[#allocation2 + $0x99] sm:$0xff] %vm100, %v94
    %121 = vst.msk [vmem:[#allocation2 + $0xa1] sm:$0xff] %vm100, %v95
    %122 = vst.msk [vmem:[#allocation2 + $0xa9] sm:$0xff] %vm100, %v96
    %123 = vst.msk [vmem:[#allocation2 + $0xb1] sm:$0xff] %vm100, %v97
    %124 = vst.msk [vmem:[#allocation2 + $0xb9] sm:$0xff] %vm100, %v98
    %125 = vst.msk [vmem:[#allocation2 + $0xc1] sm:$0xff] %vm100, %v99
    %v126 = vlaneseq
    %v127 = vshrl.u32 %v126, 7
    %v128 = vadd.s32 %v127, 8
    %v129 = vadd.s32 %v127, 16
    %v130 = vadd.s32 %v127, 24
    %v131 = vadd.s32 %v127, 32
    %v132 = vadd.s32 %v127, 40
    %v133 = vadd.s32 %v127, 48
    %v134 = vadd.s32 %v127, 56
    %v135 = vadd.s32 %v127, 64
    %v136 = vadd.s32 %v127, 72
    %v137 = vadd.s32 %v127, 80
    %v138 = vadd.s32 %v127, 88
    %v139 = vadd.s32 %v127, 96
    %v140 = vadd.s32 %v127, 104
    %v141 = vadd.s32 %v127, 112
    %v142 = vadd.s32 %v127, 120
    %v143 = vadd.s32 %v127, 128
    %v144 = vadd.s32 %v127, 136
    %v145 = vadd.s32 %v127, 144
    %v146 = vadd.s32 %v127, 152
    %v147 = vadd.s32 %v127, 160
    %v148 = vadd.s32 %v127, 168
    %v149 = vadd.s32 %v127, 176
    %v150 = vadd.s32 %v127, 184
    %v151 = vadd.s32 %v127, 192
    %vm152 = vcmp.lt.s32.totalorder %v127, 0
    %v153 = vsub.s32 0, %v127
    %v154 = vsel %vm152, %v153, %v127
    %v155 = vand.u32 %v154, 65535
    %v156 = vshrl.u32 %v154, 16
    %v158 = vmul.u32 %v155, 2622
    %v159 = vmul.u32 %v155, 41943
    %v160 = vmul.u32 %v156, 2622
    %v161 = vmul.u32 %v156, 41943
    %v162 = vshll.u32 %v159, 16
    %v163 = vshrl.u32 %v159, 16
    %v164 = vshll.u32 %v160, 16
    %v165 = vshrl.u32 %v160, 16
    %vm166 = vc.u32 %v158, %v162
    %v167 = vsel %vm166, 1, 0
    %v168 = vadd.s32 %v158, %v162
    %v169 = vadd.s32 %v161, %v167
    %vm170 = vc.u32 %v168, %v164
    %v171 = vsel %vm170, 1, 0
    %v172 = vadd.s32 %v168, %v164
    %v173 = vadd.s32 %v169, %v171
    %v174 = vadd.s32 %v173, %v163
    %v175 = vadd.s32 %v174, %v165
    %v176 = vshrl.u32 %v175, 6
    %v177 = vmul.u32 %v176, 100
    %v178 = vsub.s32 %v154, %v177
    %v179 = vsub.s32 0, %v178
    %v180 = vsel %vm152, %v179, %v178
    %vm181 = vcmp.lt.s32.totalorder %v128, 0
    %v182 = vsub.s32 0, %v128
    %v183 = vsel %vm181, %v182, %v128
    %v184 = vand.u32 %v183, 65535
    %v185 = vshrl.u32 %v183, 16
    %v187 = vmul.u32 %v184, 2622
    %v188 = vmul.u32 %v184, 41943
    %v189 = vmul.u32 %v185, 2622
    %v190 = vmul.u32 %v185, 41943
    %v191 = vshll.u32 %v188, 16
    %v192 = vshrl.u32 %v188, 16
    %v193 = vshll.u32 %v189, 16
    %v194 = vshrl.u32 %v189, 16
    %vm195 = vc.u32 %v187, %v191
    %v196 = vsel %vm195, 1, 0
    %v197 = vadd.s32 %v187, %v191
    %v198 = vadd.s32 %v190, %v196
    %vm199 = vc.u32 %v197, %v193
    %v200 = vsel %vm199, 1, 0
    %v201 = vadd.s32 %v197, %v193
    %v202 = vadd.s32 %v198, %v200
    %v203 = vadd.s32 %v202, %v192
    %v204 = vadd.s32 %v203, %v194
    %v205 = vshrl.u32 %v204, 6
    %v206 = vmul.u32 %v205, 100
    %v207 = vsub.s32 %v183, %v206
    %v208 = vsub.s32 0, %v207
    %v209 = vsel %vm181, %v208, %v207
    %vm210 = vcmp.lt.s32.totalorder %v129, 0
    %v211 = vsub.s32 0, %v129
    %v212 = vsel %vm210, %v211, %v129
    %v213 = vand.u32 %v212, 65535
    %v214 = vshrl.u32 %v212, 16
    %v216 = vmul.u32 %v213, 2622
    %v217 = vmul.u32 %v213, 41943
    %v218 = vmul.u32 %v214, 2622
    %v219 = vmul.u32 %v214, 41943
    %v220 = vshll.u32 %v217, 16
    %v221 = vshrl.u32 %v217, 16
    %v222 = vshll.u32 %v218, 16
    %v223 = vshrl.u32 %v218, 16
    %vm224 = vc.u32 %v216, %v220
    %v225 = vsel %vm224, 1, 0
    %v226 = vadd.s32 %v216, %v220
    %v227 = vadd.s32 %v219, %v225
    %vm228 = vc.u32 %v226, %v222
    %v229 = vsel %vm228, 1, 0
    %v230 = vadd.s32 %v226, %v222
    %v231 = vadd.s32 %v227, %v229
    %v232 = vadd.s32 %v231, %v221
    %v233 = vadd.s32 %v232, %v223
    %v234 = vshrl.u32 %v233, 6
    %v235 = vmul.u32 %v234, 100
    %v236 = vsub.s32 %v212, %v235
    %v237 = vsub.s32 0, %v236
    %v238 = vsel %vm210, %v237, %v236
    %vm239 = vcmp.lt.s32.totalorder %v130, 0
    %v240 = vsub.s32 0, %v130
    %v241 = vsel %vm239, %v240, %v130
    %v242 = vand.u32 %v241, 65535
    %v243 = vshrl.u32 %v241, 16
    %v245 = vmul.u32 %v242, 2622
    %v246 = vmul.u32 %v242, 41943
    %v247 = vmul.u32 %v243, 2622
    %v248 = vmul.u32 %v243, 41943
    %v249 = vshll.u32 %v246, 16
    %v250 = vshrl.u32 %v246, 16
    %v251 = vshll.u32 %v247, 16
    %v252 = vshrl.u32 %v247, 16
    %vm253 = vc.u32 %v245, %v249
    %v254 = vsel %vm253, 1, 0
    %v255 = vadd.s32 %v245, %v249
    %v256 = vadd.s32 %v248, %v254
    %vm257 = vc.u32 %v255, %v251
    %v258 = vsel %vm257, 1, 0
    %v259 = vadd.s32 %v255, %v251
    %v260 = vadd.s32 %v256, %v258
    %v261 = vadd.s32 %v260, %v250
    %v262 = vadd.s32 %v261, %v252
    %v263 = vshrl.u32 %v262, 6
    %v264 = vmul.u32 %v263, 100
    %v265 = vsub.s32 %v241, %v264
    %v266 = vsub.s32 0, %v265
    %v267 = vsel %vm239, %v266, %v265
    %vm268 = vcmp.lt.s32.totalorder %v131, 0
    %v269 = vsub.s32 0, %v131
    %v270 = vsel %vm268, %v269, %v131
    %v271 = vand.u32 %v270, 65535
    %v272 = vshrl.u32 %v270, 16
    %v274 = vmul.u32 %v271, 2622
    %v275 = vmul.u32 %v271, 41943
    %v276 = vmul.u32 %v272, 2622
    %v277 = vmul.u32 %v272, 41943
    %v278 = vshll.u32 %v275, 16
    %v279 = vshrl.u32 %v275, 16
    %v280 = vshll.u32 %v276, 16
    %v281 = vshrl.u32 %v276, 16
    %vm282 = vc.u32 %v274, %v278
    %v283 = vsel %vm282, 1, 0
    %v284 = vadd.s32 %v274, %v278
    %v285 = vadd.s32 %v277, %v283
    %vm286 = vc.u32 %v284, %v280
    %v287 = vsel %vm286, 1, 0
    %v288 = vadd.s32 %v284, %v280
    %v289 = vadd.s32 %v285, %v287
    %v290 = vadd.s32 %v289, %v279
    %v291 = vadd.s32 %v290, %v281
    %v292 = vshrl.u32 %v291, 6
    %v293 = vmul.u32 %v292, 100
    %v294 = vsub.s32 %v270, %v293
    %v295 = vsub.s32 0, %v294
    %v296 = vsel %vm268, %v295, %v294
    %vm297 = vcmp.lt.s32.totalorder %v132, 0
    %v298 = vsub.s32 0, %v132
    %v299 = vsel %vm297, %v298, %v132
    %v300 = vand.u32 %v299, 65535
    %v301 = vshrl.u32 %v299, 16
    %v303 = vmul.u32 %v300, 2622
    %v304 = vmul.u32 %v300, 41943
    %v305 = vmul.u32 %v301, 2622
    %v306 = vmul.u32 %v301, 41943
    %v307 = vshll.u32 %v304, 16
    %v308 = vshrl.u32 %v304, 16
    %v309 = vshll.u32 %v305, 16
    %v310 = vshrl.u32 %v305, 16
    %vm311 = vc.u32 %v303, %v307
    %v312 = vsel %vm311, 1, 0
    %v313 = vadd.s32 %v303, %v307
    %v314 = vadd.s32 %v306, %v312
    %vm315 = vc.u32 %v313, %v309
    %v316 = vsel %vm315, 1, 0
    %v317 = vadd.s32 %v313, %v309
    %v318 = vadd.s32 %v314, %v316
    %v319 = vadd.s32 %v318, %v308
    %v320 = vadd.s32 %v319, %v310
    %v321 = vshrl.u32 %v320, 6
    %v322 = vmul.u32 %v321, 100
    %v323 = vsub.s32 %v299, %v322
    %v324 = vsub.s32 0, %v323
    %v325 = vsel %vm297, %v324, %v323
    %vm326 = vcmp.lt.s32.totalorder %v133, 0
    %v327 = vsub.s32 0, %v133
    %v328 = vsel %vm326, %v327, %v133
    %v329 = vand.u32 %v328, 65535
    %v330 = vshrl.u32 %v328, 16
    %v332 = vmul.u32 %v329, 2622
    %v333 = vmul.u32 %v329, 41943
    %v334 = vmul.u32 %v330, 2622
    %v335 = vmul.u32 %v330, 41943
    %v336 = vshll.u32 %v333, 16
    %v337 = vshrl.u32 %v333, 16
    %v338 = vshll.u32 %v334, 16
    %v339 = vshrl.u32 %v334, 16
    %vm340 = vc.u32 %v332, %v336
    %v341 = vsel %vm340, 1, 0
    %v342 = vadd.s32 %v332, %v336
    %v343 = vadd.s32 %v335, %v341
    %vm344 = vc.u32 %v342, %v338
    %v345 = vsel %vm344, 1, 0
    %v346 = vadd.s32 %v342, %v338
    %v347 = vadd.s32 %v343, %v345
    %v348 = vadd.s32 %v347, %v337
    %v349 = vadd.s32 %v348, %v339
    %v350 = vshrl.u32 %v349, 6
    %v351 = vmul.u32 %v350, 100
    %v352 = vsub.s32 %v328, %v351
    %v353 = vsub.s32 0, %v352
    %v354 = vsel %vm326, %v353, %v352
    %vm355 = vcmp.lt.s32.totalorder %v134, 0
    %v356 = vsub.s32 0, %v134
    %v357 = vsel %vm355, %v356, %v134
    %v358 = vand.u32 %v357, 65535
    %v359 = vshrl.u32 %v357, 16
    %v361 = vmul.u32 %v358, 2622
    %v362 = vmul.u32 %v358, 41943
    %v363 = vmul.u32 %v359, 2622
    %v364 = vmul.u32 %v359, 41943
    %v365 = vshll.u32 %v362, 16
    %v366 = vshrl.u32 %v362, 16
    %v367 = vshll.u32 %v363, 16
    %v368 = vshrl.u32 %v363, 16
    %vm369 = vc.u32 %v361, %v365
    %v370 = vsel %vm369, 1, 0
    %v371 = vadd.s32 %v361, %v365
    %v372 = vadd.s32 %v364, %v370
    %vm373 = vc.u32 %v371, %v367
    %v374 = vsel %vm373, 1, 0
    %v375 = vadd.s32 %v371, %v367
    %v376 = vadd.s32 %v372, %v374
    %v377 = vadd.s32 %v376, %v366
    %v378 = vadd.s32 %v377, %v368
    %v379 = vshrl.u32 %v378, 6
    %v380 = vmul.u32 %v379, 100
    %v381 = vsub.s32 %v357, %v380
    %v382 = vsub.s32 0, %v381
    %v383 = vsel %vm355, %v382, %v381
    %vm384 = vcmp.lt.s32.totalorder %v135, 0
    %v385 = vsub.s32 0, %v135
    %v386 = vsel %vm384, %v385, %v135
    %v387 = vand.u32 %v386, 65535
    %v388 = vshrl.u32 %v386, 16
    %v390 = vmul.u32 %v387, 2622
    %v391 = vmul.u32 %v387, 41943
    %v392 = vmul.u32 %v388, 2622
    %v393 = vmul.u32 %v388, 41943
    %v394 = vshll.u32 %v391, 16
    %v395 = vshrl.u32 %v391, 16
    %v396 = vshll.u32 %v392, 16
    %v397 = vshrl.u32 %v392, 16
    %vm398 = vc.u32 %v390, %v394
    %v399 = vsel %vm398, 1, 0
    %v400 = vadd.s32 %v390, %v394
    %v401 = vadd.s32 %v393, %v399
    %vm402 = vc.u32 %v400, %v396
    %v403 = vsel %vm402, 1, 0
    %v404 = vadd.s32 %v400, %v396
    %v405 = vadd.s32 %v401, %v403
    %v406 = vadd.s32 %v405, %v395
    %v407 = vadd.s32 %v406, %v397
    %v408 = vshrl.u32 %v407, 6
    %v409 = vmul.u32 %v408, 100
    %v410 = vsub.s32 %v386, %v409
    %v411 = vsub.s32 0, %v410
    %v412 = vsel %vm384, %v411, %v410
    %vm413 = vcmp.lt.s32.totalorder %v136, 0
    %v414 = vsub.s32 0, %v136
    %v415 = vsel %vm413, %v414, %v136
    %v416 = vand.u32 %v415, 65535
    %v417 = vshrl.u32 %v415, 16
    %v419 = vmul.u32 %v416, 2622
    %v420 = vmul.u32 %v416, 41943
    %v421 = vmul.u32 %v417, 2622
    %v422 = vmul.u32 %v417, 41943
    %v423 = vshll.u32 %v420, 16
    %v424 = vshrl.u32 %v420, 16
    %v425 = vshll.u32 %v421, 16
    %v426 = vshrl.u32 %v421, 16
    %vm427 = vc.u32 %v419, %v423
    %v428 = vsel %vm427, 1, 0
    %v429 = vadd.s32 %v419, %v423
    %v430 = vadd.s32 %v422, %v428
    %vm431 = vc.u32 %v429, %v425
    %v432 = vsel %vm431, 1, 0
    %v433 = vadd.s32 %v429, %v425
    %v434 = vadd.s32 %v430, %v432
    %v435 = vadd.s32 %v434, %v424
    %v436 = vadd.s32 %v435, %v426
    %v437 = vshrl.u32 %v436, 6
    %v438 = vmul.u32 %v437, 100
    %v439 = vsub.s32 %v415, %v438
    %v440 = vsub.s32 0, %v439
    %v441 = vsel %vm413, %v440, %v439
    %vm442 = vcmp.lt.s32.totalorder %v137, 0
    %v443 = vsub.s32 0, %v137
    %v444 = vsel %vm442, %v443, %v137
    %v445 = vand.u32 %v444, 65535
    %v446 = vshrl.u32 %v444, 16
    %v448 = vmul.u32 %v445, 2622
    %v449 = vmul.u32 %v445, 41943
    %v450 = vmul.u32 %v446, 2622
    %v451 = vmul.u32 %v446, 41943
    %v452 = vshll.u32 %v449, 16
    %v453 = vshrl.u32 %v449, 16
    %v454 = vshll.u32 %v450, 16
    %v455 = vshrl.u32 %v450, 16
    %vm456 = vc.u32 %v448, %v452
    %v457 = vsel %vm456, 1, 0
    %v458 = vadd.s32 %v448, %v452
    %v459 = vadd.s32 %v451, %v457
    %vm460 = vc.u32 %v458, %v454
    %v461 = vsel %vm460, 1, 0
    %v462 = vadd.s32 %v458, %v454
    %v463 = vadd.s32 %v459, %v461
    %v464 = vadd.s32 %v463, %v453
    %v465 = vadd.s32 %v464, %v455
    %v466 = vshrl.u32 %v465, 6
    %v467 = vmul.u32 %v466, 100
    %v468 = vsub.s32 %v444, %v467
    %v469 = vsub.s32 0, %v468
    %v470 = vsel %vm442, %v469, %v468
    %vm471 = vcmp.lt.s32.totalorder %v138, 0
    %v472 = vsub.s32 0, %v138
    %v473 = vsel %vm471, %v472, %v138
    %v474 = vand.u32 %v473, 65535
    %v475 = vshrl.u32 %v473, 16
    %v477 = vmul.u32 %v474, 2622
    %v478 = vmul.u32 %v474, 41943
    %v479 = vmul.u32 %v475, 2622
    %v480 = vmul.u32 %v475, 41943
    %v481 = vshll.u32 %v478, 16
    %v482 = vshrl.u32 %v478, 16
    %v483 = vshll.u32 %v479, 16
    %v484 = vshrl.u32 %v479, 16
    %vm485 = vc.u32 %v477, %v481
    %v486 = vsel %vm485, 1, 0
    %v487 = vadd.s32 %v477, %v481
    %v488 = vadd.s32 %v480, %v486
    %vm489 = vc.u32 %v487, %v483
    %v490 = vsel %vm489, 1, 0
    %v491 = vadd.s32 %v487, %v483
    %v492 = vadd.s32 %v488, %v490
    %v493 = vadd.s32 %v492, %v482
    %v494 = vadd.s32 %v493, %v484
    %v495 = vshrl.u32 %v494, 6
    %v496 = vmul.u32 %v495, 100
    %v497 = vsub.s32 %v473, %v496
    %v498 = vsub.s32 0, %v497
    %v499 = vsel %vm471, %v498, %v497
    %vm500 = vcmp.lt.s32.totalorder %v139, 0
    %v501 = vsub.s32 0, %v139
    %v502 = vsel %vm500, %v501, %v139
    %v503 = vand.u32 %v502, 65535
    %v504 = vshrl.u32 %v502, 16
    %v506 = vmul.u32 %v503, 2622
    %v507 = vmul.u32 %v503, 41943
    %v508 = vmul.u32 %v504, 2622
    %v509 = vmul.u32 %v504, 41943
    %v510 = vshll.u32 %v507, 16
    %v511 = vshrl.u32 %v507, 16
    %v512 = vshll.u32 %v508, 16
    %v513 = vshrl.u32 %v508, 16
    %vm514 = vc.u32 %v506, %v510
    %v515 = vsel %vm514, 1, 0
    %v516 = vadd.s32 %v506, %v510
    %v517 = vadd.s32 %v509, %v515
    %vm518 = vc.u32 %v516, %v512
    %v519 = vsel %vm518, 1, 0
    %v520 = vadd.s32 %v516, %v512
    %v521 = vadd.s32 %v517, %v519
    %v522 = vadd.s32 %v521, %v511
    %v523 = vadd.s32 %v522, %v513
    %v524 = vshrl.u32 %v523, 6
    %v525 = vmul.u32 %v524, 100
    %v526 = vsub.s32 %v502, %v525
    %v527 = vsub.s32 0, %v526
    %v528 = vsel %vm500, %v527, %v526
    %vm529 = vcmp.lt.s32.totalorder %v140, 0
    %v530 = vsub.s32 0, %v140
    %v531 = vsel %vm529, %v530, %v140
    %v532 = vand.u32 %v531, 65535
    %v533 = vshrl.u32 %v531, 16
    %v535 = vmul.u32 %v532, 2622
    %v536 = vmul.u32 %v532, 41943
    %v537 = vmul.u32 %v533, 2622
    %v538 = vmul.u32 %v533, 41943
    %v539 = vshll.u32 %v536, 16
    %v540 = vshrl.u32 %v536, 16
    %v541 = vshll.u32 %v537, 16
    %v542 = vshrl.u32 %v537, 16
    %vm543 = vc.u32 %v535, %v539
    %v544 = vsel %vm543, 1, 0
    %v545 = vadd.s32 %v535, %v539
    %v546 = vadd.s32 %v538, %v544
    %vm547 = vc.u32 %v545, %v541
    %v548 = vsel %vm547, 1, 0
    %v549 = vadd.s32 %v545, %v541
    %v550 = vadd.s32 %v546, %v548
    %v551 = vadd.s32 %v550, %v540
    %v552 = vadd.s32 %v551, %v542
    %v553 = vshrl.u32 %v552, 6
    %v554 = vmul.u32 %v553, 100
    %v555 = vsub.s32 %v531, %v554
    %v556 = vsub.s32 0, %v555
    %v557 = vsel %vm529, %v556, %v555
    %vm558 = vcmp.lt.s32.totalorder %v141, 0
    %v559 = vsub.s32 0, %v141
    %v560 = vsel %vm558, %v559, %v141
    %v561 = vand.u32 %v560, 65535
    %v562 = vshrl.u32 %v560, 16
    %v564 = vmul.u32 %v561, 2622
    %v565 = vmul.u32 %v561, 41943
    %v566 = vmul.u32 %v562, 2622
    %v567 = vmul.u32 %v562, 41943
    %v568 = vshll.u32 %v565, 16
    %v569 = vshrl.u32 %v565, 16
    %v570 = vshll.u32 %v566, 16
    %v571 = vshrl.u32 %v566, 16
    %vm572 = vc.u32 %v564, %v568
    %v573 = vsel %vm572, 1, 0
    %v574 = vadd.s32 %v564, %v568
    %v575 = vadd.s32 %v567, %v573
    %vm576 = vc.u32 %v574, %v570
    %v577 = vsel %vm576, 1, 0
    %v578 = vadd.s32 %v574, %v570
    %v579 = vadd.s32 %v575, %v577
    %v580 = vadd.s32 %v579, %v569
    %v581 = vadd.s32 %v580, %v571
    %v582 = vshrl.u32 %v581, 6
    %v583 = vmul.u32 %v582, 100
    %v584 = vsub.s32 %v560, %v583
    %v585 = vsub.s32 0, %v584
    %v586 = vsel %vm558, %v585, %v584
    %vm587 = vcmp.lt.s32.totalorder %v142, 0
    %v588 = vsub.s32 0, %v142
    %v589 = vsel %vm587, %v588, %v142
    %v590 = vand.u32 %v589, 65535
    %v591 = vshrl.u32 %v589, 16
    %v593 = vmul.u32 %v590, 2622
    %v594 = vmul.u32 %v590, 41943
    %v595 = vmul.u32 %v591, 2622
    %v596 = vmul.u32 %v591, 41943
    %v597 = vshll.u32 %v594, 16
    %v598 = vshrl.u32 %v594, 16
    %v599 = vshll.u32 %v595, 16
    %v600 = vshrl.u32 %v595, 16
    %vm601 = vc.u32 %v593, %v597
    %v602 = vsel %vm601, 1, 0
    %v603 = vadd.s32 %v593, %v597
    %v604 = vadd.s32 %v596, %v602
    %vm605 = vc.u32 %v603, %v599
    %v606 = vsel %vm605, 1, 0
    %v607 = vadd.s32 %v603, %v599
    %v608 = vadd.s32 %v604, %v606
    %v609 = vadd.s32 %v608, %v598
    %v610 = vadd.s32 %v609, %v600
    %v611 = vshrl.u32 %v610, 6
    %v612 = vmul.u32 %v611, 100
    %v613 = vsub.s32 %v589, %v612
    %v614 = vsub.s32 0, %v613
    %v615 = vsel %vm587, %v614, %v613
    %vm616 = vcmp.lt.s32.totalorder %v143, 0
    %v617 = vsub.s32 0, %v143
    %v618 = vsel %vm616, %v617, %v143
    %v619 = vand.u32 %v618, 65535
    %v620 = vshrl.u32 %v618, 16
    %v622 = vmul.u32 %v619, 2622
    %v623 = vmul.u32 %v619, 41943
    %v624 = vmul.u32 %v620, 2622
    %v625 = vmul.u32 %v620, 41943
    %v626 = vshll.u32 %v623, 16
    %v627 = vshrl.u32 %v623, 16
    %v628 = vshll.u32 %v624, 16
    %v629 = vshrl.u32 %v624, 16
    %vm630 = vc.u32 %v622, %v626
    %v631 = vsel %vm630, 1, 0
    %v632 = vadd.s32 %v622, %v626
    %v633 = vadd.s32 %v625, %v631
    %vm634 = vc.u32 %v632, %v628
    %v635 = vsel %vm634, 1, 0
    %v636 = vadd.s32 %v632, %v628
    %v637 = vadd.s32 %v633, %v635
    %v638 = vadd.s32 %v637, %v627
    %v639 = vadd.s32 %v638, %v629
    %v640 = vshrl.u32 %v639, 6
    %v641 = vmul.u32 %v640, 100
    %v642 = vsub.s32 %v618, %v641
    %v643 = vsub.s32 0, %v642
    %v644 = vsel %vm616, %v643, %v642
    %vm645 = vcmp.lt.s32.totalorder %v144, 0
    %v646 = vsub.s32 0, %v144
    %v647 = vsel %vm645, %v646, %v144
    %v648 = vand.u32 %v647, 65535
    %v649 = vshrl.u32 %v647, 16
    %v651 = vmul.u32 %v648, 2622
    %v652 = vmul.u32 %v648, 41943
    %v653 = vmul.u32 %v649, 2622
    %v654 = vmul.u32 %v649, 41943
    %v655 = vshll.u32 %v652, 16
    %v656 = vshrl.u32 %v652, 16
    %v657 = vshll.u32 %v653, 16
    %v658 = vshrl.u32 %v653, 16
    %vm659 = vc.u32 %v651, %v655
    %v660 = vsel %vm659, 1, 0
    %v661 = vadd.s32 %v651, %v655
    %v662 = vadd.s32 %v654, %v660
    %vm663 = vc.u32 %v661, %v657
    %v664 = vsel %vm663, 1, 0
    %v665 = vadd.s32 %v661, %v657
    %v666 = vadd.s32 %v662, %v664
    %v667 = vadd.s32 %v666, %v656
    %v668 = vadd.s32 %v667, %v658
    %v669 = vshrl.u32 %v668, 6
    %v670 = vmul.u32 %v669, 100
    %v671 = vsub.s32 %v647, %v670
    %v672 = vsub.s32 0, %v671
    %v673 = vsel %vm645, %v672, %v671
    %vm674 = vcmp.lt.s32.totalorder %v145, 0
    %v675 = vsub.s32 0, %v145
    %v676 = vsel %vm674, %v675, %v145
    %v677 = vand.u32 %v676, 65535
    %v678 = vshrl.u32 %v676, 16
    %v680 = vmul.u32 %v677, 2622
    %v681 = vmul.u32 %v677, 41943
    %v682 = vmul.u32 %v678, 2622
    %v683 = vmul.u32 %v678, 41943
    %v684 = vshll.u32 %v681, 16
    %v685 = vshrl.u32 %v681, 16
    %v686 = vshll.u32 %v682, 16
    %v687 = vshrl.u32 %v682, 16
    %vm688 = vc.u32 %v680, %v684
    %v689 = vsel %vm688, 1, 0
    %v690 = vadd.s32 %v680, %v684
    %v691 = vadd.s32 %v683, %v689
    %vm692 = vc.u32 %v690, %v686
    %v693 = vsel %vm692, 1, 0
    %v694 = vadd.s32 %v690, %v686
    %v695 = vadd.s32 %v691, %v693
    %v696 = vadd.s32 %v695, %v685
    %v697 = vadd.s32 %v696, %v687
    %v698 = vshrl.u32 %v697, 6
    %v699 = vmul.u32 %v698, 100
    %v700 = vsub.s32 %v676, %v699
    %v701 = vsub.s32 0, %v700
    %v702 = vsel %vm674, %v701, %v700
    %vm703 = vcmp.lt.s32.totalorder %v146, 0
    %v704 = vsub.s32 0, %v146
    %v705 = vsel %vm703, %v704, %v146
    %v706 = vand.u32 %v705, 65535
    %v707 = vshrl.u32 %v705, 16
    %v709 = vmul.u32 %v706, 2622
    %v710 = vmul.u32 %v706, 41943
    %v711 = vmul.u32 %v707, 2622
    %v712 = vmul.u32 %v707, 41943
    %v713 = vshll.u32 %v710, 16
    %v714 = vshrl.u32 %v710, 16
    %v715 = vshll.u32 %v711, 16
    %v716 = vshrl.u32 %v711, 16
    %vm717 = vc.u32 %v709, %v713
    %v718 = vsel %vm717, 1, 0
    %v719 = vadd.s32 %v709, %v713
    %v720 = vadd.s32 %v712, %v718
    %vm721 = vc.u32 %v719, %v715
    %v722 = vsel %vm721, 1, 0
    %v723 = vadd.s32 %v719, %v715
    %v724 = vadd.s32 %v720, %v722
    %v725 = vadd.s32 %v724, %v714
    %v726 = vadd.s32 %v725, %v716
    %v727 = vshrl.u32 %v726, 6
    %v728 = vmul.u32 %v727, 100
    %v729 = vsub.s32 %v705, %v728
    %v730 = vsub.s32 0, %v729
    %v731 = vsel %vm703, %v730, %v729
    %vm732 = vcmp.lt.s32.totalorder %v147, 0
    %v733 = vsub.s32 0, %v147
    %v734 = vsel %vm732, %v733, %v147
    %v735 = vand.u32 %v734, 65535
    %v736 = vshrl.u32 %v734, 16
    %v738 = vmul.u32 %v735, 2622
    %v739 = vmul.u32 %v735, 41943
    %v740 = vmul.u32 %v736, 2622
    %v741 = vmul.u32 %v736, 41943
    %v742 = vshll.u32 %v739, 16
    %v743 = vshrl.u32 %v739, 16
    %v744 = vshll.u32 %v740, 16
    %v745 = vshrl.u32 %v740, 16
    %vm746 = vc.u32 %v738, %v742
    %v747 = vsel %vm746, 1, 0
    %v748 = vadd.s32 %v738, %v742
    %v749 = vadd.s32 %v741, %v747
    %vm750 = vc.u32 %v748, %v744
    %v751 = vsel %vm750, 1, 0
    %v752 = vadd.s32 %v748, %v744
    %v753 = vadd.s32 %v749, %v751
    %v754 = vadd.s32 %v753, %v743
    %v755 = vadd.s32 %v754, %v745
    %v756 = vshrl.u32 %v755, 6
    %v757 = vmul.u32 %v756, 100
    %v758 = vsub.s32 %v734, %v757
    %v759 = vsub.s32 0, %v758
    %v760 = vsel %vm732, %v759, %v758
    %vm761 = vcmp.lt.s32.totalorder %v148, 0
    %v762 = vsub.s32 0, %v148
    %v763 = vsel %vm761, %v762, %v148
    %v764 = vand.u32 %v763, 65535
    %v765 = vshrl.u32 %v763, 16
    %v767 = vmul.u32 %v764, 2622
    %v768 = vmul.u32 %v764, 41943
    %v769 = vmul.u32 %v765, 2622
    %v770 = vmul.u32 %v765, 41943
    %v771 = vshll.u32 %v768, 16
    %v772 = vshrl.u32 %v768, 16
    %v773 = vshll.u32 %v769, 16
    %v774 = vshrl.u32 %v769, 16
    %vm775 = vc.u32 %v767, %v771
    %v776 = vsel %vm775, 1, 0
    %v777 = vadd.s32 %v767, %v771
    %v778 = vadd.s32 %v770, %v776
    %vm779 = vc.u32 %v777, %v773
    %v780 = vsel %vm779, 1, 0
    %v781 = vadd.s32 %v777, %v773
    %v782 = vadd.s32 %v778, %v780
    %v783 = vadd.s32 %v782, %v772
    %v784 = vadd.s32 %v783, %v774
    %v785 = vshrl.u32 %v784, 6
    %v786 = vmul.u32 %v785, 100
    %v787 = vsub.s32 %v763, %v786
    %v788 = vsub.s32 0, %v787
    %v789 = vsel %vm761, %v788, %v787
    %vm790 = vcmp.lt.s32.totalorder %v149, 0
    %v791 = vsub.s32 0, %v149
    %v792 = vsel %vm790, %v791, %v149
    %v793 = vand.u32 %v792, 65535
    %v794 = vshrl.u32 %v792, 16
    %v796 = vmul.u32 %v793, 2622
    %v797 = vmul.u32 %v793, 41943
    %v798 = vmul.u32 %v794, 2622
    %v799 = vmul.u32 %v794, 41943
    %v800 = vshll.u32 %v797, 16
    %v801 = vshrl.u32 %v797, 16
    %v802 = vshll.u32 %v798, 16
    %v803 = vshrl.u32 %v798, 16
    %vm804 = vc.u32 %v796, %v800
    %v805 = vsel %vm804, 1, 0
    %v806 = vadd.s32 %v796, %v800
    %v807 = vadd.s32 %v799, %v805
    %vm808 = vc.u32 %v806, %v802
    %v809 = vsel %vm808, 1, 0
    %v810 = vadd.s32 %v806, %v802
    %v811 = vadd.s32 %v807, %v809
    %v812 = vadd.s32 %v811, %v801
    %v813 = vadd.s32 %v812, %v803
    %v814 = vshrl.u32 %v813, 6
    %v815 = vmul.u32 %v814, 100
    %v816 = vsub.s32 %v792, %v815
    %v817 = vsub.s32 0, %v816
    %v818 = vsel %vm790, %v817, %v816
    %vm819 = vcmp.lt.s32.totalorder %v150, 0
    %v820 = vsub.s32 0, %v150
    %v821 = vsel %vm819, %v820, %v150
    %v822 = vand.u32 %v821, 65535
    %v823 = vshrl.u32 %v821, 16
    %v825 = vmul.u32 %v822, 2622
    %v826 = vmul.u32 %v822, 41943
    %v827 = vmul.u32 %v823, 2622
    %v828 = vmul.u32 %v823, 41943
    %v829 = vshll.u32 %v826, 16
    %v830 = vshrl.u32 %v826, 16
    %v831 = vshll.u32 %v827, 16
    %v832 = vshrl.u32 %v827, 16
    %vm833 = vc.u32 %v825, %v829
    %v834 = vsel %vm833, 1, 0
    %v835 = vadd.s32 %v825, %v829
    %v836 = vadd.s32 %v828, %v834
    %vm837 = vc.u32 %v835, %v831
    %v838 = vsel %vm837, 1, 0
    %v839 = vadd.s32 %v835, %v831
    %v840 = vadd.s32 %v836, %v838
    %v841 = vadd.s32 %v840, %v830
    %v842 = vadd.s32 %v841, %v832
    %v843 = vshrl.u32 %v842, 6
    %v844 = vmul.u32 %v843, 100
    %v845 = vsub.s32 %v821, %v844
    %v846 = vsub.s32 0, %v845
    %v847 = vsel %vm819, %v846, %v845
    %vm848 = vcmp.lt.s32.totalorder %v151, 0
    %v849 = vsub.s32 0, %v151
    %v850 = vsel %vm848, %v849, %v151
    %v851 = vand.u32 %v850, 65535
    %v852 = vshrl.u32 %v850, 16
    %v854 = vmul.u32 %v851, 2622
    %v855 = vmul.u32 %v851, 41943
    %v856 = vmul.u32 %v852, 2622
    %v857 = vmul.u32 %v852, 41943
    %v858 = vshll.u32 %v855, 16
    %v859 = vshrl.u32 %v855, 16
    %v860 = vshll.u32 %v856, 16
    %v861 = vshrl.u32 %v856, 16
    %vm862 = vc.u32 %v854, %v858
    %v863 = vsel %vm862, 1, 0
    %v864 = vadd.s32 %v854, %v858
    %v865 = vadd.s32 %v857, %v863
    %vm866 = vc.u32 %v864, %v860
    %v867 = vsel %vm866, 1, 0
    %v868 = vadd.s32 %v864, %v860
    %v869 = vadd.s32 %v865, %v867
    %v870 = vadd.s32 %v869, %v859
    %v871 = vadd.s32 %v870, %v861
    %v872 = vshrl.u32 %v871, 6
    %v873 = vmul.u32 %v872, 100
    %v874 = vsub.s32 %v850, %v873
    %v875 = vsub.s32 0, %v874
    %v876 = vsel %vm848, %v875, %v874
    %vm877 = vcmp.ne.s32.totalorder %v180, 0
    %vm878 = vcmp.ne.s32.totalorder %v209, 0
    %vm879 = vcmp.ne.s32.totalorder %v238, 0
    %vm880 = vcmp.ne.s32.totalorder %v267, 0
    %vm881 = vcmp.ne.s32.totalorder %v296, 0
    %vm882 = vcmp.ne.s32.totalorder %v325, 0
    %vm883 = vcmp.ne.s32.totalorder %v354, 0
    %vm884 = vcmp.ne.s32.totalorder %v383, 0
    %vm885 = vcmp.ne.s32.totalorder %v412, 0
    %vm886 = vcmp.ne.s32.totalorder %v441, 0
    %vm887 = vcmp.ne.s32.totalorder %v470, 0
    %vm888 = vcmp.ne.s32.totalorder %v499, 0
    %vm889 = vcmp.ne.s32.totalorder %v528, 0
    %vm890 = vcmp.ne.s32.totalorder %v557, 0
    %vm891 = vcmp.ne.s32.totalorder %v586, 0
    %vm892 = vcmp.ne.s32.totalorder %v615, 0
    %vm893 = vcmp.ne.s32.totalorder %v644, 0
    %vm894 = vcmp.ne.s32.totalorder %v673, 0
    %vm895 = vcmp.ne.s32.totalorder %v702, 0
    %vm896 = vcmp.ne.s32.totalorder %v731, 0
    %vm897 = vcmp.ne.s32.totalorder %v760, 0
    %vm898 = vcmp.ne.s32.totalorder %v789, 0
    %vm899 = vcmp.ne.s32.totalorder %v818, 0
    %vm900 = vcmp.ne.s32.totalorder %v847, 0
    %vm901 = vcmp.ne.s32.totalorder %v876, 0
    %vm902 = vcmp.lt.s32.totalorder %v180, 0
    %vm903 = vcmp.lt.s32.totalorder %v209, 0
    %vm904 = vcmp.lt.s32.totalorder %v238, 0
    %vm905 = vcmp.lt.s32.totalorder %v267, 0
    %vm906 = vcmp.lt.s32.totalorder %v296, 0
    %vm907 = vcmp.lt.s32.totalorder %v325, 0
    %vm908 = vcmp.lt.s32.totalorder %v354, 0
    %vm909 = vcmp.lt.s32.totalorder %v383, 0
    %vm910 = vcmp.lt.s32.totalorder %v412, 0
    %vm911 = vcmp.lt.s32.totalorder %v441, 0
    %vm912 = vcmp.lt.s32.totalorder %v470, 0
    %vm913 = vcmp.lt.s32.totalorder %v499, 0
    %vm914 = vcmp.lt.s32.totalorder %v528, 0
    %vm915 = vcmp.lt.s32.totalorder %v557, 0
    %vm916 = vcmp.lt.s32.totalorder %v586, 0
    %vm917 = vcmp.lt.s32.totalorder %v615, 0
    %vm918 = vcmp.lt.s32.totalorder %v644, 0
    %vm919 = vcmp.lt.s32.totalorder %v673, 0
    %vm920 = vcmp.lt.s32.totalorder %v702, 0
    %vm921 = vcmp.lt.s32.totalorder %v731, 0
    %vm922 = vcmp.lt.s32.totalorder %v760, 0
    %vm923 = vcmp.lt.s32.totalorder %v789, 0
    %vm924 = vcmp.lt.s32.totalorder %v818, 0
    %vm925 = vcmp.lt.s32.totalorder %v847, 0
    %vm926 = vcmp.lt.s32.totalorder %v876, 0
    %vm927 = vmand %vm902, %vm877
    %vm928 = vmand %vm903, %vm878
    %vm929 = vmand %vm904, %vm879
    %vm930 = vmand %vm905, %vm880
    %vm931 = vmand %vm906, %vm881
    %vm932 = vmand %vm907, %vm882
    %vm933 = vmand %vm908, %vm883
    %vm934 = vmand %vm909, %vm884
    %vm935 = vmand %vm910, %vm885
    %vm936 = vmand %vm911, %vm886
    %vm937 = vmand %vm912, %vm887
    %vm938 = vmand %vm913, %vm888
    %vm939 = vmand %vm914, %vm889
    %vm940 = vmand %vm915, %vm890
    %vm941 = vmand %vm916, %vm891
    %vm942 = vmand %vm917, %vm892
    %vm943 = vmand %vm918, %vm893
    %vm944 = vmand %vm919, %vm894
    %vm945 = vmand %vm920, %vm895
    %vm946 = vmand %vm921, %vm896
    %vm947 = vmand %vm922, %vm897
    %vm948 = vmand %vm923, %vm898
    %vm949 = vmand %vm924, %vm899
    %vm950 = vmand %vm925, %vm900
    %vm951 = vmand %vm926, %vm901
    %v952 = vadd.s32 %v180, 100
    %v953 = vadd.s32 %v209, 100
    %v954 = vadd.s32 %v238, 100
    %v955 = vadd.s32 %v267, 100
    %v956 = vadd.s32 %v296, 100
    %v957 = vadd.s32 %v325, 100
    %v958 = vadd.s32 %v354, 100
    %v959 = vadd.s32 %v383, 100
    %v960 = vadd.s32 %v412, 100
    %v961 = vadd.s32 %v441, 100
    %v962 = vadd.s32 %v470, 100
    %v963 = vadd.s32 %v499, 100
    %v964 = vadd.s32 %v528, 100
    %v965 = vadd.s32 %v557, 100
    %v966 = vadd.s32 %v586, 100
    %v967 = vadd.s32 %v615, 100
    %v968 = vadd.s32 %v644, 100
    %v969 = vadd.s32 %v673, 100
    %v970 = vadd.s32 %v702, 100
    %v971 = vadd.s32 %v731, 100
    %v972 = vadd.s32 %v760, 100
    %v973 = vadd.s32 %v789, 100
    %v974 = vadd.s32 %v818, 100
    %v975 = vadd.s32 %v847, 100
    %v976 = vadd.s32 %v876, 100
    %v977 = vsel %vm927, %v952, %v180
    %v978 = vsel %vm928, %v953, %v209
    %v979 = vsel %vm929, %v954, %v238
    %v980 = vsel %vm930, %v955, %v267
    %v981 = vsel %vm931, %v956, %v296
    %v982 = vsel %vm932, %v957, %v325
    %v983 = vsel %vm933, %v958, %v354
    %v984 = vsel %vm934, %v959, %v383
    %v985 = vsel %vm935, %v960, %v412
    %v986 = vsel %vm936, %v961, %v441
    %v987 = vsel %vm937, %v962, %v470
    %v988 = vsel %vm938, %v963, %v499
    %v989 = vsel %vm939, %v964, %v528
    %v990 = vsel %vm940, %v965, %v557
    %v991 = vsel %vm941, %v966, %v586
    %v992 = vsel %vm942, %v967, %v615
    %v993 = vsel %vm943, %v968, %v644
    %v994 = vsel %vm944, %v969, %v673
    %v995 = vsel %vm945, %v970, %v702
    %v996 = vsel %vm946, %v971, %v731
    %v997 = vsel %vm947, %v972, %v760
    %v998 = vsel %vm948, %v973, %v789
    %v999 = vsel %vm949, %v974, %v818
    %v1000 = vsel %vm950, %v975, %v847
    %v1001 = vsel %vm951, %v976, %v876
    %vm1002 = vcmp.eq.s32.totalorder %v977, 0
    %vm1003 = vcmp.eq.s32.totalorder %v978, 0
    %vm1004 = vcmp.eq.s32.totalorder %v979, 0
    %vm1005 = vcmp.eq.s32.totalorder %v980, 0
    %vm1006 = vcmp.eq.s32.totalorder %v981, 0
    %vm1007 = vcmp.eq.s32.totalorder %v982, 0
    %vm1008 = vcmp.eq.s32.totalorder %v983, 0
    %vm1009 = vcmp.eq.s32.totalorder %v984, 0
    %vm1010 = vcmp.eq.s32.totalorder %v985, 0
    %vm1011 = vcmp.eq.s32.totalorder %v986, 0
    %vm1012 = vcmp.eq.s32.totalorder %v987, 0
    %vm1013 = vcmp.eq.s32.totalorder %v988, 0
    %vm1014 = vcmp.eq.s32.totalorder %v989, 0
    %vm1015 = vcmp.eq.s32.totalorder %v990, 0
    %vm1016 = vcmp.eq.s32.totalorder %v991, 0
    %vm1017 = vcmp.eq.s32.totalorder %v992, 0
    %vm1018 = vcmp.eq.s32.totalorder %v993, 0
    %vm1019 = vcmp.eq.s32.totalorder %v994, 0
    %vm1020 = vcmp.eq.s32.totalorder %v995, 0
    %vm1021 = vcmp.eq.s32.totalorder %v996, 0
    %vm1022 = vcmp.eq.s32.totalorder %v997, 0
    %vm1023 = vcmp.eq.s32.totalorder %v998, 0
    %vm1024 = vcmp.eq.s32.totalorder %v999, 0
    %vm1025 = vcmp.eq.s32.totalorder %v1000, 0
    %vm1026 = vcmp.eq.s32.totalorder %v1001, 0
    %v1027 = vld [vmem:[#allocation2] sm:$0xff]
    %v1028 = vld [vmem:[#allocation2 + $0x8] sm:$0xff]
    %v1029 = vld [vmem:[#allocation2 + $0x10] sm:$0xff]
    %v1030 = vld [vmem:[#allocation2 + $0x18] sm:$0xff]
    %v1031 = vld [vmem:[#allocation2 + $0x20] sm:$0xff]
    %v1032 = vld [vmem:[#allocation2 + $0x28] sm:$0xff]
    %v1033 = vld [vmem:[#allocation2 + $0x30] sm:$0xff]
    %v1034 = vld [vmem:[#allocation2 + $0x38] sm:$0xff]
    %v1035 = vld [vmem:[#allocation2 + $0x40] sm:$0xff]
    %v1036 = vld [vmem:[#allocation2 + $0x48] sm:$0xff]
    %v1037 = vld [vmem:[#allocation2 + $0x50] sm:$0xff]
    %v1038 = vld [vmem:[#allocation2 + $0x58] sm:$0xff]
    %v1039 = vld [vmem:[#allocation2 + $0x60] sm:$0xff]
    %v1040 = vld [vmem:[#allocation2 + $0x68] sm:$0xff]
    %v1041 = vld [vmem:[#allocation2 + $0x70] sm:$0xff]
    %v1042 = vld [vmem:[#allocation2 + $0x78] sm:$0xff]
    %v1043 = vld [vmem:[#allocation2 + $0x80] sm:$0xff]
    %v1044 = vld [vmem:[#allocation2 + $0x88] sm:$0xff]
    %v1045 = vld [vmem:[#allocation2 + $0x90] sm:$0xff]
    %v1046 = vld [vmem:[#allocation2 + $0x98] sm:$0xff]
    %v1047 = vld [vmem:[#allocation2 + $0xa0] sm:$0xff]
    %v1048 = vld [vmem:[#allocation2 + $0xa8] sm:$0xff]
    %v1049 = vld [vmem:[#allocation2 + $0xb0] sm:$0xff]
    %v1050 = vld [vmem:[#allocation2 + $0xb8] sm:$0xff]
    %v1051 = vld [vmem:[#allocation2 + $0xc0] sm:$0xff]
    %v1052 = vsel %vm1002, 1, 0
    %v1053 = vsel %vm1003, 1, 0
    %v1054 = vsel %vm1004, 1, 0
    %v1055 = vsel %vm1005, 1, 0
    %v1056 = vsel %vm1006, 1, 0
    %v1057 = vsel %vm1007, 1, 0
    %v1058 = vsel %vm1008, 1, 0
    %v1059 = vsel %vm1009, 1, 0
    %v1060 = vsel %vm1010, 1, 0
    %v1061 = vsel %vm1011, 1, 0
    %v1062 = vsel %vm1012, 1, 0
    %v1063 = vsel %vm1013, 1, 0
    %v1064 = vsel %vm1014, 1, 0
    %v1065 = vsel %vm1015, 1, 0
    %v1066 = vsel %vm1016, 1, 0
    %v1067 = vsel %vm1017, 1, 0
    %v1068 = vsel %vm1018, 1, 0
    %v1069 = vsel %vm1019, 1, 0
    %v1070 = vsel %vm1020, 1, 0
    %v1071 = vsel %vm1021, 1, 0
    %v1072 = vsel %vm1022, 1, 0
    %v1073 = vsel %vm1023, 1, 0
    %v1074 = vsel %vm1024, 1, 0
    %v1075 = vsel %vm1025, 1, 0
    %v1076 = vsel %vm1026, 1, 0
    %vm1077 = vcmp.eq.s32.totalorder %v1052, 1
    %vm1078 = vcmp.eq.s32.totalorder %v1053, 1
    %vm1079 = vcmp.eq.s32.totalorder %v1054, 1
    %vm1080 = vcmp.eq.s32.totalorder %v1055, 1
    %vm1081 = vcmp.eq.s32.totalorder %v1056, 1
    %vm1082 = vcmp.eq.s32.totalorder %v1057, 1
    %vm1083 = vcmp.eq.s32.totalorder %v1058, 1
    %vm1084 = vcmp.eq.s32.totalorder %v1059, 1
    %vm1085 = vcmp.eq.s32.totalorder %v1060, 1
    %vm1086 = vcmp.eq.s32.totalorder %v1061, 1
    %vm1087 = vcmp.eq.s32.totalorder %v1062, 1
    %vm1088 = vcmp.eq.s32.totalorder %v1063, 1
    %vm1089 = vcmp.eq.s32.totalorder %v1064, 1
    %vm1090 = vcmp.eq.s32.totalorder %v1065, 1
    %vm1091 = vcmp.eq.s32.totalorder %v1066, 1
    %vm1092 = vcmp.eq.s32.totalorder %v1067, 1
    %vm1093 = vcmp.eq.s32.totalorder %v1068, 1
    %vm1094 = vcmp.eq.s32.totalorder %v1069, 1
    %vm1095 = vcmp.eq.s32.totalorder %v1070, 1
    %vm1096 = vcmp.eq.s32.totalorder %v1071, 1
    %vm1097 = vcmp.eq.s32.totalorder %v1072, 1
    %vm1098 = vcmp.eq.s32.totalorder %v1073, 1
    %vm1099 = vcmp.eq.s32.totalorder %v1074, 1
    %vm1100 = vcmp.eq.s32.totalorder %v1075, 1
    %vm1101 = vcmp.eq.s32.totalorder %v1076, 1
    %v1102 = vsel %vm1077, 0.0, %v1027
    %v1103 = vsel %vm1078, 0.0, %v1028
    %v1104 = vsel %vm1079, 0.0, %v1029
    %v1105 = vsel %vm1080, 0.0, %v1030
    %v1106 = vsel %vm1081, 0.0, %v1031
    %v1107 = vsel %vm1082, 0.0, %v1032
    %v1108 = vsel %vm1083, 0.0, %v1033
    %v1109 = vsel %vm1084, 0.0, %v1034
    %v1110 = vsel %vm1085, 0.0, %v1035
    %v1111 = vsel %vm1086, 0.0, %v1036
    %v1112 = vsel %vm1087, 0.0, %v1037
    %v1113 = vsel %vm1088, 0.0, %v1038
    %v1114 = vsel %vm1089, 0.0, %v1039
    %v1115 = vsel %vm1090, 0.0, %v1040
    %v1116 = vsel %vm1091, 0.0, %v1041
    %v1117 = vsel %vm1092, 0.0, %v1042
    %v1118 = vsel %vm1093, 0.0, %v1043
    %v1119 = vsel %vm1094, 0.0, %v1044
    %v1120 = vsel %vm1095, 0.0, %v1045
    %v1121 = vsel %vm1096, 0.0, %v1046
    %v1122 = vsel %vm1097, 0.0, %v1047
    %v1123 = vsel %vm1098, 0.0, %v1048
    %v1124 = vsel %vm1099, 0.0, %v1049
    %v1125 = vsel %vm1100, 0.0, %v1050
    %v1126 = vsel %vm1101, 0.0, %v1051
    %vm1127 = vcmp.eq.s32.totalorder %v977, 99
    %vm1128 = vcmp.eq.s32.totalorder %v978, 99
    %vm1129 = vcmp.eq.s32.totalorder %v979, 99
    %vm1130 = vcmp.eq.s32.totalorder %v980, 99
    %vm1131 = vcmp.eq.s32.totalorder %v981, 99
    %vm1132 = vcmp.eq.s32.totalorder %v982, 99
    %vm1133 = vcmp.eq.s32.totalorder %v983, 99
    %vm1134 = vcmp.eq.s32.totalorder %v984, 99
    %vm1135 = vcmp.eq.s32.totalorder %v985, 99
    %vm1136 = vcmp.eq.s32.totalorder %v986, 99
    %vm1137 = vcmp.eq.s32.totalorder %v987, 99
    %vm1138 = vcmp.eq.s32.totalorder %v988, 99
    %vm1139 = vcmp.eq.s32.totalorder %v989, 99
    %vm1140 = vcmp.eq.s32.totalorder %v990, 99
    %vm1141 = vcmp.eq.s32.totalorder %v991, 99
    %vm1142 = vcmp.eq.s32.totalorder %v992, 99
    %vm1143 = vcmp.eq.s32.totalorder %v993, 99
    %vm1144 = vcmp.eq.s32.totalorder %v994, 99
    %vm1145 = vcmp.eq.s32.totalorder %v995, 99
    %vm1146 = vcmp.eq.s32.totalorder %v996, 99
    %vm1147 = vcmp.eq.s32.totalorder %v997, 99
    %vm1148 = vcmp.eq.s32.totalorder %v998, 99
    %vm1149 = vcmp.eq.s32.totalorder %v999, 99
    %vm1150 = vcmp.eq.s32.totalorder %v1000, 99
    %vm1151 = vcmp.eq.s32.totalorder %v1001, 99
    %v1152 = vld [vmem:[#allocation2 + $0x2] sm:$0xff]
    %v1153 = vld [vmem:[#allocation2 + $0xa] sm:$0xff]
    %v1154 = vld [vmem:[#allocation2 + $0x12] sm:$0xff]
    %v1155 = vld [vmem:[#allocation2 + $0x1a] sm:$0xff]
    %v1156 = vld [vmem:[#allocation2 + $0x22] sm:$0xff]
    %v1157 = vld [vmem:[#allocation2 + $0x2a] sm:$0xff]
    %v1158 = vld [vmem:[#allocation2 + $0x32] sm:$0xff]
    %v1159 = vld [vmem:[#allocation2 + $0x3a] sm:$0xff]
    %v1160 = vld [vmem:[#allocation2 + $0x42] sm:$0xff]
    %v1161 = vld [vmem:[#allocation2 + $0x4a] sm:$0xff]
    %v1162 = vld [vmem:[#allocation2 + $0x52] sm:$0xff]
    %v1163 = vld [vmem:[#allocation2 + $0x5a] sm:$0xff]
    %v1164 = vld [vmem:[#allocation2 + $0x62] sm:$0xff]
    %v1165 = vld [vmem:[#allocation2 + $0x6a] sm:$0xff]
    %v1166 = vld [vmem:[#allocation2 + $0x72] sm:$0xff]
    %v1167 = vld [vmem:[#allocation2 + $0x7a] sm:$0xff]
    %v1168 = vld [vmem:[#allocation2 + $0x82] sm:$0xff]
    %v1169 = vld [vmem:[#allocation2 + $0x8a] sm:$0xff]
    %v1170 = vld [vmem:[#allocation2 + $0x92] sm:$0xff]
    %v1171 = vld [vmem:[#allocation2 + $0x9a] sm:$0xff]
    %v1172 = vld [vmem:[#allocation2 + $0xa2] sm:$0xff]
    %v1173 = vld [vmem:[#allocation2 + $0xaa] sm:$0xff]
    %v1174 = vld [vmem:[#allocation2 + $0xb2] sm:$0xff]
    %v1175 = vld [vmem:[#allocation2 + $0xba] sm:$0xff]
    %v1176 = vld [vmem:[#allocation2 + $0xc2] sm:$0xff]
    %v1177 = vsel %vm1127, 1, 0
    %v1178 = vsel %vm1128, 1, 0
    %v1179 = vsel %vm1129, 1, 0
    %v1180 = vsel %vm1130, 1, 0
    %v1181 = vsel %vm1131, 1, 0
    %v1182 = vsel %vm1132, 1, 0
    %v1183 = vsel %vm1133, 1, 0
    %v1184 = vsel %vm1134, 1, 0
    %v1185 = vsel %vm1135, 1, 0
    %v1186 = vsel %vm1136, 1, 0
    %v1187 = vsel %vm1137, 1, 0
    %v1188 = vsel %vm1138, 1, 0
    %v1189 = vsel %vm1139, 1, 0
    %v1190 = vsel %vm1140, 1, 0
    %v1191 = vsel %vm1141, 1, 0
    %v1192 = vsel %vm1142, 1, 0
    %v1193 = vsel %vm1143, 1, 0
    %v1194 = vsel %vm1144, 1, 0
    %v1195 = vsel %vm1145, 1, 0
    %v1196 = vsel %vm1146, 1, 0
    %v1197 = vsel %vm1147, 1, 0
    %v1198 = vsel %vm1148, 1, 0
    %v1199 = vsel %vm1149, 1, 0
    %v1200 = vsel %vm1150, 1, 0
    %v1201 = vsel %vm1151, 1, 0
    %vm1202 = vcmp.eq.s32.totalorder %v1177, 1
    %vm1203 = vcmp.eq.s32.totalorder %v1178, 1
    %vm1204 = vcmp.eq.s32.totalorder %v1179, 1
    %vm1205 = vcmp.eq.s32.totalorder %v1180, 1
    %vm1206 = vcmp.eq.s32.totalorder %v1181, 1
    %vm1207 = vcmp.eq.s32.totalorder %v1182, 1
    %vm1208 = vcmp.eq.s32.totalorder %v1183, 1
    %vm1209 = vcmp.eq.s32.totalorder %v1184, 1
    %vm1210 = vcmp.eq.s32.totalorder %v1185, 1
    %vm1211 = vcmp.eq.s32.totalorder %v1186, 1
    %vm1212 = vcmp.eq.s32.totalorder %v1187, 1
    %vm1213 = vcmp.eq.s32.totalorder %v1188, 1
    %vm1214 = vcmp.eq.s32.totalorder %v1189, 1
    %vm1215 = vcmp.eq.s32.totalorder %v1190, 1
    %vm1216 = vcmp.eq.s32.totalorder %v1191, 1
    %vm1217 = vcmp.eq.s32.totalorder %v1192, 1
    %vm1218 = vcmp.eq.s32.totalorder %v1193, 1
    %vm1219 = vcmp.eq.s32.totalorder %v1194, 1
    %vm1220 = vcmp.eq.s32.totalorder %v1195, 1
    %vm1221 = vcmp.eq.s32.totalorder %v1196, 1
    %vm1222 = vcmp.eq.s32.totalorder %v1197, 1
    %vm1223 = vcmp.eq.s32.totalorder %v1198, 1
    %vm1224 = vcmp.eq.s32.totalorder %v1199, 1
    %vm1225 = vcmp.eq.s32.totalorder %v1200, 1
    %vm1226 = vcmp.eq.s32.totalorder %v1201, 1
    %v1227 = vsel %vm1202, 0.0, %v1152
    %v1228 = vsel %vm1203, 0.0, %v1153
    %v1229 = vsel %vm1204, 0.0, %v1154
    %v1230 = vsel %vm1205, 0.0, %v1155
    %v1231 = vsel %vm1206, 0.0, %v1156
    %v1232 = vsel %vm1207, 0.0, %v1157
    %v1233 = vsel %vm1208, 0.0, %v1158
    %v1234 = vsel %vm1209, 0.0, %v1159
    %v1235 = vsel %vm1210, 0.0, %v1160
    %v1236 = vsel %vm1211, 0.0, %v1161
    %v1237 = vsel %vm1212, 0.0, %v1162
    %v1238 = vsel %vm1213, 0.0, %v1163
    %v1239 = vsel %vm1214, 0.0, %v1164
    %v1240 = vsel %vm1215, 0.0, %v1165
    %v1241 = vsel %vm1216, 0.0, %v1166
    %v1242 = vsel %vm1217, 0.0, %v1167
    %v1243 = vsel %vm1218, 0.0, %v1168
    %v1244 = vsel %vm1219, 0.0, %v1169
    %v1245 = vsel %vm1220, 0.0, %v1170
    %v1246 = vsel %vm1221, 0.0, %v1171
    %v1247 = vsel %vm1222, 0.0, %v1172
    %v1248 = vsel %vm1223, 0.0, %v1173
    %v1249 = vsel %vm1224, 0.0, %v1174
    %v1250 = vsel %vm1225, 0.0, %v1175
    %v1251 = vsel %vm1226, 0.0, %v1176
    %v1252 = vld [vmem:[%s1] sm:$0xff]
    %v1253 = vld [vmem:[%s1 + $0x8] sm:$0xff]
    %v1254 = vld [vmem:[%s1 + $0x10] sm:$0x1]
    %s1255 = scalar_lea.vmem %s1, 24
    %v1256 = vld [vmem:[%s1255] sm:$0xff]
    %v1257 = vld [vmem:[%s1255 + $0x8] sm:$0xff]
    %v1258 = vld [vmem:[%s1255 + $0x10] sm:$0x1]
    %v1260 = vsel %vm100, %v75, 0
    %v1263 = vsel %vm100, %v76, 0
    %v1266 = vsel %vm100, %v77, 0
    %v1269 = vsel %vm100, %v78, 0
    %v1272 = vsel %vm100, %v79, 0
    %v1275 = vsel %vm100, %v80, 0
    %v1278 = vsel %vm100, %v81, 0
    %v1281 = vsel %vm100, %v82, 0
    %v1284 = vsel %vm100, %v83, 0
    %v1287 = vsel %vm100, %v84, 0
    %v1290 = vsel %vm100, %v85, 0
    %v1293 = vsel %vm100, %v86, 0
    %v1296 = vsel %vm100, %v87, 0
    %v1299 = vsel %vm100, %v88, 0
    %v1302 = vsel %vm100, %v89, 0
    %v1305 = vsel %vm100, %v90, 0
    %v1308 = vsel %vm100, %v91, 0
    %v1311 = vsel %vm100, %v92, 0
    %v1314 = vsel %vm100, %v93, 0
    %v1317 = vsel %vm100, %v94, 0
    %v1320 = vsel %vm100, %v95, 0
    %v1323 = vsel %vm100, %v96, 0
    %v1326 = vsel %vm100, %v97, 0
    %v1329 = vsel %vm100, %v98, 0
    %v1332 = vsel %vm100, %v99, 0
    %vm1334 = vcmask 1040384
    %v1336 = vsel %vm1334, %v1258, 0
    %1338 = vmatpush.msra.mxu0 0.0
    %1339 = vmatpush.msra.mxu0 0.0
    %1340 = vmatpush.msra.mxu0 0.0
    %1341 = vmatpush.msra.mxu0 0.0
    %1342 = vmatpush.msra.mxu0 0.0
    %1343 = vmatpush.msra.mxu0 0.0
    %1344 = vmatpush.msra.mxu0 0.0
    %1345 = vmatpush.msra.mxu0 0.0
    %1346 = vmatpush.msra.mxu0 0.0
    %1347 = vmatpush.msra.mxu0 0.0
    %1348 = vmatpush.msra.mxu0 0.0
    %1349 = vmatpush.msra.mxu0 0.0
    %1350 = vmatpush.msra.mxu0 0.0
    %1351 = vmatpush.msra.mxu0 %v1336
    %1352 = vmatpush.msra.mxu0 %v1257
    %1353 = vmatpush.msra.mxu0 %v1256
    %1354 = vmatmul.f32.gmra.mxu0 %v1260
    %v1355 = vpop.f32.mrf.mxu0
    %v1356 = vadd.f32 0.0, %v1355
    %1357 = vmatmul.f32.gmra.mxu0 %v1263
    %v1358 = vpop.f32.mrf.mxu0
    %v1359 = vadd.f32 0.0, %v1358
    %1360 = vmatmul.f32.gmra.mxu0 %v1266
    %v1361 = vpop.f32.mrf.mxu0
    %v1362 = vadd.f32 0.0, %v1361
    %1363 = vmatmul.f32.gmra.mxu0 %v1269
    %v1364 = vpop.f32.mrf.mxu0
    %v1365 = vadd.f32 0.0, %v1364
    %1366 = vmatmul.f32.gmra.mxu0 %v1272
    %v1367 = vpop.f32.mrf.mxu0
    %v1368 = vadd.f32 0.0, %v1367
    %1369 = vmatmul.f32.gmra.mxu0 %v1275
    %v1370 = vpop.f32.mrf.mxu0
    %v1371 = vadd.f32 0.0, %v1370
    %1372 = vmatmul.f32.gmra.mxu0 %v1278
    %v1373 = vpop.f32.mrf.mxu0
    %v1374 = vadd.f32 0.0, %v1373
    %1375 = vmatmul.f32.gmra.mxu0 %v1281
    %v1376 = vpop.f32.mrf.mxu0
    %v1377 = vadd.f32 0.0, %v1376
    %1378 = vmatmul.f32.gmra.mxu0 %v1284
    %v1379 = vpop.f32.mrf.mxu0
    %v1380 = vadd.f32 0.0, %v1379
    %1381 = vmatmul.f32.gmra.mxu0 %v1287
    %v1382 = vpop.f32.mrf.mxu0
    %v1383 = vadd.f32 0.0, %v1382
    %1384 = vmatmul.f32.gmra.mxu0 %v1290
    %v1385 = vpop.f32.mrf.mxu0
    %v1386 = vadd.f32 0.0, %v1385
    %1387 = vmatmul.f32.gmra.mxu0 %v1293
    %v1388 = vpop.f32.mrf.mxu0
    %v1389 = vadd.f32 0.0, %v1388
    %1390 = vmatmul.f32.gmra.mxu0 %v1296
    %v1391 = vpop.f32.mrf.mxu0
    %v1392 = vadd.f32 0.0, %v1391
    %1393 = vmatmul.f32.gmra.mxu0 %v1299
    %v1394 = vpop.f32.mrf.mxu0
    %v1395 = vadd.f32 0.0, %v1394
    %1396 = vmatmul.f32.gmra.mxu0 %v1302
    %v1397 = vpop.f32.mrf.mxu0
    %v1398 = vadd.f32 0.0, %v1397
    %1399 = vmatmul.f32.gmra.mxu0 %v1305
    %v1400 = vpop.f32.mrf.mxu0
    %v1401 = vadd.f32 0.0, %v1400
    %1402 = vmatmul.f32.gmra.mxu0 %v1308
    %v1403 = vpop.f32.mrf.mxu0
    %v1404 = vadd.f32 0.0, %v1403
    %1405 = vmatmul.f32.gmra.mxu0 %v1311
    %v1406 = vpop.f32.mrf.mxu0
    %v1407 = vadd.f32 0.0, %v1406
    %1408 = vmatmul.f32.gmra.mxu0 %v1314
    %v1409 = vpop.f32.mrf.mxu0
    %v1410 = vadd.f32 0.0, %v1409
    %1411 = vmatmul.f32.gmra.mxu0 %v1317
    %v1412 = vpop.f32.mrf.mxu0
    %v1413 = vadd.f32 0.0, %v1412
    %1414 = vmatmul.f32.gmra.mxu0 %v1320
    %v1415 = vpop.f32.mrf.mxu0
    %v1416 = vadd.f32 0.0, %v1415
    %1417 = vmatmul.f32.gmra.mxu0 %v1323
    %v1418 = vpop.f32.mrf.mxu0
    %v1419 = vadd.f32 0.0, %v1418
    %1420 = vmatmul.f32.gmra.mxu0 %v1326
    %v1421 = vpop.f32.mrf.mxu0
    %v1422 = vadd.f32 0.0, %v1421
    %1423 = vmatmul.f32.gmra.mxu0 %v1329
    %v1424 = vpop.f32.mrf.mxu0
    %v1425 = vadd.f32 0.0, %v1424
    %1426 = vmatmul.f32.gmra.mxu0 %v1332
    %v1427 = vpop.f32.mrf.mxu0
    %v1428 = vadd.f32 0.0, %v1427
    %1429 = vdwg.mxu0
    %v1431 = vsel %vm100, %v1102, 0
    %v1434 = vsel %vm100, %v1103, 0
    %v1437 = vsel %vm100, %v1104, 0
    %v1440 = vsel %vm100, %v1105, 0
    %v1443 = vsel %vm100, %v1106, 0
    %v1446 = vsel %vm100, %v1107, 0
    %v1449 = vsel %vm100, %v1108, 0
    %v1452 = vsel %vm100, %v1109, 0
    %v1455 = vsel %vm100, %v1110, 0
    %v1458 = vsel %vm100, %v1111, 0
    %v1461 = vsel %vm100, %v1112, 0
    %v1464 = vsel %vm100, %v1113, 0
    %v1467 = vsel %vm100, %v1114, 0
    %v1470 = vsel %vm100, %v1115, 0
    %v1473 = vsel %vm100, %v1116, 0
    %v1476 = vsel %vm100, %v1117, 0
    %v1479 = vsel %vm100, %v1118, 0
    %v1482 = vsel %vm100, %v1119, 0
    %v1485 = vsel %vm100, %v1120, 0
    %v1488 = vsel %vm100, %v1121, 0
    %v1491 = vsel %vm100, %v1122, 0
    %v1494 = vsel %vm100, %v1123, 0
    %v1497 = vsel %vm100, %v1124, 0
    %v1500 = vsel %vm100, %v1125, 0
    %v1503 = vsel %vm100, %v1126, 0
    %v1506 = vsel %vm1334, %v1254, 0
    %1508 = vmatpush.msra.mxu0 0.0
    %1509 = vmatpush.msra.mxu0 0.0
    %1510 = vmatpush.msra.mxu0 0.0
    %1511 = vmatpush.msra.mxu0 0.0
    %1512 = vmatpush.msra.mxu0 0.0
    %1513 = vmatpush.msra.mxu0 0.0
    %1514 = vmatpush.msra.mxu0 0.0
    %1515 = vmatpush.msra.mxu0 0.0
    %1516 = vmatpush.msra.mxu0 0.0
    %1517 = vmatpush.msra.mxu0 0.0
    %1518 = vmatpush.msra.mxu0 0.0
    %1519 = vmatpush.msra.mxu0 0.0
    %1520 = vmatpush.msra.mxu0 0.0
    %1521 = vmatpush.msra.mxu0 %v1506
    %1522 = vmatpush.msra.mxu0 %v1253
    %1523 = vmatpush.msra.mxu0 %v1252
    %1524 = vmatmul.f32.gmra.mxu0 %v1431
    %v1525 = vpop.f32.mrf.mxu0
    %v1526 = vadd.f32 %v1356, %v1525
    %1527 = vmatmul.f32.gmra.mxu0 %v1434
    %v1528 = vpop.f32.mrf.mxu0
    %v1529 = vadd.f32 %v1359, %v1528
    %1530 = vmatmul.f32.gmra.mxu0 %v1437
    %v1531 = vpop.f32.mrf.mxu0
    %v1532 = vadd.f32 %v1362, %v1531
    %1533 = vmatmul.f32.gmra.mxu0 %v1440
    %v1534 = vpop.f32.mrf.mxu0
    %v1535 = vadd.f32 %v1365, %v1534
    %1536 = vmatmul.f32.gmra.mxu0 %v1443
    %v1537 = vpop.f32.mrf.mxu0
    %v1538 = vadd.f32 %v1368, %v1537
    %1539 = vmatmul.f32.gmra.mxu0 %v1446
    %v1540 = vpop.f32.mrf.mxu0
    %v1541 = vadd.f32 %v1371, %v1540
    %1542 = vmatmul.f32.gmra.mxu0 %v1449
    %v1543 = vpop.f32.mrf.mxu0
    %v1544 = vadd.f32 %v1374, %v1543
    %1545 = vmatmul.f32.gmra.mxu0 %v1452
    %v1546 = vpop.f32.mrf.mxu0
    %v1547 = vadd.f32 %v1377, %v1546
    %1548 = vmatmul.f32.gmra.mxu0 %v1455
    %v1549 = vpop.f32.mrf.mxu0
    %v1550 = vadd.f32 %v1380, %v1549
    %1551 = vmatmul.f32.gmra.mxu0 %v1458
    %v1552 = vpop.f32.mrf.mxu0
    %v1553 = vadd.f32 %v1383, %v1552
    %1554 = vmatmul.f32.gmra.mxu0 %v1461
    %v1555 = vpop.f32.mrf.mxu0
    %v1556 = vadd.f32 %v1386, %v1555
    %1557 = vmatmul.f32.gmra.mxu0 %v1464
    %v1558 = vpop.f32.mrf.mxu0
    %v1559 = vadd.f32 %v1389, %v1558
    %1560 = vmatmul.f32.gmra.mxu0 %v1467
    %v1561 = vpop.f32.mrf.mxu0
    %v1562 = vadd.f32 %v1392, %v1561
    %1563 = vmatmul.f32.gmra.mxu0 %v1470
    %v1564 = vpop.f32.mrf.mxu0
    %v1565 = vadd.f32 %v1395, %v1564
    %1566 = vmatmul.f32.gmra.mxu0 %v1473
    %v1567 = vpop.f32.mrf.mxu0
    %v1568 = vadd.f32 %v1398, %v1567
    %1569 = vmatmul.f32.gmra.mxu0 %v1476
    %v1570 = vpop.f32.mrf.mxu0
    %v1571 = vadd.f32 %v1401, %v1570
    %1572 = vmatmul.f32.gmra.mxu0 %v1479
    %v1573 = vpop.f32.mrf.mxu0
    %v1574 = vadd.f32 %v1404, %v1573
    %1575 = vmatmul.f32.gmra.mxu0 %v1482
    %v1576 = vpop.f32.mrf.mxu0
    %v1577 = vadd.f32 %v1407, %v1576
    %1578 = vmatmul.f32.gmra.mxu0 %v1485
    %v1579 = vpop.f32.mrf.mxu0
    %v1580 = vadd.f32 %v1410, %v1579
    %1581 = vmatmul.f32.gmra.mxu0 %v1488
    %v1582 = vpop.f32.mrf.mxu0
    %v1583 = vadd.f32 %v1413, %v1582
    %1584 = vmatmul.f32.gmra.mxu0 %v1491
    %v1585 = vpop.f32.mrf.mxu0
    %v1586 = vadd.f32 %v1416, %v1585
    %1587 = vmatmul.f32.gmra.mxu0 %v1494
    %v1588 = vpop.f32.mrf.mxu0
    %v1589 = vadd.f32 %v1419, %v1588
    %1590 = vmatmul.f32.gmra.mxu0 %v1497
    %v1591 = vpop.f32.mrf.mxu0
    %v1592 = vadd.f32 %v1422, %v1591
    %1593 = vmatmul.f32.gmra.mxu0 %v1500
    %v1594 = vpop.f32.mrf.mxu0
    %v1595 = vadd.f32 %v1425, %v1594
    %1596 = vmatmul.f32.gmra.mxu0 %v1503
    %v1597 = vpop.f32.mrf.mxu0
    %v1598 = vadd.f32 %v1428, %v1597
    %1599 = vdwg.mxu0
    %s1600 = scalar_lea.vmem %s1, 48
    %v1601 = vld [vmem:[%s1600] sm:$0xff]
    %v1602 = vld [vmem:[%s1600 + $0x8] sm:$0xff]
    %v1603 = vld [vmem:[%s1600 + $0x10] sm:$0x1]
    %v1605 = vsel %vm100, %v1227, 0
    %v1608 = vsel %vm100, %v1228, 0
    %v1611 = vsel %vm100, %v1229, 0
    %v1614 = vsel %vm100, %v1230, 0
    %v1617 = vsel %vm100, %v1231, 0
    %v1620 = vsel %vm100, %v1232, 0
    %v1623 = vsel %vm100, %v1233, 0
    %v1626 = vsel %vm100, %v1234, 0
    %v1629 = vsel %vm100, %v1235, 0
    %v1632 = vsel %vm100, %v1236, 0
    %v1635 = vsel %vm100, %v1237, 0
    %v1638 = vsel %vm100, %v1238, 0
    %v1641 = vsel %vm100, %v1239, 0
    %v1644 = vsel %vm100, %v1240, 0
    %v1647 = vsel %vm100, %v1241, 0
    %v1650 = vsel %vm100, %v1242, 0
    %v1653 = vsel %vm100, %v1243, 0
    %v1656 = vsel %vm100, %v1244, 0
    %v1659 = vsel %vm100, %v1245, 0
    %v1662 = vsel %vm100, %v1246, 0
    %v1665 = vsel %vm100, %v1247, 0
    %v1668 = vsel %vm100, %v1248, 0
    %v1671 = vsel %vm100, %v1249, 0
    %v1674 = vsel %vm100, %v1250, 0
    %v1677 = vsel %vm100, %v1251, 0
    %v1680 = vsel %vm1334, %v1603, 0
    %1682 = vmatpush.msra.mxu0 0.0
    %1683 = vmatpush.msra.mxu0 0.0
    %1684 = vmatpush.msra.mxu0 0.0
    %1685 = vmatpush.msra.mxu0 0.0
    %1686 = vmatpush.msra.mxu0 0.0
    %1687 = vmatpush.msra.mxu0 0.0
    %1688 = vmatpush.msra.mxu0 0.0
    %1689 = vmatpush.msra.mxu0 0.0
    %1690 = vmatpush.msra.mxu0 0.0
    %1691 = vmatpush.msra.mxu0 0.0
    %1692 = vmatpush.msra.mxu0 0.0
    %1693 = vmatpush.msra.mxu0 0.0
    %1694 = vmatpush.msra.mxu0 0.0
    %1695 = vmatpush.msra.mxu0 %v1680
    %1696 = vmatpush.msra.mxu0 %v1602
    %1697 = vmatpush.msra.mxu0 %v1601
    %1698 = vmatmul.f32.gmra.mxu0 %v1605
    %v1699 = vpop.f32.mrf.mxu0
    %v1700 = vadd.f32 0.0, %v1699
    %1701 = vmatmul.f32.gmra.mxu0 %v1608
    %v1702 = vpop.f32.mrf.mxu0
    %v1703 = vadd.f32 0.0, %v1702
    %1704 = vmatmul.f32.gmra.mxu0 %v1611
    %v1705 = vpop.f32.mrf.mxu0
    %v1706 = vadd.f32 0.0, %v1705
    %1707 = vmatmul.f32.gmra.mxu0 %v1614
    %v1708 = vpop.f32.mrf.mxu0
    %v1709 = vadd.f32 0.0, %v1708
    %1710 = vmatmul.f32.gmra.mxu0 %v1617
    %v1711 = vpop.f32.mrf.mxu0
    %v1712 = vadd.f32 0.0, %v1711
    %1713 = vmatmul.f32.gmra.mxu0 %v1620
    %v1714 = vpop.f32.mrf.mxu0
    %v1715 = vadd.f32 0.0, %v1714
    %1716 = vmatmul.f32.gmra.mxu0 %v1623
    %v1717 = vpop.f32.mrf.mxu0
    %v1718 = vadd.f32 0.0, %v1717
    %1719 = vmatmul.f32.gmra.mxu0 %v1626
    %v1720 = vpop.f32.mrf.mxu0
    %v1721 = vadd.f32 0.0, %v1720
    %1722 = vmatmul.f32.gmra.mxu0 %v1629
    %v1723 = vpop.f32.mrf.mxu0
    %v1724 = vadd.f32 0.0, %v1723
    %1725 = vmatmul.f32.gmra.mxu0 %v1632
    %v1726 = vpop.f32.mrf.mxu0
    %v1727 = vadd.f32 0.0, %v1726
    %1728 = vmatmul.f32.gmra.mxu0 %v1635
    %v1729 = vpop.f32.mrf.mxu0
    %v1730 = vadd.f32 0.0, %v1729
    %1731 = vmatmul.f32.gmra.mxu0 %v1638
    %v1732 = vpop.f32.mrf.mxu0
    %v1733 = vadd.f32 0.0, %v1732
    %1734 = vmatmul.f32.gmra.mxu0 %v1641
    %v1735 = vpop.f32.mrf.mxu0
    %v1736 = vadd.f32 0.0, %v1735
    %1737 = vmatmul.f32.gmra.mxu0 %v1644
    %v1738 = vpop.f32.mrf.mxu0
    %v1739 = vadd.f32 0.0, %v1738
    %1740 = vmatmul.f32.gmra.mxu0 %v1647
    %v1741 = vpop.f32.mrf.mxu0
    %v1742 = vadd.f32 0.0, %v1741
    %1743 = vmatmul.f32.gmra.mxu0 %v1650
    %v1744 = vpop.f32.mrf.mxu0
    %v1745 = vadd.f32 0.0, %v1744
    %1746 = vmatmul.f32.gmra.mxu0 %v1653
    %v1747 = vpop.f32.mrf.mxu0
    %v1748 = vadd.f32 0.0, %v1747
    %1749 = vmatmul.f32.gmra.mxu0 %v1656
    %v1750 = vpop.f32.mrf.mxu0
    %v1751 = vadd.f32 0.0, %v1750
    %1752 = vmatmul.f32.gmra.mxu0 %v1659
    %v1753 = vpop.f32.mrf.mxu0
    %v1754 = vadd.f32 0.0, %v1753
    %1755 = vmatmul.f32.gmra.mxu0 %v1662
    %v1756 = vpop.f32.mrf.mxu0
    %v1757 = vadd.f32 0.0, %v1756
    %1758 = vmatmul.f32.gmra.mxu0 %v1665
    %v1759 = vpop.f32.mrf.mxu0
    %v1760 = vadd.f32 0.0, %v1759
    %1761 = vmatmul.f32.gmra.mxu0 %v1668
    %v1762 = vpop.f32.mrf.mxu0
    %v1763 = vadd.f32 0.0, %v1762
    %1764 = vmatmul.f32.gmra.mxu0 %v1671
    %v1765 = vpop.f32.mrf.mxu0
    %v1766 = vadd.f32 0.0, %v1765
    %1767 = vmatmul.f32.gmra.mxu0 %v1674
    %v1768 = vpop.f32.mrf.mxu0
    %v1769 = vadd.f32 0.0, %v1768
    %1770 = vmatmul.f32.gmra.mxu0 %v1677
    %v1771 = vpop.f32.mrf.mxu0
    %v1772 = vadd.f32 0.0, %v1771
    %1773 = vdwg.mxu0
    %v1774 = vadd.f32 %v1526, %v1700
    %v1775 = vadd.f32 %v1529, %v1703
    %v1776 = vadd.f32 %v1532, %v1706
    %v1777 = vadd.f32 %v1535, %v1709
    %v1778 = vadd.f32 %v1538, %v1712
    %v1779 = vadd.f32 %v1541, %v1715
    %v1780 = vadd.f32 %v1544, %v1718
    %v1781 = vadd.f32 %v1547, %v1721
    %v1782 = vadd.f32 %v1550, %v1724
    %v1783 = vadd.f32 %v1553, %v1727
    %v1784 = vadd.f32 %v1556, %v1730
    %v1785 = vadd.f32 %v1559, %v1733
    %v1786 = vadd.f32 %v1562, %v1736
    %v1787 = vadd.f32 %v1565, %v1739
    %v1788 = vadd.f32 %v1568, %v1742
    %v1789 = vadd.f32 %v1571, %v1745
    %v1790 = vadd.f32 %v1574, %v1748
    %v1791 = vadd.f32 %v1577, %v1751
    %v1792 = vadd.f32 %v1580, %v1754
    %v1793 = vadd.f32 %v1583, %v1757
    %v1794 = vadd.f32 %v1586, %v1760
    %v1795 = vadd.f32 %v1589, %v1763
    %v1796 = vadd.f32 %v1592, %v1766
    %v1797 = vadd.f32 %v1595, %v1769
    %v1798 = vadd.f32 %v1598, %v1772
    %v1799 = vld [vmem:[#allocation6] sm:$0x1]
    %v1801 = vperm.slane %v1799, 0
    %v1803 = vadd.f32 %v1774, %v1801
    %v1804 = vadd.f32 %v1775, %v1801
    %v1805 = vadd.f32 %v1776, %v1801
    %v1806 = vadd.f32 %v1777, %v1801
    %v1807 = vadd.f32 %v1778, %v1801
    %v1808 = vadd.f32 %v1779, %v1801
    %v1809 = vadd.f32 %v1780, %v1801
    %v1810 = vadd.f32 %v1781, %v1801
    %v1811 = vadd.f32 %v1782, %v1801
    %v1812 = vadd.f32 %v1783, %v1801
    %v1813 = vadd.f32 %v1784, %v1801
    %v1814 = vadd.f32 %v1785, %v1801
    %v1815 = vadd.f32 %v1786, %v1801
    %v1816 = vadd.f32 %v1787, %v1801
    %v1817 = vadd.f32 %v1788, %v1801
    %v1818 = vadd.f32 %v1789, %v1801
    %v1819 = vadd.f32 %v1790, %v1801
    %v1820 = vadd.f32 %v1791, %v1801
    %v1821 = vadd.f32 %v1792, %v1801
    %v1822 = vadd.f32 %v1793, %v1801
    %v1823 = vadd.f32 %v1794, %v1801
    %v1824 = vadd.f32 %v1795, %v1801
    %v1825 = vadd.f32 %v1796, %v1801
    %v1826 = vadd.f32 %v1797, %v1801
    %v1827 = vadd.f32 %v1798, %v1801
    %v1828 = vmax.f32 %v1803, 0.0
    %v1829 = vmax.f32 %v1804, 0.0
    %v1830 = vmax.f32 %v1805, 0.0
    %v1831 = vmax.f32 %v1806, 0.0
    %v1832 = vmax.f32 %v1807, 0.0
    %v1833 = vmax.f32 %v1808, 0.0
    %v1834 = vmax.f32 %v1809, 0.0
    %v1835 = vmax.f32 %v1810, 0.0
    %v1836 = vmax.f32 %v1811, 0.0
    %v1837 = vmax.f32 %v1812, 0.0
    %v1838 = vmax.f32 %v1813, 0.0
    %v1839 = vmax.f32 %v1814, 0.0
    %v1840 = vmax.f32 %v1815, 0.0
    %v1841 = vmax.f32 %v1816, 0.0
    %v1842 = vmax.f32 %v1817, 0.0
    %v1843 = vmax.f32 %v1818, 0.0
    %v1844 = vmax.f32 %v1819, 0.0
    %v1845 = vmax.f32 %v1820, 0.0
    %v1846 = vmax.f32 %v1821, 0.0
    %v1847 = vmax.f32 %v1822, 0.0
    %v1848 = vmax.f32 %v1823, 0.0
    %v1849 = vmax.f32 %v1824, 0.0
    %v1850 = vmax.f32 %v1825, 0.0
    %v1851 = vmax.f32 %v1826, 0.0
    %v1852 = vmax.f32 %v1827, 0.0
    %v1853 = vld [vmem:[%s3] sm:$0x1]
    %v1855 = vperm.slane %v1853, 0
    %v1857 = vmul.f32 %v1828, %v1855
    %v1858 = vmul.f32 %v1829, %v1855
    %v1859 = vmul.f32 %v1830, %v1855
    %v1860 = vmul.f32 %v1831, %v1855
    %v1861 = vmul.f32 %v1832, %v1855
    %v1862 = vmul.f32 %v1833, %v1855
    %v1863 = vmul.f32 %v1834, %v1855
    %v1864 = vmul.f32 %v1835, %v1855
    %v1865 = vmul.f32 %v1836, %v1855
    %v1866 = vmul.f32 %v1837, %v1855
    %v1867 = vmul.f32 %v1838, %v1855
    %v1868 = vmul.f32 %v1839, %v1855
    %v1869 = vmul.f32 %v1840, %v1855
    %v1870 = vmul.f32 %v1841, %v1855
    %v1871 = vmul.f32 %v1842, %v1855
    %v1872 = vmul.f32 %v1843, %v1855
    %v1873 = vmul.f32 %v1844, %v1855
    %v1874 = vmul.f32 %v1845, %v1855
    %v1875 = vmul.f32 %v1846, %v1855
    %v1876 = vmul.f32 %v1847, %v1855
    %v1877 = vmul.f32 %v1848, %v1855
    %v1878 = vmul.f32 %v1849, %v1855
    %v1879 = vmul.f32 %v1850, %v1855
    %v1880 = vmul.f32 %v1851, %v1855
    %v1881 = vmul.f32 %v1852, %v1855
    %v1882 = vld [vmem:[%s4] sm:$0x1]
    %v1884 = vperm.slane %v1882, 0
    %v1886 = vadd.f32 %v1857, %v1884
    %v1887 = vadd.f32 %v1858, %v1884
    %v1888 = vadd.f32 %v1859, %v1884
    %v1889 = vadd.f32 %v1860, %v1884
    %v1890 = vadd.f32 %v1861, %v1884
    %v1891 = vadd.f32 %v1862, %v1884
    %v1892 = vadd.f32 %v1863, %v1884
    %v1893 = vadd.f32 %v1864, %v1884
    %v1894 = vadd.f32 %v1865, %v1884
    %v1895 = vadd.f32 %v1866, %v1884
    %v1896 = vadd.f32 %v1867, %v1884
    %v1897 = vadd.f32 %v1868, %v1884
    %v1898 = vadd.f32 %v1869, %v1884
    %v1899 = vadd.f32 %v1870, %v1884
    %v1900 = vadd.f32 %v1871, %v1884
    %v1901 = vadd.f32 %v1872, %v1884
    %v1902 = vadd.f32 %v1873, %v1884
    %v1903 = vadd.f32 %v1874, %v1884
    %v1904 = vadd.f32 %v1875, %v1884
    %v1905 = vadd.f32 %v1876, %v1884
    %v1906 = vadd.f32 %v1877, %v1884
    %v1907 = vadd.f32 %v1878, %v1884
    %v1908 = vadd.f32 %v1879, %v1884
    %v1909 = vadd.f32 %v1880, %v1884
    %v1910 = vadd.f32 %v1881, %v1884
    %vm1911 = vcmask 523264
    %1912 = vst.msk [vmem:[#allocation3] sm:$0xff] %vm1911, %v1886
    %1913 = vst.msk [vmem:[#allocation3 + $0x8] sm:$0xff] %vm1911, %v1887
    %1914 = vst.msk [vmem:[#allocation3 + $0x10] sm:$0xff] %vm1911, %v1888
    %1915 = vst.msk [vmem:[#allocation3 + $0x18] sm:$0xff] %vm1911, %v1889
    %1916 = vst.msk [vmem:[#allocation3 + $0x20] sm:$0xff] %vm1911, %v1890
    %1917 = vst.msk [vmem:[#allocation3 + $0x28] sm:$0xff] %vm1911, %v1891
    %1918 = vst.msk [vmem:[#allocation3 + $0x30] sm:$0xff] %vm1911, %v1892
    %1919 = vst.msk [vmem:[#allocation3 + $0x38] sm:$0xff] %vm1911, %v1893
    %1920 = vst.msk [vmem:[#allocation3 + $0x40] sm:$0xff] %vm1911, %v1894
    %1921 = vst.msk [vmem:[#allocation3 + $0x48] sm:$0xff] %vm1911, %v1895
    %1922 = vst.msk [vmem:[#allocation3 + $0x50] sm:$0xff] %vm1911, %v1896
    %1923 = vst.msk [vmem:[#allocation3 + $0x58] sm:$0xff] %vm1911, %v1897
    %1924 = vst.msk [vmem:[#allocation3 + $0x60] sm:$0xff] %vm1911, %v1898
    %1925 = vst.msk [vmem:[#allocation3 + $0x68] sm:$0xff] %vm1911, %v1899
    %1926 = vst.msk [vmem:[#allocation3 + $0x70] sm:$0xff] %vm1911, %v1900
    %1927 = vst.msk [vmem:[#allocation3 + $0x78] sm:$0xff] %vm1911, %v1901
    %1928 = vst.msk [vmem:[#allocation3 + $0x80] sm:$0xff] %vm1911, %v1902
    %1929 = vst.msk [vmem:[#allocation3 + $0x88] sm:$0xff] %vm1911, %v1903
    %1930 = vst.msk [vmem:[#allocation3 + $0x90] sm:$0xff] %vm1911, %v1904
    %1931 = vst.msk [vmem:[#allocation3 + $0x98] sm:$0xff] %vm1911, %v1905
    %1932 = vst.msk [vmem:[#allocation3 + $0xa0] sm:$0xff] %vm1911, %v1906
    %1933 = vst.msk [vmem:[#allocation3 + $0xa8] sm:$0xff] %vm1911, %v1907
    %1934 = vst.msk [vmem:[#allocation3 + $0xb0] sm:$0xff] %vm1911, %v1908
    %1935 = vst.msk [vmem:[#allocation3 + $0xb8] sm:$0xff] %vm1911, %v1909
    %1936 = vst.msk [vmem:[#allocation3 + $0xc0] sm:$0xff] %vm1911, %v1910
    %v1937 = vld [vmem:[#allocation3] ss:$2 sm:$0xff]
    %s1938 = scalar_lea.vmem [#allocation3], 16
    %v1939 = vld [vmem:[%s1938] ss:$2 sm:$0xff]
    %s1940 = scalar_lea.vmem [#allocation3], 32
    %v1941 = vld [vmem:[%s1940] ss:$2 sm:$0xff]
    %s1942 = scalar_lea.vmem [#allocation3], 48
    %v1943 = vld [vmem:[%s1942] ss:$2 sm:$0xff]
    %s1944 = scalar_lea.vmem [#allocation3], 64
    %v1945 = vld [vmem:[%s1944] ss:$2 sm:$0xff]
    %s1946 = scalar_lea.vmem [#allocation3], 80
    %v1947 = vld [vmem:[%s1946] ss:$2 sm:$0xff]
    %s1948 = scalar_lea.vmem [#allocation3], 96
    %v1949 = vld [vmem:[%s1948] ss:$2 sm:$0xff]
    %s1950 = scalar_lea.vmem [#allocation3], 112
    %v1951 = vld [vmem:[%s1950] ss:$2 sm:$0xff]
    %s1952 = scalar_lea.vmem [#allocation3], 128
    %v1953 = vld [vmem:[%s1952] ss:$2 sm:$0xff]
    %s1954 = scalar_lea.vmem [#allocation3], 144
    %v1955 = vld [vmem:[%s1954] ss:$2 sm:$0xff]
    %s1956 = scalar_lea.vmem [#allocation3], 160
    %v1957 = vld [vmem:[%s1956] ss:$2 sm:$0xff]
    %s1958 = scalar_lea.vmem [#allocation3], 176
    %v1959 = vld [vmem:[%s1958] ss:$2 sm:$0xff]
    %s1960 = scalar_lea.vmem [#allocation3], 192
    %v1961 = vld [vmem:[%s1960] ss:$2 sm:$0xf]
    %s1962 = scalar_lea.vmem [#allocation3], 1
    %v1963 = vld [vmem:[%s1962] ss:$2 sm:$0xff]
    %s1964 = scalar_lea.vmem [#allocation3], 17
    %v1965 = vld [vmem:[%s1964] ss:$2 sm:$0xff]
    %s1966 = scalar_lea.vmem [#allocation3], 33
    %v1967 = vld [vmem:[%s1966] ss:$2 sm:$0xff]
    %s1968 = scalar_lea.vmem [#allocation3], 49
    %v1969 = vld [vmem:[%s1968] ss:$2 sm:$0xff]
    %s1970 = scalar_lea.vmem [#allocation3], 65
    %v1971 = vld [vmem:[%s1970] ss:$2 sm:$0xff]
    %s1972 = scalar_lea.vmem [#allocation3], 81
    %v1973 = vld [vmem:[%s1972] ss:$2 sm:$0xff]
    %s1974 = scalar_lea.vmem [#allocation3], 97
    %v1975 = vld [vmem:[%s1974] ss:$2 sm:$0xff]
    %s1976 = scalar_lea.vmem [#allocation3], 113
    %v1977 = vld [vmem:[%s1976] ss:$2 sm:$0xff]
    %s1978 = scalar_lea.vmem [#allocation3], 129
    %v1979 = vld [vmem:[%s1978] ss:$2 sm:$0xff]
    %s1980 = scalar_lea.vmem [#allocation3], 145
    %v1981 = vld [vmem:[%s1980] ss:$2 sm:$0xff]
    %s1982 = scalar_lea.vmem [#allocation3], 161
    %v1983 = vld [vmem:[%s1982] ss:$2 sm:$0xff]
    %s1984 = scalar_lea.vmem [#allocation3], 177
    %v1985 = vld [vmem:[%s1984] ss:$2 sm:$0xff]
    %s1986 = scalar_lea.vmem [#allocation3], 193
    %v1987 = vld [vmem:[%s1986] ss:$2 sm:$0xf]
    %v1988 = vmax.f32 %v1937, %v1963
    %v1989 = vmax.f32 %v1939, %v1965
    %v1990 = vmax.f32 %v1941, %v1967
    %v1991 = vmax.f32 %v1943, %v1969
    %v1992 = vmax.f32 %v1945, %v1971
    %v1993 = vmax.f32 %v1947, %v1973
    %v1994 = vmax.f32 %v1949, %v1975
    %v1995 = vmax.f32 %v1951, %v1977
    %v1996 = vmax.f32 %v1953, %v1979
    %v1997 = vmax.f32 %v1955, %v1981
    %v1998 = vmax.f32 %v1957, %v1983
    %v1999 = vmax.f32 %v1959, %v1985
    %v2000 = vmax.f32 %v1961, %v1987
    %2001 = vst.msk [vmem:[#allocation4 + $0x1] sm:$0xff] %vm1911, %v1988
    %2002 = vst.msk [vmem:[#allocation4 + $0x9] sm:$0xff] %vm1911, %v1989
    %2003 = vst.msk [vmem:[#allocation4 + $0x11] sm:$0xff] %vm1911, %v1990
    %2004 = vst.msk [vmem:[#allocation4 + $0x19] sm:$0xff] %vm1911, %v1991
    %2005 = vst.msk [vmem:[#allocation4 + $0x21] sm:$0xff] %vm1911, %v1992
    %2006 = vst.msk [vmem:[#allocation4 + $0x29] sm:$0xff] %vm1911, %v1993
    %2007 = vst.msk [vmem:[#allocation4 + $0x31] sm:$0xff] %vm1911, %v1994
    %2008 = vst.msk [vmem:[#allocation4 + $0x39] sm:$0xff] %vm1911, %v1995
    %2009 = vst.msk [vmem:[#allocation4 + $0x41] sm:$0xff] %vm1911, %v1996
    %2010 = vst.msk [vmem:[#allocation4 + $0x49] sm:$0xff] %vm1911, %v1997
    %2011 = vst.msk [vmem:[#allocation4 + $0x51] sm:$0xff] %vm1911, %v1998
    %2012 = vst.msk [vmem:[#allocation4 + $0x59] sm:$0xff] %vm1911, %v1999
    %vm2013 = vcmask 519168
    %2014 = vst.msk [vmem:[#allocation4 + $0x61] sm:$0xf] %vm2013, %v2000
    %vm2015 = vcmp.lt.s32.totalorder %v127, 0
    %v2016 = vsub.s32 0, %v127
    %v2017 = vsel %vm2015, %v2016, %v127
    %v2018 = vand.u32 %v2017, 65535
    %v2019 = vshrl.u32 %v2017, 16
    %v2021 = vmul.u32 %v2018, 2622
    %v2022 = vmul.u32 %v2018, 41943
    %v2023 = vmul.u32 %v2019, 2622
    %v2024 = vmul.u32 %v2019, 41943
    %v2025 = vshll.u32 %v2022, 16
    %v2026 = vshrl.u32 %v2022, 16
    %v2027 = vshll.u32 %v2023, 16
    %v2028 = vshrl.u32 %v2023, 16
    %vm2029 = vc.u32 %v2021, %v2025
    %v2030 = vsel %vm2029, 1, 0
    %v2031 = vadd.s32 %v2021, %v2025
    %v2032 = vadd.s32 %v2024, %v2030
    %vm2033 = vc.u32 %v2031, %v2027
    %v2034 = vsel %vm2033, 1, 0
    %v2035 = vadd.s32 %v2031, %v2027
    %v2036 = vadd.s32 %v2032, %v2034
    %v2037 = vadd.s32 %v2036, %v2026
    %v2038 = vadd.s32 %v2037, %v2028
    %v2039 = vshrl.u32 %v2038, 5
    %v2040 = vmul.u32 %v2039, 50
    %v2041 = vsub.s32 %v2017, %v2040
    %v2042 = vsub.s32 0, %v2041
    %v2043 = vsel %vm2015, %v2042, %v2041
    %vm2044 = vcmp.lt.s32.totalorder %v128, 0
    %v2045 = vsub.s32 0, %v128
    %v2046 = vsel %vm2044, %v2045, %v128
    %v2047 = vand.u32 %v2046, 65535
    %v2048 = vshrl.u32 %v2046, 16
    %v2050 = vmul.u32 %v2047, 2622
    %v2051 = vmul.u32 %v2047, 41943
    %v2052 = vmul.u32 %v2048, 2622
    %v2053 = vmul.u32 %v2048, 41943
    %v2054 = vshll.u32 %v2051, 16
    %v2055 = vshrl.u32 %v2051, 16
    %v2056 = vshll.u32 %v2052, 16
    %v2057 = vshrl.u32 %v2052, 16
    %vm2058 = vc.u32 %v2050, %v2054
    %v2059 = vsel %vm2058, 1, 0
    %v2060 = vadd.s32 %v2050, %v2054
    %v2061 = vadd.s32 %v2053, %v2059
    %vm2062 = vc.u32 %v2060, %v2056
    %v2063 = vsel %vm2062, 1, 0
    %v2064 = vadd.s32 %v2060, %v2056
    %v2065 = vadd.s32 %v2061, %v2063
    %v2066 = vadd.s32 %v2065, %v2055
    %v2067 = vadd.s32 %v2066, %v2057
    %v2068 = vshrl.u32 %v2067, 5
    %v2069 = vmul.u32 %v2068, 50
    %v2070 = vsub.s32 %v2046, %v2069
    %v2071 = vsub.s32 0, %v2070
    %v2072 = vsel %vm2044, %v2071, %v2070
    %vm2073 = vcmp.lt.s32.totalorder %v129, 0
    %v2074 = vsub.s32 0, %v129
    %v2075 = vsel %vm2073, %v2074, %v129
    %v2076 = vand.u32 %v2075, 65535
    %v2077 = vshrl.u32 %v2075, 16
    %v2079 = vmul.u32 %v2076, 2622
    %v2080 = vmul.u32 %v2076, 41943
    %v2081 = vmul.u32 %v2077, 2622
    %v2082 = vmul.u32 %v2077, 41943
    %v2083 = vshll.u32 %v2080, 16
    %v2084 = vshrl.u32 %v2080, 16
    %v2085 = vshll.u32 %v2081, 16
    %v2086 = vshrl.u32 %v2081, 16
    %vm2087 = vc.u32 %v2079, %v2083
    %v2088 = vsel %vm2087, 1, 0
    %v2089 = vadd.s32 %v2079, %v2083
    %v2090 = vadd.s32 %v2082, %v2088
    %vm2091 = vc.u32 %v2089, %v2085
    %v2092 = vsel %vm2091, 1, 0
    %v2093 = vadd.s32 %v2089, %v2085
    %v2094 = vadd.s32 %v2090, %v2092
    %v2095 = vadd.s32 %v2094, %v2084
    %v2096 = vadd.s32 %v2095, %v2086
    %v2097 = vshrl.u32 %v2096, 5
    %v2098 = vmul.u32 %v2097, 50
    %v2099 = vsub.s32 %v2075, %v2098
    %v2100 = vsub.s32 0, %v2099
    %v2101 = vsel %vm2073, %v2100, %v2099
    %vm2102 = vcmp.lt.s32.totalorder %v130, 0
    %v2103 = vsub.s32 0, %v130
    %v2104 = vsel %vm2102, %v2103, %v130
    %v2105 = vand.u32 %v2104, 65535
    %v2106 = vshrl.u32 %v2104, 16
    %v2108 = vmul.u32 %v2105, 2622
    %v2109 = vmul.u32 %v2105, 41943
    %v2110 = vmul.u32 %v2106, 2622
    %v2111 = vmul.u32 %v2106, 41943
    %v2112 = vshll.u32 %v2109, 16
    %v2113 = vshrl.u32 %v2109, 16
    %v2114 = vshll.u32 %v2110, 16
    %v2115 = vshrl.u32 %v2110, 16
    %vm2116 = vc.u32 %v2108, %v2112
    %v2117 = vsel %vm2116, 1, 0
    %v2118 = vadd.s32 %v2108, %v2112
    %v2119 = vadd.s32 %v2111, %v2117
    %vm2120 = vc.u32 %v2118, %v2114
    %v2121 = vsel %vm2120, 1, 0
    %v2122 = vadd.s32 %v2118, %v2114
    %v2123 = vadd.s32 %v2119, %v2121
    %v2124 = vadd.s32 %v2123, %v2113
    %v2125 = vadd.s32 %v2124, %v2115
    %v2126 = vshrl.u32 %v2125, 5
    %v2127 = vmul.u32 %v2126, 50
    %v2128 = vsub.s32 %v2104, %v2127
    %v2129 = vsub.s32 0, %v2128
    %v2130 = vsel %vm2102, %v2129, %v2128
    %vm2131 = vcmp.lt.s32.totalorder %v131, 0
    %v2132 = vsub.s32 0, %v131
    %v2133 = vsel %vm2131, %v2132, %v131
    %v2134 = vand.u32 %v2133, 65535
    %v2135 = vshrl.u32 %v2133, 16
    %v2137 = vmul.u32 %v2134, 2622
    %v2138 = vmul.u32 %v2134, 41943
    %v2139 = vmul.u32 %v2135, 2622
    %v2140 = vmul.u32 %v2135, 41943
    %v2141 = vshll.u32 %v2138, 16
    %v2142 = vshrl.u32 %v2138, 16
    %v2143 = vshll.u32 %v2139, 16
    %v2144 = vshrl.u32 %v2139, 16
    %vm2145 = vc.u32 %v2137, %v2141
    %v2146 = vsel %vm2145, 1, 0
    %v2147 = vadd.s32 %v2137, %v2141
    %v2148 = vadd.s32 %v2140, %v2146
    %vm2149 = vc.u32 %v2147, %v2143
    %v2150 = vsel %vm2149, 1, 0
    %v2151 = vadd.s32 %v2147, %v2143
    %v2152 = vadd.s32 %v2148, %v2150
    %v2153 = vadd.s32 %v2152, %v2142
    %v2154 = vadd.s32 %v2153, %v2144
    %v2155 = vshrl.u32 %v2154, 5
    %v2156 = vmul.u32 %v2155, 50
    %v2157 = vsub.s32 %v2133, %v2156
    %v2158 = vsub.s32 0, %v2157
    %v2159 = vsel %vm2131, %v2158, %v2157
    %vm2160 = vcmp.lt.s32.totalorder %v132, 0
    %v2161 = vsub.s32 0, %v132
    %v2162 = vsel %vm2160, %v2161, %v132
    %v2163 = vand.u32 %v2162, 65535
    %v2164 = vshrl.u32 %v2162, 16
    %v2166 = vmul.u32 %v2163, 2622
    %v2167 = vmul.u32 %v2163, 41943
    %v2168 = vmul.u32 %v2164, 2622
    %v2169 = vmul.u32 %v2164, 41943
    %v2170 = vshll.u32 %v2167, 16
    %v2171 = vshrl.u32 %v2167, 16
    %v2172 = vshll.u32 %v2168, 16
    %v2173 = vshrl.u32 %v2168, 16
    %vm2174 = vc.u32 %v2166, %v2170
    %v2175 = vsel %vm2174, 1, 0
    %v2176 = vadd.s32 %v2166, %v2170
    %v2177 = vadd.s32 %v2169, %v2175
    %vm2178 = vc.u32 %v2176, %v2172
    %v2179 = vsel %vm2178, 1, 0
    %v2180 = vadd.s32 %v2176, %v2172
    %v2181 = vadd.s32 %v2177, %v2179
    %v2182 = vadd.s32 %v2181, %v2171
    %v2183 = vadd.s32 %v2182, %v2173
    %v2184 = vshrl.u32 %v2183, 5
    %v2185 = vmul.u32 %v2184, 50
    %v2186 = vsub.s32 %v2162, %v2185
    %v2187 = vsub.s32 0, %v2186
    %v2188 = vsel %vm2160, %v2187, %v2186
    %vm2189 = vcmp.lt.s32.totalorder %v133, 0
    %v2190 = vsub.s32 0, %v133
    %v2191 = vsel %vm2189, %v2190, %v133
    %v2192 = vand.u32 %v2191, 65535
    %v2193 = vshrl.u32 %v2191, 16
    %v2195 = vmul.u32 %v2192, 2622
    %v2196 = vmul.u32 %v2192, 41943
    %v2197 = vmul.u32 %v2193, 2622
    %v2198 = vmul.u32 %v2193, 41943
    %v2199 = vshll.u32 %v2196, 16
    %v2200 = vshrl.u32 %v2196, 16
    %v2201 = vshll.u32 %v2197, 16
    %v2202 = vshrl.u32 %v2197, 16
    %vm2203 = vc.u32 %v2195, %v2199
    %v2204 = vsel %vm2203, 1, 0
    %v2205 = vadd.s32 %v2195, %v2199
    %v2206 = vadd.s32 %v2198, %v2204
    %vm2207 = vc.u32 %v2205, %v2201
    %v2208 = vsel %vm2207, 1, 0
    %v2209 = vadd.s32 %v2205, %v2201
    %v2210 = vadd.s32 %v2206, %v2208
    %v2211 = vadd.s32 %v2210, %v2200
    %v2212 = vadd.s32 %v2211, %v2202
    %v2213 = vshrl.u32 %v2212, 5
    %v2214 = vmul.u32 %v2213, 50
    %v2215 = vsub.s32 %v2191, %v2214
    %v2216 = vsub.s32 0, %v2215
    %v2217 = vsel %vm2189, %v2216, %v2215
    %vm2218 = vcmp.lt.s32.totalorder %v134, 0
    %v2219 = vsub.s32 0, %v134
    %v2220 = vsel %vm2218, %v2219, %v134
    %v2221 = vand.u32 %v2220, 65535
    %v2222 = vshrl.u32 %v2220, 16
    %v2224 = vmul.u32 %v2221, 2622
    %v2225 = vmul.u32 %v2221, 41943
    %v2226 = vmul.u32 %v2222, 2622
    %v2227 = vmul.u32 %v2222, 41943
    %v2228 = vshll.u32 %v2225, 16
    %v2229 = vshrl.u32 %v2225, 16
    %v2230 = vshll.u32 %v2226, 16
    %v2231 = vshrl.u32 %v2226, 16
    %vm2232 = vc.u32 %v2224, %v2228
    %v2233 = vsel %vm2232, 1, 0
    %v2234 = vadd.s32 %v2224, %v2228
    %v2235 = vadd.s32 %v2227, %v2233
    %vm2236 = vc.u32 %v2234, %v2230
    %v2237 = vsel %vm2236, 1, 0
    %v2238 = vadd.s32 %v2234, %v2230
    %v2239 = vadd.s32 %v2235, %v2237
    %v2240 = vadd.s32 %v2239, %v2229
    %v2241 = vadd.s32 %v2240, %v2231
    %v2242 = vshrl.u32 %v2241, 5
    %v2243 = vmul.u32 %v2242, 50
    %v2244 = vsub.s32 %v2220, %v2243
    %v2245 = vsub.s32 0, %v2244
    %v2246 = vsel %vm2218, %v2245, %v2244
    %vm2247 = vcmp.lt.s32.totalorder %v135, 0
    %v2248 = vsub.s32 0, %v135
    %v2249 = vsel %vm2247, %v2248, %v135
    %v2250 = vand.u32 %v2249, 65535
    %v2251 = vshrl.u32 %v2249, 16
    %v2253 = vmul.u32 %v2250, 2622
    %v2254 = vmul.u32 %v2250, 41943
    %v2255 = vmul.u32 %v2251, 2622
    %v2256 = vmul.u32 %v2251, 41943
    %v2257 = vshll.u32 %v2254, 16
    %v2258 = vshrl.u32 %v2254, 16
    %v2259 = vshll.u32 %v2255, 16
    %v2260 = vshrl.u32 %v2255, 16
    %vm2261 = vc.u32 %v2253, %v2257
    %v2262 = vsel %vm2261, 1, 0
    %v2263 = vadd.s32 %v2253, %v2257
    %v2264 = vadd.s32 %v2256, %v2262
    %vm2265 = vc.u32 %v2263, %v2259
    %v2266 = vsel %vm2265, 1, 0
    %v2267 = vadd.s32 %v2263, %v2259
    %v2268 = vadd.s32 %v2264, %v2266
    %v2269 = vadd.s32 %v2268, %v2258
    %v2270 = vadd.s32 %v2269, %v2260
    %v2271 = vshrl.u32 %v2270, 5
    %v2272 = vmul.u32 %v2271, 50
    %v2273 = vsub.s32 %v2249, %v2272
    %v2274 = vsub.s32 0, %v2273
    %v2275 = vsel %vm2247, %v2274, %v2273
    %vm2276 = vcmp.lt.s32.totalorder %v136, 0
    %v2277 = vsub.s32 0, %v136
    %v2278 = vsel %vm2276, %v2277, %v136
    %v2279 = vand.u32 %v2278, 65535
    %v2280 = vshrl.u32 %v2278, 16
    %v2282 = vmul.u32 %v2279, 2622
    %v2283 = vmul.u32 %v2279, 41943
    %v2284 = vmul.u32 %v2280, 2622
    %v2285 = vmul.u32 %v2280, 41943
    %v2286 = vshll.u32 %v2283, 16
    %v2287 = vshrl.u32 %v2283, 16
    %v2288 = vshll.u32 %v2284, 16
    %v2289 = vshrl.u32 %v2284, 16
    %vm2290 = vc.u32 %v2282, %v2286
    %v2291 = vsel %vm2290, 1, 0
    %v2292 = vadd.s32 %v2282, %v2286
    %v2293 = vadd.s32 %v2285, %v2291
    %vm2294 = vc.u32 %v2292, %v2288
    %v2295 = vsel %vm2294, 1, 0
    %v2296 = vadd.s32 %v2292, %v2288
    %v2297 = vadd.s32 %v2293, %v2295
    %v2298 = vadd.s32 %v2297, %v2287
    %v2299 = vadd.s32 %v2298, %v2289
    %v2300 = vshrl.u32 %v2299, 5
    %v2301 = vmul.u32 %v2300, 50
    %v2302 = vsub.s32 %v2278, %v2301
    %v2303 = vsub.s32 0, %v2302
    %v2304 = vsel %vm2276, %v2303, %v2302
    %vm2305 = vcmp.lt.s32.totalorder %v137, 0
    %v2306 = vsub.s32 0, %v137
    %v2307 = vsel %vm2305, %v2306, %v137
    %v2308 = vand.u32 %v2307, 65535
    %v2309 = vshrl.u32 %v2307, 16
    %v2311 = vmul.u32 %v2308, 2622
    %v2312 = vmul.u32 %v2308, 41943
    %v2313 = vmul.u32 %v2309, 2622
    %v2314 = vmul.u32 %v2309, 41943
    %v2315 = vshll.u32 %v2312, 16
    %v2316 = vshrl.u32 %v2312, 16
    %v2317 = vshll.u32 %v2313, 16
    %v2318 = vshrl.u32 %v2313, 16
    %vm2319 = vc.u32 %v2311, %v2315
    %v2320 = vsel %vm2319, 1, 0
    %v2321 = vadd.s32 %v2311, %v2315
    %v2322 = vadd.s32 %v2314, %v2320
    %vm2323 = vc.u32 %v2321, %v2317
    %v2324 = vsel %vm2323, 1, 0
    %v2325 = vadd.s32 %v2321, %v2317
    %v2326 = vadd.s32 %v2322, %v2324
    %v2327 = vadd.s32 %v2326, %v2316
    %v2328 = vadd.s32 %v2327, %v2318
    %v2329 = vshrl.u32 %v2328, 5
    %v2330 = vmul.u32 %v2329, 50
    %v2331 = vsub.s32 %v2307, %v2330
    %v2332 = vsub.s32 0, %v2331
    %v2333 = vsel %vm2305, %v2332, %v2331
    %vm2334 = vcmp.lt.s32.totalorder %v138, 0
    %v2335 = vsub.s32 0, %v138
    %v2336 = vsel %vm2334, %v2335, %v138
    %v2337 = vand.u32 %v2336, 65535
    %v2338 = vshrl.u32 %v2336, 16
    %v2340 = vmul.u32 %v2337, 2622
    %v2341 = vmul.u32 %v2337, 41943
    %v2342 = vmul.u32 %v2338, 2622
    %v2343 = vmul.u32 %v2338, 41943
    %v2344 = vshll.u32 %v2341, 16
    %v2345 = vshrl.u32 %v2341, 16
    %v2346 = vshll.u32 %v2342, 16
    %v2347 = vshrl.u32 %v2342, 16
    %vm2348 = vc.u32 %v2340, %v2344
    %v2349 = vsel %vm2348, 1, 0
    %v2350 = vadd.s32 %v2340, %v2344
    %v2351 = vadd.s32 %v2343, %v2349
    %vm2352 = vc.u32 %v2350, %v2346
    %v2353 = vsel %vm2352, 1, 0
    %v2354 = vadd.s32 %v2350, %v2346
    %v2355 = vadd.s32 %v2351, %v2353
    %v2356 = vadd.s32 %v2355, %v2345
    %v2357 = vadd.s32 %v2356, %v2347
    %v2358 = vshrl.u32 %v2357, 5
    %v2359 = vmul.u32 %v2358, 50
    %v2360 = vsub.s32 %v2336, %v2359
    %v2361 = vsub.s32 0, %v2360
    %v2362 = vsel %vm2334, %v2361, %v2360
    %vm2363 = vcmp.lt.s32.totalorder %v139, 0
    %v2364 = vsub.s32 0, %v139
    %v2365 = vsel %vm2363, %v2364, %v139
    %v2366 = vand.u32 %v2365, 65535
    %v2367 = vshrl.u32 %v2365, 16
    %v2369 = vmul.u32 %v2366, 2622
    %v2370 = vmul.u32 %v2366, 41943
    %v2371 = vmul.u32 %v2367, 2622
    %v2372 = vmul.u32 %v2367, 41943
    %v2373 = vshll.u32 %v2370, 16
    %v2374 = vshrl.u32 %v2370, 16
    %v2375 = vshll.u32 %v2371, 16
    %v2376 = vshrl.u32 %v2371, 16
    %vm2377 = vc.u32 %v2369, %v2373
    %v2378 = vsel %vm2377, 1, 0
    %v2379 = vadd.s32 %v2369, %v2373
    %v2380 = vadd.s32 %v2372, %v2378
    %vm2381 = vc.u32 %v2379, %v2375
    %v2382 = vsel %vm2381, 1, 0
    %v2383 = vadd.s32 %v2379, %v2375
    %v2384 = vadd.s32 %v2380, %v2382
    %v2385 = vadd.s32 %v2384, %v2374
    %v2386 = vadd.s32 %v2385, %v2376
    %v2387 = vshrl.u32 %v2386, 5
    %v2388 = vmul.u32 %v2387, 50
    %v2389 = vsub.s32 %v2365, %v2388
    %v2390 = vsub.s32 0, %v2389
    %v2391 = vsel %vm2363, %v2390, %v2389
    %vm2392 = vcmp.ne.s32.totalorder %v2043, 0
    %vm2393 = vcmp.ne.s32.totalorder %v2072, 0
    %vm2394 = vcmp.ne.s32.totalorder %v2101, 0
    %vm2395 = vcmp.ne.s32.totalorder %v2130, 0
    %vm2396 = vcmp.ne.s32.totalorder %v2159, 0
    %vm2397 = vcmp.ne.s32.totalorder %v2188, 0
    %vm2398 = vcmp.ne.s32.totalorder %v2217, 0
    %vm2399 = vcmp.ne.s32.totalorder %v2246, 0
    %vm2400 = vcmp.ne.s32.totalorder %v2275, 0
    %vm2401 = vcmp.ne.s32.totalorder %v2304, 0
    %vm2402 = vcmp.ne.s32.totalorder %v2333, 0
    %vm2403 = vcmp.ne.s32.totalorder %v2362, 0
    %vm2404 = vcmp.ne.s32.totalorder %v2391, 0
    %vm2405 = vcmp.lt.s32.totalorder %v2043, 0
    %vm2406 = vcmp.lt.s32.totalorder %v2072, 0
    %vm2407 = vcmp.lt.s32.totalorder %v2101, 0
    %vm2408 = vcmp.lt.s32.totalorder %v2130, 0
    %vm2409 = vcmp.lt.s32.totalorder %v2159, 0
    %vm2410 = vcmp.lt.s32.totalorder %v2188, 0
    %vm2411 = vcmp.lt.s32.totalorder %v2217, 0
    %vm2412 = vcmp.lt.s32.totalorder %v2246, 0
    %vm2413 = vcmp.lt.s32.totalorder %v2275, 0
    %vm2414 = vcmp.lt.s32.totalorder %v2304, 0
    %vm2415 = vcmp.lt.s32.totalorder %v2333, 0
    %vm2416 = vcmp.lt.s32.totalorder %v2362, 0
    %vm2417 = vcmp.lt.s32.totalorder %v2391, 0
    %vm2418 = vmand %vm2405, %vm2392
    %vm2419 = vmand %vm2406, %vm2393
    %vm2420 = vmand %vm2407, %vm2394
    %vm2421 = vmand %vm2408, %vm2395
    %vm2422 = vmand %vm2409, %vm2396
    %vm2423 = vmand %vm2410, %vm2397
    %vm2424 = vmand %vm2411, %vm2398
    %vm2425 = vmand %vm2412, %vm2399
    %vm2426 = vmand %vm2413, %vm2400
    %vm2427 = vmand %vm2414, %vm2401
    %vm2428 = vmand %vm2415, %vm2402
    %vm2429 = vmand %vm2416, %vm2403
    %vm2430 = vmand %vm2417, %vm2404
    %v2431 = vadd.s32 %v2043, 50
    %v2432 = vadd.s32 %v2072, 50
    %v2433 = vadd.s32 %v2101, 50
    %v2434 = vadd.s32 %v2130, 50
    %v2435 = vadd.s32 %v2159, 50
    %v2436 = vadd.s32 %v2188, 50
    %v2437 = vadd.s32 %v2217, 50
    %v2438 = vadd.s32 %v2246, 50
    %v2439 = vadd.s32 %v2275, 50
    %v2440 = vadd.s32 %v2304, 50
    %v2441 = vadd.s32 %v2333, 50
    %v2442 = vadd.s32 %v2362, 50
    %v2443 = vadd.s32 %v2391, 50
    %v2444 = vsel %vm2418, %v2431, %v2043
    %v2445 = vsel %vm2419, %v2432, %v2072
    %v2446 = vsel %vm2420, %v2433, %v2101
    %v2447 = vsel %vm2421, %v2434, %v2130
    %v2448 = vsel %vm2422, %v2435, %v2159
    %v2449 = vsel %vm2423, %v2436, %v2188
    %v2450 = vsel %vm2424, %v2437, %v2217
    %v2451 = vsel %vm2425, %v2438, %v2246
    %v2452 = vsel %vm2426, %v2439, %v2275
    %v2453 = vsel %vm2427, %v2440, %v2304
    %v2454 = vsel %vm2428, %v2441, %v2333
    %v2455 = vsel %vm2429, %v2442, %v2362
    %v2456 = vsel %vm2430, %v2443, %v2391
    %vm2457 = vcmp.eq.s32.totalorder %v2444, 0
    %vm2458 = vcmp.eq.s32.totalorder %v2445, 0
    %vm2459 = vcmp.eq.s32.totalorder %v2446, 0
    %vm2460 = vcmp.eq.s32.totalorder %v2447, 0
    %vm2461 = vcmp.eq.s32.totalorder %v2448, 0
    %vm2462 = vcmp.eq.s32.totalorder %v2449, 0
    %vm2463 = vcmp.eq.s32.totalorder %v2450, 0
    %vm2464 = vcmp.eq.s32.totalorder %v2451, 0
    %vm2465 = vcmp.eq.s32.totalorder %v2452, 0
    %vm2466 = vcmp.eq.s32.totalorder %v2453, 0
    %vm2467 = vcmp.eq.s32.totalorder %v2454, 0
    %vm2468 = vcmp.eq.s32.totalorder %v2455, 0
    %vm2469 = vcmp.eq.s32.totalorder %v2456, 0
    %v2470 = vld [vmem:[#allocation4] sm:$0xff]
    %v2471 = vld [vmem:[#allocation4 + $0x8] sm:$0xff]
    %v2472 = vld [vmem:[#allocation4 + $0x10] sm:$0xff]
    %v2473 = vld [vmem:[#allocation4 + $0x18] sm:$0xff]
    %v2474 = vld [vmem:[#allocation4 + $0x20] sm:$0xff]
    %v2475 = vld [vmem:[#allocation4 + $0x28] sm:$0xff]
    %v2476 = vld [vmem:[#allocation4 + $0x30] sm:$0xff]
    %v2477 = vld [vmem:[#allocation4 + $0x38] sm:$0xff]
    %v2478 = vld [vmem:[#allocation4 + $0x40] sm:$0xff]
    %v2479 = vld [vmem:[#allocation4 + $0x48] sm:$0xff]
    %v2480 = vld [vmem:[#allocation4 + $0x50] sm:$0xff]
    %v2481 = vld [vmem:[#allocation4 + $0x58] sm:$0xff]
    %v2482 = vld [vmem:[#allocation4 + $0x60] sm:$0xf]
    %v2483 = vsel %vm2457, 1, 0
    %v2484 = vsel %vm2458, 1, 0
    %v2485 = vsel %vm2459, 1, 0
    %v2486 = vsel %vm2460, 1, 0
    %v2487 = vsel %vm2461, 1, 0
    %v2488 = vsel %vm2462, 1, 0
    %v2489 = vsel %vm2463, 1, 0
    %v2490 = vsel %vm2464, 1, 0
    %v2491 = vsel %vm2465, 1, 0
    %v2492 = vsel %vm2466, 1, 0
    %v2493 = vsel %vm2467, 1, 0
    %v2494 = vsel %vm2468, 1, 0
    %v2495 = vsel %vm2469, 1, 0
    %vm2496 = vcmp.eq.s32.totalorder %v2483, 1
    %vm2497 = vcmp.eq.s32.totalorder %v2484, 1
    %vm2498 = vcmp.eq.s32.totalorder %v2485, 1
    %vm2499 = vcmp.eq.s32.totalorder %v2486, 1
    %vm2500 = vcmp.eq.s32.totalorder %v2487, 1
    %vm2501 = vcmp.eq.s32.totalorder %v2488, 1
    %vm2502 = vcmp.eq.s32.totalorder %v2489, 1
    %vm2503 = vcmp.eq.s32.totalorder %v2490, 1
    %vm2504 = vcmp.eq.s32.totalorder %v2491, 1
    %vm2505 = vcmp.eq.s32.totalorder %v2492, 1
    %vm2506 = vcmp.eq.s32.totalorder %v2493, 1
    %vm2507 = vcmp.eq.s32.totalorder %v2494, 1
    %vm2508 = vcmp.eq.s32.totalorder %v2495, 1
    %v2509 = vsel %vm2496, 0.0, %v2470
    %v2510 = vsel %vm2497, 0.0, %v2471
    %v2511 = vsel %vm2498, 0.0, %v2472
    %v2512 = vsel %vm2499, 0.0, %v2473
    %v2513 = vsel %vm2500, 0.0, %v2474
    %v2514 = vsel %vm2501, 0.0, %v2475
    %v2515 = vsel %vm2502, 0.0, %v2476
    %v2516 = vsel %vm2503, 0.0, %v2477
    %v2517 = vsel %vm2504, 0.0, %v2478
    %v2518 = vsel %vm2505, 0.0, %v2479
    %v2519 = vsel %vm2506, 0.0, %v2480
    %v2520 = vsel %vm2507, 0.0, %v2481
    %v2521 = vsel %vm2508, 0.0, %v2482
    %vm2522 = vcmp.eq.s32.totalorder %v2444, 49
    %vm2523 = vcmp.eq.s32.totalorder %v2445, 49
    %vm2524 = vcmp.eq.s32.totalorder %v2446, 49
    %vm2525 = vcmp.eq.s32.totalorder %v2447, 49
    %vm2526 = vcmp.eq.s32.totalorder %v2448, 49
    %vm2527 = vcmp.eq.s32.totalorder %v2449, 49
    %vm2528 = vcmp.eq.s32.totalorder %v2450, 49
    %vm2529 = vcmp.eq.s32.totalorder %v2451, 49
    %vm2530 = vcmp.eq.s32.totalorder %v2452, 49
    %vm2531 = vcmp.eq.s32.totalorder %v2453, 49
    %vm2532 = vcmp.eq.s32.totalorder %v2454, 49
    %vm2533 = vcmp.eq.s32.totalorder %v2455, 49
    %vm2534 = vcmp.eq.s32.totalorder %v2456, 49
    %v2535 = vld [vmem:[#allocation4 + $0x2] sm:$0xff]
    %v2536 = vld [vmem:[#allocation4 + $0xa] sm:$0xff]
    %v2537 = vld [vmem:[#allocation4 + $0x12] sm:$0xff]
    %v2538 = vld [vmem:[#allocation4 + $0x1a] sm:$0xff]
    %v2539 = vld [vmem:[#allocation4 + $0x22] sm:$0xff]
    %v2540 = vld [vmem:[#allocation4 + $0x2a] sm:$0xff]
    %v2541 = vld [vmem:[#allocation4 + $0x32] sm:$0xff]
    %v2542 = vld [vmem:[#allocation4 + $0x3a] sm:$0xff]
    %v2543 = vld [vmem:[#allocation4 + $0x42] sm:$0xff]
    %v2544 = vld [vmem:[#allocation4 + $0x4a] sm:$0xff]
    %v2545 = vld [vmem:[#allocation4 + $0x52] sm:$0xff]
    %v2546 = vld [vmem:[#allocation4 + $0x5a] sm:$0xff]
    %v2547 = vld [vmem:[#allocation4 + $0x62] sm:$0xf]
    %v2548 = vsel %vm2522, 1, 0
    %v2549 = vsel %vm2523, 1, 0
    %v2550 = vsel %vm2524, 1, 0
    %v2551 = vsel %vm2525, 1, 0
    %v2552 = vsel %vm2526, 1, 0
    %v2553 = vsel %vm2527, 1, 0
    %v2554 = vsel %vm2528, 1, 0
    %v2555 = vsel %vm2529, 1, 0
    %v2556 = vsel %vm2530, 1, 0
    %v2557 = vsel %vm2531, 1, 0
    %v2558 = vsel %vm2532, 1, 0
    %v2559 = vsel %vm2533, 1, 0
    %v2560 = vsel %vm2534, 1, 0
    %vm2561 = vcmp.eq.s32.totalorder %v2548, 1
    %vm2562 = vcmp.eq.s32.totalorder %v2549, 1
    %vm2563 = vcmp.eq.s32.totalorder %v2550, 1
    %vm2564 = vcmp.eq.s32.totalorder %v2551, 1
    %vm2565 = vcmp.eq.s32.totalorder %v2552, 1
    %vm2566 = vcmp.eq.s32.totalorder %v2553, 1
    %vm2567 = vcmp.eq.s32.totalorder %v2554, 1
    %vm2568 = vcmp.eq.s32.totalorder %v2555, 1
    %vm2569 = vcmp.eq.s32.totalorder %v2556, 1
    %vm2570 = vcmp.eq.s32.totalorder %v2557, 1
    %vm2571 = vcmp.eq.s32.totalorder %v2558, 1
    %vm2572 = vcmp.eq.s32.totalorder %v2559, 1
    %vm2573 = vcmp.eq.s32.totalorder %v2560, 1
    %v2574 = vsel %vm2561, 0.0, %v2535
    %v2575 = vsel %vm2562, 0.0, %v2536
    %v2576 = vsel %vm2563, 0.0, %v2537
    %v2577 = vsel %vm2564, 0.0, %v2538
    %v2578 = vsel %vm2565, 0.0, %v2539
    %v2579 = vsel %vm2566, 0.0, %v2540
    %v2580 = vsel %vm2567, 0.0, %v2541
    %v2581 = vsel %vm2568, 0.0, %v2542
    %v2582 = vsel %vm2569, 0.0, %v2543
    %v2583 = vsel %vm2570, 0.0, %v2544
    %v2584 = vsel %vm2571, 0.0, %v2545
    %v2585 = vsel %vm2572, 0.0, %v2546
    %v2586 = vsel %vm2573, 0.0, %v2547
    %v2587 = vld [vmem:[#allocation8] sm:$0xff]
    %v2588 = vld [vmem:[#allocation8 + $0x8] sm:$0xff]
    %v2589 = vld [vmem:[#allocation8 + $0x10] sm:$0xff]
    %v2590 = vld [vmem:[#allocation8 + $0x18] sm:$0xff]
    %v2591 = vld [vmem:[#allocation8 + $0x20] sm:$0xff]
    %v2592 = vld [vmem:[#allocation8 + $0x28] sm:$0xff]
    %v2593 = vld [vmem:[#allocation8 + $0x30] sm:$0xff]
    %v2594 = vld [vmem:[#allocation8 + $0x38] sm:$0xff]
    %s2595 = scalar_lea.vmem [#allocation8], 64
    %v2596 = vld [vmem:[%s2595] sm:$0xff]
    %v2597 = vld [vmem:[%s2595 + $0x8] sm:$0xff]
    %v2598 = vld [vmem:[%s2595 + $0x10] sm:$0xff]
    %v2599 = vld [vmem:[%s2595 + $0x18] sm:$0xff]
    %v2600 = vld [vmem:[%s2595 + $0x20] sm:$0xff]
    %v2601 = vld [vmem:[%s2595 + $0x28] sm:$0xff]
    %v2602 = vld [vmem:[%s2595 + $0x30] sm:$0xff]
    %v2603 = vld [vmem:[%s2595 + $0x38] sm:$0xff]
    %v2605 = vsel %vm1911, %v1988, 0
    %v2608 = vsel %vm1911, %v1989, 0
    %v2611 = vsel %vm1911, %v1990, 0
    %v2614 = vsel %vm1911, %v1991, 0
    %v2617 = vsel %vm1911, %v1992, 0
    %v2620 = vsel %vm1911, %v1993, 0
    %v2623 = vsel %vm1911, %v1994, 0
    %v2626 = vsel %vm1911, %v1995, 0
    %v2629 = vsel %vm1911, %v1996, 0
    %v2632 = vsel %vm1911, %v1997, 0
    %v2635 = vsel %vm1911, %v1998, 0
    %v2638 = vsel %vm1911, %v1999, 0
    %v2641 = vsel %vm1911, %v2000, 0
    %2643 = vmatpush.msra.mxu0 0.0
    %2644 = vmatpush.msra.mxu0 0.0
    %2645 = vmatpush.msra.mxu0 0.0
    %2646 = vmatpush.msra.mxu0 0.0
    %2647 = vmatpush.msra.mxu0 0.0
    %2648 = vmatpush.msra.mxu0 0.0
    %2649 = vmatpush.msra.mxu0 0.0
    %2650 = vmatpush.msra.mxu0 0.0
    %2651 = vmatpush.msra.mxu0 %v2603
    %2652 = vmatpush.msra.mxu0 %v2602
    %2653 = vmatpush.msra.mxu0 %v2601
    %2654 = vmatpush.msra.mxu0 %v2600
    %2655 = vmatpush.msra.mxu0 %v2599
    %2656 = vmatpush.msra.mxu0 %v2598
    %2657 = vmatpush.msra.mxu0 %v2597
    %2658 = vmatpush.msra.mxu0 %v2596
    %2659 = vmatmul.f32.gmra.mxu0 %v2605
    %v2660 = vpop.f32.mrf.mxu0
    %v2661 = vadd.f32 0.0, %v2660
    %2662 = vmatmul.f32.gmra.mxu0 %v2608
    %v2663 = vpop.f32.mrf.mxu0
    %v2664 = vadd.f32 0.0, %v2663
    %2665 = vmatmul.f32.gmra.mxu0 %v2611
    %v2666 = vpop.f32.mrf.mxu0
    %v2667 = vadd.f32 0.0, %v2666
    %2668 = vmatmul.f32.gmra.mxu0 %v2614
    %v2669 = vpop.f32.mrf.mxu0
    %v2670 = vadd.f32 0.0, %v2669
    %2671 = vmatmul.f32.gmra.mxu0 %v2617
    %v2672 = vpop.f32.mrf.mxu0
    %v2673 = vadd.f32 0.0, %v2672
    %2674 = vmatmul.f32.gmra.mxu0 %v2620
    %v2675 = vpop.f32.mrf.mxu0
    %v2676 = vadd.f32 0.0, %v2675
    %2677 = vmatmul.f32.gmra.mxu0 %v2623
    %v2678 = vpop.f32.mrf.mxu0
    %v2679 = vadd.f32 0.0, %v2678
    %2680 = vmatmul.f32.gmra.mxu0 %v2626
    %v2681 = vpop.f32.mrf.mxu0
    %v2682 = vadd.f32 0.0, %v2681
    %2683 = vmatmul.f32.gmra.mxu0 %v2629
    %v2684 = vpop.f32.mrf.mxu0
    %v2685 = vadd.f32 0.0, %v2684
    %2686 = vmatmul.f32.gmra.mxu0 %v2632
    %v2687 = vpop.f32.mrf.mxu0
    %v2688 = vadd.f32 0.0, %v2687
    %2689 = vmatmul.f32.gmra.mxu0 %v2635
    %v2690 = vpop.f32.mrf.mxu0
    %v2691 = vadd.f32 0.0, %v2690
    %2692 = vmatmul.f32.gmra.mxu0 %v2638
    %v2693 = vpop.f32.mrf.mxu0
    %v2694 = vadd.f32 0.0, %v2693
    %2695 = vmatmul.f32.gmra.mxu0 %v2641
    %v2696 = vpop.f32.mrf.mxu0
    %v2697 = vadd.f32 0.0, %v2696
    %2698 = vdwg.mxu0
    %v2700 = vsel %vm1911, %v2509, 0
    %v2703 = vsel %vm1911, %v2510, 0
    %v2706 = vsel %vm1911, %v2511, 0
    %v2709 = vsel %vm1911, %v2512, 0
    %v2712 = vsel %vm1911, %v2513, 0
    %v2715 = vsel %vm1911, %v2514, 0
    %v2718 = vsel %vm1911, %v2515, 0
    %v2721 = vsel %vm1911, %v2516, 0
    %v2724 = vsel %vm1911, %v2517, 0
    %v2727 = vsel %vm1911, %v2518, 0
    %v2730 = vsel %vm1911, %v2519, 0
    %v2733 = vsel %vm1911, %v2520, 0
    %v2736 = vsel %vm1911, %v2521, 0
    %2738 = vmatpush.msra.mxu0 0.0
    %2739 = vmatpush.msra.mxu0 0.0
    %2740 = vmatpush.msra.mxu0 0.0
    %2741 = vmatpush.msra.mxu0 0.0
    %2742 = vmatpush.msra.mxu0 0.0
    %2743 = vmatpush.msra.mxu0 0.0
    %2744 = vmatpush.msra.mxu0 0.0
    %2745 = vmatpush.msra.mxu0 0.0
    %2746 = vmatpush.msra.mxu0 %v2594
    %2747 = vmatpush.msra.mxu0 %v2593
    %2748 = vmatpush.msra.mxu0 %v2592
    %2749 = vmatpush.msra.mxu0 %v2591
    %2750 = vmatpush.msra.mxu0 %v2590
    %2751 = vmatpush.msra.mxu0 %v2589
    %2752 = vmatpush.msra.mxu0 %v2588
    %2753 = vmatpush.msra.mxu0 %v2587
    %2754 = vmatmul.f32.gmra.mxu0 %v2700
    %v2755 = vpop.f32.mrf.mxu0
    %v2756 = vadd.f32 %v2661, %v2755
    %2757 = vmatmul.f32.gmra.mxu0 %v2703
    %v2758 = vpop.f32.mrf.mxu0
    %v2759 = vadd.f32 %v2664, %v2758
    %2760 = vmatmul.f32.gmra.mxu0 %v2706
    %v2761 = vpop.f32.mrf.mxu0
    %v2762 = vadd.f32 %v2667, %v2761
    %2763 = vmatmul.f32.gmra.mxu0 %v2709
    %v2764 = vpop.f32.mrf.mxu0
    %v2765 = vadd.f32 %v2670, %v2764
    %2766 = vmatmul.f32.gmra.mxu0 %v2712
    %v2767 = vpop.f32.mrf.mxu0
    %v2768 = vadd.f32 %v2673, %v2767
    %2769 = vmatmul.f32.gmra.mxu0 %v2715
    %v2770 = vpop.f32.mrf.mxu0
    %v2771 = vadd.f32 %v2676, %v2770
    %2772 = vmatmul.f32.gmra.mxu0 %v2718
    %v2773 = vpop.f32.mrf.mxu0
    %v2774 = vadd.f32 %v2679, %v2773
    %2775 = vmatmul.f32.gmra.mxu0 %v2721
    %v2776 = vpop.f32.mrf.mxu0
    %v2777 = vadd.f32 %v2682, %v2776
    %2778 = vmatmul.f32.gmra.mxu0 %v2724
    %v2779 = vpop.f32.mrf.mxu0
    %v2780 = vadd.f32 %v2685, %v2779
    %2781 = vmatmul.f32.gmra.mxu0 %v2727
    %v2782 = vpop.f32.mrf.mxu0
    %v2783 = vadd.f32 %v2688, %v2782
    %2784 = vmatmul.f32.gmra.mxu0 %v2730
    %v2785 = vpop.f32.mrf.mxu0
    %v2786 = vadd.f32 %v2691, %v2785
    %2787 = vmatmul.f32.gmra.mxu0 %v2733
    %v2788 = vpop.f32.mrf.mxu0
    %v2789 = vadd.f32 %v2694, %v2788
    %2790 = vmatmul.f32.gmra.mxu0 %v2736
    %v2791 = vpop.f32.mrf.mxu0
    %v2792 = vadd.f32 %v2697, %v2791
    %2793 = vdwg.mxu0
    %s2794 = scalar_lea.vmem [#allocation8], 128
    %v2795 = vld [vmem:[%s2794] sm:$0xff]
    %v2796 = vld [vmem:[%s2794 + $0x8] sm:$0xff]
    %v2797 = vld [vmem:[%s2794 + $0x10] sm:$0xff]
    %v2798 = vld [vmem:[%s2794 + $0x18] sm:$0xff]
    %v2799 = vld [vmem:[%s2794 + $0x20] sm:$0xff]
    %v2800 = vld [vmem:[%s2794 + $0x28] sm:$0xff]
    %v2801 = vld [vmem:[%s2794 + $0x30] sm:$0xff]
    %v2802 = vld [vmem:[%s2794 + $0x38] sm:$0xff]
    %v2804 = vsel %vm1911, %v2574, 0
    %v2807 = vsel %vm1911, %v2575, 0
    %v2810 = vsel %vm1911, %v2576, 0
    %v2813 = vsel %vm1911, %v2577, 0
    %v2816 = vsel %vm1911, %v2578, 0
    %v2819 = vsel %vm1911, %v2579, 0
    %v2822 = vsel %vm1911, %v2580, 0
    %v2825 = vsel %vm1911, %v2581, 0
    %v2828 = vsel %vm1911, %v2582, 0
    %v2831 = vsel %vm1911, %v2583, 0
    %v2834 = vsel %vm1911, %v2584, 0
    %v2837 = vsel %vm1911, %v2585, 0
    %v2840 = vsel %vm1911, %v2586, 0
    %2842 = vmatpush.msra.mxu0 0.0
    %2843 = vmatpush.msra.mxu0 0.0
    %2844 = vmatpush.msra.mxu0 0.0
    %2845 = vmatpush.msra.mxu0 0.0
    %2846 = vmatpush.msra.mxu0 0.0
    %2847 = vmatpush.msra.mxu0 0.0
    %2848 = vmatpush.msra.mxu0 0.0
    %2849 = vmatpush.msra.mxu0 0.0
    %2850 = vmatpush.msra.mxu0 %v2802
    %2851 = vmatpush.msra.mxu0 %v2801
    %2852 = vmatpush.msra.mxu0 %v2800
    %2853 = vmatpush.msra.mxu0 %v2799
    %2854 = vmatpush.msra.mxu0 %v2798
    %2855 = vmatpush.msra.mxu0 %v2797
    %2856 = vmatpush.msra.mxu0 %v2796
    %2857 = vmatpush.msra.mxu0 %v2795
    %2858 = vmatmul.f32.gmra.mxu0 %v2804
    %v2859 = vpop.f32.mrf.mxu0
    %v2860 = vadd.f32 0.0, %v2859
    %2861 = vmatmul.f32.gmra.mxu0 %v2807
    %v2862 = vpop.f32.mrf.mxu0
    %v2863 = vadd.f32 0.0, %v2862
    %2864 = vmatmul.f32.gmra.mxu0 %v2810
    %v2865 = vpop.f32.mrf.mxu0
    %v2866 = vadd.f32 0.0, %v2865
    %2867 = vmatmul.f32.gmra.mxu0 %v2813
    %v2868 = vpop.f32.mrf.mxu0
    %v2869 = vadd.f32 0.0, %v2868
    %2870 = vmatmul.f32.gmra.mxu0 %v2816
    %v2871 = vpop.f32.mrf.mxu0
    %v2872 = vadd.f32 0.0, %v2871
    %2873 = vmatmul.f32.gmra.mxu0 %v2819
    %v2874 = vpop.f32.mrf.mxu0
    %v2875 = vadd.f32 0.0, %v2874
    %2876 = vmatmul.f32.gmra.mxu0 %v2822
    %v2877 = vpop.f32.mrf.mxu0
    %v2878 = vadd.f32 0.0, %v2877
    %2879 = vmatmul.f32.gmra.mxu0 %v2825
    %v2880 = vpop.f32.mrf.mxu0
    %v2881 = vadd.f32 0.0, %v2880
    %2882 = vmatmul.f32.gmra.mxu0 %v2828
    %v2883 = vpop.f32.mrf.mxu0
    %v2884 = vadd.f32 0.0, %v2883
    %2885 = vmatmul.f32.gmra.mxu0 %v2831
    %v2886 = vpop.f32.mrf.mxu0
    %v2887 = vadd.f32 0.0, %v2886
    %2888 = vmatmul.f32.gmra.mxu0 %v2834
    %v2889 = vpop.f32.mrf.mxu0
    %v2890 = vadd.f32 0.0, %v2889
    %2891 = vmatmul.f32.gmra.mxu0 %v2837
    %v2892 = vpop.f32.mrf.mxu0
    %v2893 = vadd.f32 0.0, %v2892
    %2894 = vmatmul.f32.gmra.mxu0 %v2840
    %v2895 = vpop.f32.mrf.mxu0
    %v2896 = vadd.f32 0.0, %v2895
    %2897 = vdwg.mxu0
    %v2898 = vadd.f32 %v2756, %v2860
    %v2899 = vadd.f32 %v2759, %v2863
    %v2900 = vadd.f32 %v2762, %v2866
    %v2901 = vadd.f32 %v2765, %v2869
    %v2902 = vadd.f32 %v2768, %v2872
    %v2903 = vadd.f32 %v2771, %v2875
    %v2904 = vadd.f32 %v2774, %v2878
    %v2905 = vadd.f32 %v2777, %v2881
    %v2906 = vadd.f32 %v2780, %v2884
    %v2907 = vadd.f32 %v2783, %v2887
    %v2908 = vadd.f32 %v2786, %v2890
    %v2909 = vadd.f32 %v2789, %v2893
    %v2910 = vadd.f32 %v2792, %v2896
    %v2911 = vld [vmem:[#allocation10] sm:$0x1]
    %v2913 = vperm.slane %v2911, 0
    %v2915 = vadd.f32 %v2898, %v2913
    %v2916 = vadd.f32 %v2899, %v2913
    %v2917 = vadd.f32 %v2900, %v2913
    %v2918 = vadd.f32 %v2901, %v2913
    %v2919 = vadd.f32 %v2902, %v2913
    %v2920 = vadd.f32 %v2903, %v2913
    %v2921 = vadd.f32 %v2904, %v2913
    %v2922 = vadd.f32 %v2905, %v2913
    %v2923 = vadd.f32 %v2906, %v2913
    %v2924 = vadd.f32 %v2907, %v2913
    %v2925 = vadd.f32 %v2908, %v2913
    %v2926 = vadd.f32 %v2909, %v2913
    %v2927 = vadd.f32 %v2910, %v2913
    %v2928 = vmax.f32 %v2915, 0.0
    %v2929 = vmax.f32 %v2916, 0.0
    %v2930 = vmax.f32 %v2917, 0.0
    %v2931 = vmax.f32 %v2918, 0.0
    %v2932 = vmax.f32 %v2919, 0.0
    %v2933 = vmax.f32 %v2920, 0.0
    %v2934 = vmax.f32 %v2921, 0.0
    %v2935 = vmax.f32 %v2922, 0.0
    %v2936 = vmax.f32 %v2923, 0.0
    %v2937 = vmax.f32 %v2924, 0.0
    %v2938 = vmax.f32 %v2925, 0.0
    %v2939 = vmax.f32 %v2926, 0.0
    %v2940 = vmax.f32 %v2927, 0.0
    %v2941 = vld [vmem:[%s7] sm:$0x1]
    %v2943 = vperm.slane %v2941, 0
    %v2945 = vmul.f32 %v2928, %v2943
    %v2946 = vmul.f32 %v2929, %v2943
    %v2947 = vmul.f32 %v2930, %v2943
    %v2948 = vmul.f32 %v2931, %v2943
    %v2949 = vmul.f32 %v2932, %v2943
    %v2950 = vmul.f32 %v2933, %v2943
    %v2951 = vmul.f32 %v2934, %v2943
    %v2952 = vmul.f32 %v2935, %v2943
    %v2953 = vmul.f32 %v2936, %v2943
    %v2954 = vmul.f32 %v2937, %v2943
    %v2955 = vmul.f32 %v2938, %v2943
    %v2956 = vmul.f32 %v2939, %v2943
    %v2957 = vmul.f32 %v2940, %v2943
    %v2958 = vld [vmem:[%s8] sm:$0x1]
    %v2960 = vperm.slane %v2958, 0
    %v2962 = vadd.f32 %v2945, %v2960
    %v2963 = vadd.f32 %v2946, %v2960
    %v2964 = vadd.f32 %v2947, %v2960
    %v2965 = vadd.f32 %v2948, %v2960
    %v2966 = vadd.f32 %v2949, %v2960
    %v2967 = vadd.f32 %v2950, %v2960
    %v2968 = vadd.f32 %v2951, %v2960
    %v2969 = vadd.f32 %v2952, %v2960
    %v2970 = vadd.f32 %v2953, %v2960
    %v2971 = vadd.f32 %v2954, %v2960
    %v2972 = vadd.f32 %v2955, %v2960
    %v2973 = vadd.f32 %v2956, %v2960
    %v2974 = vadd.f32 %v2957, %v2960
    %2975 = vst [vmem:[#allocation5] sm:$0xff] %v2962
    %2976 = vst [vmem:[#allocation5 + $0x8] sm:$0xff] %v2963
    %2977 = vst [vmem:[#allocation5 + $0x10] sm:$0xff] %v2964
    %2978 = vst [vmem:[#allocation5 + $0x18] sm:$0xff] %v2965
    %2979 = vst [vmem:[#allocation5 + $0x20] sm:$0xff] %v2966
    %2980 = vst [vmem:[#allocation5 + $0x28] sm:$0xff] %v2967
    %2981 = vst [vmem:[#allocation5 + $0x30] sm:$0xff] %v2968
    %2982 = vst [vmem:[#allocation5 + $0x38] sm:$0xff] %v2969
    %2983 = vst [vmem:[#allocation5 + $0x40] sm:$0xff] %v2970
    %2984 = vst [vmem:[#allocation5 + $0x48] sm:$0xff] %v2971
    %2985 = vst [vmem:[#allocation5 + $0x50] sm:$0xff] %v2972
    %2986 = vst [vmem:[#allocation5 + $0x58] sm:$0xff] %v2973
    %2987 = vst [vmem:[#allocation5 + $0x60] sm:$0xf] %v2974
    %v2988 = vld [vmem:[#allocation5] ss:$2 sm:$0xff]
    %s2989 = scalar_lea.vmem [#allocation5], 16
    %v2990 = vld [vmem:[%s2989] ss:$2 sm:$0xff]
    %s2991 = scalar_lea.vmem [#allocation5], 32
    %v2992 = vld [vmem:[%s2991] ss:$2 sm:$0xff]
    %s2993 = scalar_lea.vmem [#allocation5], 48
    %v2994 = vld [vmem:[%s2993] ss:$2 sm:$0xff]
    %s2995 = scalar_lea.vmem [#allocation5], 64
    %v2996 = vld [vmem:[%s2995] ss:$2 sm:$0xff]
    %s2997 = scalar_lea.vmem [#allocation5], 80
    %v2998 = vld [vmem:[%s2997] ss:$2 sm:$0xff]
    %s2999 = scalar_lea.vmem [#allocation5], 96
    %v3000 = vld [vmem:[%s2999] ss:$2 sm:$0x3]
    %s3001 = scalar_lea.vmem [#allocation5], 1
    %v3002 = vld [vmem:[%s3001] ss:$2 sm:$0xff]
    %s3003 = scalar_lea.vmem [#allocation5], 17
    %v3004 = vld [vmem:[%s3003] ss:$2 sm:$0xff]
    %s3005 = scalar_lea.vmem [#allocation5], 33
    %v3006 = vld [vmem:[%s3005] ss:$2 sm:$0xff]
    %s3007 = scalar_lea.vmem [#allocation5], 49
    %v3008 = vld [vmem:[%s3007] ss:$2 sm:$0xff]
    %s3009 = scalar_lea.vmem [#allocation5], 65
    %v3010 = vld [vmem:[%s3009] ss:$2 sm:$0xff]
    %s3011 = scalar_lea.vmem [#allocation5], 81
    %v3012 = vld [vmem:[%s3011] ss:$2 sm:$0xff]
    %s3013 = scalar_lea.vmem [#allocation5], 97
    %v3014 = vld [vmem:[%s3013] ss:$2 sm:$0x3]
    %v3015 = vmax.f32 %v2988, %v3002
    %v3016 = vmax.f32 %v2990, %v3004
    %v3017 = vmax.f32 %v2992, %v3006
    %v3018 = vmax.f32 %v2994, %v3008
    %v3019 = vmax.f32 %v2996, %v3010
    %v3020 = vmax.f32 %v2998, %v3012
    %v3021 = vmax.f32 %v3000, %v3014
    %3022 = vst [vmem:[%s9] sm:$0xff] %v3015
    %3023 = vst [vmem:[%s9 + $0x8] sm:$0xff] %v3016
    %3024 = vst [vmem:[%s9 + $0x10] sm:$0xff] %v3017
    %3025 = vst [vmem:[%s9 + $0x18] sm:$0xff] %v3018
    %3026 = vst [vmem:[%s9 + $0x20] sm:$0xff] %v3019
    %3027 = vst [vmem:[%s9 + $0x28] sm:$0xff] %v3020
    %3028 = vst [vmem:[%s9 + $0x30] sm:$0x3] %v3021
    // Predicated region
    $region50: #{regression_model_forward.2} parent=1 // pred_check
      _
    $region51: #{regression_model_forward.2} parent=1 // pred_check_branch
      %3030 = sbr.rel (0) target = $region53
    $region52: #{regression_model_forward.2} parent=1 // pred_region
      _
    $region53: #{regression_model_forward.2} parent=1 // pred_fallthru
      _
    // Predicated region
    $region54: #{regression_model_forward.2} parent=1 // pred_check
      _
    $region55: #{regression_model_forward.2} parent=1 // pred_check_branch
      %3032 = sbr.rel (0) target = $region57
    $region56: #{regression_model_forward.2} parent=1 // pred_region
      _
    $region57: #{regression_model_forward.2} parent=1 // pred_fallthru
      _
    %3033 = vsyncpa [#allocation7], 1
    %3034 = vsyncpa [#allocation9], 1

// kernel: regression_model_forward.3
$region0: #{regression_model_forward.3}
  #allocation0 [shape = 'u32[]', space=smem, size = 0x4, offset = 0x4, fixed_abs, tag = 'smem constant byte address 0x4 - core index']
  #allocation1 [shape = 'u32[72,128]{1,0:T(1,128)}', space=vmem, size = 0x9000, scoped, tag = 'internal scratch']
  #allocation2 [shape = 'f32[2,512]{1,0:T(2,128)}', space=vmem, size = 0x1000, scoped, tag = 'scratch operand']
  %s0 = inlined_call_operand.vmem [shape: f32[2,3200], index: 0, kind: input, shape index: {}]
  %s1 = inlined_call_operand.hbm [shape: bf16[3200,512], index: 1, kind: input, shape index: {}]
  %s2 = inlined_call_operand.hbm [shape: f32[1,512], index: 2, kind: input, shape index: {}]
  %s3 = inlined_call_operand.vmem [shape: f32[1,512], index: 3, kind: input, shape index: {}]
  %s4 = inlined_call_operand.vmem [shape: f32[1,512], index: 4, kind: input, shape index: {}]
  %s5 = inlined_call_operand.hbm [shape: bf16[512,256], index: 5, kind: input, shape index: {}]
  %s6 = inlined_call_operand.hbm [shape: f32[1,256], index: 6, kind: input, shape index: {}]
  %s7 = inlined_call_operand.vmem [shape: f32[1,256], index: 7, kind: input, shape index: {}]
  %s8 = inlined_call_operand.vmem [shape: f32[1,256], index: 8, kind: input, shape index: {}]
  %s9 = inlined_call_operand.hbm [shape: bf16[256,768], index: 9, kind: input, shape index: {}]
  %s10 = inlined_call_operand.vmem [shape: f32[1,768], index: 10, kind: input, shape index: {}]
  %s11 = inlined_call_operand.vmem [shape: f32[2,768], index: 11, kind: output, shape index: {}]
  %s12 = sld [smem:[#allocation0]]
  $region105: #{regression_model_forward.3} parent=0
    _
  %s14 = ssub.s32 1, %s12
  %s15 = scalar_select 0, %s14, %s12
  $region1: #{regression_model_forward.3} parent=0
    #allocation3 [shape = 'u8[3276800]{0}', space=vmem, size = 0x320000, scoped, tag = 'input window, operand 1']
    #allocation4 [shape = 's32[2]{0}', space=sflag, size = 0x8, scoped, tag = 'scoped memory for regression_model_forward.3']
    #allocation5 [shape = 'u8[2048]{0}', space=vmem, size = 0x800, scoped, tag = 'input window, operand 2, single buffered']
    #allocation6 [shape = 's32[1]{0}', space=sflag, size = 0x4, scoped, tag = 'scoped memory for regression_model_forward.3']
    #allocation7 [shape = 'u8[262144]{0}', space=vmem, size = 0x40000, scoped, tag = 'input window, operand 5, single buffered']
    #allocation8 [shape = 'u8[1024]{0}', space=vmem, size = 0x400, scoped, tag = 'input window, operand 6, single buffered']
    #allocation9 [shape = 's32[1]{0}', space=sflag, size = 0x4, scoped, tag = 'scoped memory for regression_model_forward.3']
    #allocation10 [shape = 'u8[393216]{0}', space=vmem, size = 0x60000, scoped, tag = 'input window, operand 9, single buffered']
    %16 = vsyncpa [#allocation4], 0
    %s17 = scalar_lea.sflag [#allocation4], 1
    %18 = vsyncpa %s17, 0
    %19 = vsyncpa [#allocation6], 0
    %20 = vsyncpa [#allocation9], 0
    loop: start=0, step=1, limit=4
    $region2: #{regression_model_forward.3} parent=1 // loop_pre_header
      _
    $region3: #{regression_model_forward.3} parent=1 // loop_header
      %s22 = sphi 0, %s26
      %p23 = scmp.ge.s32.totalorder %s22, 4
      %s30 = sphi 0, %s30
      %s32 = sphi 0, %s30
      %s33 = sphi 0, %s32
      %s47 = sphi 0, %s33
      %s53 = sphi 0, %s55
      %s56 = sphi 0, %s53
      %s57 = sphi 0, %s56
      %s73 = sphi 0, %s57
      %s77 = sphi 0, %s77
      %s79 = sphi 0, %s77
      %s80 = sphi 0, %s79
      %s94 = sphi 0, %s80
      %s98 = sphi 0, %s98
      %s100 = sphi 0, %s98
      %s101 = sphi 0, %s100
      %s115 = sphi 0, %s101
      %s119 = sphi 0, %s119
      %s121 = sphi 0, %s119
      %s122 = sphi 0, %s121
      %s136 = sphi 0, %s122
      %s140 = sphi 0, %s140
      %s142 = sphi 0, %s140
      %s143 = sphi 0, %s142
      %s157 = sphi 0, %s143
      %s161 = sphi 0, %s161
      %s163 = sphi 0, %s161
      %s164 = sphi 0, %s163
      %s178 = sphi 0, %s164
      %s182 = sphi 0, %s182
      %s184 = sphi 0, %s182
      %s185 = sphi 0, %s184
      %s199 = sphi 0, %s185
      %s203 = sphi 0, %s203
      %s205 = sphi 0, %s203
      %s206 = sphi 0, %s205
      %s220 = sphi 0, %s206
      %s224 = sphi 0, %s224
      %s226 = sphi 0, %s224
      %s227 = sphi 0, %s226
      %s241 = sphi 0, %s227
      %s245 = sphi 0, %s245
      %s247 = sphi 0, %s245
      %s248 = sphi 0, %s247
      %s262 = sphi 0, %s248
      %s266 = sphi 0, %s266
      %s268 = sphi 0, %s266
      %s269 = sphi 0, %s268
      %s283 = sphi 0, %s269
    $region4: #{regression_model_forward.3} parent=1 // loop_header_branch
      %25 = sbr.rel (%p23) target = $region8
    $region5: #{regression_model_forward.3} parent=1 // loop_body
      %s27 = ssub.s32 %s22, 1
      %s28 = ssub.s32 %s22, 2
      %s29 = sadd.s32 %s22, 1
      %s31 = sadd.s32 %s30, 1
      %p34 = scmp.eq.s32.totalorder %s22, 1
      %p35 = scmp.ne.s32.totalorder %s30, %s32
      %p36 = scmp.eq.s32.totalorder %s22, 0
      %p37 = por %p35, %p36
      %p38 = scmp.ne.s32.totalorder %s30, %s32
      %p39 = scmp.eq.s32.totalorder %s27, 1
      %p40 = por %p38, %p39
      %p41 = scmp.ne.s32.totalorder %s32, %s33
      %p42 = scmp.eq.s32.totalorder %s27, 0
      %p43 = por %p41, %p42
      %p44 = scmp.ne.s32.totalorder %s32, %s33
      %p45 = scmp.eq.s32.totalorder %s28, 1
      %p46 = por %p44, %p45
      %p48 = scmp.ne.s32.totalorder %s33, %s47
      %p49 = scmp.eq.s32.totalorder %s28, 0
      %p50 = por %p48, %p49
      %s51 = ssub.s32 %s22, %s29
      %p52 = scmp.eq.s32.totalorder %s51, 0
      %s54 = sadd.s32 %s53, 1
      %s55 = scalar_select %p52, %s53, %s54
      %p58 = pneg %p52
      %p59 = scmp.eq.s32.totalorder %s22, 1
      %p60 = por %p58, %p59
      %p61 = scmp.ne.s32.totalorder %s53, %s56
      %p62 = scmp.eq.s32.totalorder %s22, 0
      %p63 = por %p61, %p62
      %p64 = scmp.ne.s32.totalorder %s53, %s56
      %p65 = scmp.eq.s32.totalorder %s27, 1
      %p66 = por %p64, %p65
      %p67 = scmp.ne.s32.totalorder %s56, %s57
      %p68 = scmp.eq.s32.totalorder %s27, 0
      %p69 = por %p67, %p68
      %p70 = scmp.ne.s32.totalorder %s56, %s57
      %p71 = scmp.eq.s32.totalorder %s28, 1
      %p72 = por %p70, %p71
      %p74 = scmp.ne.s32.totalorder %s57, %s73
      %p75 = scmp.eq.s32.totalorder %s28, 0
      %p76 = por %p74, %p75
      %s78 = sadd.s32 %s77, 1
      %p81 = scmp.eq.s32.totalorder %s22, 1
      %p82 = scmp.ne.s32.totalorder %s77, %s79
      %p83 = scmp.eq.s32.totalorder %s22, 0
      %p84 = por %p82, %p83
      %p85 = scmp.ne.s32.totalorder %s77, %s79
      %p86 = scmp.eq.s32.totalorder %s27, 1
      %p87 = por %p85, %p86
      %p88 = scmp.ne.s32.totalorder %s79, %s80
      %p89 = scmp.eq.s32.totalorder %s27, 0
      %p90 = por %p88, %p89
      %p91 = scmp.ne.s32.totalorder %s79, %s80
      %p92 = scmp.eq.s32.totalorder %s28, 1
      %p93 = por %p91, %p92
      %p95 = scmp.ne.s32.totalorder %s80, %s94
      %p96 = scmp.eq.s32.totalorder %s28, 0
      %p97 = por %p95, %p96
      %s99 = sadd.s32 %s98, 1
      %p102 = scmp.eq.s32.totalorder %s22, 1
      %p103 = scmp.ne.s32.totalorder %s98, %s100
      %p104 = scmp.eq.s32.totalorder %s22, 0
      %p105 = por %p103, %p104
      %p106 = scmp.ne.s32.totalorder %s98, %s100
      %p107 = scmp.eq.s32.totalorder %s27, 1
      %p108 = por %p106, %p107
      %p109 = scmp.ne.s32.totalorder %s100, %s101
      %p110 = scmp.eq.s32.totalorder %s27, 0
      %p111 = por %p109, %p110
      %p112 = scmp.ne.s32.totalorder %s100, %s101
      %p113 = scmp.eq.s32.totalorder %s28, 1
      %p114 = por %p112, %p113
      %p116 = scmp.ne.s32.totalorder %s101, %s115
      %p117 = scmp.eq.s32.totalorder %s28, 0
      %p118 = por %p116, %p117
      %s120 = sadd.s32 %s119, 1
      %p123 = scmp.eq.s32.totalorder %s22, 1
      %p124 = scmp.ne.s32.totalorder %s119, %s121
      %p125 = scmp.eq.s32.totalorder %s22, 0
      %p126 = por %p124, %p125
      %p127 = scmp.ne.s32.totalorder %s119, %s121
      %p128 = scmp.eq.s32.totalorder %s27, 1
      %p129 = por %p127, %p128
      %p130 = scmp.ne.s32.totalorder %s121, %s122
      %p131 = scmp.eq.s32.totalorder %s27, 0
      %p132 = por %p130, %p131
      %p133 = scmp.ne.s32.totalorder %s121, %s122
      %p134 = scmp.eq.s32.totalorder %s28, 1
      %p135 = por %p133, %p134
      %p137 = scmp.ne.s32.totalorder %s122, %s136
      %p138 = scmp.eq.s32.totalorder %s28, 0
      %p139 = por %p137, %p138
      %s141 = sadd.s32 %s140, 1
      %p144 = scmp.eq.s32.totalorder %s22, 1
      %p145 = scmp.ne.s32.totalorder %s140, %s142
      %p146 = scmp.eq.s32.totalorder %s22, 0
      %p147 = por %p145, %p146
      %p148 = scmp.ne.s32.totalorder %s140, %s142
      %p149 = scmp.eq.s32.totalorder %s27, 1
      %p150 = por %p148, %p149
      %p151 = scmp.ne.s32.totalorder %s142, %s143
      %p152 = scmp.eq.s32.totalorder %s27, 0
      %p153 = por %p151, %p152
      %p154 = scmp.ne.s32.totalorder %s142, %s143
      %p155 = scmp.eq.s32.totalorder %s28, 1
      %p156 = por %p154, %p155
      %p158 = scmp.ne.s32.totalorder %s143, %s157
      %p159 = scmp.eq.s32.totalorder %s28, 0
      %p160 = por %p158, %p159
      %s162 = sadd.s32 %s161, 1
      %p165 = scmp.eq.s32.totalorder %s22, 1
      %p166 = scmp.ne.s32.totalorder %s161, %s163
      %p167 = scmp.eq.s32.totalorder %s22, 0
      %p168 = por %p166, %p167
      %p169 = scmp.ne.s32.totalorder %s161, %s163
      %p170 = scmp.eq.s32.totalorder %s27, 1
      %p171 = por %p169, %p170
      %p172 = scmp.ne.s32.totalorder %s163, %s164
      %p173 = scmp.eq.s32.totalorder %s27, 0
      %p174 = por %p172, %p173
      %p175 = scmp.ne.s32.totalorder %s163, %s164
      %p176 = scmp.eq.s32.totalorder %s28, 1
      %p177 = por %p175, %p176
      %p179 = scmp.ne.s32.totalorder %s164, %s178
      %p180 = scmp.eq.s32.totalorder %s28, 0
      %p181 = por %p179, %p180
      %s183 = sadd.s32 %s182, 1
      %p186 = scmp.eq.s32.totalorder %s22, 1
      %p187 = scmp.ne.s32.totalorder %s182, %s184
      %p188 = scmp.eq.s32.totalorder %s22, 0
      %p189 = por %p187, %p188
      %p190 = scmp.ne.s32.totalorder %s182, %s184
      %p191 = scmp.eq.s32.totalorder %s27, 1
      %p192 = por %p190, %p191
      %p193 = scmp.ne.s32.totalorder %s184, %s185
      %p194 = scmp.eq.s32.totalorder %s27, 0
      %p195 = por %p193, %p194
      %p196 = scmp.ne.s32.totalorder %s184, %s185
      %p197 = scmp.eq.s32.totalorder %s28, 1
      %p198 = por %p196, %p197
      %p200 = scmp.ne.s32.totalorder %s185, %s199
      %p201 = scmp.eq.s32.totalorder %s28, 0
      %p202 = por %p200, %p201
      %s204 = sadd.s32 %s203, 1
      %p207 = scmp.eq.s32.totalorder %s22, 1
      %p208 = scmp.ne.s32.totalorder %s203, %s205
      %p209 = scmp.eq.s32.totalorder %s22, 0
      %p210 = por %p208, %p209
      %p211 = scmp.ne.s32.totalorder %s203, %s205
      %p212 = scmp.eq.s32.totalorder %s27, 1
      %p213 = por %p211, %p212
      %p214 = scmp.ne.s32.totalorder %s205, %s206
      %p215 = scmp.eq.s32.totalorder %s27, 0
      %p216 = por %p214, %p215
      %p217 = scmp.ne.s32.totalorder %s205, %s206
      %p218 = scmp.eq.s32.totalorder %s28, 1
      %p219 = por %p217, %p218
      %p221 = scmp.ne.s32.totalorder %s206, %s220
      %p222 = scmp.eq.s32.totalorder %s28, 0
      %p223 = por %p221, %p222
      %s225 = sadd.s32 %s224, 1
      %p228 = scmp.eq.s32.totalorder %s22, 1
      %p229 = scmp.ne.s32.totalorder %s224, %s226
      %p230 = scmp.eq.s32.totalorder %s22, 0
      %p231 = por %p229, %p230
      %p232 = scmp.ne.s32.totalorder %s224, %s226
      %p233 = scmp.eq.s32.totalorder %s27, 1
      %p234 = por %p232, %p233
      %p235 = scmp.ne.s32.totalorder %s226, %s227
      %p236 = scmp.eq.s32.totalorder %s27, 0
      %p237 = por %p235, %p236
      %p238 = scmp.ne.s32.totalorder %s226, %s227
      %p239 = scmp.eq.s32.totalorder %s28, 1
      %p240 = por %p238, %p239
      %p242 = scmp.ne.s32.totalorder %s227, %s241
      %p243 = scmp.eq.s32.totalorder %s28, 0
      %p244 = por %p242, %p243
      %s246 = sadd.s32 %s245, 1
      %p249 = scmp.eq.s32.totalorder %s22, 1
      %p250 = scmp.ne.s32.totalorder %s245, %s247
      %p251 = scmp.eq.s32.totalorder %s22, 0
      %p252 = por %p250, %p251
      %p253 = scmp.ne.s32.totalorder %s245, %s247
      %p254 = scmp.eq.s32.totalorder %s27, 1
      %p255 = por %p253, %p254
      %p256 = scmp.ne.s32.totalorder %s247, %s248
      %p257 = scmp.eq.s32.totalorder %s27, 0
      %p258 = por %p256, %p257
      %p259 = scmp.ne.s32.totalorder %s247, %s248
      %p260 = scmp.eq.s32.totalorder %s28, 1
      %p261 = por %p259, %p260
      %p263 = scmp.ne.s32.totalorder %s248, %s262
      %p264 = scmp.eq.s32.totalorder %s28, 0
      %p265 = por %p263, %p264
      %s267 = sadd.s32 %s266, 1
      %p270 = scmp.eq.s32.totalorder %s22, 1
      %p271 = scmp.ne.s32.totalorder %s266, %s268
      %p272 = scmp.eq.s32.totalorder %s22, 0
      %p273 = por %p271, %p272
      %p274 = scmp.ne.s32.totalorder %s266, %s268
      %p275 = scmp.eq.s32.totalorder %s27, 1
      %p276 = por %p274, %p275
      %p277 = scmp.ne.s32.totalorder %s268, %s269
      %p278 = scmp.eq.s32.totalorder %s27, 0
      %p279 = por %p277, %p278
      %p280 = scmp.ne.s32.totalorder %s268, %s269
      %p281 = scmp.eq.s32.totalorder %s28, 1
      %p282 = por %p280, %p281
      %p284 = scmp.ne.s32.totalorder %s269, %s283
      %p285 = scmp.eq.s32.totalorder %s28, 0
      %p286 = por %p284, %p285
      %p287 = scmp.le.s32.totalorder 1, %s22
      %p288 = scmp.lt.s32.totalorder %s22, 3
      %p289 = pnand %p287, %p288
      %p290 = pneg %p289
      // Predicated region
      $region9: #{regression_model_forward.3} parent=5 // pred_check
        _
      $region10: #{regression_model_forward.3} parent=5 // pred_check_branch
        %292 = sbr.rel (%p289) target = $region12
      $region11: #{regression_model_forward.3} parent=5 // pred_region
        %s293 = ssub.s32 %s22, 1
        // Predicated region
        $region13: #{regression_model_forward.3} parent=11 // pred_check
          %p294 = pneg %p43
        $region14: #{regression_model_forward.3} parent=11 // pred_check_branch
          %296 = sbr.rel (%p294) target = $region16
        $region15: #{regression_model_forward.3} parent=11 // pred_region
          _
        $region16: #{regression_model_forward.3} parent=11 // pred_fallthru
          _
        // Predicated region
        $region17: #{regression_model_forward.3} parent=11 // pred_check
          %p297 = pneg %p90
        $region18: #{regression_model_forward.3} parent=11 // pred_check_branch
          %299 = sbr.rel (%p297) target = $region20
        $region19: #{regression_model_forward.3} parent=11 // pred_region
          %301 = vsyncadd [#allocation6], 0
          %s303 = sshll.u32 %s2, 4
          %s304 = int_to_ptr.hbm [resolvable:$true] %s303
          %s305 = sshll.u32 [#allocation5], 4
          %s306 = int_to_ptr.vmem [resolvable:$true] %s305
          %308 = dma.hbm_to_vmem [thread:$0]  %s304, 64, %s306, [#allocation6]
        $region20: #{regression_model_forward.3} parent=11 // pred_fallthru
          _
        // Predicated region
        $region21: #{regression_model_forward.3} parent=11 // pred_check
          %p309 = pneg %p111
        $region22: #{regression_model_forward.3} parent=11 // pred_check_branch
          %311 = sbr.rel (%p309) target = $region24
        $region23: #{regression_model_forward.3} parent=11 // pred_region
          _
        $region24: #{regression_model_forward.3} parent=11 // pred_fallthru
          _
        // Predicated region
        $region25: #{regression_model_forward.3} parent=11 // pred_check
          %p312 = pneg %p132
        $region26: #{regression_model_forward.3} parent=11 // pred_check_branch
          %314 = sbr.rel (%p312) target = $region28
        $region27: #{regression_model_forward.3} parent=11 // pred_region
          _
        $region28: #{regression_model_forward.3} parent=11 // pred_fallthru
          _
        // Predicated region
        $region29: #{regression_model_forward.3} parent=11 // pred_check
          %p315 = pneg %p153
        $region30: #{regression_model_forward.3} parent=11 // pred_check_branch
          %317 = sbr.rel (%p315) target = $region32
        $region31: #{regression_model_forward.3} parent=11 // pred_region
          %319 = vsyncadd [#allocation6], 0
          %s320 = sshll.u32 %s5, 4
          %s321 = int_to_ptr.hbm [resolvable:$true] %s320
          %s322 = sshll.u32 [#allocation7], 4
          %s323 = int_to_ptr.vmem [resolvable:$true] %s322
          %328 = dma.hbm_to_vmem [thread:$0]  %s321, 8192, %s323, [#allocation6], 128, 128, 8
        $region32: #{regression_model_forward.3} parent=11 // pred_fallthru
          _
        // Predicated region
        $region33: #{regression_model_forward.3} parent=11 // pred_check
          %p329 = pneg %p174
        $region34: #{regression_model_forward.3} parent=11 // pred_check_branch
          %331 = sbr.rel (%p329) target = $region36
        $region35: #{regression_model_forward.3} parent=11 // pred_region
          %333 = vsyncadd [#allocation9], 0
          %s335 = sshll.u32 %s6, 4
          %s336 = int_to_ptr.hbm [resolvable:$true] %s335
          %s337 = sshll.u32 [#allocation8], 4
          %s338 = int_to_ptr.vmem [resolvable:$true] %s337
          %340 = dma.hbm_to_vmem [thread:$0]  %s336, 32, %s338, [#allocation9]
        $region36: #{regression_model_forward.3} parent=11 // pred_fallthru
          _
        // Predicated region
        $region37: #{regression_model_forward.3} parent=11 // pred_check
          %p341 = pneg %p195
        $region38: #{regression_model_forward.3} parent=11 // pred_check_branch
          %343 = sbr.rel (%p341) target = $region40
        $region39: #{regression_model_forward.3} parent=11 // pred_region
          _
        $region40: #{regression_model_forward.3} parent=11 // pred_fallthru
          _
        // Predicated region
        $region41: #{regression_model_forward.3} parent=11 // pred_check
          %p344 = pneg %p216
        $region42: #{regression_model_forward.3} parent=11 // pred_check_branch
          %346 = sbr.rel (%p344) target = $region44
        $region43: #{regression_model_forward.3} parent=11 // pred_region
          _
        $region44: #{regression_model_forward.3} parent=11 // pred_fallthru
          _
        // Predicated region
        $region45: #{regression_model_forward.3} parent=11 // pred_check
          %p347 = pneg %p237
        $region46: #{regression_model_forward.3} parent=11 // pred_check_branch
          %349 = sbr.rel (%p347) target = $region48
        $region47: #{regression_model_forward.3} parent=11 // pred_region
          %351 = vsyncadd [#allocation9], 0
          %s352 = sshll.u32 %s9, 4
          %s353 = int_to_ptr.hbm [resolvable:$true] %s352
          %s354 = sshll.u32 [#allocation10], 4
          %s355 = int_to_ptr.vmem [resolvable:$true] %s354
          %360 = dma.hbm_to_vmem [thread:$0]  %s353, 12288, %s355, [#allocation9], 384, 384, 24
        $region48: #{regression_model_forward.3} parent=11 // pred_fallthru
          _
        // Predicated region
        $region49: #{regression_model_forward.3} parent=11 // pred_check
          %p361 = pneg %p258
        $region50: #{regression_model_forward.3} parent=11 // pred_check_branch
          %363 = sbr.rel (%p361) target = $region52
        $region51: #{regression_model_forward.3} parent=11 // pred_region
          _
        $region52: #{regression_model_forward.3} parent=11 // pred_fallthru
          _
      $region12: #{regression_model_forward.3} parent=5 // pred_fallthru
        _
      %p364 = scmp.lt.s32.totalorder %s22, 2
      // Predicated region
      $region53: #{regression_model_forward.3} parent=5 // pred_check
        %p365 = pneg %p364
      $region54: #{regression_model_forward.3} parent=5 // pred_check_branch
        %367 = sbr.rel (%p365) target = $region56
      $region55: #{regression_model_forward.3} parent=5 // pred_region
        // Predicated region
        $region57: #{regression_model_forward.3} parent=55 // pred_check
          %p368 = pneg %p63
        $region58: #{regression_model_forward.3} parent=55 // pred_check_branch
          %370 = sbr.rel (%p368) target = $region60
        $region59: #{regression_model_forward.3} parent=55 // pred_region
          %s371 = sand.u32 %s53, 1
          %s372 = scalar_lea.sflag [#allocation4], %s371
          %s373 = sand.u32 %s53, 1
          %s374 = smul.addr %s373, 3200
          %s375 = scalar_lea.vmem [#allocation3], %s374
          %s376 = smul.u32 2, %s22
          %378 = vsyncadd %s372, 0
          %s379 = smul.addr %s376, 4
          %s380 = scalar_lea.hbm %s1, %s379
          %s381 = sshll.u32 %s380, 4
          %s382 = int_to_ptr.hbm [resolvable:$true] %s381
          %s383 = sshll.u32 %s375, 4
          %s384 = int_to_ptr.vmem [resolvable:$true] %s383
          %389 = dma.hbm_to_vmem [thread:$0]  %s382, 51200, %s384, %s372, 256, 128, 8
        $region60: #{regression_model_forward.3} parent=55 // pred_fallthru
          _
      $region56: #{regression_model_forward.3} parent=5 // pred_fallthru
        _
      %p390 = scmp.le.s32.totalorder 1, %s22
      %p391 = scmp.lt.s32.totalorder %s22, 3
      %p392 = pnand %p390, %p391
      %p393 = pneg %p392
      // Predicated region
      $region61: #{regression_model_forward.3} parent=5 // pred_check
        _
      $region62: #{regression_model_forward.3} parent=5 // pred_check_branch
        %395 = sbr.rel (%p392) target = $region64
      $region63: #{regression_model_forward.3} parent=5 // pred_region
        %s396 = ssub.s32 %s22, 1
        %s397 = sand.u32 %s56, 1
        %s398 = scalar_lea.sflag [#allocation4], %s397
        %s399 = sand.u32 %s56, 1
        %s400 = smul.addr %s399, 3200
        %s401 = scalar_lea.vmem [#allocation3], %s400
        // Predicated region
        $region65: #{regression_model_forward.3} parent=63 // pred_check
          %p402 = pneg %p69
        $region66: #{regression_model_forward.3} parent=63 // pred_check_branch
          %404 = sbr.rel (%p402) target = $region68
        $region67: #{regression_model_forward.3} parent=63 // pred_region
          %406 = dma.done %s398, 51200
        $region68: #{regression_model_forward.3} parent=63 // pred_fallthru
          _
        // Predicated region
        $region69: #{regression_model_forward.3} parent=63 // pred_check
          %p407 = pneg %p90
        $region70: #{regression_model_forward.3} parent=63 // pred_check_branch
          %409 = sbr.rel (%p407) target = $region72
        $region71: #{regression_model_forward.3} parent=63 // pred_region
          %411 = dma.done [#allocation6], 64
        $region72: #{regression_model_forward.3} parent=63 // pred_fallthru
          _
        // Predicated region
        $region73: #{regression_model_forward.3} parent=63 // pred_check
          %p412 = pneg %p153
        $region74: #{regression_model_forward.3} parent=63 // pred_check_branch
          %414 = sbr.rel (%p412) target = $region76
        $region75: #{regression_model_forward.3} parent=63 // pred_region
          %416 = dma.done [#allocation6], 8192
        $region76: #{regression_model_forward.3} parent=63 // pred_fallthru
          _
        // Predicated region
        $region77: #{regression_model_forward.3} parent=63 // pred_check
          %p417 = pneg %p174
        $region78: #{regression_model_forward.3} parent=63 // pred_check_branch
          %419 = sbr.rel (%p417) target = $region80
        $region79: #{regression_model_forward.3} parent=63 // pred_region
          %421 = dma.done [#allocation9], 32
        $region80: #{regression_model_forward.3} parent=63 // pred_fallthru
          _
        // Predicated region
        $region81: #{regression_model_forward.3} parent=63 // pred_check
          %p422 = pneg %p237
        $region82: #{regression_model_forward.3} parent=63 // pred_check_branch
          %424 = sbr.rel (%p422) target = $region84
        $region83: #{regression_model_forward.3} parent=63 // pred_region
          %426 = dma.done [#allocation9], 12288
        $region84: #{regression_model_forward.3} parent=63 // pred_fallthru
          _
        %p427 = pneg %p43
        %p428 = pneg %p40
        %s429 = sand.u32 %s56, 1
        %s430 = scalar_lea.sflag [#allocation4], %s429
        %s431 = sand.u32 %s56, 1
        %s432 = smul.addr %s431, 3200
        %s433 = scalar_lea.vmem [#allocation3], %s432
        %p434 = pneg %p69
        %p435 = pneg %p66
        %p436 = pneg %p90
        %p437 = pneg %p87
        %p438 = pneg %p111
        %p439 = pneg %p108
        %p440 = pneg %p132
        %p441 = pneg %p129
        %p442 = pneg %p153
        %p443 = pneg %p150
        %p444 = pneg %p174
        %p445 = pneg %p171
        %p446 = pneg %p195
        %p447 = pneg %p192
        %p448 = pneg %p216
        %p449 = pneg %p213
        %p450 = pneg %p237
        %p451 = pneg %p234
        %p452 = pneg %p258
        %p453 = pneg %p255
        %p454 = pneg %p279
        %p455 = pneg %p276
        %s456 = smul.u32 2, %s27
        %v457 = vld [vmem:[%s0] sm:$0xff]
        %v458 = vld [vmem:[%s0 + $0x8] sm:$0xff]
        %v459 = vld [vmem:[%s0 + $0x10] sm:$0xff]
        %v460 = vld [vmem:[%s0 + $0x18] sm:$0xff]
        %v461 = vld [vmem:[%s0 + $0x20] sm:$0xff]
        %v462 = vld [vmem:[%s0 + $0x28] sm:$0xff]
        %v463 = vld [vmem:[%s0 + $0x30] sm:$0x3]
        %471 = vst [vmem:[#allocation1] ss:$4 sm:$0xff] %v457
        %s472 = scalar_lea.vmem [#allocation1], 32
        %473 = vst [vmem:[%s472] ss:$4 sm:$0xff] %v458
        %v474 = vld.sshfl [vmem:[#allocation1] sm:$0xff pattern:$0x73625140]
        %v475 = vld.sshfl [vmem:[#allocation1 + $0x8] sm:$0xff pattern:$0x73625140]
        %v476 = vld.sshfl [vmem:[#allocation1 + $0x10] sm:$0xff pattern:$0x73625140]
        %v477 = vld.sshfl [vmem:[#allocation1 + $0x18] sm:$0xff pattern:$0x73625140]
        %v478 = vld.sshfl [vmem:[#allocation1 + $0x20] sm:$0xff pattern:$0x73625140]
        %v479 = vld.sshfl [vmem:[#allocation1 + $0x28] sm:$0xff pattern:$0x73625140]
        %v480 = vld.sshfl [vmem:[#allocation1 + $0x30] sm:$0xff pattern:$0x73625140]
        %v481 = vld.sshfl [vmem:[#allocation1 + $0x38] sm:$0xff pattern:$0x73625140]
        %482 = vst [vmem:[#allocation1] ss:$4 sm:$0xff] %v459
        %483 = vst [vmem:[%s472] ss:$4 sm:$0xff] %v460
        %v484 = vld.sshfl [vmem:[#allocation1] sm:$0xff pattern:$0x73625140]
        %v485 = vld.sshfl [vmem:[#allocation1 + $0x8] sm:$0xff pattern:$0x73625140]
        %v486 = vld.sshfl [vmem:[#allocation1 + $0x10] sm:$0xff pattern:$0x73625140]
        %v487 = vld.sshfl [vmem:[#allocation1 + $0x18] sm:$0xff pattern:$0x73625140]
        %v488 = vld.sshfl [vmem:[#allocation1 + $0x20] sm:$0xff pattern:$0x73625140]
        %v489 = vld.sshfl [vmem:[#allocation1 + $0x28] sm:$0xff pattern:$0x73625140]
        %v490 = vld.sshfl [vmem:[#allocation1 + $0x30] sm:$0xff pattern:$0x73625140]
        %v491 = vld.sshfl [vmem:[#allocation1 + $0x38] sm:$0xff pattern:$0x73625140]
        %492 = vst [vmem:[#allocation1] ss:$4 sm:$0xff] %v461
        %493 = vst [vmem:[%s472] ss:$4 sm:$0xff] %v462
        %v494 = vld.sshfl [vmem:[#allocation1] sm:$0xff pattern:$0x73625140]
        %v495 = vld.sshfl [vmem:[#allocation1 + $0x8] sm:$0xff pattern:$0x73625140]
        %v496 = vld.sshfl [vmem:[#allocation1 + $0x10] sm:$0xff pattern:$0x73625140]
        %v497 = vld.sshfl [vmem:[#allocation1 + $0x18] sm:$0xff pattern:$0x73625140]
        %v498 = vld.sshfl [vmem:[#allocation1 + $0x20] sm:$0xff pattern:$0x73625140]
        %v499 = vld.sshfl [vmem:[#allocation1 + $0x28] sm:$0xff pattern:$0x73625140]
        %v500 = vld.sshfl [vmem:[#allocation1 + $0x30] sm:$0xff pattern:$0x73625140]
        %v501 = vld.sshfl [vmem:[#allocation1 + $0x38] sm:$0xff pattern:$0x73625140]
        %502 = vst [vmem:[#allocation1] ss:$4 sm:$0xff] %v463
        %v503 = vld.sshfl [vmem:[#allocation1] sm:$0xff pattern:$0x73625140]
        %v529 = vpack.c.bf16 %v474, %v474
        %v530 = vpack.c.bf16 %v475, %v475
        %v531 = vpack.c.bf16 %v476, %v476
        %v532 = vpack.c.bf16 %v477, %v477
        %v533 = vpack.c.bf16 %v478, %v478
        %v534 = vpack.c.bf16 %v479, %v479
        %v535 = vpack.c.bf16 %v480, %v480
        %v536 = vpack.c.bf16 %v481, %v481
        %v537 = vpack.c.bf16 %v484, %v484
        %v538 = vpack.c.bf16 %v485, %v485
        %v539 = vpack.c.bf16 %v486, %v486
        %v540 = vpack.c.bf16 %v487, %v487
        %v541 = vpack.c.bf16 %v488, %v488
        %v542 = vpack.c.bf16 %v489, %v489
        %v543 = vpack.c.bf16 %v490, %v490
        %v544 = vpack.c.bf16 %v491, %v491
        %v545 = vpack.c.bf16 %v494, %v494
        %v546 = vpack.c.bf16 %v495, %v495
        %v547 = vpack.c.bf16 %v496, %v496
        %v548 = vpack.c.bf16 %v497, %v497
        %v549 = vpack.c.bf16 %v498, %v498
        %v550 = vpack.c.bf16 %v499, %v499
        %v551 = vpack.c.bf16 %v500, %v500
        %v552 = vpack.c.bf16 %v501, %v501
        %v553 = vpack.c.bf16 %v503, %v503
        %v554 = vld [vmem:[%s401] sm:$0xff]
        %v555 = vld [vmem:[%s401 + $0x8] sm:$0xff]
        %v556 = vld [vmem:[%s401 + $0x10] sm:$0xff]
        %v557 = vld [vmem:[%s401 + $0x18] sm:$0xff]
        %v558 = vld [vmem:[%s401 + $0x20] sm:$0xff]
        %v559 = vld [vmem:[%s401 + $0x28] sm:$0xff]
        %v560 = vld [vmem:[%s401 + $0x30] sm:$0xff]
        %v561 = vld [vmem:[%s401 + $0x38] sm:$0xff]
        %v562 = vld [vmem:[%s401 + $0x40] sm:$0xff]
        %v563 = vld [vmem:[%s401 + $0x48] sm:$0xff]
        %v564 = vld [vmem:[%s401 + $0x50] sm:$0xff]
        %v565 = vld [vmem:[%s401 + $0x58] sm:$0xff]
        %v566 = vld [vmem:[%s401 + $0x60] sm:$0xff]
        %v567 = vld [vmem:[%s401 + $0x68] sm:$0xff]
        %v568 = vld [vmem:[%s401 + $0x70] sm:$0xff]
        %v569 = vld [vmem:[%s401 + $0x78] sm:$0xff]
        %v570 = vld [vmem:[%s401 + $0x80] sm:$0xff]
        %v571 = vld [vmem:[%s401 + $0x88] sm:$0xff]
        %v572 = vld [vmem:[%s401 + $0x90] sm:$0xff]
        %v573 = vld [vmem:[%s401 + $0x98] sm:$0xff]
        %v574 = vld [vmem:[%s401 + $0xa0] sm:$0xff]
        %v575 = vld [vmem:[%s401 + $0xa8] sm:$0xff]
        %v576 = vld [vmem:[%s401 + $0xb0] sm:$0xff]
        %v577 = vld [vmem:[%s401 + $0xb8] sm:$0xff]
        %v578 = vld [vmem:[%s401 + $0xc0] sm:$0xff]
        %v579 = vld [vmem:[%s401 + $0xc8] sm:$0xff]
        %v580 = vld [vmem:[%s401 + $0xd0] sm:$0xff]
        %v581 = vld [vmem:[%s401 + $0xd8] sm:$0xff]
        %v582 = vld [vmem:[%s401 + $0xe0] sm:$0xff]
        %v583 = vld [vmem:[%s401 + $0xe8] sm:$0xff]
        %v584 = vld [vmem:[%s401 + $0xf0] sm:$0xff]
        %v585 = vld [vmem:[%s401 + $0xf8] sm:$0xff]
        %v586 = vld [vmem:[%s401 + $0x100] sm:$0xff]
        %v587 = vld [vmem:[%s401 + $0x108] sm:$0xff]
        %v588 = vld [vmem:[%s401 + $0x110] sm:$0xff]
        %v589 = vld [vmem:[%s401 + $0x118] sm:$0xff]
        %v590 = vld [vmem:[%s401 + $0x120] sm:$0xff]
        %v591 = vld [vmem:[%s401 + $0x128] sm:$0xff]
        %v592 = vld [vmem:[%s401 + $0x130] sm:$0xff]
        %v593 = vld [vmem:[%s401 + $0x138] sm:$0xff]
        %v594 = vld [vmem:[%s401 + $0x140] sm:$0xff]
        %v595 = vld [vmem:[%s401 + $0x148] sm:$0xff]
        %v596 = vld [vmem:[%s401 + $0x150] sm:$0xff]
        %v597 = vld [vmem:[%s401 + $0x158] sm:$0xff]
        %v598 = vld [vmem:[%s401 + $0x160] sm:$0xff]
        %v599 = vld [vmem:[%s401 + $0x168] sm:$0xff]
        %v600 = vld [vmem:[%s401 + $0x170] sm:$0xff]
        %v601 = vld [vmem:[%s401 + $0x178] sm:$0xff]
        %v602 = vld [vmem:[%s401 + $0x180] sm:$0xff]
        %v603 = vld [vmem:[%s401 + $0x188] sm:$0xff]
        %v604 = vld [vmem:[%s401 + $0x190] sm:$0xff]
        %v605 = vld [vmem:[%s401 + $0x198] sm:$0xff]
        %v606 = vld [vmem:[%s401 + $0x1a0] sm:$0xff]
        %v607 = vld [vmem:[%s401 + $0x1a8] sm:$0xff]
        %v608 = vld [vmem:[%s401 + $0x1b0] sm:$0xff]
        %v609 = vld [vmem:[%s401 + $0x1b8] sm:$0xff]
        %v610 = vld [vmem:[%s401 + $0x1c0] sm:$0xff]
        %v611 = vld [vmem:[%s401 + $0x1c8] sm:$0xff]
        %v612 = vld [vmem:[%s401 + $0x1d0] sm:$0xff]
        %v613 = vld [vmem:[%s401 + $0x1d8] sm:$0xff]
        %v614 = vld [vmem:[%s401 + $0x1e0] sm:$0xff]
        %v615 = vld [vmem:[%s401 + $0x1e8] sm:$0xff]
        %v616 = vld [vmem:[%s401 + $0x1f0] sm:$0xff]
        %v617 = vld [vmem:[%s401 + $0x1f8] sm:$0xff]
        %v618 = vld [vmem:[%s401 + $0x200] sm:$0xff]
        %v619 = vld [vmem:[%s401 + $0x208] sm:$0xff]
        %v620 = vld [vmem:[%s401 + $0x210] sm:$0xff]
        %v621 = vld [vmem:[%s401 + $0x218] sm:$0xff]
        %v622 = vld [vmem:[%s401 + $0x220] sm:$0xff]
        %v623 = vld [vmem:[%s401 + $0x228] sm:$0xff]
        %v624 = vld [vmem:[%s401 + $0x230] sm:$0xff]
        %v625 = vld [vmem:[%s401 + $0x238] sm:$0xff]
        %v626 = vld [vmem:[%s401 + $0x240] sm:$0xff]
        %v627 = vld [vmem:[%s401 + $0x248] sm:$0xff]
        %v628 = vld [vmem:[%s401 + $0x250] sm:$0xff]
        %v629 = vld [vmem:[%s401 + $0x258] sm:$0xff]
        %v630 = vld [vmem:[%s401 + $0x260] sm:$0xff]
        %v631 = vld [vmem:[%s401 + $0x268] sm:$0xff]
        %v632 = vld [vmem:[%s401 + $0x270] sm:$0xff]
        %v633 = vld [vmem:[%s401 + $0x278] sm:$0xff]
        %v634 = vld [vmem:[%s401 + $0x280] sm:$0xff]
        %v635 = vld [vmem:[%s401 + $0x288] sm:$0xff]
        %v636 = vld [vmem:[%s401 + $0x290] sm:$0xff]
        %v637 = vld [vmem:[%s401 + $0x298] sm:$0xff]
        %v638 = vld [vmem:[%s401 + $0x2a0] sm:$0xff]
        %v639 = vld [vmem:[%s401 + $0x2a8] sm:$0xff]
        %v640 = vld [vmem:[%s401 + $0x2b0] sm:$0xff]
        %v641 = vld [vmem:[%s401 + $0x2b8] sm:$0xff]
        %v642 = vld [vmem:[%s401 + $0x2c0] sm:$0xff]
        %v643 = vld [vmem:[%s401 + $0x2c8] sm:$0xff]
        %v644 = vld [vmem:[%s401 + $0x2d0] sm:$0xff]
        %v645 = vld [vmem:[%s401 + $0x2d8] sm:$0xff]
        %v646 = vld [vmem:[%s401 + $0x2e0] sm:$0xff]
        %v647 = vld [vmem:[%s401 + $0x2e8] sm:$0xff]
        %v648 = vld [vmem:[%s401 + $0x2f0] sm:$0xff]
        %v649 = vld [vmem:[%s401 + $0x2f8] sm:$0xff]
        %v650 = vld [vmem:[%s401 + $0x300] sm:$0xff]
        %v651 = vld [vmem:[%s401 + $0x308] sm:$0xff]
        %v652 = vld [vmem:[%s401 + $0x310] sm:$0xff]
        %v653 = vld [vmem:[%s401 + $0x318] sm:$0xff]
        %v654 = vld [vmem:[%s401 + $0x320] sm:$0xff]
        %v655 = vld [vmem:[%s401 + $0x328] sm:$0xff]
        %v656 = vld [vmem:[%s401 + $0x330] sm:$0xff]
        %v657 = vld [vmem:[%s401 + $0x338] sm:$0xff]
        %v658 = vld [vmem:[%s401 + $0x340] sm:$0xff]
        %v659 = vld [vmem:[%s401 + $0x348] sm:$0xff]
        %v660 = vld [vmem:[%s401 + $0x350] sm:$0xff]
        %v661 = vld [vmem:[%s401 + $0x358] sm:$0xff]
        %v662 = vld [vmem:[%s401 + $0x360] sm:$0xff]
        %v663 = vld [vmem:[%s401 + $0x368] sm:$0xff]
        %v664 = vld [vmem:[%s401 + $0x370] sm:$0xff]
        %v665 = vld [vmem:[%s401 + $0x378] sm:$0xff]
        %v666 = vld [vmem:[%s401 + $0x380] sm:$0xff]
        %v667 = vld [vmem:[%s401 + $0x388] sm:$0xff]
        %v668 = vld [vmem:[%s401 + $0x390] sm:$0xff]
        %v669 = vld [vmem:[%s401 + $0x398] sm:$0xff]
        %v670 = vld [vmem:[%s401 + $0x3a0] sm:$0xff]
        %v671 = vld [vmem:[%s401 + $0x3a8] sm:$0xff]
        %v672 = vld [vmem:[%s401 + $0x3b0] sm:$0xff]
        %v673 = vld [vmem:[%s401 + $0x3b8] sm:$0xff]
        %v674 = vld [vmem:[%s401 + $0x3c0] sm:$0xff]
        %v675 = vld [vmem:[%s401 + $0x3c8] sm:$0xff]
        %v676 = vld [vmem:[%s401 + $0x3d0] sm:$0xff]
        %v677 = vld [vmem:[%s401 + $0x3d8] sm:$0xff]
        %v678 = vld [vmem:[%s401 + $0x3e0] sm:$0xff]
        %v679 = vld [vmem:[%s401 + $0x3e8] sm:$0xff]
        %v680 = vld [vmem:[%s401 + $0x3f0] sm:$0xff]
        %v681 = vld [vmem:[%s401 + $0x3f8] sm:$0xff]
        %v682 = vld [vmem:[%s401 + $0x400] sm:$0xff]
        %v683 = vld [vmem:[%s401 + $0x408] sm:$0xff]
        %v684 = vld [vmem:[%s401 + $0x410] sm:$0xff]
        %v685 = vld [vmem:[%s401 + $0x418] sm:$0xff]
        %v686 = vld [vmem:[%s401 + $0x420] sm:$0xff]
        %v687 = vld [vmem:[%s401 + $0x428] sm:$0xff]
        %v688 = vld [vmem:[%s401 + $0x430] sm:$0xff]
        %v689 = vld [vmem:[%s401 + $0x438] sm:$0xff]
        %v690 = vld [vmem:[%s401 + $0x440] sm:$0xff]
        %v691 = vld [vmem:[%s401 + $0x448] sm:$0xff]
        %v692 = vld [vmem:[%s401 + $0x450] sm:$0xff]
        %v693 = vld [vmem:[%s401 + $0x458] sm:$0xff]
        %v694 = vld [vmem:[%s401 + $0x460] sm:$0xff]
        %v695 = vld [vmem:[%s401 + $0x468] sm:$0xff]
        %v696 = vld [vmem:[%s401 + $0x470] sm:$0xff]
        %v697 = vld [vmem:[%s401 + $0x478] sm:$0xff]
        %v698 = vld [vmem:[%s401 + $0x480] sm:$0xff]
        %v699 = vld [vmem:[%s401 + $0x488] sm:$0xff]
        %v700 = vld [vmem:[%s401 + $0x490] sm:$0xff]
        %v701 = vld [vmem:[%s401 + $0x498] sm:$0xff]
        %v702 = vld [vmem:[%s401 + $0x4a0] sm:$0xff]
        %v703 = vld [vmem:[%s401 + $0x4a8] sm:$0xff]
        %v704 = vld [vmem:[%s401 + $0x4b0] sm:$0xff]
        %v705 = vld [vmem:[%s401 + $0x4b8] sm:$0xff]
        %v706 = vld [vmem:[%s401 + $0x4c0] sm:$0xff]
        %v707 = vld [vmem:[%s401 + $0x4c8] sm:$0xff]
        %v708 = vld [vmem:[%s401 + $0x4d0] sm:$0xff]
        %v709 = vld [vmem:[%s401 + $0x4d8] sm:$0xff]
        %v710 = vld [vmem:[%s401 + $0x4e0] sm:$0xff]
        %v711 = vld [vmem:[%s401 + $0x4e8] sm:$0xff]
        %v712 = vld [vmem:[%s401 + $0x4f0] sm:$0xff]
        %v713 = vld [vmem:[%s401 + $0x4f8] sm:$0xff]
        %v714 = vld [vmem:[%s401 + $0x500] sm:$0xff]
        %v715 = vld [vmem:[%s401 + $0x508] sm:$0xff]
        %v716 = vld [vmem:[%s401 + $0x510] sm:$0xff]
        %v717 = vld [vmem:[%s401 + $0x518] sm:$0xff]
        %v718 = vld [vmem:[%s401 + $0x520] sm:$0xff]
        %v719 = vld [vmem:[%s401 + $0x528] sm:$0xff]
        %v720 = vld [vmem:[%s401 + $0x530] sm:$0xff]
        %v721 = vld [vmem:[%s401 + $0x538] sm:$0xff]
        %v722 = vld [vmem:[%s401 + $0x540] sm:$0xff]
        %v723 = vld [vmem:[%s401 + $0x548] sm:$0xff]
        %v724 = vld [vmem:[%s401 + $0x550] sm:$0xff]
        %v725 = vld [vmem:[%s401 + $0x558] sm:$0xff]
        %v726 = vld [vmem:[%s401 + $0x560] sm:$0xff]
        %v727 = vld [vmem:[%s401 + $0x568] sm:$0xff]
        %v728 = vld [vmem:[%s401 + $0x570] sm:$0xff]
        %v729 = vld [vmem:[%s401 + $0x578] sm:$0xff]
        %v730 = vld [vmem:[%s401 + $0x580] sm:$0xff]
        %v731 = vld [vmem:[%s401 + $0x588] sm:$0xff]
        %v732 = vld [vmem:[%s401 + $0x590] sm:$0xff]
        %v733 = vld [vmem:[%s401 + $0x598] sm:$0xff]
        %v734 = vld [vmem:[%s401 + $0x5a0] sm:$0xff]
        %v735 = vld [vmem:[%s401 + $0x5a8] sm:$0xff]
        %v736 = vld [vmem:[%s401 + $0x5b0] sm:$0xff]
        %v737 = vld [vmem:[%s401 + $0x5b8] sm:$0xff]
        %v738 = vld [vmem:[%s401 + $0x5c0] sm:$0xff]
        %v739 = vld [vmem:[%s401 + $0x5c8] sm:$0xff]
        %v740 = vld [vmem:[%s401 + $0x5d0] sm:$0xff]
        %v741 = vld [vmem:[%s401 + $0x5d8] sm:$0xff]
        %v742 = vld [vmem:[%s401 + $0x5e0] sm:$0xff]
        %v743 = vld [vmem:[%s401 + $0x5e8] sm:$0xff]
        %v744 = vld [vmem:[%s401 + $0x5f0] sm:$0xff]
        %v745 = vld [vmem:[%s401 + $0x5f8] sm:$0xff]
        %v746 = vld [vmem:[%s401 + $0x600] sm:$0xff]
        %v747 = vld [vmem:[%s401 + $0x608] sm:$0xff]
        %v748 = vld [vmem:[%s401 + $0x610] sm:$0xff]
        %v749 = vld [vmem:[%s401 + $0x618] sm:$0xff]
        %v750 = vld [vmem:[%s401 + $0x620] sm:$0xff]
        %v751 = vld [vmem:[%s401 + $0x628] sm:$0xff]
        %v752 = vld [vmem:[%s401 + $0x630] sm:$0xff]
        %v753 = vld [vmem:[%s401 + $0x638] sm:$0xff]
        %v754 = vld [vmem:[%s401 + $0x640] sm:$0xff]
        %v755 = vld [vmem:[%s401 + $0x648] sm:$0xff]
        %v756 = vld [vmem:[%s401 + $0x650] sm:$0xff]
        %v757 = vld [vmem:[%s401 + $0x658] sm:$0xff]
        %v758 = vld [vmem:[%s401 + $0x660] sm:$0xff]
        %v759 = vld [vmem:[%s401 + $0x668] sm:$0xff]
        %v760 = vld [vmem:[%s401 + $0x670] sm:$0xff]
        %v761 = vld [vmem:[%s401 + $0x678] sm:$0xff]
        %v762 = vld [vmem:[%s401 + $0x680] sm:$0xff]
        %v763 = vld [vmem:[%s401 + $0x688] sm:$0xff]
        %v764 = vld [vmem:[%s401 + $0x690] sm:$0xff]
        %v765 = vld [vmem:[%s401 + $0x698] sm:$0xff]
        %v766 = vld [vmem:[%s401 + $0x6a0] sm:$0xff]
        %v767 = vld [vmem:[%s401 + $0x6a8] sm:$0xff]
        %v768 = vld [vmem:[%s401 + $0x6b0] sm:$0xff]
        %v769 = vld [vmem:[%s401 + $0x6b8] sm:$0xff]
        %v770 = vld [vmem:[%s401 + $0x6c0] sm:$0xff]
        %v771 = vld [vmem:[%s401 + $0x6c8] sm:$0xff]
        %v772 = vld [vmem:[%s401 + $0x6d0] sm:$0xff]
        %v773 = vld [vmem:[%s401 + $0x6d8] sm:$0xff]
        %v774 = vld [vmem:[%s401 + $0x6e0] sm:$0xff]
        %v775 = vld [vmem:[%s401 + $0x6e8] sm:$0xff]
        %v776 = vld [vmem:[%s401 + $0x6f0] sm:$0xff]
        %v777 = vld [vmem:[%s401 + $0x6f8] sm:$0xff]
        %v778 = vld [vmem:[%s401 + $0x700] sm:$0xff]
        %v779 = vld [vmem:[%s401 + $0x708] sm:$0xff]
        %v780 = vld [vmem:[%s401 + $0x710] sm:$0xff]
        %v781 = vld [vmem:[%s401 + $0x718] sm:$0xff]
        %v782 = vld [vmem:[%s401 + $0x720] sm:$0xff]
        %v783 = vld [vmem:[%s401 + $0x728] sm:$0xff]
        %v784 = vld [vmem:[%s401 + $0x730] sm:$0xff]
        %v785 = vld [vmem:[%s401 + $0x738] sm:$0xff]
        %v786 = vld [vmem:[%s401 + $0x740] sm:$0xff]
        %v787 = vld [vmem:[%s401 + $0x748] sm:$0xff]
        %v788 = vld [vmem:[%s401 + $0x750] sm:$0xff]
        %v789 = vld [vmem:[%s401 + $0x758] sm:$0xff]
        %v790 = vld [vmem:[%s401 + $0x760] sm:$0xff]
        %v791 = vld [vmem:[%s401 + $0x768] sm:$0xff]
        %v792 = vld [vmem:[%s401 + $0x770] sm:$0xff]
        %v793 = vld [vmem:[%s401 + $0x778] sm:$0xff]
        %v794 = vld [vmem:[%s401 + $0x780] sm:$0xff]
        %v795 = vld [vmem:[%s401 + $0x788] sm:$0xff]
        %v796 = vld [vmem:[%s401 + $0x790] sm:$0xff]
        %v797 = vld [vmem:[%s401 + $0x798] sm:$0xff]
        %v798 = vld [vmem:[%s401 + $0x7a0] sm:$0xff]
        %v799 = vld [vmem:[%s401 + $0x7a8] sm:$0xff]
        %v800 = vld [vmem:[%s401 + $0x7b0] sm:$0xff]
        %v801 = vld [vmem:[%s401 + $0x7b8] sm:$0xff]
        %v802 = vld [vmem:[%s401 + $0x7c0] sm:$0xff]
        %v803 = vld [vmem:[%s401 + $0x7c8] sm:$0xff]
        %v804 = vld [vmem:[%s401 + $0x7d0] sm:$0xff]
        %v805 = vld [vmem:[%s401 + $0x7d8] sm:$0xff]
        %v806 = vld [vmem:[%s401 + $0x7e0] sm:$0xff]
        %v807 = vld [vmem:[%s401 + $0x7e8] sm:$0xff]
        %v808 = vld [vmem:[%s401 + $0x7f0] sm:$0xff]
        %v809 = vld [vmem:[%s401 + $0x7f8] sm:$0xff]
        %v810 = vld [vmem:[%s401 + $0x800] sm:$0xff]
        %v811 = vld [vmem:[%s401 + $0x808] sm:$0xff]
        %v812 = vld [vmem:[%s401 + $0x810] sm:$0xff]
        %v813 = vld [vmem:[%s401 + $0x818] sm:$0xff]
        %v814 = vld [vmem:[%s401 + $0x820] sm:$0xff]
        %v815 = vld [vmem:[%s401 + $0x828] sm:$0xff]
        %v816 = vld [vmem:[%s401 + $0x830] sm:$0xff]
        %v817 = vld [vmem:[%s401 + $0x838] sm:$0xff]
        %v818 = vld [vmem:[%s401 + $0x840] sm:$0xff]
        %v819 = vld [vmem:[%s401 + $0x848] sm:$0xff]
        %v820 = vld [vmem:[%s401 + $0x850] sm:$0xff]
        %v821 = vld [vmem:[%s401 + $0x858] sm:$0xff]
        %v822 = vld [vmem:[%s401 + $0x860] sm:$0xff]
        %v823 = vld [vmem:[%s401 + $0x868] sm:$0xff]
        %v824 = vld [vmem:[%s401 + $0x870] sm:$0xff]
        %v825 = vld [vmem:[%s401 + $0x878] sm:$0xff]
        %v826 = vld [vmem:[%s401 + $0x880] sm:$0xff]
        %v827 = vld [vmem:[%s401 + $0x888] sm:$0xff]
        %v828 = vld [vmem:[%s401 + $0x890] sm:$0xff]
        %v829 = vld [vmem:[%s401 + $0x898] sm:$0xff]
        %v830 = vld [vmem:[%s401 + $0x8a0] sm:$0xff]
        %v831 = vld [vmem:[%s401 + $0x8a8] sm:$0xff]
        %v832 = vld [vmem:[%s401 + $0x8b0] sm:$0xff]
        %v833 = vld [vmem:[%s401 + $0x8b8] sm:$0xff]
        %v834 = vld [vmem:[%s401 + $0x8c0] sm:$0xff]
        %v835 = vld [vmem:[%s401 + $0x8c8] sm:$0xff]
        %v836 = vld [vmem:[%s401 + $0x8d0] sm:$0xff]
        %v837 = vld [vmem:[%s401 + $0x8d8] sm:$0xff]
        %v838 = vld [vmem:[%s401 + $0x8e0] sm:$0xff]
        %v839 = vld [vmem:[%s401 + $0x8e8] sm:$0xff]
        %v840 = vld [vmem:[%s401 + $0x8f0] sm:$0xff]
        %v841 = vld [vmem:[%s401 + $0x8f8] sm:$0xff]
        %v842 = vld [vmem:[%s401 + $0x900] sm:$0xff]
        %v843 = vld [vmem:[%s401 + $0x908] sm:$0xff]
        %v844 = vld [vmem:[%s401 + $0x910] sm:$0xff]
        %v845 = vld [vmem:[%s401 + $0x918] sm:$0xff]
        %v846 = vld [vmem:[%s401 + $0x920] sm:$0xff]
        %v847 = vld [vmem:[%s401 + $0x928] sm:$0xff]
        %v848 = vld [vmem:[%s401 + $0x930] sm:$0xff]
        %v849 = vld [vmem:[%s401 + $0x938] sm:$0xff]
        %v850 = vld [vmem:[%s401 + $0x940] sm:$0xff]
        %v851 = vld [vmem:[%s401 + $0x948] sm:$0xff]
        %v852 = vld [vmem:[%s401 + $0x950] sm:$0xff]
        %v853 = vld [vmem:[%s401 + $0x958] sm:$0xff]
        %v854 = vld [vmem:[%s401 + $0x960] sm:$0xff]
        %v855 = vld [vmem:[%s401 + $0x968] sm:$0xff]
        %v856 = vld [vmem:[%s401 + $0x970] sm:$0xff]
        %v857 = vld [vmem:[%s401 + $0x978] sm:$0xff]
        %v858 = vld [vmem:[%s401 + $0x980] sm:$0xff]
        %v859 = vld [vmem:[%s401 + $0x988] sm:$0xff]
        %v860 = vld [vmem:[%s401 + $0x990] sm:$0xff]
        %v861 = vld [vmem:[%s401 + $0x998] sm:$0xff]
        %v862 = vld [vmem:[%s401 + $0x9a0] sm:$0xff]
        %v863 = vld [vmem:[%s401 + $0x9a8] sm:$0xff]
        %v864 = vld [vmem:[%s401 + $0x9b0] sm:$0xff]
        %v865 = vld [vmem:[%s401 + $0x9b8] sm:$0xff]
        %v866 = vld [vmem:[%s401 + $0x9c0] sm:$0xff]
        %v867 = vld [vmem:[%s401 + $0x9c8] sm:$0xff]
        %v868 = vld [vmem:[%s401 + $0x9d0] sm:$0xff]
        %v869 = vld [vmem:[%s401 + $0x9d8] sm:$0xff]
        %v870 = vld [vmem:[%s401 + $0x9e0] sm:$0xff]
        %v871 = vld [vmem:[%s401 + $0x9e8] sm:$0xff]
        %v872 = vld [vmem:[%s401 + $0x9f0] sm:$0xff]
        %v873 = vld [vmem:[%s401 + $0x9f8] sm:$0xff]
        %v874 = vld [vmem:[%s401 + $0xa00] sm:$0xff]
        %v875 = vld [vmem:[%s401 + $0xa08] sm:$0xff]
        %v876 = vld [vmem:[%s401 + $0xa10] sm:$0xff]
        %v877 = vld [vmem:[%s401 + $0xa18] sm:$0xff]
        %v878 = vld [vmem:[%s401 + $0xa20] sm:$0xff]
        %v879 = vld [vmem:[%s401 + $0xa28] sm:$0xff]
        %v880 = vld [vmem:[%s401 + $0xa30] sm:$0xff]
        %v881 = vld [vmem:[%s401 + $0xa38] sm:$0xff]
        %v882 = vld [vmem:[%s401 + $0xa40] sm:$0xff]
        %v883 = vld [vmem:[%s401 + $0xa48] sm:$0xff]
        %v884 = vld [vmem:[%s401 + $0xa50] sm:$0xff]
        %v885 = vld [vmem:[%s401 + $0xa58] sm:$0xff]
        %v886 = vld [vmem:[%s401 + $0xa60] sm:$0xff]
        %v887 = vld [vmem:[%s401 + $0xa68] sm:$0xff]
        %v888 = vld [vmem:[%s401 + $0xa70] sm:$0xff]
        %v889 = vld [vmem:[%s401 + $0xa78] sm:$0xff]
        %v890 = vld [vmem:[%s401 + $0xa80] sm:$0xff]
        %v891 = vld [vmem:[%s401 + $0xa88] sm:$0xff]
        %v892 = vld [vmem:[%s401 + $0xa90] sm:$0xff]
        %v893 = vld [vmem:[%s401 + $0xa98] sm:$0xff]
        %v894 = vld [vmem:[%s401 + $0xaa0] sm:$0xff]
        %v895 = vld [vmem:[%s401 + $0xaa8] sm:$0xff]
        %v896 = vld [vmem:[%s401 + $0xab0] sm:$0xff]
        %v897 = vld [vmem:[%s401 + $0xab8] sm:$0xff]
        %v898 = vld [vmem:[%s401 + $0xac0] sm:$0xff]
        %v899 = vld [vmem:[%s401 + $0xac8] sm:$0xff]
        %v900 = vld [vmem:[%s401 + $0xad0] sm:$0xff]
        %v901 = vld [vmem:[%s401 + $0xad8] sm:$0xff]
        %v902 = vld [vmem:[%s401 + $0xae0] sm:$0xff]
        %v903 = vld [vmem:[%s401 + $0xae8] sm:$0xff]
        %v904 = vld [vmem:[%s401 + $0xaf0] sm:$0xff]
        %v905 = vld [vmem:[%s401 + $0xaf8] sm:$0xff]
        %v906 = vld [vmem:[%s401 + $0xb00] sm:$0xff]
        %v907 = vld [vmem:[%s401 + $0xb08] sm:$0xff]
        %v908 = vld [vmem:[%s401 + $0xb10] sm:$0xff]
        %v909 = vld [vmem:[%s401 + $0xb18] sm:$0xff]
        %v910 = vld [vmem:[%s401 + $0xb20] sm:$0xff]
        %v911 = vld [vmem:[%s401 + $0xb28] sm:$0xff]
        %v912 = vld [vmem:[%s401 + $0xb30] sm:$0xff]
        %v913 = vld [vmem:[%s401 + $0xb38] sm:$0xff]
        %v914 = vld [vmem:[%s401 + $0xb40] sm:$0xff]
        %v915 = vld [vmem:[%s401 + $0xb48] sm:$0xff]
        %v916 = vld [vmem:[%s401 + $0xb50] sm:$0xff]
        %v917 = vld [vmem:[%s401 + $0xb58] sm:$0xff]
        %v918 = vld [vmem:[%s401 + $0xb60] sm:$0xff]
        %v919 = vld [vmem:[%s401 + $0xb68] sm:$0xff]
        %v920 = vld [vmem:[%s401 + $0xb70] sm:$0xff]
        %v921 = vld [vmem:[%s401 + $0xb78] sm:$0xff]
        %v922 = vld [vmem:[%s401 + $0xb80] sm:$0xff]
        %v923 = vld [vmem:[%s401 + $0xb88] sm:$0xff]
        %v924 = vld [vmem:[%s401 + $0xb90] sm:$0xff]
        %v925 = vld [vmem:[%s401 + $0xb98] sm:$0xff]
        %v926 = vld [vmem:[%s401 + $0xba0] sm:$0xff]
        %v927 = vld [vmem:[%s401 + $0xba8] sm:$0xff]
        %v928 = vld [vmem:[%s401 + $0xbb0] sm:$0xff]
        %v929 = vld [vmem:[%s401 + $0xbb8] sm:$0xff]
        %v930 = vld [vmem:[%s401 + $0xbc0] sm:$0xff]
        %v931 = vld [vmem:[%s401 + $0xbc8] sm:$0xff]
        %v932 = vld [vmem:[%s401 + $0xbd0] sm:$0xff]
        %v933 = vld [vmem:[%s401 + $0xbd8] sm:$0xff]
        %v934 = vld [vmem:[%s401 + $0xbe0] sm:$0xff]
        %v935 = vld [vmem:[%s401 + $0xbe8] sm:$0xff]
        %v936 = vld [vmem:[%s401 + $0xbf0] sm:$0xff]
        %v937 = vld [vmem:[%s401 + $0xbf8] sm:$0xff]
        %v938 = vld [vmem:[%s401 + $0xc00] sm:$0xff]
        %v939 = vld [vmem:[%s401 + $0xc08] sm:$0xff]
        %v940 = vld [vmem:[%s401 + $0xc10] sm:$0xff]
        %v941 = vld [vmem:[%s401 + $0xc18] sm:$0xff]
        %v942 = vld [vmem:[%s401 + $0xc20] sm:$0xff]
        %v943 = vld [vmem:[%s401 + $0xc28] sm:$0xff]
        %v944 = vld [vmem:[%s401 + $0xc30] sm:$0xff]
        %v945 = vld [vmem:[%s401 + $0xc38] sm:$0xff]
        %v946 = vld [vmem:[%s401 + $0xc40] sm:$0xff]
        %v947 = vld [vmem:[%s401 + $0xc48] sm:$0xff]
        %v948 = vld [vmem:[%s401 + $0xc50] sm:$0xff]
        %v949 = vld [vmem:[%s401 + $0xc58] sm:$0xff]
        %v950 = vld [vmem:[%s401 + $0xc60] sm:$0xff]
        %v951 = vld [vmem:[%s401 + $0xc68] sm:$0xff]
        %v952 = vld [vmem:[%s401 + $0xc70] sm:$0xff]
        %v953 = vld [vmem:[%s401 + $0xc78] sm:$0xff]
        %v1354 = vunpack.c.l.b16 %v554
        %v1355 = vunpack.c.h.b16 %v554
        %v1356 = vunpack.c.l.b16 %v555
        %v1357 = vunpack.c.h.b16 %v555
        %v1358 = vunpack.c.l.b16 %v556
        %v1359 = vunpack.c.h.b16 %v556
        %v1360 = vunpack.c.l.b16 %v557
        %v1361 = vunpack.c.h.b16 %v557
        %v1362 = vunpack.c.l.b16 %v558
        %v1363 = vunpack.c.h.b16 %v558
        %v1364 = vunpack.c.l.b16 %v559
        %v1365 = vunpack.c.h.b16 %v559
        %v1366 = vunpack.c.l.b16 %v560
        %v1367 = vunpack.c.h.b16 %v560
        %v1368 = vunpack.c.l.b16 %v561
        %v1369 = vunpack.c.h.b16 %v561
        %v1370 = vunpack.c.l.b16 %v562
        %v1371 = vunpack.c.h.b16 %v562
        %v1372 = vunpack.c.l.b16 %v563
        %v1373 = vunpack.c.h.b16 %v563
        %v1374 = vunpack.c.l.b16 %v564
        %v1375 = vunpack.c.h.b16 %v564
        %v1376 = vunpack.c.l.b16 %v565
        %v1377 = vunpack.c.h.b16 %v565
        %v1378 = vunpack.c.l.b16 %v566
        %v1379 = vunpack.c.h.b16 %v566
        %v1380 = vunpack.c.l.b16 %v567
        %v1381 = vunpack.c.h.b16 %v567
        %v1382 = vunpack.c.l.b16 %v568
        %v1383 = vunpack.c.h.b16 %v568
        %v1384 = vunpack.c.l.b16 %v569
        %v1385 = vunpack.c.h.b16 %v569
        %v1386 = vunpack.c.l.b16 %v570
        %v1387 = vunpack.c.h.b16 %v570
        %v1388 = vunpack.c.l.b16 %v571
        %v1389 = vunpack.c.h.b16 %v571
        %v1390 = vunpack.c.l.b16 %v572
        %v1391 = vunpack.c.h.b16 %v572
        %v1392 = vunpack.c.l.b16 %v573
        %v1393 = vunpack.c.h.b16 %v573
        %v1394 = vunpack.c.l.b16 %v574
        %v1395 = vunpack.c.h.b16 %v574
        %v1396 = vunpack.c.l.b16 %v575
        %v1397 = vunpack.c.h.b16 %v575
        %v1398 = vunpack.c.l.b16 %v576
        %v1399 = vunpack.c.h.b16 %v576
        %v1400 = vunpack.c.l.b16 %v577
        %v1401 = vunpack.c.h.b16 %v577
        %v1402 = vunpack.c.l.b16 %v578
        %v1403 = vunpack.c.h.b16 %v578
        %v1404 = vunpack.c.l.b16 %v579
        %v1405 = vunpack.c.h.b16 %v579
        %v1406 = vunpack.c.l.b16 %v580
        %v1407 = vunpack.c.h.b16 %v580
        %v1408 = vunpack.c.l.b16 %v581
        %v1409 = vunpack.c.h.b16 %v581
        %v1410 = vunpack.c.l.b16 %v582
        %v1411 = vunpack.c.h.b16 %v582
        %v1412 = vunpack.c.l.b16 %v583
        %v1413 = vunpack.c.h.b16 %v583
        %v1414 = vunpack.c.l.b16 %v584
        %v1415 = vunpack.c.h.b16 %v584
        %v1416 = vunpack.c.l.b16 %v585
        %v1417 = vunpack.c.h.b16 %v585
        %v1418 = vunpack.c.l.b16 %v586
        %v1419 = vunpack.c.h.b16 %v586
        %v1420 = vunpack.c.l.b16 %v587
        %v1421 = vunpack.c.h.b16 %v587
        %v1422 = vunpack.c.l.b16 %v588
        %v1423 = vunpack.c.h.b16 %v588
        %v1424 = vunpack.c.l.b16 %v589
        %v1425 = vunpack.c.h.b16 %v589
        %v1426 = vunpack.c.l.b16 %v590
        %v1427 = vunpack.c.h.b16 %v590
        %v1428 = vunpack.c.l.b16 %v591
        %v1429 = vunpack.c.h.b16 %v591
        %v1430 = vunpack.c.l.b16 %v592
        %v1431 = vunpack.c.h.b16 %v592
        %v1432 = vunpack.c.l.b16 %v593
        %v1433 = vunpack.c.h.b16 %v593
        %v1434 = vunpack.c.l.b16 %v594
        %v1435 = vunpack.c.h.b16 %v594
        %v1436 = vunpack.c.l.b16 %v595
        %v1437 = vunpack.c.h.b16 %v595
        %v1438 = vunpack.c.l.b16 %v596
        %v1439 = vunpack.c.h.b16 %v596
        %v1440 = vunpack.c.l.b16 %v597
        %v1441 = vunpack.c.h.b16 %v597
        %v1442 = vunpack.c.l.b16 %v598
        %v1443 = vunpack.c.h.b16 %v598
        %v1444 = vunpack.c.l.b16 %v599
        %v1445 = vunpack.c.h.b16 %v599
        %v1446 = vunpack.c.l.b16 %v600
        %v1447 = vunpack.c.h.b16 %v600
        %v1448 = vunpack.c.l.b16 %v601
        %v1449 = vunpack.c.h.b16 %v601
        %v1450 = vunpack.c.l.b16 %v602
        %v1451 = vunpack.c.h.b16 %v602
        %v1452 = vunpack.c.l.b16 %v603
        %v1453 = vunpack.c.h.b16 %v603
        %v1454 = vunpack.c.l.b16 %v604
        %v1455 = vunpack.c.h.b16 %v604
        %v1456 = vunpack.c.l.b16 %v605
        %v1457 = vunpack.c.h.b16 %v605
        %v1458 = vunpack.c.l.b16 %v606
        %v1459 = vunpack.c.h.b16 %v606
        %v1460 = vunpack.c.l.b16 %v607
        %v1461 = vunpack.c.h.b16 %v607
        %v1462 = vunpack.c.l.b16 %v608
        %v1463 = vunpack.c.h.b16 %v608
        %v1464 = vunpack.c.l.b16 %v609
        %v1465 = vunpack.c.h.b16 %v609
        %v1466 = vunpack.c.l.b16 %v610
        %v1467 = vunpack.c.h.b16 %v610
        %v1468 = vunpack.c.l.b16 %v611
        %v1469 = vunpack.c.h.b16 %v611
        %v1470 = vunpack.c.l.b16 %v612
        %v1471 = vunpack.c.h.b16 %v612
        %v1472 = vunpack.c.l.b16 %v613
        %v1473 = vunpack.c.h.b16 %v613
        %v1474 = vunpack.c.l.b16 %v614
        %v1475 = vunpack.c.h.b16 %v614
        %v1476 = vunpack.c.l.b16 %v615
        %v1477 = vunpack.c.h.b16 %v615
        %v1478 = vunpack.c.l.b16 %v616
        %v1479 = vunpack.c.h.b16 %v616
        %v1480 = vunpack.c.l.b16 %v617
        %v1481 = vunpack.c.h.b16 %v617
        %v1482 = vunpack.c.l.b16 %v618
        %v1483 = vunpack.c.h.b16 %v618
        %v1484 = vunpack.c.l.b16 %v619
        %v1485 = vunpack.c.h.b16 %v619
        %v1486 = vunpack.c.l.b16 %v620
        %v1487 = vunpack.c.h.b16 %v620
        %v1488 = vunpack.c.l.b16 %v621
        %v1489 = vunpack.c.h.b16 %v621
        %v1490 = vunpack.c.l.b16 %v622
        %v1491 = vunpack.c.h.b16 %v622
        %v1492 = vunpack.c.l.b16 %v623
        %v1493 = vunpack.c.h.b16 %v623
        %v1494 = vunpack.c.l.b16 %v624
        %v1495 = vunpack.c.h.b16 %v624
        %v1496 = vunpack.c.l.b16 %v625
        %v1497 = vunpack.c.h.b16 %v625
        %v1498 = vunpack.c.l.b16 %v626
        %v1499 = vunpack.c.h.b16 %v626
        %v1500 = vunpack.c.l.b16 %v627
        %v1501 = vunpack.c.h.b16 %v627
        %v1502 = vunpack.c.l.b16 %v628
        %v1503 = vunpack.c.h.b16 %v628
        %v1504 = vunpack.c.l.b16 %v629
        %v1505 = vunpack.c.h.b16 %v629
        %v1506 = vunpack.c.l.b16 %v630
        %v1507 = vunpack.c.h.b16 %v630
        %v1508 = vunpack.c.l.b16 %v631
        %v1509 = vunpack.c.h.b16 %v631
        %v1510 = vunpack.c.l.b16 %v632
        %v1511 = vunpack.c.h.b16 %v632
        %v1512 = vunpack.c.l.b16 %v633
        %v1513 = vunpack.c.h.b16 %v633
        %v1514 = vunpack.c.l.b16 %v634
        %v1515 = vunpack.c.h.b16 %v634
        %v1516 = vunpack.c.l.b16 %v635
        %v1517 = vunpack.c.h.b16 %v635
        %v1518 = vunpack.c.l.b16 %v636
        %v1519 = vunpack.c.h.b16 %v636
        %v1520 = vunpack.c.l.b16 %v637
        %v1521 = vunpack.c.h.b16 %v637
        %v1522 = vunpack.c.l.b16 %v638
        %v1523 = vunpack.c.h.b16 %v638
        %v1524 = vunpack.c.l.b16 %v639
        %v1525 = vunpack.c.h.b16 %v639
        %v1526 = vunpack.c.l.b16 %v640
        %v1527 = vunpack.c.h.b16 %v640
        %v1528 = vunpack.c.l.b16 %v641
        %v1529 = vunpack.c.h.b16 %v641
        %v1530 = vunpack.c.l.b16 %v642
        %v1531 = vunpack.c.h.b16 %v642
        %v1532 = vunpack.c.l.b16 %v643
        %v1533 = vunpack.c.h.b16 %v643
        %v1534 = vunpack.c.l.b16 %v644
        %v1535 = vunpack.c.h.b16 %v644
        %v1536 = vunpack.c.l.b16 %v645
        %v1537 = vunpack.c.h.b16 %v645
        %v1538 = vunpack.c.l.b16 %v646
        %v1539 = vunpack.c.h.b16 %v646
        %v1540 = vunpack.c.l.b16 %v647
        %v1541 = vunpack.c.h.b16 %v647
        %v1542 = vunpack.c.l.b16 %v648
        %v1543 = vunpack.c.h.b16 %v648
        %v1544 = vunpack.c.l.b16 %v649
        %v1545 = vunpack.c.h.b16 %v649
        %v1546 = vunpack.c.l.b16 %v650
        %v1547 = vunpack.c.h.b16 %v650
        %v1548 = vunpack.c.l.b16 %v651
        %v1549 = vunpack.c.h.b16 %v651
        %v1550 = vunpack.c.l.b16 %v652
        %v1551 = vunpack.c.h.b16 %v652
        %v1552 = vunpack.c.l.b16 %v653
        %v1553 = vunpack.c.h.b16 %v653
        %v1554 = vunpack.c.l.b16 %v654
        %v1555 = vunpack.c.h.b16 %v654
        %v1556 = vunpack.c.l.b16 %v655
        %v1557 = vunpack.c.h.b16 %v655
        %v1558 = vunpack.c.l.b16 %v656
        %v1559 = vunpack.c.h.b16 %v656
        %v1560 = vunpack.c.l.b16 %v657
        %v1561 = vunpack.c.h.b16 %v657
        %v1562 = vunpack.c.l.b16 %v658
        %v1563 = vunpack.c.h.b16 %v658
        %v1564 = vunpack.c.l.b16 %v659
        %v1565 = vunpack.c.h.b16 %v659
        %v1566 = vunpack.c.l.b16 %v660
        %v1567 = vunpack.c.h.b16 %v660
        %v1568 = vunpack.c.l.b16 %v661
        %v1569 = vunpack.c.h.b16 %v661
        %v1570 = vunpack.c.l.b16 %v662
        %v1571 = vunpack.c.h.b16 %v662
        %v1572 = vunpack.c.l.b16 %v663
        %v1573 = vunpack.c.h.b16 %v663
        %v1574 = vunpack.c.l.b16 %v664
        %v1575 = vunpack.c.h.b16 %v664
        %v1576 = vunpack.c.l.b16 %v665
        %v1577 = vunpack.c.h.b16 %v665
        %v1578 = vunpack.c.l.b16 %v666
        %v1579 = vunpack.c.h.b16 %v666
        %v1580 = vunpack.c.l.b16 %v667
        %v1581 = vunpack.c.h.b16 %v667
        %v1582 = vunpack.c.l.b16 %v668
        %v1583 = vunpack.c.h.b16 %v668
        %v1584 = vunpack.c.l.b16 %v669
        %v1585 = vunpack.c.h.b16 %v669
        %v1586 = vunpack.c.l.b16 %v670
        %v1587 = vunpack.c.h.b16 %v670
        %v1588 = vunpack.c.l.b16 %v671
        %v1589 = vunpack.c.h.b16 %v671
        %v1590 = vunpack.c.l.b16 %v672
        %v1591 = vunpack.c.h.b16 %v672
        %v1592 = vunpack.c.l.b16 %v673
        %v1593 = vunpack.c.h.b16 %v673
        %v1594 = vunpack.c.l.b16 %v674
        %v1595 = vunpack.c.h.b16 %v674
        %v1596 = vunpack.c.l.b16 %v675
        %v1597 = vunpack.c.h.b16 %v675
        %v1598 = vunpack.c.l.b16 %v676
        %v1599 = vunpack.c.h.b16 %v676
        %v1600 = vunpack.c.l.b16 %v677
        %v1601 = vunpack.c.h.b16 %v677
        %v1602 = vunpack.c.l.b16 %v678
        %v1603 = vunpack.c.h.b16 %v678
        %v1604 = vunpack.c.l.b16 %v679
        %v1605 = vunpack.c.h.b16 %v679
        %v1606 = vunpack.c.l.b16 %v680
        %v1607 = vunpack.c.h.b16 %v680
        %v1608 = vunpack.c.l.b16 %v681
        %v1609 = vunpack.c.h.b16 %v681
        %v1610 = vunpack.c.l.b16 %v682
        %v1611 = vunpack.c.h.b16 %v682
        %v1612 = vunpack.c.l.b16 %v683
        %v1613 = vunpack.c.h.b16 %v683
        %v1614 = vunpack.c.l.b16 %v684
        %v1615 = vunpack.c.h.b16 %v684
        %v1616 = vunpack.c.l.b16 %v685
        %v1617 = vunpack.c.h.b16 %v685
        %v1618 = vunpack.c.l.b16 %v686
        %v1619 = vunpack.c.h.b16 %v686
        %v1620 = vunpack.c.l.b16 %v687
        %v1621 = vunpack.c.h.b16 %v687
        %v1622 = vunpack.c.l.b16 %v688
        %v1623 = vunpack.c.h.b16 %v688
        %v1624 = vunpack.c.l.b16 %v689
        %v1625 = vunpack.c.h.b16 %v689
        %v1626 = vunpack.c.l.b16 %v690
        %v1627 = vunpack.c.h.b16 %v690
        %v1628 = vunpack.c.l.b16 %v691
        %v1629 = vunpack.c.h.b16 %v691
        %v1630 = vunpack.c.l.b16 %v692
        %v1631 = vunpack.c.h.b16 %v692
        %v1632 = vunpack.c.l.b16 %v693
        %v1633 = vunpack.c.h.b16 %v693
        %v1634 = vunpack.c.l.b16 %v694
        %v1635 = vunpack.c.h.b16 %v694
        %v1636 = vunpack.c.l.b16 %v695
        %v1637 = vunpack.c.h.b16 %v695
        %v1638 = vunpack.c.l.b16 %v696
        %v1639 = vunpack.c.h.b16 %v696
        %v1640 = vunpack.c.l.b16 %v697
        %v1641 = vunpack.c.h.b16 %v697
        %v1642 = vunpack.c.l.b16 %v698
        %v1643 = vunpack.c.h.b16 %v698
        %v1644 = vunpack.c.l.b16 %v699
        %v1645 = vunpack.c.h.b16 %v699
        %v1646 = vunpack.c.l.b16 %v700
        %v1647 = vunpack.c.h.b16 %v700
        %v1648 = vunpack.c.l.b16 %v701
        %v1649 = vunpack.c.h.b16 %v701
        %v1650 = vunpack.c.l.b16 %v702
        %v1651 = vunpack.c.h.b16 %v702
        %v1652 = vunpack.c.l.b16 %v703
        %v1653 = vunpack.c.h.b16 %v703
        %v1654 = vunpack.c.l.b16 %v704
        %v1655 = vunpack.c.h.b16 %v704
        %v1656 = vunpack.c.l.b16 %v705
        %v1657 = vunpack.c.h.b16 %v705
        %v1658 = vunpack.c.l.b16 %v706
        %v1659 = vunpack.c.h.b16 %v706
        %v1660 = vunpack.c.l.b16 %v707
        %v1661 = vunpack.c.h.b16 %v707
        %v1662 = vunpack.c.l.b16 %v708
        %v1663 = vunpack.c.h.b16 %v708
        %v1664 = vunpack.c.l.b16 %v709
        %v1665 = vunpack.c.h.b16 %v709
        %v1666 = vunpack.c.l.b16 %v710
        %v1667 = vunpack.c.h.b16 %v710
        %v1668 = vunpack.c.l.b16 %v711
        %v1669 = vunpack.c.h.b16 %v711
        %v1670 = vunpack.c.l.b16 %v712
        %v1671 = vunpack.c.h.b16 %v712
        %v1672 = vunpack.c.l.b16 %v713
        %v1673 = vunpack.c.h.b16 %v713
        %v1674 = vunpack.c.l.b16 %v714
        %v1675 = vunpack.c.h.b16 %v714
        %v1676 = vunpack.c.l.b16 %v715
        %v1677 = vunpack.c.h.b16 %v715
        %v1678 = vunpack.c.l.b16 %v716
        %v1679 = vunpack.c.h.b16 %v716
        %v1680 = vunpack.c.l.b16 %v717
        %v1681 = vunpack.c.h.b16 %v717
        %v1682 = vunpack.c.l.b16 %v718
        %v1683 = vunpack.c.h.b16 %v718
        %v1684 = vunpack.c.l.b16 %v719
        %v1685 = vunpack.c.h.b16 %v719
        %v1686 = vunpack.c.l.b16 %v720
        %v1687 = vunpack.c.h.b16 %v720
        %v1688 = vunpack.c.l.b16 %v721
        %v1689 = vunpack.c.h.b16 %v721
        %v1690 = vunpack.c.l.b16 %v722
        %v1691 = vunpack.c.h.b16 %v722
        %v1692 = vunpack.c.l.b16 %v723
        %v1693 = vunpack.c.h.b16 %v723
        %v1694 = vunpack.c.l.b16 %v724
        %v1695 = vunpack.c.h.b16 %v724
        %v1696 = vunpack.c.l.b16 %v725
        %v1697 = vunpack.c.h.b16 %v725
        %v1698 = vunpack.c.l.b16 %v726
        %v1699 = vunpack.c.h.b16 %v726
        %v1700 = vunpack.c.l.b16 %v727
        %v1701 = vunpack.c.h.b16 %v727
        %v1702 = vunpack.c.l.b16 %v728
        %v1703 = vunpack.c.h.b16 %v728
        %v1704 = vunpack.c.l.b16 %v729
        %v1705 = vunpack.c.h.b16 %v729
        %v1706 = vunpack.c.l.b16 %v730
        %v1707 = vunpack.c.h.b16 %v730
        %v1708 = vunpack.c.l.b16 %v731
        %v1709 = vunpack.c.h.b16 %v731
        %v1710 = vunpack.c.l.b16 %v732
        %v1711 = vunpack.c.h.b16 %v732
        %v1712 = vunpack.c.l.b16 %v733
        %v1713 = vunpack.c.h.b16 %v733
        %v1714 = vunpack.c.l.b16 %v734
        %v1715 = vunpack.c.h.b16 %v734
        %v1716 = vunpack.c.l.b16 %v735
        %v1717 = vunpack.c.h.b16 %v735
        %v1718 = vunpack.c.l.b16 %v736
        %v1719 = vunpack.c.h.b16 %v736
        %v1720 = vunpack.c.l.b16 %v737
        %v1721 = vunpack.c.h.b16 %v737
        %v1722 = vunpack.c.l.b16 %v738
        %v1723 = vunpack.c.h.b16 %v738
        %v1724 = vunpack.c.l.b16 %v739
        %v1725 = vunpack.c.h.b16 %v739
        %v1726 = vunpack.c.l.b16 %v740
        %v1727 = vunpack.c.h.b16 %v740
        %v1728 = vunpack.c.l.b16 %v741
        %v1729 = vunpack.c.h.b16 %v741
        %v1730 = vunpack.c.l.b16 %v742
        %v1731 = vunpack.c.h.b16 %v742
        %v1732 = vunpack.c.l.b16 %v743
        %v1733 = vunpack.c.h.b16 %v743
        %v1734 = vunpack.c.l.b16 %v744
        %v1735 = vunpack.c.h.b16 %v744
        %v1736 = vunpack.c.l.b16 %v745
        %v1737 = vunpack.c.h.b16 %v745
        %v1738 = vunpack.c.l.b16 %v746
        %v1739 = vunpack.c.h.b16 %v746
        %v1740 = vunpack.c.l.b16 %v747
        %v1741 = vunpack.c.h.b16 %v747
        %v1742 = vunpack.c.l.b16 %v748
        %v1743 = vunpack.c.h.b16 %v748
        %v1744 = vunpack.c.l.b16 %v749
        %v1745 = vunpack.c.h.b16 %v749
        %v1746 = vunpack.c.l.b16 %v750
        %v1747 = vunpack.c.h.b16 %v750
        %v1748 = vunpack.c.l.b16 %v751
        %v1749 = vunpack.c.h.b16 %v751
        %v1750 = vunpack.c.l.b16 %v752
        %v1751 = vunpack.c.h.b16 %v752
        %v1752 = vunpack.c.l.b16 %v753
        %v1753 = vunpack.c.h.b16 %v753
        %v1754 = vunpack.c.l.b16 %v754
        %v1755 = vunpack.c.h.b16 %v754
        %v1756 = vunpack.c.l.b16 %v755
        %v1757 = vunpack.c.h.b16 %v755
        %v1758 = vunpack.c.l.b16 %v756
        %v1759 = vunpack.c.h.b16 %v756
        %v1760 = vunpack.c.l.b16 %v757
        %v1761 = vunpack.c.h.b16 %v757
        %v1762 = vunpack.c.l.b16 %v758
        %v1763 = vunpack.c.h.b16 %v758
        %v1764 = vunpack.c.l.b16 %v759
        %v1765 = vunpack.c.h.b16 %v759
        %v1766 = vunpack.c.l.b16 %v760
        %v1767 = vunpack.c.h.b16 %v760
        %v1768 = vunpack.c.l.b16 %v761
        %v1769 = vunpack.c.h.b16 %v761
        %v1770 = vunpack.c.l.b16 %v762
        %v1771 = vunpack.c.h.b16 %v762
        %v1772 = vunpack.c.l.b16 %v763
        %v1773 = vunpack.c.h.b16 %v763
        %v1774 = vunpack.c.l.b16 %v764
        %v1775 = vunpack.c.h.b16 %v764
        %v1776 = vunpack.c.l.b16 %v765
        %v1777 = vunpack.c.h.b16 %v765
        %v1778 = vunpack.c.l.b16 %v766
        %v1779 = vunpack.c.h.b16 %v766
        %v1780 = vunpack.c.l.b16 %v767
        %v1781 = vunpack.c.h.b16 %v767
        %v1782 = vunpack.c.l.b16 %v768
        %v1783 = vunpack.c.h.b16 %v768
        %v1784 = vunpack.c.l.b16 %v769
        %v1785 = vunpack.c.h.b16 %v769
        %v1786 = vunpack.c.l.b16 %v770
        %v1787 = vunpack.c.h.b16 %v770
        %v1788 = vunpack.c.l.b16 %v771
        %v1789 = vunpack.c.h.b16 %v771
        %v1790 = vunpack.c.l.b16 %v772
        %v1791 = vunpack.c.h.b16 %v772
        %v1792 = vunpack.c.l.b16 %v773
        %v1793 = vunpack.c.h.b16 %v773
        %v1794 = vunpack.c.l.b16 %v774
        %v1795 = vunpack.c.h.b16 %v774
        %v1796 = vunpack.c.l.b16 %v775
        %v1797 = vunpack.c.h.b16 %v775
        %v1798 = vunpack.c.l.b16 %v776
        %v1799 = vunpack.c.h.b16 %v776
        %v1800 = vunpack.c.l.b16 %v777
        %v1801 = vunpack.c.h.b16 %v777
        %v1802 = vunpack.c.l.b16 %v778
        %v1803 = vunpack.c.h.b16 %v778
        %v1804 = vunpack.c.l.b16 %v779
        %v1805 = vunpack.c.h.b16 %v779
        %v1806 = vunpack.c.l.b16 %v780
        %v1807 = vunpack.c.h.b16 %v780
        %v1808 = vunpack.c.l.b16 %v781
        %v1809 = vunpack.c.h.b16 %v781
        %v1810 = vunpack.c.l.b16 %v782
        %v1811 = vunpack.c.h.b16 %v782
        %v1812 = vunpack.c.l.b16 %v783
        %v1813 = vunpack.c.h.b16 %v783
        %v1814 = vunpack.c.l.b16 %v784
        %v1815 = vunpack.c.h.b16 %v784
        %v1816 = vunpack.c.l.b16 %v785
        %v1817 = vunpack.c.h.b16 %v785
        %v1818 = vunpack.c.l.b16 %v786
        %v1819 = vunpack.c.h.b16 %v786
        %v1820 = vunpack.c.l.b16 %v787
        %v1821 = vunpack.c.h.b16 %v787
        %v1822 = vunpack.c.l.b16 %v788
        %v1823 = vunpack.c.h.b16 %v788
        %v1824 = vunpack.c.l.b16 %v789
        %v1825 = vunpack.c.h.b16 %v789
        %v1826 = vunpack.c.l.b16 %v790
        %v1827 = vunpack.c.h.b16 %v790
        %v1828 = vunpack.c.l.b16 %v791
        %v1829 = vunpack.c.h.b16 %v791
        %v1830 = vunpack.c.l.b16 %v792
        %v1831 = vunpack.c.h.b16 %v792
        %v1832 = vunpack.c.l.b16 %v793
        %v1833 = vunpack.c.h.b16 %v793
        %v1834 = vunpack.c.l.b16 %v794
        %v1835 = vunpack.c.h.b16 %v794
        %v1836 = vunpack.c.l.b16 %v795
        %v1837 = vunpack.c.h.b16 %v795
        %v1838 = vunpack.c.l.b16 %v796
        %v1839 = vunpack.c.h.b16 %v796
        %v1840 = vunpack.c.l.b16 %v797
        %v1841 = vunpack.c.h.b16 %v797
        %v1842 = vunpack.c.l.b16 %v798
        %v1843 = vunpack.c.h.b16 %v798
        %v1844 = vunpack.c.l.b16 %v799
        %v1845 = vunpack.c.h.b16 %v799
        %v1846 = vunpack.c.l.b16 %v800
        %v1847 = vunpack.c.h.b16 %v800
        %v1848 = vunpack.c.l.b16 %v801
        %v1849 = vunpack.c.h.b16 %v801
        %v1850 = vunpack.c.l.b16 %v802
        %v1851 = vunpack.c.h.b16 %v802
        %v1852 = vunpack.c.l.b16 %v803
        %v1853 = vunpack.c.h.b16 %v803
        %v1854 = vunpack.c.l.b16 %v804
        %v1855 = vunpack.c.h.b16 %v804
        %v1856 = vunpack.c.l.b16 %v805
        %v1857 = vunpack.c.h.b16 %v805
        %v1858 = vunpack.c.l.b16 %v806
        %v1859 = vunpack.c.h.b16 %v806
        %v1860 = vunpack.c.l.b16 %v807
        %v1861 = vunpack.c.h.b16 %v807
        %v1862 = vunpack.c.l.b16 %v808
        %v1863 = vunpack.c.h.b16 %v808
        %v1864 = vunpack.c.l.b16 %v809
        %v1865 = vunpack.c.h.b16 %v809
        %v1866 = vunpack.c.l.b16 %v810
        %v1867 = vunpack.c.h.b16 %v810
        %v1868 = vunpack.c.l.b16 %v811
        %v1869 = vunpack.c.h.b16 %v811
        %v1870 = vunpack.c.l.b16 %v812
        %v1871 = vunpack.c.h.b16 %v812
        %v1872 = vunpack.c.l.b16 %v813
        %v1873 = vunpack.c.h.b16 %v813
        %v1874 = vunpack.c.l.b16 %v814
        %v1875 = vunpack.c.h.b16 %v814
        %v1876 = vunpack.c.l.b16 %v815
        %v1877 = vunpack.c.h.b16 %v815
        %v1878 = vunpack.c.l.b16 %v816
        %v1879 = vunpack.c.h.b16 %v816
        %v1880 = vunpack.c.l.b16 %v817
        %v1881 = vunpack.c.h.b16 %v817
        %v1882 = vunpack.c.l.b16 %v818
        %v1883 = vunpack.c.h.b16 %v818
        %v1884 = vunpack.c.l.b16 %v819
        %v1885 = vunpack.c.h.b16 %v819
        %v1886 = vunpack.c.l.b16 %v820
        %v1887 = vunpack.c.h.b16 %v820
        %v1888 = vunpack.c.l.b16 %v821
        %v1889 = vunpack.c.h.b16 %v821
        %v1890 = vunpack.c.l.b16 %v822
        %v1891 = vunpack.c.h.b16 %v822
        %v1892 = vunpack.c.l.b16 %v823
        %v1893 = vunpack.c.h.b16 %v823
        %v1894 = vunpack.c.l.b16 %v824
        %v1895 = vunpack.c.h.b16 %v824
        %v1896 = vunpack.c.l.b16 %v825
        %v1897 = vunpack.c.h.b16 %v825
        %v1898 = vunpack.c.l.b16 %v826
        %v1899 = vunpack.c.h.b16 %v826
        %v1900 = vunpack.c.l.b16 %v827
        %v1901 = vunpack.c.h.b16 %v827
        %v1902 = vunpack.c.l.b16 %v828
        %v1903 = vunpack.c.h.b16 %v828
        %v1904 = vunpack.c.l.b16 %v829
        %v1905 = vunpack.c.h.b16 %v829
        %v1906 = vunpack.c.l.b16 %v830
        %v1907 = vunpack.c.h.b16 %v830
        %v1908 = vunpack.c.l.b16 %v831
        %v1909 = vunpack.c.h.b16 %v831
        %v1910 = vunpack.c.l.b16 %v832
        %v1911 = vunpack.c.h.b16 %v832
        %v1912 = vunpack.c.l.b16 %v833
        %v1913 = vunpack.c.h.b16 %v833
        %v1914 = vunpack.c.l.b16 %v834
        %v1915 = vunpack.c.h.b16 %v834
        %v1916 = vunpack.c.l.b16 %v835
        %v1917 = vunpack.c.h.b16 %v835
        %v1918 = vunpack.c.l.b16 %v836
        %v1919 = vunpack.c.h.b16 %v836
        %v1920 = vunpack.c.l.b16 %v837
        %v1921 = vunpack.c.h.b16 %v837
        %v1922 = vunpack.c.l.b16 %v838
        %v1923 = vunpack.c.h.b16 %v838
        %v1924 = vunpack.c.l.b16 %v839
        %v1925 = vunpack.c.h.b16 %v839
        %v1926 = vunpack.c.l.b16 %v840
        %v1927 = vunpack.c.h.b16 %v840
        %v1928 = vunpack.c.l.b16 %v841
        %v1929 = vunpack.c.h.b16 %v841
        %v1930 = vunpack.c.l.b16 %v842
        %v1931 = vunpack.c.h.b16 %v842
        %v1932 = vunpack.c.l.b16 %v843
        %v1933 = vunpack.c.h.b16 %v843
        %v1934 = vunpack.c.l.b16 %v844
        %v1935 = vunpack.c.h.b16 %v844
        %v1936 = vunpack.c.l.b16 %v845
        %v1937 = vunpack.c.h.b16 %v845
        %v1938 = vunpack.c.l.b16 %v846
        %v1939 = vunpack.c.h.b16 %v846
        %v1940 = vunpack.c.l.b16 %v847
        %v1941 = vunpack.c.h.b16 %v847
        %v1942 = vunpack.c.l.b16 %v848
        %v1943 = vunpack.c.h.b16 %v848
        %v1944 = vunpack.c.l.b16 %v849
        %v1945 = vunpack.c.h.b16 %v849
        %v1946 = vunpack.c.l.b16 %v850
        %v1947 = vunpack.c.h.b16 %v850
        %v1948 = vunpack.c.l.b16 %v851
        %v1949 = vunpack.c.h.b16 %v851
        %v1950 = vunpack.c.l.b16 %v852
        %v1951 = vunpack.c.h.b16 %v852
        %v1952 = vunpack.c.l.b16 %v853
        %v1953 = vunpack.c.h.b16 %v853
        %v1954 = vunpack.c.l.b16 %v854
        %v1955 = vunpack.c.h.b16 %v854
        %v1956 = vunpack.c.l.b16 %v855
        %v1957 = vunpack.c.h.b16 %v855
        %v1958 = vunpack.c.l.b16 %v856
        %v1959 = vunpack.c.h.b16 %v856
        %v1960 = vunpack.c.l.b16 %v857
        %v1961 = vunpack.c.h.b16 %v857
        %v1962 = vunpack.c.l.b16 %v858
        %v1963 = vunpack.c.h.b16 %v858
        %v1964 = vunpack.c.l.b16 %v859
        %v1965 = vunpack.c.h.b16 %v859
        %v1966 = vunpack.c.l.b16 %v860
        %v1967 = vunpack.c.h.b16 %v860
        %v1968 = vunpack.c.l.b16 %v861
        %v1969 = vunpack.c.h.b16 %v861
        %v1970 = vunpack.c.l.b16 %v862
        %v1971 = vunpack.c.h.b16 %v862
        %v1972 = vunpack.c.l.b16 %v863
        %v1973 = vunpack.c.h.b16 %v863
        %v1974 = vunpack.c.l.b16 %v864
        %v1975 = vunpack.c.h.b16 %v864
        %v1976 = vunpack.c.l.b16 %v865
        %v1977 = vunpack.c.h.b16 %v865
        %v1978 = vunpack.c.l.b16 %v866
        %v1979 = vunpack.c.h.b16 %v866
        %v1980 = vunpack.c.l.b16 %v867
        %v1981 = vunpack.c.h.b16 %v867
        %v1982 = vunpack.c.l.b16 %v868
        %v1983 = vunpack.c.h.b16 %v868
        %v1984 = vunpack.c.l.b16 %v869
        %v1985 = vunpack.c.h.b16 %v869
        %v1986 = vunpack.c.l.b16 %v870
        %v1987 = vunpack.c.h.b16 %v870
        %v1988 = vunpack.c.l.b16 %v871
        %v1989 = vunpack.c.h.b16 %v871
        %v1990 = vunpack.c.l.b16 %v872
        %v1991 = vunpack.c.h.b16 %v872
        %v1992 = vunpack.c.l.b16 %v873
        %v1993 = vunpack.c.h.b16 %v873
        %v1994 = vunpack.c.l.b16 %v874
        %v1995 = vunpack.c.h.b16 %v874
        %v1996 = vunpack.c.l.b16 %v875
        %v1997 = vunpack.c.h.b16 %v875
        %v1998 = vunpack.c.l.b16 %v876
        %v1999 = vunpack.c.h.b16 %v876
        %v2000 = vunpack.c.l.b16 %v877
        %v2001 = vunpack.c.h.b16 %v877
        %v2002 = vunpack.c.l.b16 %v878
        %v2003 = vunpack.c.h.b16 %v878
        %v2004 = vunpack.c.l.b16 %v879
        %v2005 = vunpack.c.h.b16 %v879
        %v2006 = vunpack.c.l.b16 %v880
        %v2007 = vunpack.c.h.b16 %v880
        %v2008 = vunpack.c.l.b16 %v881
        %v2009 = vunpack.c.h.b16 %v881
        %v2010 = vunpack.c.l.b16 %v882
        %v2011 = vunpack.c.h.b16 %v882
        %v2012 = vunpack.c.l.b16 %v883
        %v2013 = vunpack.c.h.b16 %v883
        %v2014 = vunpack.c.l.b16 %v884
        %v2015 = vunpack.c.h.b16 %v884
        %v2016 = vunpack.c.l.b16 %v885
        %v2017 = vunpack.c.h.b16 %v885
        %v2018 = vunpack.c.l.b16 %v886
        %v2019 = vunpack.c.h.b16 %v886
        %v2020 = vunpack.c.l.b16 %v887
        %v2021 = vunpack.c.h.b16 %v887
        %v2022 = vunpack.c.l.b16 %v888
        %v2023 = vunpack.c.h.b16 %v888
        %v2024 = vunpack.c.l.b16 %v889
        %v2025 = vunpack.c.h.b16 %v889
        %v2026 = vunpack.c.l.b16 %v890
        %v2027 = vunpack.c.h.b16 %v890
        %v2028 = vunpack.c.l.b16 %v891
        %v2029 = vunpack.c.h.b16 %v891
        %v2030 = vunpack.c.l.b16 %v892
        %v2031 = vunpack.c.h.b16 %v892
        %v2032 = vunpack.c.l.b16 %v893
        %v2033 = vunpack.c.h.b16 %v893
        %v2034 = vunpack.c.l.b16 %v894
        %v2035 = vunpack.c.h.b16 %v894
        %v2036 = vunpack.c.l.b16 %v895
        %v2037 = vunpack.c.h.b16 %v895
        %v2038 = vunpack.c.l.b16 %v896
        %v2039 = vunpack.c.h.b16 %v896
        %v2040 = vunpack.c.l.b16 %v897
        %v2041 = vunpack.c.h.b16 %v897
        %v2042 = vunpack.c.l.b16 %v898
        %v2043 = vunpack.c.h.b16 %v898
        %v2044 = vunpack.c.l.b16 %v899
        %v2045 = vunpack.c.h.b16 %v899
        %v2046 = vunpack.c.l.b16 %v900
        %v2047 = vunpack.c.h.b16 %v900
        %v2048 = vunpack.c.l.b16 %v901
        %v2049 = vunpack.c.h.b16 %v901
        %v2050 = vunpack.c.l.b16 %v902
        %v2051 = vunpack.c.h.b16 %v902
        %v2052 = vunpack.c.l.b16 %v903
        %v2053 = vunpack.c.h.b16 %v903
        %v2054 = vunpack.c.l.b16 %v904
        %v2055 = vunpack.c.h.b16 %v904
        %v2056 = vunpack.c.l.b16 %v905
        %v2057 = vunpack.c.h.b16 %v905
        %v2058 = vunpack.c.l.b16 %v906
        %v2059 = vunpack.c.h.b16 %v906
        %v2060 = vunpack.c.l.b16 %v907
        %v2061 = vunpack.c.h.b16 %v907
        %v2062 = vunpack.c.l.b16 %v908
        %v2063 = vunpack.c.h.b16 %v908
        %v2064 = vunpack.c.l.b16 %v909
        %v2065 = vunpack.c.h.b16 %v909
        %v2066 = vunpack.c.l.b16 %v910
        %v2067 = vunpack.c.h.b16 %v910
        %v2068 = vunpack.c.l.b16 %v911
        %v2069 = vunpack.c.h.b16 %v911
        %v2070 = vunpack.c.l.b16 %v912
        %v2071 = vunpack.c.h.b16 %v912
        %v2072 = vunpack.c.l.b16 %v913
        %v2073 = vunpack.c.h.b16 %v913
        %v2074 = vunpack.c.l.b16 %v914
        %v2075 = vunpack.c.h.b16 %v914
        %v2076 = vunpack.c.l.b16 %v915
        %v2077 = vunpack.c.h.b16 %v915
        %v2078 = vunpack.c.l.b16 %v916
        %v2079 = vunpack.c.h.b16 %v916
        %v2080 = vunpack.c.l.b16 %v917
        %v2081 = vunpack.c.h.b16 %v917
        %v2082 = vunpack.c.l.b16 %v918
        %v2083 = vunpack.c.h.b16 %v918
        %v2084 = vunpack.c.l.b16 %v919
        %v2085 = vunpack.c.h.b16 %v919
        %v2086 = vunpack.c.l.b16 %v920
        %v2087 = vunpack.c.h.b16 %v920
        %v2088 = vunpack.c.l.b16 %v921
        %v2089 = vunpack.c.h.b16 %v921
        %v2090 = vunpack.c.l.b16 %v922
        %v2091 = vunpack.c.h.b16 %v922
        %v2092 = vunpack.c.l.b16 %v923
        %v2093 = vunpack.c.h.b16 %v923
        %v2094 = vunpack.c.l.b16 %v924
        %v2095 = vunpack.c.h.b16 %v924
        %v2096 = vunpack.c.l.b16 %v925
        %v2097 = vunpack.c.h.b16 %v925
        %v2098 = vunpack.c.l.b16 %v926
        %v2099 = vunpack.c.h.b16 %v926
        %v2100 = vunpack.c.l.b16 %v927
        %v2101 = vunpack.c.h.b16 %v927
        %v2102 = vunpack.c.l.b16 %v928
        %v2103 = vunpack.c.h.b16 %v928
        %v2104 = vunpack.c.l.b16 %v929
        %v2105 = vunpack.c.h.b16 %v929
        %v2106 = vunpack.c.l.b16 %v930
        %v2107 = vunpack.c.h.b16 %v930
        %v2108 = vunpack.c.l.b16 %v931
        %v2109 = vunpack.c.h.b16 %v931
        %v2110 = vunpack.c.l.b16 %v932
        %v2111 = vunpack.c.h.b16 %v932
        %v2112 = vunpack.c.l.b16 %v933
        %v2113 = vunpack.c.h.b16 %v933
        %v2114 = vunpack.c.l.b16 %v934
        %v2115 = vunpack.c.h.b16 %v934
        %v2116 = vunpack.c.l.b16 %v935
        %v2117 = vunpack.c.h.b16 %v935
        %v2118 = vunpack.c.l.b16 %v936
        %v2119 = vunpack.c.h.b16 %v936
        %v2120 = vunpack.c.l.b16 %v937
        %v2121 = vunpack.c.h.b16 %v937
        %v2122 = vunpack.c.l.b16 %v938
        %v2123 = vunpack.c.h.b16 %v938
        %v2124 = vunpack.c.l.b16 %v939
        %v2125 = vunpack.c.h.b16 %v939
        %v2126 = vunpack.c.l.b16 %v940
        %v2127 = vunpack.c.h.b16 %v940
        %v2128 = vunpack.c.l.b16 %v941
        %v2129 = vunpack.c.h.b16 %v941
        %v2130 = vunpack.c.l.b16 %v942
        %v2131 = vunpack.c.h.b16 %v942
        %v2132 = vunpack.c.l.b16 %v943
        %v2133 = vunpack.c.h.b16 %v943
        %v2134 = vunpack.c.l.b16 %v944
        %v2135 = vunpack.c.h.b16 %v944
        %v2136 = vunpack.c.l.b16 %v945
        %v2137 = vunpack.c.h.b16 %v945
        %v2138 = vunpack.c.l.b16 %v946
        %v2139 = vunpack.c.h.b16 %v946
        %v2140 = vunpack.c.l.b16 %v947
        %v2141 = vunpack.c.h.b16 %v947
        %v2142 = vunpack.c.l.b16 %v948
        %v2143 = vunpack.c.h.b16 %v948
        %v2144 = vunpack.c.l.b16 %v949
        %v2145 = vunpack.c.h.b16 %v949
        %v2146 = vunpack.c.l.b16 %v950
        %v2147 = vunpack.c.h.b16 %v950
        %v2148 = vunpack.c.l.b16 %v951
        %v2149 = vunpack.c.h.b16 %v951
        %v2150 = vunpack.c.l.b16 %v952
        %v2151 = vunpack.c.h.b16 %v952
        %v2152 = vunpack.c.l.b16 %v953
        %v2153 = vunpack.c.h.b16 %v953
        %v2154 = vpack.c.b16 %v1356, %v1354
        %v2155 = vpack.c.b16 %v1357, %v1355
        %v2156 = vpack.c.b16 %v1360, %v1358
        %v2157 = vpack.c.b16 %v1361, %v1359
        %v2158 = vpack.c.b16 %v1364, %v1362
        %v2159 = vpack.c.b16 %v1365, %v1363
        %v2160 = vpack.c.b16 %v1368, %v1366
        %v2161 = vpack.c.b16 %v1369, %v1367
        %v2162 = vpack.c.b16 %v1372, %v1370
        %v2163 = vpack.c.b16 %v1373, %v1371
        %v2164 = vpack.c.b16 %v1376, %v1374
        %v2165 = vpack.c.b16 %v1377, %v1375
        %v2166 = vpack.c.b16 %v1380, %v1378
        %v2167 = vpack.c.b16 %v1381, %v1379
        %v2168 = vpack.c.b16 %v1384, %v1382
        %v2169 = vpack.c.b16 %v1385, %v1383
        %v2170 = vpack.c.b16 %v1388, %v1386
        %v2171 = vpack.c.b16 %v1389, %v1387
        %v2172 = vpack.c.b16 %v1392, %v1390
        %v2173 = vpack.c.b16 %v1393, %v1391
        %v2174 = vpack.c.b16 %v1396, %v1394
        %v2175 = vpack.c.b16 %v1397, %v1395
        %v2176 = vpack.c.b16 %v1400, %v1398
        %v2177 = vpack.c.b16 %v1401, %v1399
        %v2178 = vpack.c.b16 %v1404, %v1402
        %v2179 = vpack.c.b16 %v1405, %v1403
        %v2180 = vpack.c.b16 %v1408, %v1406
        %v2181 = vpack.c.b16 %v1409, %v1407
        %v2182 = vpack.c.b16 %v1412, %v1410
        %v2183 = vpack.c.b16 %v1413, %v1411
        %v2184 = vpack.c.b16 %v1416, %v1414
        %v2185 = vpack.c.b16 %v1417, %v1415
        %v2186 = vpack.c.b16 %v1420, %v1418
        %v2187 = vpack.c.b16 %v1421, %v1419
        %v2188 = vpack.c.b16 %v1424, %v1422
        %v2189 = vpack.c.b16 %v1425, %v1423
        %v2190 = vpack.c.b16 %v1428, %v1426
        %v2191 = vpack.c.b16 %v1429, %v1427
        %v2192 = vpack.c.b16 %v1432, %v1430
        %v2193 = vpack.c.b16 %v1433, %v1431
        %v2194 = vpack.c.b16 %v1436, %v1434
        %v2195 = vpack.c.b16 %v1437, %v1435
        %v2196 = vpack.c.b16 %v1440, %v1438
        %v2197 = vpack.c.b16 %v1441, %v1439
        %v2198 = vpack.c.b16 %v1444, %v1442
        %v2199 = vpack.c.b16 %v1445, %v1443
        %v2200 = vpack.c.b16 %v1448, %v1446
        %v2201 = vpack.c.b16 %v1449, %v1447
        %v2202 = vpack.c.b16 %v1452, %v1450
        %v2203 = vpack.c.b16 %v1453, %v1451
        %v2204 = vpack.c.b16 %v1456, %v1454
        %v2205 = vpack.c.b16 %v1457, %v1455
        %v2206 = vpack.c.b16 %v1460, %v1458
        %v2207 = vpack.c.b16 %v1461, %v1459
        %v2208 = vpack.c.b16 %v1464, %v1462
        %v2209 = vpack.c.b16 %v1465, %v1463
        %v2210 = vpack.c.b16 %v1468, %v1466
        %v2211 = vpack.c.b16 %v1469, %v1467
        %v2212 = vpack.c.b16 %v1472, %v1470
        %v2213 = vpack.c.b16 %v1473, %v1471
        %v2214 = vpack.c.b16 %v1476, %v1474
        %v2215 = vpack.c.b16 %v1477, %v1475
        %v2216 = vpack.c.b16 %v1480, %v1478
        %v2217 = vpack.c.b16 %v1481, %v1479
        %v2218 = vpack.c.b16 %v1484, %v1482
        %v2219 = vpack.c.b16 %v1485, %v1483
        %v2220 = vpack.c.b16 %v1488, %v1486
        %v2221 = vpack.c.b16 %v1489, %v1487
        %v2222 = vpack.c.b16 %v1492, %v1490
        %v2223 = vpack.c.b16 %v1493, %v1491
        %v2224 = vpack.c.b16 %v1496, %v1494
        %v2225 = vpack.c.b16 %v1497, %v1495
        %v2226 = vpack.c.b16 %v1500, %v1498
        %v2227 = vpack.c.b16 %v1501, %v1499
        %v2228 = vpack.c.b16 %v1504, %v1502
        %v2229 = vpack.c.b16 %v1505, %v1503
        %v2230 = vpack.c.b16 %v1508, %v1506
        %v2231 = vpack.c.b16 %v1509, %v1507
        %v2232 = vpack.c.b16 %v1512, %v1510
        %v2233 = vpack.c.b16 %v1513, %v1511
        %v2234 = vpack.c.b16 %v1516, %v1514
        %v2235 = vpack.c.b16 %v1517, %v1515
        %v2236 = vpack.c.b16 %v1520, %v1518
        %v2237 = vpack.c.b16 %v1521, %v1519
        %v2238 = vpack.c.b16 %v1524, %v1522
        %v2239 = vpack.c.b16 %v1525, %v1523
        %v2240 = vpack.c.b16 %v1528, %v1526
        %v2241 = vpack.c.b16 %v1529, %v1527
        %v2242 = vpack.c.b16 %v1532, %v1530
        %v2243 = vpack.c.b16 %v1533, %v1531
        %v2244 = vpack.c.b16 %v1536, %v1534
        %v2245 = vpack.c.b16 %v1537, %v1535
        %v2246 = vpack.c.b16 %v1540, %v1538
        %v2247 = vpack.c.b16 %v1541, %v1539
        %v2248 = vpack.c.b16 %v1544, %v1542
        %v2249 = vpack.c.b16 %v1545, %v1543
        %v2250 = vpack.c.b16 %v1548, %v1546
        %v2251 = vpack.c.b16 %v1549, %v1547
        %v2252 = vpack.c.b16 %v1552, %v1550
        %v2253 = vpack.c.b16 %v1553, %v1551
        %v2254 = vpack.c.b16 %v1556, %v1554
        %v2255 = vpack.c.b16 %v1557, %v1555
        %v2256 = vpack.c.b16 %v1560, %v1558
        %v2257 = vpack.c.b16 %v1561, %v1559
        %v2258 = vpack.c.b16 %v1564, %v1562
        %v2259 = vpack.c.b16 %v1565, %v1563
        %v2260 = vpack.c.b16 %v1568, %v1566
        %v2261 = vpack.c.b16 %v1569, %v1567
        %v2262 = vpack.c.b16 %v1572, %v1570
        %v2263 = vpack.c.b16 %v1573, %v1571
        %v2264 = vpack.c.b16 %v1576, %v1574
        %v2265 = vpack.c.b16 %v1577, %v1575
        %v2266 = vpack.c.b16 %v1580, %v1578
        %v2267 = vpack.c.b16 %v1581, %v1579
        %v2268 = vpack.c.b16 %v1584, %v1582
        %v2269 = vpack.c.b16 %v1585, %v1583
        %v2270 = vpack.c.b16 %v1588, %v1586
        %v2271 = vpack.c.b16 %v1589, %v1587
        %v2272 = vpack.c.b16 %v1592, %v1590
        %v2273 = vpack.c.b16 %v1593, %v1591
        %v2274 = vpack.c.b16 %v1596, %v1594
        %v2275 = vpack.c.b16 %v1597, %v1595
        %v2276 = vpack.c.b16 %v1600, %v1598
        %v2277 = vpack.c.b16 %v1601, %v1599
        %v2278 = vpack.c.b16 %v1604, %v1602
        %v2279 = vpack.c.b16 %v1605, %v1603
        %v2280 = vpack.c.b16 %v1608, %v1606
        %v2281 = vpack.c.b16 %v1609, %v1607
        %v2282 = vpack.c.b16 %v1612, %v1610
        %v2283 = vpack.c.b16 %v1613, %v1611
        %v2284 = vpack.c.b16 %v1616, %v1614
        %v2285 = vpack.c.b16 %v1617, %v1615
        %v2286 = vpack.c.b16 %v1620, %v1618
        %v2287 = vpack.c.b16 %v1621, %v1619
        %v2288 = vpack.c.b16 %v1624, %v1622
        %v2289 = vpack.c.b16 %v1625, %v1623
        %v2290 = vpack.c.b16 %v1628, %v1626
        %v2291 = vpack.c.b16 %v1629, %v1627
        %v2292 = vpack.c.b16 %v1632, %v1630
        %v2293 = vpack.c.b16 %v1633, %v1631
        %v2294 = vpack.c.b16 %v1636, %v1634
        %v2295 = vpack.c.b16 %v1637, %v1635
        %v2296 = vpack.c.b16 %v1640, %v1638
        %v2297 = vpack.c.b16 %v1641, %v1639
        %v2298 = vpack.c.b16 %v1644, %v1642
        %v2299 = vpack.c.b16 %v1645, %v1643
        %v2300 = vpack.c.b16 %v1648, %v1646
        %v2301 = vpack.c.b16 %v1649, %v1647
        %v2302 = vpack.c.b16 %v1652, %v1650
        %v2303 = vpack.c.b16 %v1653, %v1651
        %v2304 = vpack.c.b16 %v1656, %v1654
        %v2305 = vpack.c.b16 %v1657, %v1655
        %v2306 = vpack.c.b16 %v1660, %v1658
        %v2307 = vpack.c.b16 %v1661, %v1659
        %v2308 = vpack.c.b16 %v1664, %v1662
        %v2309 = vpack.c.b16 %v1665, %v1663
        %v2310 = vpack.c.b16 %v1668, %v1666
        %v2311 = vpack.c.b16 %v1669, %v1667
        %v2312 = vpack.c.b16 %v1672, %v1670
        %v2313 = vpack.c.b16 %v1673, %v1671
        %v2314 = vpack.c.b16 %v1676, %v1674
        %v2315 = vpack.c.b16 %v1677, %v1675
        %v2316 = vpack.c.b16 %v1680, %v1678
        %v2317 = vpack.c.b16 %v1681, %v1679
        %v2318 = vpack.c.b16 %v1684, %v1682
        %v2319 = vpack.c.b16 %v1685, %v1683
        %v2320 = vpack.c.b16 %v1688, %v1686
        %v2321 = vpack.c.b16 %v1689, %v1687
        %v2322 = vpack.c.b16 %v1692, %v1690
        %v2323 = vpack.c.b16 %v1693, %v1691
        %v2324 = vpack.c.b16 %v1696, %v1694
        %v2325 = vpack.c.b16 %v1697, %v1695
        %v2326 = vpack.c.b16 %v1700, %v1698
        %v2327 = vpack.c.b16 %v1701, %v1699
        %v2328 = vpack.c.b16 %v1704, %v1702
        %v2329 = vpack.c.b16 %v1705, %v1703
        %v2330 = vpack.c.b16 %v1708, %v1706
        %v2331 = vpack.c.b16 %v1709, %v1707
        %v2332 = vpack.c.b16 %v1712, %v1710
        %v2333 = vpack.c.b16 %v1713, %v1711
        %v2334 = vpack.c.b16 %v1716, %v1714
        %v2335 = vpack.c.b16 %v1717, %v1715
        %v2336 = vpack.c.b16 %v1720, %v1718
        %v2337 = vpack.c.b16 %v1721, %v1719
        %v2338 = vpack.c.b16 %v1724, %v1722
        %v2339 = vpack.c.b16 %v1725, %v1723
        %v2340 = vpack.c.b16 %v1728, %v1726
        %v2341 = vpack.c.b16 %v1729, %v1727
        %v2342 = vpack.c.b16 %v1732, %v1730
        %v2343 = vpack.c.b16 %v1733, %v1731
        %v2344 = vpack.c.b16 %v1736, %v1734
        %v2345 = vpack.c.b16 %v1737, %v1735
        %v2346 = vpack.c.b16 %v1740, %v1738
        %v2347 = vpack.c.b16 %v1741, %v1739
        %v2348 = vpack.c.b16 %v1744, %v1742
        %v2349 = vpack.c.b16 %v1745, %v1743
        %v2350 = vpack.c.b16 %v1748, %v1746
        %v2351 = vpack.c.b16 %v1749, %v1747
        %v2352 = vpack.c.b16 %v1752, %v1750
        %v2353 = vpack.c.b16 %v1753, %v1751
        %v2354 = vpack.c.b16 %v1756, %v1754
        %v2355 = vpack.c.b16 %v1757, %v1755
        %v2356 = vpack.c.b16 %v1760, %v1758
        %v2357 = vpack.c.b16 %v1761, %v1759
        %v2358 = vpack.c.b16 %v1764, %v1762
        %v2359 = vpack.c.b16 %v1765, %v1763
        %v2360 = vpack.c.b16 %v1768, %v1766
        %v2361 = vpack.c.b16 %v1769, %v1767
        %v2362 = vpack.c.b16 %v1772, %v1770
        %v2363 = vpack.c.b16 %v1773, %v1771
        %v2364 = vpack.c.b16 %v1776, %v1774
        %v2365 = vpack.c.b16 %v1777, %v1775
        %v2366 = vpack.c.b16 %v1780, %v1778
        %v2367 = vpack.c.b16 %v1781, %v1779
        %v2368 = vpack.c.b16 %v1784, %v1782
        %v2369 = vpack.c.b16 %v1785, %v1783
        %v2370 = vpack.c.b16 %v1788, %v1786
        %v2371 = vpack.c.b16 %v1789, %v1787
        %v2372 = vpack.c.b16 %v1792, %v1790
        %v2373 = vpack.c.b16 %v1793, %v1791
        %v2374 = vpack.c.b16 %v1796, %v1794
        %v2375 = vpack.c.b16 %v1797, %v1795
        %v2376 = vpack.c.b16 %v1800, %v1798
        %v2377 = vpack.c.b16 %v1801, %v1799
        %v2378 = vpack.c.b16 %v1804, %v1802
        %v2379 = vpack.c.b16 %v1805, %v1803
        %v2380 = vpack.c.b16 %v1808, %v1806
        %v2381 = vpack.c.b16 %v1809, %v1807
        %v2382 = vpack.c.b16 %v1812, %v1810
        %v2383 = vpack.c.b16 %v1813, %v1811
        %v2384 = vpack.c.b16 %v1816, %v1814
        %v2385 = vpack.c.b16 %v1817, %v1815
        %v2386 = vpack.c.b16 %v1820, %v1818
        %v2387 = vpack.c.b16 %v1821, %v1819
        %v2388 = vpack.c.b16 %v1824, %v1822
        %v2389 = vpack.c.b16 %v1825, %v1823
        %v2390 = vpack.c.b16 %v1828, %v1826
        %v2391 = vpack.c.b16 %v1829, %v1827
        %v2392 = vpack.c.b16 %v1832, %v1830
        %v2393 = vpack.c.b16 %v1833, %v1831
        %v2394 = vpack.c.b16 %v1836, %v1834
        %v2395 = vpack.c.b16 %v1837, %v1835
        %v2396 = vpack.c.b16 %v1840, %v1838
        %v2397 = vpack.c.b16 %v1841, %v1839
        %v2398 = vpack.c.b16 %v1844, %v1842
        %v2399 = vpack.c.b16 %v1845, %v1843
        %v2400 = vpack.c.b16 %v1848, %v1846
        %v2401 = vpack.c.b16 %v1849, %v1847
        %v2402 = vpack.c.b16 %v1852, %v1850
        %v2403 = vpack.c.b16 %v1853, %v1851
        %v2404 = vpack.c.b16 %v1856, %v1854
        %v2405 = vpack.c.b16 %v1857, %v1855
        %v2406 = vpack.c.b16 %v1860, %v1858
        %v2407 = vpack.c.b16 %v1861, %v1859
        %v2408 = vpack.c.b16 %v1864, %v1862
        %v2409 = vpack.c.b16 %v1865, %v1863
        %v2410 = vpack.c.b16 %v1868, %v1866
        %v2411 = vpack.c.b16 %v1869, %v1867
        %v2412 = vpack.c.b16 %v1872, %v1870
        %v2413 = vpack.c.b16 %v1873, %v1871
        %v2414 = vpack.c.b16 %v1876, %v1874
        %v2415 = vpack.c.b16 %v1877, %v1875
        %v2416 = vpack.c.b16 %v1880, %v1878
        %v2417 = vpack.c.b16 %v1881, %v1879
        %v2418 = vpack.c.b16 %v1884, %v1882
        %v2419 = vpack.c.b16 %v1885, %v1883
        %v2420 = vpack.c.b16 %v1888, %v1886
        %v2421 = vpack.c.b16 %v1889, %v1887
        %v2422 = vpack.c.b16 %v1892, %v1890
        %v2423 = vpack.c.b16 %v1893, %v1891
        %v2424 = vpack.c.b16 %v1896, %v1894
        %v2425 = vpack.c.b16 %v1897, %v1895
        %v2426 = vpack.c.b16 %v1900, %v1898
        %v2427 = vpack.c.b16 %v1901, %v1899
        %v2428 = vpack.c.b16 %v1904, %v1902
        %v2429 = vpack.c.b16 %v1905, %v1903
        %v2430 = vpack.c.b16 %v1908, %v1906
        %v2431 = vpack.c.b16 %v1909, %v1907
        %v2432 = vpack.c.b16 %v1912, %v1910
        %v2433 = vpack.c.b16 %v1913, %v1911
        %v2434 = vpack.c.b16 %v1916, %v1914
        %v2435 = vpack.c.b16 %v1917, %v1915
        %v2436 = vpack.c.b16 %v1920, %v1918
        %v2437 = vpack.c.b16 %v1921, %v1919
        %v2438 = vpack.c.b16 %v1924, %v1922
        %v2439 = vpack.c.b16 %v1925, %v1923
        %v2440 = vpack.c.b16 %v1928, %v1926
        %v2441 = vpack.c.b16 %v1929, %v1927
        %v2442 = vpack.c.b16 %v1932, %v1930
        %v2443 = vpack.c.b16 %v1933, %v1931
        %v2444 = vpack.c.b16 %v1936, %v1934
        %v2445 = vpack.c.b16 %v1937, %v1935
        %v2446 = vpack.c.b16 %v1940, %v1938
        %v2447 = vpack.c.b16 %v1941, %v1939
        %v2448 = vpack.c.b16 %v1944, %v1942
        %v2449 = vpack.c.b16 %v1945, %v1943
        %v2450 = vpack.c.b16 %v1948, %v1946
        %v2451 = vpack.c.b16 %v1949, %v1947
        %v2452 = vpack.c.b16 %v1952, %v1950
        %v2453 = vpack.c.b16 %v1953, %v1951
        %v2454 = vpack.c.b16 %v1956, %v1954
        %v2455 = vpack.c.b16 %v1957, %v1955
        %v2456 = vpack.c.b16 %v1960, %v1958
        %v2457 = vpack.c.b16 %v1961, %v1959
        %v2458 = vpack.c.b16 %v1964, %v1962
        %v2459 = vpack.c.b16 %v1965, %v1963
        %v2460 = vpack.c.b16 %v1968, %v1966
        %v2461 = vpack.c.b16 %v1969, %v1967
        %v2462 = vpack.c.b16 %v1972, %v1970
        %v2463 = vpack.c.b16 %v1973, %v1971
        %v2464 = vpack.c.b16 %v1976, %v1974
        %v2465 = vpack.c.b16 %v1977, %v1975
        %v2466 = vpack.c.b16 %v1980, %v1978
        %v2467 = vpack.c.b16 %v1981, %v1979
        %v2468 = vpack.c.b16 %v1984, %v1982
        %v2469 = vpack.c.b16 %v1985, %v1983
        %v2470 = vpack.c.b16 %v1988, %v1986
        %v2471 = vpack.c.b16 %v1989, %v1987
        %v2472 = vpack.c.b16 %v1992, %v1990
        %v2473 = vpack.c.b16 %v1993, %v1991
        %v2474 = vpack.c.b16 %v1996, %v1994
        %v2475 = vpack.c.b16 %v1997, %v1995
        %v2476 = vpack.c.b16 %v2000, %v1998
        %v2477 = vpack.c.b16 %v2001, %v1999
        %v2478 = vpack.c.b16 %v2004, %v2002
        %v2479 = vpack.c.b16 %v2005, %v2003
        %v2480 = vpack.c.b16 %v2008, %v2006
        %v2481 = vpack.c.b16 %v2009, %v2007
        %v2482 = vpack.c.b16 %v2012, %v2010
        %v2483 = vpack.c.b16 %v2013, %v2011
        %v2484 = vpack.c.b16 %v2016, %v2014
        %v2485 = vpack.c.b16 %v2017, %v2015
        %v2486 = vpack.c.b16 %v2020, %v2018
        %v2487 = vpack.c.b16 %v2021, %v2019
        %v2488 = vpack.c.b16 %v2024, %v2022
        %v2489 = vpack.c.b16 %v2025, %v2023
        %v2490 = vpack.c.b16 %v2028, %v2026
        %v2491 = vpack.c.b16 %v2029, %v2027
        %v2492 = vpack.c.b16 %v2032, %v2030
        %v2493 = vpack.c.b16 %v2033, %v2031
        %v2494 = vpack.c.b16 %v2036, %v2034
        %v2495 = vpack.c.b16 %v2037, %v2035
        %v2496 = vpack.c.b16 %v2040, %v2038
        %v2497 = vpack.c.b16 %v2041, %v2039
        %v2498 = vpack.c.b16 %v2044, %v2042
        %v2499 = vpack.c.b16 %v2045, %v2043
        %v2500 = vpack.c.b16 %v2048, %v2046
        %v2501 = vpack.c.b16 %v2049, %v2047
        %v2502 = vpack.c.b16 %v2052, %v2050
        %v2503 = vpack.c.b16 %v2053, %v2051
        %v2504 = vpack.c.b16 %v2056, %v2054
        %v2505 = vpack.c.b16 %v2057, %v2055
        %v2506 = vpack.c.b16 %v2060, %v2058
        %v2507 = vpack.c.b16 %v2061, %v2059
        %v2508 = vpack.c.b16 %v2064, %v2062
        %v2509 = vpack.c.b16 %v2065, %v2063
        %v2510 = vpack.c.b16 %v2068, %v2066
        %v2511 = vpack.c.b16 %v2069, %v2067
        %v2512 = vpack.c.b16 %v2072, %v2070
        %v2513 = vpack.c.b16 %v2073, %v2071
        %v2514 = vpack.c.b16 %v2076, %v2074
        %v2515 = vpack.c.b16 %v2077, %v2075
        %v2516 = vpack.c.b16 %v2080, %v2078
        %v2517 = vpack.c.b16 %v2081, %v2079
        %v2518 = vpack.c.b16 %v2084, %v2082
        %v2519 = vpack.c.b16 %v2085, %v2083
        %v2520 = vpack.c.b16 %v2088, %v2086
        %v2521 = vpack.c.b16 %v2089, %v2087
        %v2522 = vpack.c.b16 %v2092, %v2090
        %v2523 = vpack.c.b16 %v2093, %v2091
        %v2524 = vpack.c.b16 %v2096, %v2094
        %v2525 = vpack.c.b16 %v2097, %v2095
        %v2526 = vpack.c.b16 %v2100, %v2098
        %v2527 = vpack.c.b16 %v2101, %v2099
        %v2528 = vpack.c.b16 %v2104, %v2102
        %v2529 = vpack.c.b16 %v2105, %v2103
        %v2530 = vpack.c.b16 %v2108, %v2106
        %v2531 = vpack.c.b16 %v2109, %v2107
        %v2532 = vpack.c.b16 %v2112, %v2110
        %v2533 = vpack.c.b16 %v2113, %v2111
        %v2534 = vpack.c.b16 %v2116, %v2114
        %v2535 = vpack.c.b16 %v2117, %v2115
        %v2536 = vpack.c.b16 %v2120, %v2118
        %v2537 = vpack.c.b16 %v2121, %v2119
        %v2538 = vpack.c.b16 %v2124, %v2122
        %v2539 = vpack.c.b16 %v2125, %v2123
        %v2540 = vpack.c.b16 %v2128, %v2126
        %v2541 = vpack.c.b16 %v2129, %v2127
        %v2542 = vpack.c.b16 %v2132, %v2130
        %v2543 = vpack.c.b16 %v2133, %v2131
        %v2544 = vpack.c.b16 %v2136, %v2134
        %v2545 = vpack.c.b16 %v2137, %v2135
        %v2546 = vpack.c.b16 %v2140, %v2138
        %v2547 = vpack.c.b16 %v2141, %v2139
        %v2548 = vpack.c.b16 %v2144, %v2142
        %v2549 = vpack.c.b16 %v2145, %v2143
        %v2550 = vpack.c.b16 %v2148, %v2146
        %v2551 = vpack.c.b16 %v2149, %v2147
        %v2552 = vpack.c.b16 %v2152, %v2150
        %v2553 = vpack.c.b16 %v2153, %v2151
        %2954 = vmatpush.bf16.msra.mxu0 %v2168
        %2955 = vmatpush.bf16.msra.mxu0 %v2166
        %2956 = vmatpush.bf16.msra.mxu0 %v2164
        %2957 = vmatpush.bf16.msra.mxu0 %v2162
        %2958 = vmatpush.bf16.msra.mxu0 %v2160
        %2959 = vmatpush.bf16.msra.mxu0 %v2158
        %2960 = vmatpush.bf16.msra.mxu0 %v2156
        %2961 = vmatpush.bf16.msra.mxu0 %v2154
        %2962 = vmatmul.bf16.gmra.mxu0 %v529
        %v2963 = vpop.f32.mrf.mxu0
        %v2964 = vadd.f32 0.0, %v2963
        %v2965 = vpop.f32.mrf.mxu0
        %2966 = vdwg.mxu0
        %2967 = vmatpush.bf16.msra.mxu0 %v2184
        %2968 = vmatpush.bf16.msra.mxu0 %v2182
        %2969 = vmatpush.bf16.msra.mxu0 %v2180
        %2970 = vmatpush.bf16.msra.mxu0 %v2178
        %2971 = vmatpush.bf16.msra.mxu0 %v2176
        %2972 = vmatpush.bf16.msra.mxu0 %v2174
        %2973 = vmatpush.bf16.msra.mxu0 %v2172
        %2974 = vmatpush.bf16.msra.mxu0 %v2170
        %2975 = vmatmul.bf16.gmra.mxu0 %v530
        %v2976 = vpop.f32.mrf.mxu0
        %v2977 = vadd.f32 %v2964, %v2976
        %v2978 = vpop.f32.mrf.mxu0
        %2979 = vdwg.mxu0
        %2980 = vmatpush.bf16.msra.mxu0 %v2200
        %2981 = vmatpush.bf16.msra.mxu0 %v2198
        %2982 = vmatpush.bf16.msra.mxu0 %v2196
        %2983 = vmatpush.bf16.msra.mxu0 %v2194
        %2984 = vmatpush.bf16.msra.mxu0 %v2192
        %2985 = vmatpush.bf16.msra.mxu0 %v2190
        %2986 = vmatpush.bf16.msra.mxu0 %v2188
        %2987 = vmatpush.bf16.msra.mxu0 %v2186
        %2988 = vmatmul.bf16.gmra.mxu0 %v531
        %v2989 = vpop.f32.mrf.mxu0
        %v2990 = vadd.f32 %v2977, %v2989
        %v2991 = vpop.f32.mrf.mxu0
        %2992 = vdwg.mxu0
        %2993 = vmatpush.bf16.msra.mxu0 %v2216
        %2994 = vmatpush.bf16.msra.mxu0 %v2214
        %2995 = vmatpush.bf16.msra.mxu0 %v2212
        %2996 = vmatpush.bf16.msra.mxu0 %v2210
        %2997 = vmatpush.bf16.msra.mxu0 %v2208
        %2998 = vmatpush.bf16.msra.mxu0 %v2206
        %2999 = vmatpush.bf16.msra.mxu0 %v2204
        %3000 = vmatpush.bf16.msra.mxu0 %v2202
        %3001 = vmatmul.bf16.gmra.mxu0 %v532
        %v3002 = vpop.f32.mrf.mxu0
        %v3003 = vadd.f32 %v2990, %v3002
        %v3004 = vpop.f32.mrf.mxu0
        %3005 = vdwg.mxu0
        %3006 = vmatpush.bf16.msra.mxu0 %v2232
        %3007 = vmatpush.bf16.msra.mxu0 %v2230
        %3008 = vmatpush.bf16.msra.mxu0 %v2228
        %3009 = vmatpush.bf16.msra.mxu0 %v2226
        %3010 = vmatpush.bf16.msra.mxu0 %v2224
        %3011 = vmatpush.bf16.msra.mxu0 %v2222
        %3012 = vmatpush.bf16.msra.mxu0 %v2220
        %3013 = vmatpush.bf16.msra.mxu0 %v2218
        %3014 = vmatmul.bf16.gmra.mxu0 %v533
        %v3015 = vpop.f32.mrf.mxu0
        %v3016 = vadd.f32 %v3003, %v3015
        %v3017 = vpop.f32.mrf.mxu0
        %3018 = vdwg.mxu0
        %3019 = vmatpush.bf16.msra.mxu0 %v2248
        %3020 = vmatpush.bf16.msra.mxu0 %v2246
        %3021 = vmatpush.bf16.msra.mxu0 %v2244
        %3022 = vmatpush.bf16.msra.mxu0 %v2242
        %3023 = vmatpush.bf16.msra.mxu0 %v2240
        %3024 = vmatpush.bf16.msra.mxu0 %v2238
        %3025 = vmatpush.bf16.msra.mxu0 %v2236
        %3026 = vmatpush.bf16.msra.mxu0 %v2234
        %3027 = vmatmul.bf16.gmra.mxu0 %v534
        %v3028 = vpop.f32.mrf.mxu0
        %v3029 = vadd.f32 %v3016, %v3028
        %v3030 = vpop.f32.mrf.mxu0
        %3031 = vdwg.mxu0
        %3032 = vmatpush.bf16.msra.mxu0 %v2264
        %3033 = vmatpush.bf16.msra.mxu0 %v2262
        %3034 = vmatpush.bf16.msra.mxu0 %v2260
        %3035 = vmatpush.bf16.msra.mxu0 %v2258
        %3036 = vmatpush.bf16.msra.mxu0 %v2256
        %3037 = vmatpush.bf16.msra.mxu0 %v2254
        %3038 = vmatpush.bf16.msra.mxu0 %v2252
        %3039 = vmatpush.bf16.msra.mxu0 %v2250
        %3040 = vmatmul.bf16.gmra.mxu0 %v535
        %v3041 = vpop.f32.mrf.mxu0
        %v3042 = vadd.f32 %v3029, %v3041
        %v3043 = vpop.f32.mrf.mxu0
        %3044 = vdwg.mxu0
        %3045 = vmatpush.bf16.msra.mxu0 %v2280
        %3046 = vmatpush.bf16.msra.mxu0 %v2278
        %3047 = vmatpush.bf16.msra.mxu0 %v2276
        %3048 = vmatpush.bf16.msra.mxu0 %v2274
        %3049 = vmatpush.bf16.msra.mxu0 %v2272
        %3050 = vmatpush.bf16.msra.mxu0 %v2270
        %3051 = vmatpush.bf16.msra.mxu0 %v2268
        %3052 = vmatpush.bf16.msra.mxu0 %v2266
        %3053 = vmatmul.bf16.gmra.mxu0 %v536
        %v3054 = vpop.f32.mrf.mxu0
        %v3055 = vadd.f32 %v3042, %v3054
        %v3056 = vpop.f32.mrf.mxu0
        %3057 = vdwg.mxu0
        %3058 = vmatpush.bf16.msra.mxu0 %v2296
        %3059 = vmatpush.bf16.msra.mxu0 %v2294
        %3060 = vmatpush.bf16.msra.mxu0 %v2292
        %3061 = vmatpush.bf16.msra.mxu0 %v2290
        %3062 = vmatpush.bf16.msra.mxu0 %v2288
        %3063 = vmatpush.bf16.msra.mxu0 %v2286
        %3064 = vmatpush.bf16.msra.mxu0 %v2284
        %3065 = vmatpush.bf16.msra.mxu0 %v2282
        %3066 = vmatmul.bf16.gmra.mxu0 %v537
        %v3067 = vpop.f32.mrf.mxu0
        %v3068 = vadd.f32 %v3055, %v3067
        %v3069 = vpop.f32.mrf.mxu0
        %3070 = vdwg.mxu0
        %3071 = vmatpush.bf16.msra.mxu0 %v2312
        %3072 = vmatpush.bf16.msra.mxu0 %v2310
        %3073 = vmatpush.bf16.msra.mxu0 %v2308
        %3074 = vmatpush.bf16.msra.mxu0 %v2306
        %3075 = vmatpush.bf16.msra.mxu0 %v2304
        %3076 = vmatpush.bf16.msra.mxu0 %v2302
        %3077 = vmatpush.bf16.msra.mxu0 %v2300
        %3078 = vmatpush.bf16.msra.mxu0 %v2298
        %3079 = vmatmul.bf16.gmra.mxu0 %v538
        %v3080 = vpop.f32.mrf.mxu0
        %v3081 = vadd.f32 %v3068, %v3080
        %v3082 = vpop.f32.mrf.mxu0
        %3083 = vdwg.mxu0
        %3084 = vmatpush.bf16.msra.mxu0 %v2328
        %3085 = vmatpush.bf16.msra.mxu0 %v2326
        %3086 = vmatpush.bf16.msra.mxu0 %v2324
        %3087 = vmatpush.bf16.msra.mxu0 %v2322
        %3088 = vmatpush.bf16.msra.mxu0 %v2320
        %3089 = vmatpush.bf16.msra.mxu0 %v2318
        %3090 = vmatpush.bf16.msra.mxu0 %v2316
        %3091 = vmatpush.bf16.msra.mxu0 %v2314
        %3092 = vmatmul.bf16.gmra.mxu0 %v539
        %v3093 = vpop.f32.mrf.mxu0
        %v3094 = vadd.f32 %v3081, %v3093
        %v3095 = vpop.f32.mrf.mxu0
        %3096 = vdwg.mxu0
        %3097 = vmatpush.bf16.msra.mxu0 %v2344
        %3098 = vmatpush.bf16.msra.mxu0 %v2342
        %3099 = vmatpush.bf16.msra.mxu0 %v2340
        %3100 = vmatpush.bf16.msra.mxu0 %v2338
        %3101 = vmatpush.bf16.msra.mxu0 %v2336
        %3102 = vmatpush.bf16.msra.mxu0 %v2334
        %3103 = vmatpush.bf16.msra.mxu0 %v2332
        %3104 = vmatpush.bf16.msra.mxu0 %v2330
        %3105 = vmatmul.bf16.gmra.mxu0 %v540
        %v3106 = vpop.f32.mrf.mxu0
        %v3107 = vadd.f32 %v3094, %v3106
        %v3108 = vpop.f32.mrf.mxu0
        %3109 = vdwg.mxu0
        %3110 = vmatpush.bf16.msra.mxu0 %v2360
        %3111 = vmatpush.bf16.msra.mxu0 %v2358
        %3112 = vmatpush.bf16.msra.mxu0 %v2356
        %3113 = vmatpush.bf16.msra.mxu0 %v2354
        %3114 = vmatpush.bf16.msra.mxu0 %v2352
        %3115 = vmatpush.bf16.msra.mxu0 %v2350
        %3116 = vmatpush.bf16.msra.mxu0 %v2348
        %3117 = vmatpush.bf16.msra.mxu0 %v2346
        %3118 = vmatmul.bf16.gmra.mxu0 %v541
        %v3119 = vpop.f32.mrf.mxu0
        %v3120 = vadd.f32 %v3107, %v3119
        %v3121 = vpop.f32.mrf.mxu0
        %3122 = vdwg.mxu0
        %3123 = vmatpush.bf16.msra.mxu0 %v2376
        %3124 = vmatpush.bf16.msra.mxu0 %v2374
        %3125 = vmatpush.bf16.msra.mxu0 %v2372
        %3126 = vmatpush.bf16.msra.mxu0 %v2370
        %3127 = vmatpush.bf16.msra.mxu0 %v2368
        %3128 = vmatpush.bf16.msra.mxu0 %v2366
        %3129 = vmatpush.bf16.msra.mxu0 %v2364
        %3130 = vmatpush.bf16.msra.mxu0 %v2362
        %3131 = vmatmul.bf16.gmra.mxu0 %v542
        %v3132 = vpop.f32.mrf.mxu0
        %v3133 = vadd.f32 %v3120, %v3132
        %v3134 = vpop.f32.mrf.mxu0
        %3135 = vdwg.mxu0
        %3136 = vmatpush.bf16.msra.mxu0 %v2392
        %3137 = vmatpush.bf16.msra.mxu0 %v2390
        %3138 = vmatpush.bf16.msra.mxu0 %v2388
        %3139 = vmatpush.bf16.msra.mxu0 %v2386
        %3140 = vmatpush.bf16.msra.mxu0 %v2384
        %3141 = vmatpush.bf16.msra.mxu0 %v2382
        %3142 = vmatpush.bf16.msra.mxu0 %v2380
        %3143 = vmatpush.bf16.msra.mxu0 %v2378
        %3144 = vmatmul.bf16.gmra.mxu0 %v543
        %v3145 = vpop.f32.mrf.mxu0
        %v3146 = vadd.f32 %v3133, %v3145
        %v3147 = vpop.f32.mrf.mxu0
        %3148 = vdwg.mxu0
        %3149 = vmatpush.bf16.msra.mxu0 %v2408
        %3150 = vmatpush.bf16.msra.mxu0 %v2406
        %3151 = vmatpush.bf16.msra.mxu0 %v2404
        %3152 = vmatpush.bf16.msra.mxu0 %v2402
        %3153 = vmatpush.bf16.msra.mxu0 %v2400
        %3154 = vmatpush.bf16.msra.mxu0 %v2398
        %3155 = vmatpush.bf16.msra.mxu0 %v2396
        %3156 = vmatpush.bf16.msra.mxu0 %v2394
        %3157 = vmatmul.bf16.gmra.mxu0 %v544
        %v3158 = vpop.f32.mrf.mxu0
        %v3159 = vadd.f32 %v3146, %v3158
        %v3160 = vpop.f32.mrf.mxu0
        %3161 = vdwg.mxu0
        %3162 = vmatpush.bf16.msra.mxu0 %v2424
        %3163 = vmatpush.bf16.msra.mxu0 %v2422
        %3164 = vmatpush.bf16.msra.mxu0 %v2420
        %3165 = vmatpush.bf16.msra.mxu0 %v2418
        %3166 = vmatpush.bf16.msra.mxu0 %v2416
        %3167 = vmatpush.bf16.msra.mxu0 %v2414
        %3168 = vmatpush.bf16.msra.mxu0 %v2412
        %3169 = vmatpush.bf16.msra.mxu0 %v2410
        %3170 = vmatmul.bf16.gmra.mxu0 %v545
        %v3171 = vpop.f32.mrf.mxu0
        %v3172 = vadd.f32 %v3159, %v3171
        %v3173 = vpop.f32.mrf.mxu0
        %3174 = vdwg.mxu0
        %3175 = vmatpush.bf16.msra.mxu0 %v2440
        %3176 = vmatpush.bf16.msra.mxu0 %v2438
        %3177 = vmatpush.bf16.msra.mxu0 %v2436
        %3178 = vmatpush.bf16.msra.mxu0 %v2434
        %3179 = vmatpush.bf16.msra.mxu0 %v2432
        %3180 = vmatpush.bf16.msra.mxu0 %v2430
        %3181 = vmatpush.bf16.msra.mxu0 %v2428
        %3182 = vmatpush.bf16.msra.mxu0 %v2426
        %3183 = vmatmul.bf16.gmra.mxu0 %v546
        %v3184 = vpop.f32.mrf.mxu0
        %v3185 = vadd.f32 %v3172, %v3184
        %v3186 = vpop.f32.mrf.mxu0
        %3187 = vdwg.mxu0
        %3188 = vmatpush.bf16.msra.mxu0 %v2456
        %3189 = vmatpush.bf16.msra.mxu0 %v2454
        %3190 = vmatpush.bf16.msra.mxu0 %v2452
        %3191 = vmatpush.bf16.msra.mxu0 %v2450
        %3192 = vmatpush.bf16.msra.mxu0 %v2448
        %3193 = vmatpush.bf16.msra.mxu0 %v2446
        %3194 = vmatpush.bf16.msra.mxu0 %v2444
        %3195 = vmatpush.bf16.msra.mxu0 %v2442
        %3196 = vmatmul.bf16.gmra.mxu0 %v547
        %v3197 = vpop.f32.mrf.mxu0
        %v3198 = vadd.f32 %v3185, %v3197
        %v3199 = vpop.f32.mrf.mxu0
        %3200 = vdwg.mxu0
        %3201 = vmatpush.bf16.msra.mxu0 %v2472
        %3202 = vmatpush.bf16.msra.mxu0 %v2470
        %3203 = vmatpush.bf16.msra.mxu0 %v2468
        %3204 = vmatpush.bf16.msra.mxu0 %v2466
        %3205 = vmatpush.bf16.msra.mxu0 %v2464
        %3206 = vmatpush.bf16.msra.mxu0 %v2462
        %3207 = vmatpush.bf16.msra.mxu0 %v2460
        %3208 = vmatpush.bf16.msra.mxu0 %v2458
        %3209 = vmatmul.bf16.gmra.mxu0 %v548
        %v3210 = vpop.f32.mrf.mxu0
        %v3211 = vadd.f32 %v3198, %v3210
        %v3212 = vpop.f32.mrf.mxu0
        %3213 = vdwg.mxu0
        %3214 = vmatpush.bf16.msra.mxu0 %v2488
        %3215 = vmatpush.bf16.msra.mxu0 %v2486
        %3216 = vmatpush.bf16.msra.mxu0 %v2484
        %3217 = vmatpush.bf16.msra.mxu0 %v2482
        %3218 = vmatpush.bf16.msra.mxu0 %v2480
        %3219 = vmatpush.bf16.msra.mxu0 %v2478
        %3220 = vmatpush.bf16.msra.mxu0 %v2476
        %3221 = vmatpush.bf16.msra.mxu0 %v2474
        %3222 = vmatmul.bf16.gmra.mxu0 %v549
        %v3223 = vpop.f32.mrf.mxu0
        %v3224 = vadd.f32 %v3211, %v3223
        %v3225 = vpop.f32.mrf.mxu0
        %3226 = vdwg.mxu0
        %3227 = vmatpush.bf16.msra.mxu0 %v2504
        %3228 = vmatpush.bf16.msra.mxu0 %v2502
        %3229 = vmatpush.bf16.msra.mxu0 %v2500
        %3230 = vmatpush.bf16.msra.mxu0 %v2498
        %3231 = vmatpush.bf16.msra.mxu0 %v2496
        %3232 = vmatpush.bf16.msra.mxu0 %v2494
        %3233 = vmatpush.bf16.msra.mxu0 %v2492
        %3234 = vmatpush.bf16.msra.mxu0 %v2490
        %3235 = vmatmul.bf16.gmra.mxu0 %v550
        %v3236 = vpop.f32.mrf.mxu0
        %v3237 = vadd.f32 %v3224, %v3236
        %v3238 = vpop.f32.mrf.mxu0
        %3239 = vdwg.mxu0
        %3240 = vmatpush.bf16.msra.mxu0 %v2520
        %3241 = vmatpush.bf16.msra.mxu0 %v2518
        %3242 = vmatpush.bf16.msra.mxu0 %v2516
        %3243 = vmatpush.bf16.msra.mxu0 %v2514
        %3244 = vmatpush.bf16.msra.mxu0 %v2512
        %3245 = vmatpush.bf16.msra.mxu0 %v2510
        %3246 = vmatpush.bf16.msra.mxu0 %v2508
        %3247 = vmatpush.bf16.msra.mxu0 %v2506
        %3248 = vmatmul.bf16.gmra.mxu0 %v551
        %v3249 = vpop.f32.mrf.mxu0
        %v3250 = vadd.f32 %v3237, %v3249
        %v3251 = vpop.f32.mrf.mxu0
        %3252 = vdwg.mxu0
        %3253 = vmatpush.bf16.msra.mxu0 %v2536
        %3254 = vmatpush.bf16.msra.mxu0 %v2534
        %3255 = vmatpush.bf16.msra.mxu0 %v2532
        %3256 = vmatpush.bf16.msra.mxu0 %v2530
        %3257 = vmatpush.bf16.msra.mxu0 %v2528
        %3258 = vmatpush.bf16.msra.mxu0 %v2526
        %3259 = vmatpush.bf16.msra.mxu0 %v2524
        %3260 = vmatpush.bf16.msra.mxu0 %v2522
        %3261 = vmatmul.bf16.gmra.mxu0 %v552
        %v3262 = vpop.f32.mrf.mxu0
        %v3263 = vadd.f32 %v3250, %v3262
        %v3264 = vpop.f32.mrf.mxu0
        %3265 = vdwg.mxu0
        %3266 = vmatpush.bf16.msra.mxu0 %v2552
        %3267 = vmatpush.bf16.msra.mxu0 %v2550
        %3268 = vmatpush.bf16.msra.mxu0 %v2548
        %3269 = vmatpush.bf16.msra.mxu0 %v2546
        %3270 = vmatpush.bf16.msra.mxu0 %v2544
        %3271 = vmatpush.bf16.msra.mxu0 %v2542
        %3272 = vmatpush.bf16.msra.mxu0 %v2540
        %3273 = vmatpush.bf16.msra.mxu0 %v2538
        %3274 = vmatmul.bf16.gmra.mxu0 %v553
        %v3275 = vpop.f32.mrf.mxu0
        %v3276 = vadd.f32 %v3263, %v3275
        %v3277 = vpop.f32.mrf.mxu0
        %3278 = vdwg.mxu0
        %3279 = vmatpush.bf16.msra.mxu0 %v2169
        %3280 = vmatpush.bf16.msra.mxu0 %v2167
        %3281 = vmatpush.bf16.msra.mxu0 %v2165
        %3282 = vmatpush.bf16.msra.mxu0 %v2163
        %3283 = vmatpush.bf16.msra.mxu0 %v2161
        %3284 = vmatpush.bf16.msra.mxu0 %v2159
        %3285 = vmatpush.bf16.msra.mxu0 %v2157
        %3286 = vmatpush.bf16.msra.mxu0 %v2155
        %3287 = vmatmul.bf16.gmra.mxu0 %v529
        %v3288 = vpop.f32.mrf.mxu0
        %v3289 = vadd.f32 0.0, %v3288
        %v3290 = vpop.f32.mrf.mxu0
        %3291 = vdwg.mxu0
        %3292 = vmatpush.bf16.msra.mxu0 %v2185
        %3293 = vmatpush.bf16.msra.mxu0 %v2183
        %3294 = vmatpush.bf16.msra.mxu0 %v2181
        %3295 = vmatpush.bf16.msra.mxu0 %v2179
        %3296 = vmatpush.bf16.msra.mxu0 %v2177
        %3297 = vmatpush.bf16.msra.mxu0 %v2175
        %3298 = vmatpush.bf16.msra.mxu0 %v2173
        %3299 = vmatpush.bf16.msra.mxu0 %v2171
        %3300 = vmatmul.bf16.gmra.mxu0 %v530
        %v3301 = vpop.f32.mrf.mxu0
        %v3302 = vadd.f32 %v3289, %v3301
        %v3303 = vpop.f32.mrf.mxu0
        %3304 = vdwg.mxu0
        %3305 = vmatpush.bf16.msra.mxu0 %v2201
        %3306 = vmatpush.bf16.msra.mxu0 %v2199
        %3307 = vmatpush.bf16.msra.mxu0 %v2197
        %3308 = vmatpush.bf16.msra.mxu0 %v2195
        %3309 = vmatpush.bf16.msra.mxu0 %v2193
        %3310 = vmatpush.bf16.msra.mxu0 %v2191
        %3311 = vmatpush.bf16.msra.mxu0 %v2189
        %3312 = vmatpush.bf16.msra.mxu0 %v2187
        %3313 = vmatmul.bf16.gmra.mxu0 %v531
        %v3314 = vpop.f32.mrf.mxu0
        %v3315 = vadd.f32 %v3302, %v3314
        %v3316 = vpop.f32.mrf.mxu0
        %3317 = vdwg.mxu0
        %3318 = vmatpush.bf16.msra.mxu0 %v2217
        %3319 = vmatpush.bf16.msra.mxu0 %v2215
        %3320 = vmatpush.bf16.msra.mxu0 %v2213
        %3321 = vmatpush.bf16.msra.mxu0 %v2211
        %3322 = vmatpush.bf16.msra.mxu0 %v2209
        %3323 = vmatpush.bf16.msra.mxu0 %v2207
        %3324 = vmatpush.bf16.msra.mxu0 %v2205
        %3325 = vmatpush.bf16.msra.mxu0 %v2203
        %3326 = vmatmul.bf16.gmra.mxu0 %v532
        %v3327 = vpop.f32.mrf.mxu0
        %v3328 = vadd.f32 %v3315, %v3327
        %v3329 = vpop.f32.mrf.mxu0
        %3330 = vdwg.mxu0
        %3331 = vmatpush.bf16.msra.mxu0 %v2233
        %3332 = vmatpush.bf16.msra.mxu0 %v2231
        %3333 = vmatpush.bf16.msra.mxu0 %v2229
        %3334 = vmatpush.bf16.msra.mxu0 %v2227
        %3335 = vmatpush.bf16.msra.mxu0 %v2225
        %3336 = vmatpush.bf16.msra.mxu0 %v2223
        %3337 = vmatpush.bf16.msra.mxu0 %v2221
        %3338 = vmatpush.bf16.msra.mxu0 %v2219
        %3339 = vmatmul.bf16.gmra.mxu0 %v533
        %v3340 = vpop.f32.mrf.mxu0
        %v3341 = vadd.f32 %v3328, %v3340
        %v3342 = vpop.f32.mrf.mxu0
        %3343 = vdwg.mxu0
        %3344 = vmatpush.bf16.msra.mxu0 %v2249
        %3345 = vmatpush.bf16.msra.mxu0 %v2247
        %3346 = vmatpush.bf16.msra.mxu0 %v2245
        %3347 = vmatpush.bf16.msra.mxu0 %v2243
        %3348 = vmatpush.bf16.msra.mxu0 %v2241
        %3349 = vmatpush.bf16.msra.mxu0 %v2239
        %3350 = vmatpush.bf16.msra.mxu0 %v2237
        %3351 = vmatpush.bf16.msra.mxu0 %v2235
        %3352 = vmatmul.bf16.gmra.mxu0 %v534
        %v3353 = vpop.f32.mrf.mxu0
        %v3354 = vadd.f32 %v3341, %v3353
        %v3355 = vpop.f32.mrf.mxu0
        %3356 = vdwg.mxu0
        %3357 = vmatpush.bf16.msra.mxu0 %v2265
        %3358 = vmatpush.bf16.msra.mxu0 %v2263
        %3359 = vmatpush.bf16.msra.mxu0 %v2261
        %3360 = vmatpush.bf16.msra.mxu0 %v2259
        %3361 = vmatpush.bf16.msra.mxu0 %v2257
        %3362 = vmatpush.bf16.msra.mxu0 %v2255
        %3363 = vmatpush.bf16.msra.mxu0 %v2253
        %3364 = vmatpush.bf16.msra.mxu0 %v2251
        %3365 = vmatmul.bf16.gmra.mxu0 %v535
        %v3366 = vpop.f32.mrf.mxu0
        %v3367 = vadd.f32 %v3354, %v3366
        %v3368 = vpop.f32.mrf.mxu0
        %3369 = vdwg.mxu0
        %3370 = vmatpush.bf16.msra.mxu0 %v2281
        %3371 = vmatpush.bf16.msra.mxu0 %v2279
        %3372 = vmatpush.bf16.msra.mxu0 %v2277
        %3373 = vmatpush.bf16.msra.mxu0 %v2275
        %3374 = vmatpush.bf16.msra.mxu0 %v2273
        %3375 = vmatpush.bf16.msra.mxu0 %v2271
        %3376 = vmatpush.bf16.msra.mxu0 %v2269
        %3377 = vmatpush.bf16.msra.mxu0 %v2267
        %3378 = vmatmul.bf16.gmra.mxu0 %v536
        %v3379 = vpop.f32.mrf.mxu0
        %v3380 = vadd.f32 %v3367, %v3379
        %v3381 = vpop.f32.mrf.mxu0
        %3382 = vdwg.mxu0
        %3383 = vmatpush.bf16.msra.mxu0 %v2297
        %3384 = vmatpush.bf16.msra.mxu0 %v2295
        %3385 = vmatpush.bf16.msra.mxu0 %v2293
        %3386 = vmatpush.bf16.msra.mxu0 %v2291
        %3387 = vmatpush.bf16.msra.mxu0 %v2289
        %3388 = vmatpush.bf16.msra.mxu0 %v2287
        %3389 = vmatpush.bf16.msra.mxu0 %v2285
        %3390 = vmatpush.bf16.msra.mxu0 %v2283
        %3391 = vmatmul.bf16.gmra.mxu0 %v537
        %v3392 = vpop.f32.mrf.mxu0
        %v3393 = vadd.f32 %v3380, %v3392
        %v3394 = vpop.f32.mrf.mxu0
        %3395 = vdwg.mxu0
        %3396 = vmatpush.bf16.msra.mxu0 %v2313
        %3397 = vmatpush.bf16.msra.mxu0 %v2311
        %3398 = vmatpush.bf16.msra.mxu0 %v2309
        %3399 = vmatpush.bf16.msra.mxu0 %v2307
        %3400 = vmatpush.bf16.msra.mxu0 %v2305
        %3401 = vmatpush.bf16.msra.mxu0 %v2303
        %3402 = vmatpush.bf16.msra.mxu0 %v2301
        %3403 = vmatpush.bf16.msra.mxu0 %v2299
        %3404 = vmatmul.bf16.gmra.mxu0 %v538
        %v3405 = vpop.f32.mrf.mxu0
        %v3406 = vadd.f32 %v3393, %v3405
        %v3407 = vpop.f32.mrf.mxu0
        %3408 = vdwg.mxu0
        %3409 = vmatpush.bf16.msra.mxu0 %v2329
        %3410 = vmatpush.bf16.msra.mxu0 %v2327
        %3411 = vmatpush.bf16.msra.mxu0 %v2325
        %3412 = vmatpush.bf16.msra.mxu0 %v2323
        %3413 = vmatpush.bf16.msra.mxu0 %v2321
        %3414 = vmatpush.bf16.msra.mxu0 %v2319
        %3415 = vmatpush.bf16.msra.mxu0 %v2317
        %3416 = vmatpush.bf16.msra.mxu0 %v2315
        %3417 = vmatmul.bf16.gmra.mxu0 %v539
        %v3418 = vpop.f32.mrf.mxu0
        %v3419 = vadd.f32 %v3406, %v3418
        %v3420 = vpop.f32.mrf.mxu0
        %3421 = vdwg.mxu0
        %3422 = vmatpush.bf16.msra.mxu0 %v2345
        %3423 = vmatpush.bf16.msra.mxu0 %v2343
        %3424 = vmatpush.bf16.msra.mxu0 %v2341
        %3425 = vmatpush.bf16.msra.mxu0 %v2339
        %3426 = vmatpush.bf16.msra.mxu0 %v2337
        %3427 = vmatpush.bf16.msra.mxu0 %v2335
        %3428 = vmatpush.bf16.msra.mxu0 %v2333
        %3429 = vmatpush.bf16.msra.mxu0 %v2331
        %3430 = vmatmul.bf16.gmra.mxu0 %v540
        %v3431 = vpop.f32.mrf.mxu0
        %v3432 = vadd.f32 %v3419, %v3431
        %v3433 = vpop.f32.mrf.mxu0
        %3434 = vdwg.mxu0
        %3435 = vmatpush.bf16.msra.mxu0 %v2361
        %3436 = vmatpush.bf16.msra.mxu0 %v2359
        %3437 = vmatpush.bf16.msra.mxu0 %v2357
        %3438 = vmatpush.bf16.msra.mxu0 %v2355
        %3439 = vmatpush.bf16.msra.mxu0 %v2353
        %3440 = vmatpush.bf16.msra.mxu0 %v2351
        %3441 = vmatpush.bf16.msra.mxu0 %v2349
        %3442 = vmatpush.bf16.msra.mxu0 %v2347
        %3443 = vmatmul.bf16.gmra.mxu0 %v541
        %v3444 = vpop.f32.mrf.mxu0
        %v3445 = vadd.f32 %v3432, %v3444
        %v3446 = vpop.f32.mrf.mxu0
        %3447 = vdwg.mxu0
        %3448 = vmatpush.bf16.msra.mxu0 %v2377
        %3449 = vmatpush.bf16.msra.mxu0 %v2375
        %3450 = vmatpush.bf16.msra.mxu0 %v2373
        %3451 = vmatpush.bf16.msra.mxu0 %v2371
        %3452 = vmatpush.bf16.msra.mxu0 %v2369
        %3453 = vmatpush.bf16.msra.mxu0 %v2367
        %3454 = vmatpush.bf16.msra.mxu0 %v2365
        %3455 = vmatpush.bf16.msra.mxu0 %v2363
        %3456 = vmatmul.bf16.gmra.mxu0 %v542
        %v3457 = vpop.f32.mrf.mxu0
        %v3458 = vadd.f32 %v3445, %v3457
        %v3459 = vpop.f32.mrf.mxu0
        %3460 = vdwg.mxu0
        %3461 = vmatpush.bf16.msra.mxu0 %v2393
        %3462 = vmatpush.bf16.msra.mxu0 %v2391
        %3463 = vmatpush.bf16.msra.mxu0 %v2389
        %3464 = vmatpush.bf16.msra.mxu0 %v2387
        %3465 = vmatpush.bf16.msra.mxu0 %v2385
        %3466 = vmatpush.bf16.msra.mxu0 %v2383
        %3467 = vmatpush.bf16.msra.mxu0 %v2381
        %3468 = vmatpush.bf16.msra.mxu0 %v2379
        %3469 = vmatmul.bf16.gmra.mxu0 %v543
        %v3470 = vpop.f32.mrf.mxu0
        %v3471 = vadd.f32 %v3458, %v3470
        %v3472 = vpop.f32.mrf.mxu0
        %3473 = vdwg.mxu0
        %3474 = vmatpush.bf16.msra.mxu0 %v2409
        %3475 = vmatpush.bf16.msra.mxu0 %v2407
        %3476 = vmatpush.bf16.msra.mxu0 %v2405
        %3477 = vmatpush.bf16.msra.mxu0 %v2403
        %3478 = vmatpush.bf16.msra.mxu0 %v2401
        %3479 = vmatpush.bf16.msra.mxu0 %v2399
        %3480 = vmatpush.bf16.msra.mxu0 %v2397
        %3481 = vmatpush.bf16.msra.mxu0 %v2395
        %3482 = vmatmul.bf16.gmra.mxu0 %v544
        %v3483 = vpop.f32.mrf.mxu0
        %v3484 = vadd.f32 %v3471, %v3483
        %v3485 = vpop.f32.mrf.mxu0
        %3486 = vdwg.mxu0
        %3487 = vmatpush.bf16.msra.mxu0 %v2425
        %3488 = vmatpush.bf16.msra.mxu0 %v2423
        %3489 = vmatpush.bf16.msra.mxu0 %v2421
        %3490 = vmatpush.bf16.msra.mxu0 %v2419
        %3491 = vmatpush.bf16.msra.mxu0 %v2417
        %3492 = vmatpush.bf16.msra.mxu0 %v2415
        %3493 = vmatpush.bf16.msra.mxu0 %v2413
        %3494 = vmatpush.bf16.msra.mxu0 %v2411
        %3495 = vmatmul.bf16.gmra.mxu0 %v545
        %v3496 = vpop.f32.mrf.mxu0
        %v3497 = vadd.f32 %v3484, %v3496
        %v3498 = vpop.f32.mrf.mxu0
        %3499 = vdwg.mxu0
        %3500 = vmatpush.bf16.msra.mxu0 %v2441
        %3501 = vmatpush.bf16.msra.mxu0 %v2439
        %3502 = vmatpush.bf16.msra.mxu0 %v2437
        %3503 = vmatpush.bf16.msra.mxu0 %v2435
        %3504 = vmatpush.bf16.msra.mxu0 %v2433
        %3505 = vmatpush.bf16.msra.mxu0 %v2431
        %3506 = vmatpush.bf16.msra.mxu0 %v2429
        %3507 = vmatpush.bf16.msra.mxu0 %v2427
        %3508 = vmatmul.bf16.gmra.mxu0 %v546
        %v3509 = vpop.f32.mrf.mxu0
        %v3510 = vadd.f32 %v3497, %v3509
        %v3511 = vpop.f32.mrf.mxu0
        %3512 = vdwg.mxu0
        %3513 = vmatpush.bf16.msra.mxu0 %v2457
        %3514 = vmatpush.bf16.msra.mxu0 %v2455
        %3515 = vmatpush.bf16.msra.mxu0 %v2453
        %3516 = vmatpush.bf16.msra.mxu0 %v2451
        %3517 = vmatpush.bf16.msra.mxu0 %v2449
        %3518 = vmatpush.bf16.msra.mxu0 %v2447
        %3519 = vmatpush.bf16.msra.mxu0 %v2445
        %3520 = vmatpush.bf16.msra.mxu0 %v2443
        %3521 = vmatmul.bf16.gmra.mxu0 %v547
        %v3522 = vpop.f32.mrf.mxu0
        %v3523 = vadd.f32 %v3510, %v3522
        %v3524 = vpop.f32.mrf.mxu0
        %3525 = vdwg.mxu0
        %3526 = vmatpush.bf16.msra.mxu0 %v2473
        %3527 = vmatpush.bf16.msra.mxu0 %v2471
        %3528 = vmatpush.bf16.msra.mxu0 %v2469
        %3529 = vmatpush.bf16.msra.mxu0 %v2467
        %3530 = vmatpush.bf16.msra.mxu0 %v2465
        %3531 = vmatpush.bf16.msra.mxu0 %v2463
        %3532 = vmatpush.bf16.msra.mxu0 %v2461
        %3533 = vmatpush.bf16.msra.mxu0 %v2459
        %3534 = vmatmul.bf16.gmra.mxu0 %v548
        %v3535 = vpop.f32.mrf.mxu0
        %v3536 = vadd.f32 %v3523, %v3535
        %v3537 = vpop.f32.mrf.mxu0
        %3538 = vdwg.mxu0
        %3539 = vmatpush.bf16.msra.mxu0 %v2489
        %3540 = vmatpush.bf16.msra.mxu0 %v2487
        %3541 = vmatpush.bf16.msra.mxu0 %v2485
        %3542 = vmatpush.bf16.msra.mxu0 %v2483
        %3543 = vmatpush.bf16.msra.mxu0 %v2481
        %3544 = vmatpush.bf16.msra.mxu0 %v2479
        %3545 = vmatpush.bf16.msra.mxu0 %v2477
        %3546 = vmatpush.bf16.msra.mxu0 %v2475
        %3547 = vmatmul.bf16.gmra.mxu0 %v549
        %v3548 = vpop.f32.mrf.mxu0
        %v3549 = vadd.f32 %v3536, %v3548
        %v3550 = vpop.f32.mrf.mxu0
        %3551 = vdwg.mxu0
        %3552 = vmatpush.bf16.msra.mxu0 %v2505
        %3553 = vmatpush.bf16.msra.mxu0 %v2503
        %3554 = vmatpush.bf16.msra.mxu0 %v2501
        %3555 = vmatpush.bf16.msra.mxu0 %v2499
        %3556 = vmatpush.bf16.msra.mxu0 %v2497
        %3557 = vmatpush.bf16.msra.mxu0 %v2495
        %3558 = vmatpush.bf16.msra.mxu0 %v2493
        %3559 = vmatpush.bf16.msra.mxu0 %v2491
        %3560 = vmatmul.bf16.gmra.mxu0 %v550
        %v3561 = vpop.f32.mrf.mxu0
        %v3562 = vadd.f32 %v3549, %v3561
        %v3563 = vpop.f32.mrf.mxu0
        %3564 = vdwg.mxu0
        %3565 = vmatpush.bf16.msra.mxu0 %v2521
        %3566 = vmatpush.bf16.msra.mxu0 %v2519
        %3567 = vmatpush.bf16.msra.mxu0 %v2517
        %3568 = vmatpush.bf16.msra.mxu0 %v2515
        %3569 = vmatpush.bf16.msra.mxu0 %v2513
        %3570 = vmatpush.bf16.msra.mxu0 %v2511
        %3571 = vmatpush.bf16.msra.mxu0 %v2509
        %3572 = vmatpush.bf16.msra.mxu0 %v2507
        %3573 = vmatmul.bf16.gmra.mxu0 %v551
        %v3574 = vpop.f32.mrf.mxu0
        %v3575 = vadd.f32 %v3562, %v3574
        %v3576 = vpop.f32.mrf.mxu0
        %3577 = vdwg.mxu0
        %3578 = vmatpush.bf16.msra.mxu0 %v2537
        %3579 = vmatpush.bf16.msra.mxu0 %v2535
        %3580 = vmatpush.bf16.msra.mxu0 %v2533
        %3581 = vmatpush.bf16.msra.mxu0 %v2531
        %3582 = vmatpush.bf16.msra.mxu0 %v2529
        %3583 = vmatpush.bf16.msra.mxu0 %v2527
        %3584 = vmatpush.bf16.msra.mxu0 %v2525
        %3585 = vmatpush.bf16.msra.mxu0 %v2523
        %3586 = vmatmul.bf16.gmra.mxu0 %v552
        %v3587 = vpop.f32.mrf.mxu0
        %v3588 = vadd.f32 %v3575, %v3587
        %v3589 = vpop.f32.mrf.mxu0
        %3590 = vdwg.mxu0
        %3591 = vmatpush.bf16.msra.mxu0 %v2553
        %3592 = vmatpush.bf16.msra.mxu0 %v2551
        %3593 = vmatpush.bf16.msra.mxu0 %v2549
        %3594 = vmatpush.bf16.msra.mxu0 %v2547
        %3595 = vmatpush.bf16.msra.mxu0 %v2545
        %3596 = vmatpush.bf16.msra.mxu0 %v2543
        %3597 = vmatpush.bf16.msra.mxu0 %v2541
        %3598 = vmatpush.bf16.msra.mxu0 %v2539
        %3599 = vmatmul.bf16.gmra.mxu0 %v553
        %v3600 = vpop.f32.mrf.mxu0
        %v3601 = vadd.f32 %v3588, %v3600
        %v3602 = vpop.f32.mrf.mxu0
        %3603 = vdwg.mxu0
        %p3604 = scmp.eq.s32.totalorder %s27, 0
        // Predicated region
        $region85: #{regression_model_forward.3} parent=63 // pred_check
          %p3605 = pneg %p3604
        $region86: #{regression_model_forward.3} parent=63 // pred_check_branch
          %3607 = sbr.rel (%p3605) target = $region88
        $region87: #{regression_model_forward.3} parent=63 // pred_region
          %v3610 = vrot.slane %v3601, 6
          %vm3611 = vcmask 1041408
          %v3612 = vsel %vm3611, %v3276, %v3610
          %3614 = vst [vmem:[#allocation2] sm:$0xf] %v3612
        $region88: #{regression_model_forward.3} parent=63 // pred_fallthru
          _
        %p3615 = scmp.eq.s32.totalorder %s27, 1
        // Predicated region
        $region89: #{regression_model_forward.3} parent=63 // pred_check
          %p3616 = pneg %p3615
        $region90: #{regression_model_forward.3} parent=63 // pred_check_branch
          %3618 = sbr.rel (%p3616) target = $region92
        $region91: #{regression_model_forward.3} parent=63 // pred_region
          %v3621 = vrot.slane %v3601, 6
          %vm3622 = vcmask 1041408
          %v3623 = vsel %vm3622, %v3276, %v3621
          %3625 = vst [vmem:[#allocation2 + $0x4] sm:$0xf] %v3623
          %v3626 = vld [vmem:[#allocation2] sm:$0xff]
          %v3627 = vld [vmem:[#allocation5] sm:$0xf]
          %v3629 = vperm.slane %v3627, 0
          %v3630 = vperm.slane %v3627, 1
          %v3631 = vperm.slane %v3627, 2
          %v3632 = vperm.slane %v3627, 3
          %v3633 = vrot.slane %v3630, 6
          %v3634 = vrot.slane %v3631, 4
          %v3635 = vrot.slane %v3632, 2
          %v3636 = vsel %vm3622, %v3629, %v3633
          %vm3637 = vcmask 1045508
          %v3638 = vsel %vm3637, %v3634, %v3635
          %vm3639 = vcmask 1043456
          %v3640 = vsel %vm3639, %v3636, %v3638
          %v3642 = vadd.f32 %v3626, %v3640
          %v3643 = vmax.f32 %v3642, 0.0
          %v3644 = vld [vmem:[%s3] sm:$0xf]
          %v3646 = vperm.slane %v3644, 0
          %v3647 = vperm.slane %v3644, 1
          %v3648 = vperm.slane %v3644, 2
          %v3649 = vperm.slane %v3644, 3
          %v3650 = vrot.slane %v3647, 6
          %v3651 = vrot.slane %v3648, 4
          %v3652 = vrot.slane %v3649, 2
          %v3653 = vsel %vm3622, %v3646, %v3650
          %v3654 = vsel %vm3637, %v3651, %v3652
          %v3655 = vsel %vm3639, %v3653, %v3654
          %v3657 = vmul.f32 %v3643, %v3655
          %v3658 = vld [vmem:[%s4] sm:$0xf]
          %v3660 = vperm.slane %v3658, 0
          %v3661 = vperm.slane %v3658, 1
          %v3662 = vperm.slane %v3658, 2
          %v3663 = vperm.slane %v3658, 3
          %v3664 = vrot.slane %v3661, 6
          %v3665 = vrot.slane %v3662, 4
          %v3666 = vrot.slane %v3663, 2
          %v3667 = vsel %vm3622, %v3660, %v3664
          %v3668 = vsel %vm3637, %v3665, %v3666
          %v3669 = vsel %vm3639, %v3667, %v3668
          %v3671 = vadd.f32 %v3657, %v3669
          %3673 = vst [vmem:[#allocation1] ss:$4 sm:$0xff] %v3671
          %v3674 = vld.sshfl [vmem:[#allocation1] sm:$0xff pattern:$0x73625140]
          %v3675 = vld.sshfl [vmem:[#allocation1 + $0x8] sm:$0xff pattern:$0x73625140]
          %v3676 = vld.sshfl [vmem:[#allocation1 + $0x10] sm:$0xff pattern:$0x73625140]
          %v3677 = vld.sshfl [vmem:[#allocation1 + $0x18] sm:$0xff pattern:$0x73625140]
          %v3682 = vpack.c.bf16 %v3674, %v3674
          %v3683 = vpack.c.bf16 %v3675, %v3675
          %v3684 = vpack.c.bf16 %v3676, %v3676
          %v3685 = vpack.c.bf16 %v3677, %v3677
          %v3686 = vld [vmem:[#allocation7] sm:$0xff]
          %v3687 = vld [vmem:[#allocation7 + $0x8] sm:$0xff]
          %v3688 = vld [vmem:[#allocation7 + $0x10] sm:$0xff]
          %v3689 = vld [vmem:[#allocation7 + $0x18] sm:$0xff]
          %v3690 = vld [vmem:[#allocation7 + $0x20] sm:$0xff]
          %v3691 = vld [vmem:[#allocation7 + $0x28] sm:$0xff]
          %v3692 = vld [vmem:[#allocation7 + $0x30] sm:$0xff]
          %v3693 = vld [vmem:[#allocation7 + $0x38] sm:$0xff]
          %v3694 = vld [vmem:[#allocation7 + $0x40] sm:$0xff]
          %v3695 = vld [vmem:[#allocation7 + $0x48] sm:$0xff]
          %v3696 = vld [vmem:[#allocation7 + $0x50] sm:$0xff]
          %v3697 = vld [vmem:[#allocation7 + $0x58] sm:$0xff]
          %v3698 = vld [vmem:[#allocation7 + $0x60] sm:$0xff]
          %v3699 = vld [vmem:[#allocation7 + $0x68] sm:$0xff]
          %v3700 = vld [vmem:[#allocation7 + $0x70] sm:$0xff]
          %v3701 = vld [vmem:[#allocation7 + $0x78] sm:$0xff]
          %v3702 = vld [vmem:[#allocation7 + $0x80] sm:$0xff]
          %v3703 = vld [vmem:[#allocation7 + $0x88] sm:$0xff]
          %v3704 = vld [vmem:[#allocation7 + $0x90] sm:$0xff]
          %v3705 = vld [vmem:[#allocation7 + $0x98] sm:$0xff]
          %v3706 = vld [vmem:[#allocation7 + $0xa0] sm:$0xff]
          %v3707 = vld [vmem:[#allocation7 + $0xa8] sm:$0xff]
          %v3708 = vld [vmem:[#allocation7 + $0xb0] sm:$0xff]
          %v3709 = vld [vmem:[#allocation7 + $0xb8] sm:$0xff]
          %v3710 = vld [vmem:[#allocation7 + $0xc0] sm:$0xff]
          %v3711 = vld [vmem:[#allocation7 + $0xc8] sm:$0xff]
          %v3712 = vld [vmem:[#allocation7 + $0xd0] sm:$0xff]
          %v3713 = vld [vmem:[#allocation7 + $0xd8] sm:$0xff]
          %v3714 = vld [vmem:[#allocation7 + $0xe0] sm:$0xff]
          %v3715 = vld [vmem:[#allocation7 + $0xe8] sm:$0xff]
          %v3716 = vld [vmem:[#allocation7 + $0xf0] sm:$0xff]
          %v3717 = vld [vmem:[#allocation7 + $0xf8] sm:$0xff]
          %v3718 = vld [vmem:[#allocation7 + $0x100] sm:$0xff]
          %v3719 = vld [vmem:[#allocation7 + $0x108] sm:$0xff]
          %v3720 = vld [vmem:[#allocation7 + $0x110] sm:$0xff]
          %v3721 = vld [vmem:[#allocation7 + $0x118] sm:$0xff]
          %v3722 = vld [vmem:[#allocation7 + $0x120] sm:$0xff]
          %v3723 = vld [vmem:[#allocation7 + $0x128] sm:$0xff]
          %v3724 = vld [vmem:[#allocation7 + $0x130] sm:$0xff]
          %v3725 = vld [vmem:[#allocation7 + $0x138] sm:$0xff]
          %v3726 = vld [vmem:[#allocation7 + $0x140] sm:$0xff]
          %v3727 = vld [vmem:[#allocation7 + $0x148] sm:$0xff]
          %v3728 = vld [vmem:[#allocation7 + $0x150] sm:$0xff]
          %v3729 = vld [vmem:[#allocation7 + $0x158] sm:$0xff]
          %v3730 = vld [vmem:[#allocation7 + $0x160] sm:$0xff]
          %v3731 = vld [vmem:[#allocation7 + $0x168] sm:$0xff]
          %v3732 = vld [vmem:[#allocation7 + $0x170] sm:$0xff]
          %v3733 = vld [vmem:[#allocation7 + $0x178] sm:$0xff]
          %v3734 = vld [vmem:[#allocation7 + $0x180] sm:$0xff]
          %v3735 = vld [vmem:[#allocation7 + $0x188] sm:$0xff]
          %v3736 = vld [vmem:[#allocation7 + $0x190] sm:$0xff]
          %v3737 = vld [vmem:[#allocation7 + $0x198] sm:$0xff]
          %v3738 = vld [vmem:[#allocation7 + $0x1a0] sm:$0xff]
          %v3739 = vld [vmem:[#allocation7 + $0x1a8] sm:$0xff]
          %v3740 = vld [vmem:[#allocation7 + $0x1b0] sm:$0xff]
          %v3741 = vld [vmem:[#allocation7 + $0x1b8] sm:$0xff]
          %v3742 = vld [vmem:[#allocation7 + $0x1c0] sm:$0xff]
          %v3743 = vld [vmem:[#allocation7 + $0x1c8] sm:$0xff]
          %v3744 = vld [vmem:[#allocation7 + $0x1d0] sm:$0xff]
          %v3745 = vld [vmem:[#allocation7 + $0x1d8] sm:$0xff]
          %v3746 = vld [vmem:[#allocation7 + $0x1e0] sm:$0xff]
          %v3747 = vld [vmem:[#allocation7 + $0x1e8] sm:$0xff]
          %v3748 = vld [vmem:[#allocation7 + $0x1f0] sm:$0xff]
          %v3749 = vld [vmem:[#allocation7 + $0x1f8] sm:$0xff]
          %v3750 = vld [vmem:[#allocation8] sm:$0x3]
          %v3752 = vperm.slane %v3750, 0
          %v3753 = vperm.slane %v3750, 1
          %v3820 = vunpack.c.l.b16 %v3686
          %v3821 = vunpack.c.h.b16 %v3686
          %v3822 = vunpack.c.l.b16 %v3687
          %v3823 = vunpack.c.h.b16 %v3687
          %v3824 = vunpack.c.l.b16 %v3688
          %v3825 = vunpack.c.h.b16 %v3688
          %v3826 = vunpack.c.l.b16 %v3689
          %v3827 = vunpack.c.h.b16 %v3689
          %v3828 = vunpack.c.l.b16 %v3690
          %v3829 = vunpack.c.h.b16 %v3690
          %v3830 = vunpack.c.l.b16 %v3691
          %v3831 = vunpack.c.h.b16 %v3691
          %v3832 = vunpack.c.l.b16 %v3692
          %v3833 = vunpack.c.h.b16 %v3692
          %v3834 = vunpack.c.l.b16 %v3693
          %v3835 = vunpack.c.h.b16 %v3693
          %v3836 = vunpack.c.l.b16 %v3694
          %v3837 = vunpack.c.h.b16 %v3694
          %v3838 = vunpack.c.l.b16 %v3695
          %v3839 = vunpack.c.h.b16 %v3695
          %v3840 = vunpack.c.l.b16 %v3696
          %v3841 = vunpack.c.h.b16 %v3696
          %v3842 = vunpack.c.l.b16 %v3697
          %v3843 = vunpack.c.h.b16 %v3697
          %v3844 = vunpack.c.l.b16 %v3698
          %v3845 = vunpack.c.h.b16 %v3698
          %v3846 = vunpack.c.l.b16 %v3699
          %v3847 = vunpack.c.h.b16 %v3699
          %v3848 = vunpack.c.l.b16 %v3700
          %v3849 = vunpack.c.h.b16 %v3700
          %v3850 = vunpack.c.l.b16 %v3701
          %v3851 = vunpack.c.h.b16 %v3701
          %v3852 = vunpack.c.l.b16 %v3702
          %v3853 = vunpack.c.h.b16 %v3702
          %v3854 = vunpack.c.l.b16 %v3703
          %v3855 = vunpack.c.h.b16 %v3703
          %v3856 = vunpack.c.l.b16 %v3704
          %v3857 = vunpack.c.h.b16 %v3704
          %v3858 = vunpack.c.l.b16 %v3705
          %v3859 = vunpack.c.h.b16 %v3705
          %v3860 = vunpack.c.l.b16 %v3706
          %v3861 = vunpack.c.h.b16 %v3706
          %v3862 = vunpack.c.l.b16 %v3707
          %v3863 = vunpack.c.h.b16 %v3707
          %v3864 = vunpack.c.l.b16 %v3708
          %v3865 = vunpack.c.h.b16 %v3708
          %v3866 = vunpack.c.l.b16 %v3709
          %v3867 = vunpack.c.h.b16 %v3709
          %v3868 = vunpack.c.l.b16 %v3710
          %v3869 = vunpack.c.h.b16 %v3710
          %v3870 = vunpack.c.l.b16 %v3711
          %v3871 = vunpack.c.h.b16 %v3711
          %v3872 = vunpack.c.l.b16 %v3712
          %v3873 = vunpack.c.h.b16 %v3712
          %v3874 = vunpack.c.l.b16 %v3713
          %v3875 = vunpack.c.h.b16 %v3713
          %v3876 = vunpack.c.l.b16 %v3714
          %v3877 = vunpack.c.h.b16 %v3714
          %v3878 = vunpack.c.l.b16 %v3715
          %v3879 = vunpack.c.h.b16 %v3715
          %v3880 = vunpack.c.l.b16 %v3716
          %v3881 = vunpack.c.h.b16 %v3716
          %v3882 = vunpack.c.l.b16 %v3717
          %v3883 = vunpack.c.h.b16 %v3717
          %v3884 = vunpack.c.l.b16 %v3718
          %v3885 = vunpack.c.h.b16 %v3718
          %v3886 = vunpack.c.l.b16 %v3719
          %v3887 = vunpack.c.h.b16 %v3719
          %v3888 = vunpack.c.l.b16 %v3720
          %v3889 = vunpack.c.h.b16 %v3720
          %v3890 = vunpack.c.l.b16 %v3721
          %v3891 = vunpack.c.h.b16 %v3721
          %v3892 = vunpack.c.l.b16 %v3722
          %v3893 = vunpack.c.h.b16 %v3722
          %v3894 = vunpack.c.l.b16 %v3723
          %v3895 = vunpack.c.h.b16 %v3723
          %v3896 = vunpack.c.l.b16 %v3724
          %v3897 = vunpack.c.h.b16 %v3724
          %v3898 = vunpack.c.l.b16 %v3725
          %v3899 = vunpack.c.h.b16 %v3725
          %v3900 = vunpack.c.l.b16 %v3726
          %v3901 = vunpack.c.h.b16 %v3726
          %v3902 = vunpack.c.l.b16 %v3727
          %v3903 = vunpack.c.h.b16 %v3727
          %v3904 = vunpack.c.l.b16 %v3728
          %v3905 = vunpack.c.h.b16 %v3728
          %v3906 = vunpack.c.l.b16 %v3729
          %v3907 = vunpack.c.h.b16 %v3729
          %v3908 = vunpack.c.l.b16 %v3730
          %v3909 = vunpack.c.h.b16 %v3730
          %v3910 = vunpack.c.l.b16 %v3731
          %v3911 = vunpack.c.h.b16 %v3731
          %v3912 = vunpack.c.l.b16 %v3732
          %v3913 = vunpack.c.h.b16 %v3732
          %v3914 = vunpack.c.l.b16 %v3733
          %v3915 = vunpack.c.h.b16 %v3733
          %v3916 = vunpack.c.l.b16 %v3734
          %v3917 = vunpack.c.h.b16 %v3734
          %v3918 = vunpack.c.l.b16 %v3735
          %v3919 = vunpack.c.h.b16 %v3735
          %v3920 = vunpack.c.l.b16 %v3736
          %v3921 = vunpack.c.h.b16 %v3736
          %v3922 = vunpack.c.l.b16 %v3737
          %v3923 = vunpack.c.h.b16 %v3737
          %v3924 = vunpack.c.l.b16 %v3738
          %v3925 = vunpack.c.h.b16 %v3738
          %v3926 = vunpack.c.l.b16 %v3739
          %v3927 = vunpack.c.h.b16 %v3739
          %v3928 = vunpack.c.l.b16 %v3740
          %v3929 = vunpack.c.h.b16 %v3740
          %v3930 = vunpack.c.l.b16 %v3741
          %v3931 = vunpack.c.h.b16 %v3741
          %v3932 = vunpack.c.l.b16 %v3742
          %v3933 = vunpack.c.h.b16 %v3742
          %v3934 = vunpack.c.l.b16 %v3743
          %v3935 = vunpack.c.h.b16 %v3743
          %v3936 = vunpack.c.l.b16 %v3744
          %v3937 = vunpack.c.h.b16 %v3744
          %v3938 = vunpack.c.l.b16 %v3745
          %v3939 = vunpack.c.h.b16 %v3745
          %v3940 = vunpack.c.l.b16 %v3746
          %v3941 = vunpack.c.h.b16 %v3746
          %v3942 = vunpack.c.l.b16 %v3747
          %v3943 = vunpack.c.h.b16 %v3747
          %v3944 = vunpack.c.l.b16 %v3748
          %v3945 = vunpack.c.h.b16 %v3748
          %v3946 = vunpack.c.l.b16 %v3749
          %v3947 = vunpack.c.h.b16 %v3749
          %v3948 = vpack.c.b16 %v3822, %v3820
          %v3949 = vpack.c.b16 %v3823, %v3821
          %v3950 = vpack.c.b16 %v3826, %v3824
          %v3951 = vpack.c.b16 %v3827, %v3825
          %v3952 = vpack.c.b16 %v3830, %v3828
          %v3953 = vpack.c.b16 %v3831, %v3829
          %v3954 = vpack.c.b16 %v3834, %v3832
          %v3955 = vpack.c.b16 %v3835, %v3833
          %v3956 = vpack.c.b16 %v3838, %v3836
          %v3957 = vpack.c.b16 %v3839, %v3837
          %v3958 = vpack.c.b16 %v3842, %v3840
          %v3959 = vpack.c.b16 %v3843, %v3841
          %v3960 = vpack.c.b16 %v3846, %v3844
          %v3961 = vpack.c.b16 %v3847, %v3845
          %v3962 = vpack.c.b16 %v3850, %v3848
          %v3963 = vpack.c.b16 %v3851, %v3849
          %v3964 = vpack.c.b16 %v3854, %v3852
          %v3965 = vpack.c.b16 %v3855, %v3853
          %v3966 = vpack.c.b16 %v3858, %v3856
          %v3967 = vpack.c.b16 %v3859, %v3857
          %v3968 = vpack.c.b16 %v3862, %v3860
          %v3969 = vpack.c.b16 %v3863, %v3861
          %v3970 = vpack.c.b16 %v3866, %v3864
          %v3971 = vpack.c.b16 %v3867, %v3865
          %v3972 = vpack.c.b16 %v3870, %v3868
          %v3973 = vpack.c.b16 %v3871, %v3869
          %v3974 = vpack.c.b16 %v3874, %v3872
          %v3975 = vpack.c.b16 %v3875, %v3873
          %v3976 = vpack.c.b16 %v3878, %v3876
          %v3977 = vpack.c.b16 %v3879, %v3877
          %v3978 = vpack.c.b16 %v3882, %v3880
          %v3979 = vpack.c.b16 %v3883, %v3881
          %v3980 = vpack.c.b16 %v3886, %v3884
          %v3981 = vpack.c.b16 %v3887, %v3885
          %v3982 = vpack.c.b16 %v3890, %v3888
          %v3983 = vpack.c.b16 %v3891, %v3889
          %v3984 = vpack.c.b16 %v3894, %v3892
          %v3985 = vpack.c.b16 %v3895, %v3893
          %v3986 = vpack.c.b16 %v3898, %v3896
          %v3987 = vpack.c.b16 %v3899, %v3897
          %v3988 = vpack.c.b16 %v3902, %v3900
          %v3989 = vpack.c.b16 %v3903, %v3901
          %v3990 = vpack.c.b16 %v3906, %v3904
          %v3991 = vpack.c.b16 %v3907, %v3905
          %v3992 = vpack.c.b16 %v3910, %v3908
          %v3993 = vpack.c.b16 %v3911, %v3909
          %v3994 = vpack.c.b16 %v3914, %v3912
          %v3995 = vpack.c.b16 %v3915, %v3913
          %v3996 = vpack.c.b16 %v3918, %v3916
          %v3997 = vpack.c.b16 %v3919, %v3917
          %v3998 = vpack.c.b16 %v3922, %v3920
          %v3999 = vpack.c.b16 %v3923, %v3921
          %v4000 = vpack.c.b16 %v3926, %v3924
          %v4001 = vpack.c.b16 %v3927, %v3925
          %v4002 = vpack.c.b16 %v3930, %v3928
          %v4003 = vpack.c.b16 %v3931, %v3929
          %v4004 = vpack.c.b16 %v3934, %v3932
          %v4005 = vpack.c.b16 %v3935, %v3933
          %v4006 = vpack.c.b16 %v3938, %v3936
          %v4007 = vpack.c.b16 %v3939, %v3937
          %v4008 = vpack.c.b16 %v3942, %v3940
          %v4009 = vpack.c.b16 %v3943, %v3941
          %v4010 = vpack.c.b16 %v3946, %v3944
          %v4011 = vpack.c.b16 %v3947, %v3945
          %4076 = vmatpush.bf16.msra.mxu0 %v3962
          %4077 = vmatpush.bf16.msra.mxu0 %v3960
          %4078 = vmatpush.bf16.msra.mxu0 %v3958
          %4079 = vmatpush.bf16.msra.mxu0 %v3956
          %4080 = vmatpush.bf16.msra.mxu0 %v3954
          %4081 = vmatpush.bf16.msra.mxu0 %v3952
          %4082 = vmatpush.bf16.msra.mxu0 %v3950
          %4083 = vmatpush.bf16.msra.mxu0 %v3948
          %4084 = vmatmul.bf16.gmra.mxu0 %v3682
          %v4085 = vpop.f32.mrf.mxu0
          %v4086 = vadd.f32 %v3752, %v4085
          %v4087 = vpop.f32.mrf.mxu0
          %4088 = vdwg.mxu0
          %4089 = vmatpush.bf16.msra.mxu0 %v3978
          %4090 = vmatpush.bf16.msra.mxu0 %v3976
          %4091 = vmatpush.bf16.msra.mxu0 %v3974
          %4092 = vmatpush.bf16.msra.mxu0 %v3972
          %4093 = vmatpush.bf16.msra.mxu0 %v3970
          %4094 = vmatpush.bf16.msra.mxu0 %v3968
          %4095 = vmatpush.bf16.msra.mxu0 %v3966
          %4096 = vmatpush.bf16.msra.mxu0 %v3964
          %4097 = vmatmul.bf16.gmra.mxu0 %v3683
          %v4098 = vpop.f32.mrf.mxu0
          %v4099 = vadd.f32 %v4086, %v4098
          %v4100 = vpop.f32.mrf.mxu0
          %4101 = vdwg.mxu0
          %4102 = vmatpush.bf16.msra.mxu0 %v3994
          %4103 = vmatpush.bf16.msra.mxu0 %v3992
          %4104 = vmatpush.bf16.msra.mxu0 %v3990
          %4105 = vmatpush.bf16.msra.mxu0 %v3988
          %4106 = vmatpush.bf16.msra.mxu0 %v3986
          %4107 = vmatpush.bf16.msra.mxu0 %v3984
          %4108 = vmatpush.bf16.msra.mxu0 %v3982
          %4109 = vmatpush.bf16.msra.mxu0 %v3980
          %4110 = vmatmul.bf16.gmra.mxu0 %v3684
          %v4111 = vpop.f32.mrf.mxu0
          %v4112 = vadd.f32 %v4099, %v4111
          %v4113 = vpop.f32.mrf.mxu0
          %4114 = vdwg.mxu0
          %4115 = vmatpush.bf16.msra.mxu0 %v4010
          %4116 = vmatpush.bf16.msra.mxu0 %v4008
          %4117 = vmatpush.bf16.msra.mxu0 %v4006
          %4118 = vmatpush.bf16.msra.mxu0 %v4004
          %4119 = vmatpush.bf16.msra.mxu0 %v4002
          %4120 = vmatpush.bf16.msra.mxu0 %v4000
          %4121 = vmatpush.bf16.msra.mxu0 %v3998
          %4122 = vmatpush.bf16.msra.mxu0 %v3996
          %4123 = vmatmul.bf16.gmra.mxu0 %v3685
          %v4124 = vpop.f32.mrf.mxu0
          %v4125 = vadd.f32 %v4112, %v4124
          %v4126 = vpop.f32.mrf.mxu0
          %4127 = vdwg.mxu0
          %4128 = vmatpush.bf16.msra.mxu0 %v3963
          %4129 = vmatpush.bf16.msra.mxu0 %v3961
          %4130 = vmatpush.bf16.msra.mxu0 %v3959
          %4131 = vmatpush.bf16.msra.mxu0 %v3957
          %4132 = vmatpush.bf16.msra.mxu0 %v3955
          %4133 = vmatpush.bf16.msra.mxu0 %v3953
          %4134 = vmatpush.bf16.msra.mxu0 %v3951
          %4135 = vmatpush.bf16.msra.mxu0 %v3949
          %4136 = vmatmul.bf16.gmra.mxu0 %v3682
          %v4137 = vpop.f32.mrf.mxu0
          %v4138 = vadd.f32 %v3753, %v4137
          %v4139 = vpop.f32.mrf.mxu0
          %4140 = vdwg.mxu0
          %4141 = vmatpush.bf16.msra.mxu0 %v3979
          %4142 = vmatpush.bf16.msra.mxu0 %v3977
          %4143 = vmatpush.bf16.msra.mxu0 %v3975
          %4144 = vmatpush.bf16.msra.mxu0 %v3973
          %4145 = vmatpush.bf16.msra.mxu0 %v3971
          %4146 = vmatpush.bf16.msra.mxu0 %v3969
          %4147 = vmatpush.bf16.msra.mxu0 %v3967
          %4148 = vmatpush.bf16.msra.mxu0 %v3965
          %4149 = vmatmul.bf16.gmra.mxu0 %v3683
          %v4150 = vpop.f32.mrf.mxu0
          %v4151 = vadd.f32 %v4138, %v4150
          %v4152 = vpop.f32.mrf.mxu0
          %4153 = vdwg.mxu0
          %4154 = vmatpush.bf16.msra.mxu0 %v3995
          %4155 = vmatpush.bf16.msra.mxu0 %v3993
          %4156 = vmatpush.bf16.msra.mxu0 %v3991
          %4157 = vmatpush.bf16.msra.mxu0 %v3989
          %4158 = vmatpush.bf16.msra.mxu0 %v3987
          %4159 = vmatpush.bf16.msra.mxu0 %v3985
          %4160 = vmatpush.bf16.msra.mxu0 %v3983
          %4161 = vmatpush.bf16.msra.mxu0 %v3981
          %4162 = vmatmul.bf16.gmra.mxu0 %v3684
          %v4163 = vpop.f32.mrf.mxu0
          %v4164 = vadd.f32 %v4151, %v4163
          %v4165 = vpop.f32.mrf.mxu0
          %4166 = vdwg.mxu0
          %4167 = vmatpush.bf16.msra.mxu0 %v4011
          %4168 = vmatpush.bf16.msra.mxu0 %v4009
          %4169 = vmatpush.bf16.msra.mxu0 %v4007
          %4170 = vmatpush.bf16.msra.mxu0 %v4005
          %4171 = vmatpush.bf16.msra.mxu0 %v4003
          %4172 = vmatpush.bf16.msra.mxu0 %v4001
          %4173 = vmatpush.bf16.msra.mxu0 %v3999
          %4174 = vmatpush.bf16.msra.mxu0 %v3997
          %4175 = vmatmul.bf16.gmra.mxu0 %v3685
          %v4176 = vpop.f32.mrf.mxu0
          %v4177 = vadd.f32 %v4164, %v4176
          %v4178 = vpop.f32.mrf.mxu0
          %4179 = vdwg.mxu0
          %v4180 = vmax.f32 %v4125, 0.0
          %v4181 = vmax.f32 %v4177, 0.0
          %v4182 = vld [vmem:[%s7] sm:$0x3]
          %v4184 = vperm.slane %v4182, 0
          %v4185 = vperm.slane %v4182, 1
          %v4188 = vmul.f32 %v4180, %v4184
          %v4189 = vmul.f32 %v4181, %v4185
          %v4190 = vld [vmem:[%s8] sm:$0x3]
          %v4192 = vperm.slane %v4190, 0
          %v4193 = vperm.slane %v4190, 1
          %v4196 = vadd.f32 %v4188, %v4192
          %v4197 = vadd.f32 %v4189, %v4193
          %v4198 = vpack.c.bf16 %v4196, %v4196
          %v4199 = vpack.c.bf16 %v4197, %v4197
          %v4200 = vld [vmem:[#allocation10] sm:$0xff]
          %v4201 = vld [vmem:[#allocation10 + $0x8] sm:$0xff]
          %v4202 = vld [vmem:[#allocation10 + $0x10] sm:$0xff]
          %v4203 = vld [vmem:[#allocation10 + $0x18] sm:$0xff]
          %v4204 = vld [vmem:[#allocation10 + $0x20] sm:$0xff]
          %v4205 = vld [vmem:[#allocation10 + $0x28] sm:$0xff]
          %v4206 = vld [vmem:[#allocation10 + $0x30] sm:$0xff]
          %v4207 = vld [vmem:[#allocation10 + $0x38] sm:$0xff]
          %v4208 = vld [vmem:[#allocation10 + $0x40] sm:$0xff]
          %v4209 = vld [vmem:[#allocation10 + $0x48] sm:$0xff]
          %v4210 = vld [vmem:[#allocation10 + $0x50] sm:$0xff]
          %v4211 = vld [vmem:[#allocation10 + $0x58] sm:$0xff]
          %v4212 = vld [vmem:[#allocation10 + $0x60] sm:$0xff]
          %v4213 = vld [vmem:[#allocation10 + $0x68] sm:$0xff]
          %v4214 = vld [vmem:[#allocation10 + $0x70] sm:$0xff]
          %v4215 = vld [vmem:[#allocation10 + $0x78] sm:$0xff]
          %v4216 = vld [vmem:[#allocation10 + $0x80] sm:$0xff]
          %v4217 = vld [vmem:[#allocation10 + $0x88] sm:$0xff]
          %v4218 = vld [vmem:[#allocation10 + $0x90] sm:$0xff]
          %v4219 = vld [vmem:[#allocation10 + $0x98] sm:$0xff]
          %v4220 = vld [vmem:[#allocation10 + $0xa0] sm:$0xff]
          %v4221 = vld [vmem:[#allocation10 + $0xa8] sm:$0xff]
          %v4222 = vld [vmem:[#allocation10 + $0xb0] sm:$0xff]
          %v4223 = vld [vmem:[#allocation10 + $0xb8] sm:$0xff]
          %v4224 = vld [vmem:[#allocation10 + $0xc0] sm:$0xff]
          %v4225 = vld [vmem:[#allocation10 + $0xc8] sm:$0xff]
          %v4226 = vld [vmem:[#allocation10 + $0xd0] sm:$0xff]
          %v4227 = vld [vmem:[#allocation10 + $0xd8] sm:$0xff]
          %v4228 = vld [vmem:[#allocation10 + $0xe0] sm:$0xff]
          %v4229 = vld [vmem:[#allocation10 + $0xe8] sm:$0xff]
          %v4230 = vld [vmem:[#allocation10 + $0xf0] sm:$0xff]
          %v4231 = vld [vmem:[#allocation10 + $0xf8] sm:$0xff]
          %v4232 = vld [vmem:[#allocation10 + $0x100] sm:$0xff]
          %v4233 = vld [vmem:[#allocation10 + $0x108] sm:$0xff]
          %v4234 = vld [vmem:[#allocation10 + $0x110] sm:$0xff]
          %v4235 = vld [vmem:[#allocation10 + $0x118] sm:$0xff]
          %v4236 = vld [vmem:[#allocation10 + $0x120] sm:$0xff]
          %v4237 = vld [vmem:[#allocation10 + $0x128] sm:$0xff]
          %v4238 = vld [vmem:[#allocation10 + $0x130] sm:$0xff]
          %v4239 = vld [vmem:[#allocation10 + $0x138] sm:$0xff]
          %v4240 = vld [vmem:[#allocation10 + $0x140] sm:$0xff]
          %v4241 = vld [vmem:[#allocation10 + $0x148] sm:$0xff]
          %v4242 = vld [vmem:[#allocation10 + $0x150] sm:$0xff]
          %v4243 = vld [vmem:[#allocation10 + $0x158] sm:$0xff]
          %v4244 = vld [vmem:[#allocation10 + $0x160] sm:$0xff]
          %v4245 = vld [vmem:[#allocation10 + $0x168] sm:$0xff]
          %v4246 = vld [vmem:[#allocation10 + $0x170] sm:$0xff]
          %v4247 = vld [vmem:[#allocation10 + $0x178] sm:$0xff]
          %v4248 = vld [vmem:[#allocation10 + $0x180] sm:$0xff]
          %v4249 = vld [vmem:[#allocation10 + $0x188] sm:$0xff]
          %v4250 = vld [vmem:[#allocation10 + $0x190] sm:$0xff]
          %v4251 = vld [vmem:[#allocation10 + $0x198] sm:$0xff]
          %v4252 = vld [vmem:[#allocation10 + $0x1a0] sm:$0xff]
          %v4253 = vld [vmem:[#allocation10 + $0x1a8] sm:$0xff]
          %v4254 = vld [vmem:[#allocation10 + $0x1b0] sm:$0xff]
          %v4255 = vld [vmem:[#allocation10 + $0x1b8] sm:$0xff]
          %v4256 = vld [vmem:[#allocation10 + $0x1c0] sm:$0xff]
          %v4257 = vld [vmem:[#allocation10 + $0x1c8] sm:$0xff]
          %v4258 = vld [vmem:[#allocation10 + $0x1d0] sm:$0xff]
          %v4259 = vld [vmem:[#allocation10 + $0x1d8] sm:$0xff]
          %v4260 = vld [vmem:[#allocation10 + $0x1e0] sm:$0xff]
          %v4261 = vld [vmem:[#allocation10 + $0x1e8] sm:$0xff]
          %v4262 = vld [vmem:[#allocation10 + $0x1f0] sm:$0xff]
          %v4263 = vld [vmem:[#allocation10 + $0x1f8] sm:$0xff]
          %v4264 = vld [vmem:[#allocation10 + $0x200] sm:$0xff]
          %v4265 = vld [vmem:[#allocation10 + $0x208] sm:$0xff]
          %v4266 = vld [vmem:[#allocation10 + $0x210] sm:$0xff]
          %v4267 = vld [vmem:[#allocation10 + $0x218] sm:$0xff]
          %v4268 = vld [vmem:[#allocation10 + $0x220] sm:$0xff]
          %v4269 = vld [vmem:[#allocation10 + $0x228] sm:$0xff]
          %v4270 = vld [vmem:[#allocation10 + $0x230] sm:$0xff]
          %v4271 = vld [vmem:[#allocation10 + $0x238] sm:$0xff]
          %v4272 = vld [vmem:[#allocation10 + $0x240] sm:$0xff]
          %v4273 = vld [vmem:[#allocation10 + $0x248] sm:$0xff]
          %v4274 = vld [vmem:[#allocation10 + $0x250] sm:$0xff]
          %v4275 = vld [vmem:[#allocation10 + $0x258] sm:$0xff]
          %v4276 = vld [vmem:[#allocation10 + $0x260] sm:$0xff]
          %v4277 = vld [vmem:[#allocation10 + $0x268] sm:$0xff]
          %v4278 = vld [vmem:[#allocation10 + $0x270] sm:$0xff]
          %v4279 = vld [vmem:[#allocation10 + $0x278] sm:$0xff]
          %v4280 = vld [vmem:[#allocation10 + $0x280] sm:$0xff]
          %v4281 = vld [vmem:[#allocation10 + $0x288] sm:$0xff]
          %v4282 = vld [vmem:[#allocation10 + $0x290] sm:$0xff]
          %v4283 = vld [vmem:[#allocation10 + $0x298] sm:$0xff]
          %v4284 = vld [vmem:[#allocation10 + $0x2a0] sm:$0xff]
          %v4285 = vld [vmem:[#allocation10 + $0x2a8] sm:$0xff]
          %v4286 = vld [vmem:[#allocation10 + $0x2b0] sm:$0xff]
          %v4287 = vld [vmem:[#allocation10 + $0x2b8] sm:$0xff]
          %v4288 = vld [vmem:[#allocation10 + $0x2c0] sm:$0xff]
          %v4289 = vld [vmem:[#allocation10 + $0x2c8] sm:$0xff]
          %v4290 = vld [vmem:[#allocation10 + $0x2d0] sm:$0xff]
          %v4291 = vld [vmem:[#allocation10 + $0x2d8] sm:$0xff]
          %v4292 = vld [vmem:[#allocation10 + $0x2e0] sm:$0xff]
          %v4293 = vld [vmem:[#allocation10 + $0x2e8] sm:$0xff]
          %v4294 = vld [vmem:[#allocation10 + $0x2f0] sm:$0xff]
          %v4295 = vld [vmem:[#allocation10 + $0x2f8] sm:$0xff]
          %v4296 = vld [vmem:[%s10] sm:$0x3f]
          %v4298 = vperm.slane %v4296, 0
          %v4299 = vperm.slane %v4296, 1
          %v4300 = vperm.slane %v4296, 2
          %v4301 = vperm.slane %v4296, 3
          %v4302 = vperm.slane %v4296, 4
          %v4303 = vperm.slane %v4296, 5
          %v4406 = vunpack.c.l.b16 %v4200
          %v4407 = vunpack.c.h.b16 %v4200
          %v4408 = vunpack.c.l.b16 %v4201
          %v4409 = vunpack.c.h.b16 %v4201
          %v4410 = vunpack.c.l.b16 %v4202
          %v4411 = vunpack.c.h.b16 %v4202
          %v4412 = vunpack.c.l.b16 %v4203
          %v4413 = vunpack.c.h.b16 %v4203
          %v4414 = vunpack.c.l.b16 %v4204
          %v4415 = vunpack.c.h.b16 %v4204
          %v4416 = vunpack.c.l.b16 %v4205
          %v4417 = vunpack.c.h.b16 %v4205
          %v4418 = vunpack.c.l.b16 %v4206
          %v4419 = vunpack.c.h.b16 %v4206
          %v4420 = vunpack.c.l.b16 %v4207
          %v4421 = vunpack.c.h.b16 %v4207
          %v4422 = vunpack.c.l.b16 %v4208
          %v4423 = vunpack.c.h.b16 %v4208
          %v4424 = vunpack.c.l.b16 %v4209
          %v4425 = vunpack.c.h.b16 %v4209
          %v4426 = vunpack.c.l.b16 %v4210
          %v4427 = vunpack.c.h.b16 %v4210
          %v4428 = vunpack.c.l.b16 %v4211
          %v4429 = vunpack.c.h.b16 %v4211
          %v4430 = vunpack.c.l.b16 %v4212
          %v4431 = vunpack.c.h.b16 %v4212
          %v4432 = vunpack.c.l.b16 %v4213
          %v4433 = vunpack.c.h.b16 %v4213
          %v4434 = vunpack.c.l.b16 %v4214
          %v4435 = vunpack.c.h.b16 %v4214
          %v4436 = vunpack.c.l.b16 %v4215
          %v4437 = vunpack.c.h.b16 %v4215
          %v4438 = vunpack.c.l.b16 %v4216
          %v4439 = vunpack.c.h.b16 %v4216
          %v4440 = vunpack.c.l.b16 %v4217
          %v4441 = vunpack.c.h.b16 %v4217
          %v4442 = vunpack.c.l.b16 %v4218
          %v4443 = vunpack.c.h.b16 %v4218
          %v4444 = vunpack.c.l.b16 %v4219
          %v4445 = vunpack.c.h.b16 %v4219
          %v4446 = vunpack.c.l.b16 %v4220
          %v4447 = vunpack.c.h.b16 %v4220
          %v4448 = vunpack.c.l.b16 %v4221
          %v4449 = vunpack.c.h.b16 %v4221
          %v4450 = vunpack.c.l.b16 %v4222
          %v4451 = vunpack.c.h.b16 %v4222
          %v4452 = vunpack.c.l.b16 %v4223
          %v4453 = vunpack.c.h.b16 %v4223
          %v4454 = vunpack.c.l.b16 %v4224
          %v4455 = vunpack.c.h.b16 %v4224
          %v4456 = vunpack.c.l.b16 %v4225
          %v4457 = vunpack.c.h.b16 %v4225
          %v4458 = vunpack.c.l.b16 %v4226
          %v4459 = vunpack.c.h.b16 %v4226
          %v4460 = vunpack.c.l.b16 %v4227
          %v4461 = vunpack.c.h.b16 %v4227
          %v4462 = vunpack.c.l.b16 %v4228
          %v4463 = vunpack.c.h.b16 %v4228
          %v4464 = vunpack.c.l.b16 %v4229
          %v4465 = vunpack.c.h.b16 %v4229
          %v4466 = vunpack.c.l.b16 %v4230
          %v4467 = vunpack.c.h.b16 %v4230
          %v4468 = vunpack.c.l.b16 %v4231
          %v4469 = vunpack.c.h.b16 %v4231
          %v4470 = vunpack.c.l.b16 %v4232
          %v4471 = vunpack.c.h.b16 %v4232
          %v4472 = vunpack.c.l.b16 %v4233
          %v4473 = vunpack.c.h.b16 %v4233
          %v4474 = vunpack.c.l.b16 %v4234
          %v4475 = vunpack.c.h.b16 %v4234
          %v4476 = vunpack.c.l.b16 %v4235
          %v4477 = vunpack.c.h.b16 %v4235
          %v4478 = vunpack.c.l.b16 %v4236
          %v4479 = vunpack.c.h.b16 %v4236
          %v4480 = vunpack.c.l.b16 %v4237
          %v4481 = vunpack.c.h.b16 %v4237
          %v4482 = vunpack.c.l.b16 %v4238
          %v4483 = vunpack.c.h.b16 %v4238
          %v4484 = vunpack.c.l.b16 %v4239
          %v4485 = vunpack.c.h.b16 %v4239
          %v4486 = vunpack.c.l.b16 %v4240
          %v4487 = vunpack.c.h.b16 %v4240
          %v4488 = vunpack.c.l.b16 %v4241
          %v4489 = vunpack.c.h.b16 %v4241
          %v4490 = vunpack.c.l.b16 %v4242
          %v4491 = vunpack.c.h.b16 %v4242
          %v4492 = vunpack.c.l.b16 %v4243
          %v4493 = vunpack.c.h.b16 %v4243
          %v4494 = vunpack.c.l.b16 %v4244
          %v4495 = vunpack.c.h.b16 %v4244
          %v4496 = vunpack.c.l.b16 %v4245
          %v4497 = vunpack.c.h.b16 %v4245
          %v4498 = vunpack.c.l.b16 %v4246
          %v4499 = vunpack.c.h.b16 %v4246
          %v4500 = vunpack.c.l.b16 %v4247
          %v4501 = vunpack.c.h.b16 %v4247
          %v4502 = vunpack.c.l.b16 %v4248
          %v4503 = vunpack.c.h.b16 %v4248
          %v4504 = vunpack.c.l.b16 %v4249
          %v4505 = vunpack.c.h.b16 %v4249
          %v4506 = vunpack.c.l.b16 %v4250
          %v4507 = vunpack.c.h.b16 %v4250
          %v4508 = vunpack.c.l.b16 %v4251
          %v4509 = vunpack.c.h.b16 %v4251
          %v4510 = vunpack.c.l.b16 %v4252
          %v4511 = vunpack.c.h.b16 %v4252
          %v4512 = vunpack.c.l.b16 %v4253
          %v4513 = vunpack.c.h.b16 %v4253
          %v4514 = vunpack.c.l.b16 %v4254
          %v4515 = vunpack.c.h.b16 %v4254
          %v4516 = vunpack.c.l.b16 %v4255
          %v4517 = vunpack.c.h.b16 %v4255
          %v4518 = vunpack.c.l.b16 %v4256
          %v4519 = vunpack.c.h.b16 %v4256
          %v4520 = vunpack.c.l.b16 %v4257
          %v4521 = vunpack.c.h.b16 %v4257
          %v4522 = vunpack.c.l.b16 %v4258
          %v4523 = vunpack.c.h.b16 %v4258
          %v4524 = vunpack.c.l.b16 %v4259
          %v4525 = vunpack.c.h.b16 %v4259
          %v4526 = vunpack.c.l.b16 %v4260
          %v4527 = vunpack.c.h.b16 %v4260
          %v4528 = vunpack.c.l.b16 %v4261
          %v4529 = vunpack.c.h.b16 %v4261
          %v4530 = vunpack.c.l.b16 %v4262
          %v4531 = vunpack.c.h.b16 %v4262
          %v4532 = vunpack.c.l.b16 %v4263
          %v4533 = vunpack.c.h.b16 %v4263
          %v4534 = vunpack.c.l.b16 %v4264
          %v4535 = vunpack.c.h.b16 %v4264
          %v4536 = vunpack.c.l.b16 %v4265
          %v4537 = vunpack.c.h.b16 %v4265
          %v4538 = vunpack.c.l.b16 %v4266
          %v4539 = vunpack.c.h.b16 %v4266
          %v4540 = vunpack.c.l.b16 %v4267
          %v4541 = vunpack.c.h.b16 %v4267
          %v4542 = vunpack.c.l.b16 %v4268
          %v4543 = vunpack.c.h.b16 %v4268
          %v4544 = vunpack.c.l.b16 %v4269
          %v4545 = vunpack.c.h.b16 %v4269
          %v4546 = vunpack.c.l.b16 %v4270
          %v4547 = vunpack.c.h.b16 %v4270
          %v4548 = vunpack.c.l.b16 %v4271
          %v4549 = vunpack.c.h.b16 %v4271
          %v4550 = vunpack.c.l.b16 %v4272
          %v4551 = vunpack.c.h.b16 %v4272
          %v4552 = vunpack.c.l.b16 %v4273
          %v4553 = vunpack.c.h.b16 %v4273
          %v4554 = vunpack.c.l.b16 %v4274
          %v4555 = vunpack.c.h.b16 %v4274
          %v4556 = vunpack.c.l.b16 %v4275
          %v4557 = vunpack.c.h.b16 %v4275
          %v4558 = vunpack.c.l.b16 %v4276
          %v4559 = vunpack.c.h.b16 %v4276
          %v4560 = vunpack.c.l.b16 %v4277
          %v4561 = vunpack.c.h.b16 %v4277
          %v4562 = vunpack.c.l.b16 %v4278
          %v4563 = vunpack.c.h.b16 %v4278
          %v4564 = vunpack.c.l.b16 %v4279
          %v4565 = vunpack.c.h.b16 %v4279
          %v4566 = vunpack.c.l.b16 %v4280
          %v4567 = vunpack.c.h.b16 %v4280
          %v4568 = vunpack.c.l.b16 %v4281
          %v4569 = vunpack.c.h.b16 %v4281
          %v4570 = vunpack.c.l.b16 %v4282
          %v4571 = vunpack.c.h.b16 %v4282
          %v4572 = vunpack.c.l.b16 %v4283
          %v4573 = vunpack.c.h.b16 %v4283
          %v4574 = vunpack.c.l.b16 %v4284
          %v4575 = vunpack.c.h.b16 %v4284
          %v4576 = vunpack.c.l.b16 %v4285
          %v4577 = vunpack.c.h.b16 %v4285
          %v4578 = vunpack.c.l.b16 %v4286
          %v4579 = vunpack.c.h.b16 %v4286
          %v4580 = vunpack.c.l.b16 %v4287
          %v4581 = vunpack.c.h.b16 %v4287
          %v4582 = vunpack.c.l.b16 %v4288
          %v4583 = vunpack.c.h.b16 %v4288
          %v4584 = vunpack.c.l.b16 %v4289
          %v4585 = vunpack.c.h.b16 %v4289
          %v4586 = vunpack.c.l.b16 %v4290
          %v4587 = vunpack.c.h.b16 %v4290
          %v4588 = vunpack.c.l.b16 %v4291
          %v4589 = vunpack.c.h.b16 %v4291
          %v4590 = vunpack.c.l.b16 %v4292
          %v4591 = vunpack.c.h.b16 %v4292
          %v4592 = vunpack.c.l.b16 %v4293
          %v4593 = vunpack.c.h.b16 %v4293
          %v4594 = vunpack.c.l.b16 %v4294
          %v4595 = vunpack.c.h.b16 %v4294
          %v4596 = vunpack.c.l.b16 %v4295
          %v4597 = vunpack.c.h.b16 %v4295
          %v4598 = vpack.c.b16 %v4412, %v4406
          %v4599 = vpack.c.b16 %v4413, %v4407
          %v4600 = vpack.c.b16 %v4414, %v4408
          %v4601 = vpack.c.b16 %v4415, %v4409
          %v4602 = vpack.c.b16 %v4416, %v4410
          %v4603 = vpack.c.b16 %v4417, %v4411
          %v4604 = vpack.c.b16 %v4424, %v4418
          %v4605 = vpack.c.b16 %v4425, %v4419
          %v4606 = vpack.c.b16 %v4426, %v4420
          %v4607 = vpack.c.b16 %v4427, %v4421
          %v4608 = vpack.c.b16 %v4428, %v4422
          %v4609 = vpack.c.b16 %v4429, %v4423
          %v4610 = vpack.c.b16 %v4436, %v4430
          %v4611 = vpack.c.b16 %v4437, %v4431
          %v4612 = vpack.c.b16 %v4438, %v4432
          %v4613 = vpack.c.b16 %v4439, %v4433
          %v4614 = vpack.c.b16 %v4440, %v4434
          %v4615 = vpack.c.b16 %v4441, %v4435
          %v4616 = vpack.c.b16 %v4448, %v4442
          %v4617 = vpack.c.b16 %v4449, %v4443
          %v4618 = vpack.c.b16 %v4450, %v4444
          %v4619 = vpack.c.b16 %v4451, %v4445
          %v4620 = vpack.c.b16 %v4452, %v4446
          %v4621 = vpack.c.b16 %v4453, %v4447
          %v4622 = vpack.c.b16 %v4460, %v4454
          %v4623 = vpack.c.b16 %v4461, %v4455
          %v4624 = vpack.c.b16 %v4462, %v4456
          %v4625 = vpack.c.b16 %v4463, %v4457
          %v4626 = vpack.c.b16 %v4464, %v4458
          %v4627 = vpack.c.b16 %v4465, %v4459
          %v4628 = vpack.c.b16 %v4472, %v4466
          %v4629 = vpack.c.b16 %v4473, %v4467
          %v4630 = vpack.c.b16 %v4474, %v4468
          %v4631 = vpack.c.b16 %v4475, %v4469
          %v4632 = vpack.c.b16 %v4476, %v4470
          %v4633 = vpack.c.b16 %v4477, %v4471
          %v4634 = vpack.c.b16 %v4484, %v4478
          %v4635 = vpack.c.b16 %v4485, %v4479
          %v4636 = vpack.c.b16 %v4486, %v4480
          %v4637 = vpack.c.b16 %v4487, %v4481
          %v4638 = vpack.c.b16 %v4488, %v4482
          %v4639 = vpack.c.b16 %v4489, %v4483
          %v4640 = vpack.c.b16 %v4496, %v4490
          %v4641 = vpack.c.b16 %v4497, %v4491
          %v4642 = vpack.c.b16 %v4498, %v4492
          %v4643 = vpack.c.b16 %v4499, %v4493
          %v4644 = vpack.c.b16 %v4500, %v4494
          %v4645 = vpack.c.b16 %v4501, %v4495
          %v4646 = vpack.c.b16 %v4508, %v4502
          %v4647 = vpack.c.b16 %v4509, %v4503
          %v4648 = vpack.c.b16 %v4510, %v4504
          %v4649 = vpack.c.b16 %v4511, %v4505
          %v4650 = vpack.c.b16 %v4512, %v4506
          %v4651 = vpack.c.b16 %v4513, %v4507
          %v4652 = vpack.c.b16 %v4520, %v4514
          %v4653 = vpack.c.b16 %v4521, %v4515
          %v4654 = vpack.c.b16 %v4522, %v4516
          %v4655 = vpack.c.b16 %v4523, %v4517
          %v4656 = vpack.c.b16 %v4524, %v4518
          %v4657 = vpack.c.b16 %v4525, %v4519
          %v4658 = vpack.c.b16 %v4532, %v4526
          %v4659 = vpack.c.b16 %v4533, %v4527
          %v4660 = vpack.c.b16 %v4534, %v4528
          %v4661 = vpack.c.b16 %v4535, %v4529
          %v4662 = vpack.c.b16 %v4536, %v4530
          %v4663 = vpack.c.b16 %v4537, %v4531
          %v4664 = vpack.c.b16 %v4544, %v4538
          %v4665 = vpack.c.b16 %v4545, %v4539
          %v4666 = vpack.c.b16 %v4546, %v4540
          %v4667 = vpack.c.b16 %v4547, %v4541
          %v4668 = vpack.c.b16 %v4548, %v4542
          %v4669 = vpack.c.b16 %v4549, %v4543
          %v4670 = vpack.c.b16 %v4556, %v4550
          %v4671 = vpack.c.b16 %v4557, %v4551
          %v4672 = vpack.c.b16 %v4558, %v4552
          %v4673 = vpack.c.b16 %v4559, %v4553
          %v4674 = vpack.c.b16 %v4560, %v4554
          %v4675 = vpack.c.b16 %v4561, %v4555
          %v4676 = vpack.c.b16 %v4568, %v4562
          %v4677 = vpack.c.b16 %v4569, %v4563
          %v4678 = vpack.c.b16 %v4570, %v4564
          %v4679 = vpack.c.b16 %v4571, %v4565
          %v4680 = vpack.c.b16 %v4572, %v4566
          %v4681 = vpack.c.b16 %v4573, %v4567
          %v4682 = vpack.c.b16 %v4580, %v4574
          %v4683 = vpack.c.b16 %v4581, %v4575
          %v4684 = vpack.c.b16 %v4582, %v4576
          %v4685 = vpack.c.b16 %v4583, %v4577
          %v4686 = vpack.c.b16 %v4584, %v4578
          %v4687 = vpack.c.b16 %v4585, %v4579
          %v4688 = vpack.c.b16 %v4592, %v4586
          %v4689 = vpack.c.b16 %v4593, %v4587
          %v4690 = vpack.c.b16 %v4594, %v4588
          %v4691 = vpack.c.b16 %v4595, %v4589
          %v4692 = vpack.c.b16 %v4596, %v4590
          %v4693 = vpack.c.b16 %v4597, %v4591
          %4790 = vmatpush.bf16.msra.mxu0 %v4640
          %4791 = vmatpush.bf16.msra.mxu0 %v4634
          %4792 = vmatpush.bf16.msra.mxu0 %v4628
          %4793 = vmatpush.bf16.msra.mxu0 %v4622
          %4794 = vmatpush.bf16.msra.mxu0 %v4616
          %4795 = vmatpush.bf16.msra.mxu0 %v4610
          %4796 = vmatpush.bf16.msra.mxu0 %v4604
          %4797 = vmatpush.bf16.msra.mxu0 %v4598
          %4798 = vmatmul.bf16.gmra.mxu0 %v4198
          %v4799 = vpop.f32.mrf.mxu0
          %v4800 = vadd.f32 %v4298, %v4799
          %v4801 = vpop.f32.mrf.mxu0
          %4802 = vdwg.mxu0
          %4803 = vmatpush.bf16.msra.mxu0 %v4688
          %4804 = vmatpush.bf16.msra.mxu0 %v4682
          %4805 = vmatpush.bf16.msra.mxu0 %v4676
          %4806 = vmatpush.bf16.msra.mxu0 %v4670
          %4807 = vmatpush.bf16.msra.mxu0 %v4664
          %4808 = vmatpush.bf16.msra.mxu0 %v4658
          %4809 = vmatpush.bf16.msra.mxu0 %v4652
          %4810 = vmatpush.bf16.msra.mxu0 %v4646
          %4811 = vmatmul.bf16.gmra.mxu0 %v4199
          %v4812 = vpop.f32.mrf.mxu0
          %v4813 = vadd.f32 %v4800, %v4812
          %v4814 = vpop.f32.mrf.mxu0
          %4815 = vdwg.mxu0
          %4816 = vmatpush.bf16.msra.mxu0 %v4641
          %4817 = vmatpush.bf16.msra.mxu0 %v4635
          %4818 = vmatpush.bf16.msra.mxu0 %v4629
          %4819 = vmatpush.bf16.msra.mxu0 %v4623
          %4820 = vmatpush.bf16.msra.mxu0 %v4617
          %4821 = vmatpush.bf16.msra.mxu0 %v4611
          %4822 = vmatpush.bf16.msra.mxu0 %v4605
          %4823 = vmatpush.bf16.msra.mxu0 %v4599
          %4824 = vmatmul.bf16.gmra.mxu0 %v4198
          %v4825 = vpop.f32.mrf.mxu0
          %v4826 = vadd.f32 %v4299, %v4825
          %v4827 = vpop.f32.mrf.mxu0
          %4828 = vdwg.mxu0
          %4829 = vmatpush.bf16.msra.mxu0 %v4689
          %4830 = vmatpush.bf16.msra.mxu0 %v4683
          %4831 = vmatpush.bf16.msra.mxu0 %v4677
          %4832 = vmatpush.bf16.msra.mxu0 %v4671
          %4833 = vmatpush.bf16.msra.mxu0 %v4665
          %4834 = vmatpush.bf16.msra.mxu0 %v4659
          %4835 = vmatpush.bf16.msra.mxu0 %v4653
          %4836 = vmatpush.bf16.msra.mxu0 %v4647
          %4837 = vmatmul.bf16.gmra.mxu0 %v4199
          %v4838 = vpop.f32.mrf.mxu0
          %v4839 = vadd.f32 %v4826, %v4838
          %v4840 = vpop.f32.mrf.mxu0
          %4841 = vdwg.mxu0
          %4842 = vmatpush.bf16.msra.mxu0 %v4642
          %4843 = vmatpush.bf16.msra.mxu0 %v4636
          %4844 = vmatpush.bf16.msra.mxu0 %v4630
          %4845 = vmatpush.bf16.msra.mxu0 %v4624
          %4846 = vmatpush.bf16.msra.mxu0 %v4618
          %4847 = vmatpush.bf16.msra.mxu0 %v4612
          %4848 = vmatpush.bf16.msra.mxu0 %v4606
          %4849 = vmatpush.bf16.msra.mxu0 %v4600
          %4850 = vmatmul.bf16.gmra.mxu0 %v4198
          %v4851 = vpop.f32.mrf.mxu0
          %v4852 = vadd.f32 %v4300, %v4851
          %v4853 = vpop.f32.mrf.mxu0
          %4854 = vdwg.mxu0
          %4855 = vmatpush.bf16.msra.mxu0 %v4690
          %4856 = vmatpush.bf16.msra.mxu0 %v4684
          %4857 = vmatpush.bf16.msra.mxu0 %v4678
          %4858 = vmatpush.bf16.msra.mxu0 %v4672
          %4859 = vmatpush.bf16.msra.mxu0 %v4666
          %4860 = vmatpush.bf16.msra.mxu0 %v4660
          %4861 = vmatpush.bf16.msra.mxu0 %v4654
          %4862 = vmatpush.bf16.msra.mxu0 %v4648
          %4863 = vmatmul.bf16.gmra.mxu0 %v4199
          %v4864 = vpop.f32.mrf.mxu0
          %v4865 = vadd.f32 %v4852, %v4864
          %v4866 = vpop.f32.mrf.mxu0
          %4867 = vdwg.mxu0
          %4868 = vmatpush.bf16.msra.mxu0 %v4643
          %4869 = vmatpush.bf16.msra.mxu0 %v4637
          %4870 = vmatpush.bf16.msra.mxu0 %v4631
          %4871 = vmatpush.bf16.msra.mxu0 %v4625
          %4872 = vmatpush.bf16.msra.mxu0 %v4619
          %4873 = vmatpush.bf16.msra.mxu0 %v4613
          %4874 = vmatpush.bf16.msra.mxu0 %v4607
          %4875 = vmatpush.bf16.msra.mxu0 %v4601
          %4876 = vmatmul.bf16.gmra.mxu0 %v4198
          %v4877 = vpop.f32.mrf.mxu0
          %v4878 = vadd.f32 %v4301, %v4877
          %v4879 = vpop.f32.mrf.mxu0
          %4880 = vdwg.mxu0
          %4881 = vmatpush.bf16.msra.mxu0 %v4691
          %4882 = vmatpush.bf16.msra.mxu0 %v4685
          %4883 = vmatpush.bf16.msra.mxu0 %v4679
          %4884 = vmatpush.bf16.msra.mxu0 %v4673
          %4885 = vmatpush.bf16.msra.mxu0 %v4667
          %4886 = vmatpush.bf16.msra.mxu0 %v4661
          %4887 = vmatpush.bf16.msra.mxu0 %v4655
          %4888 = vmatpush.bf16.msra.mxu0 %v4649
          %4889 = vmatmul.bf16.gmra.mxu0 %v4199
          %v4890 = vpop.f32.mrf.mxu0
          %v4891 = vadd.f32 %v4878, %v4890
          %v4892 = vpop.f32.mrf.mxu0
          %4893 = vdwg.mxu0
          %4894 = vmatpush.bf16.msra.mxu0 %v4644
          %4895 = vmatpush.bf16.msra.mxu0 %v4638
          %4896 = vmatpush.bf16.msra.mxu0 %v4632
          %4897 = vmatpush.bf16.msra.mxu0 %v4626
          %4898 = vmatpush.bf16.msra.mxu0 %v4620
          %4899 = vmatpush.bf16.msra.mxu0 %v4614
          %4900 = vmatpush.bf16.msra.mxu0 %v4608
          %4901 = vmatpush.bf16.msra.mxu0 %v4602
          %4902 = vmatmul.bf16.gmra.mxu0 %v4198
          %v4903 = vpop.f32.mrf.mxu0
          %v4904 = vadd.f32 %v4302, %v4903
          %v4905 = vpop.f32.mrf.mxu0
          %4906 = vdwg.mxu0
          %4907 = vmatpush.bf16.msra.mxu0 %v4692
          %4908 = vmatpush.bf16.msra.mxu0 %v4686
          %4909 = vmatpush.bf16.msra.mxu0 %v4680
          %4910 = vmatpush.bf16.msra.mxu0 %v4674
          %4911 = vmatpush.bf16.msra.mxu0 %v4668
          %4912 = vmatpush.bf16.msra.mxu0 %v4662
          %4913 = vmatpush.bf16.msra.mxu0 %v4656
          %4914 = vmatpush.bf16.msra.mxu0 %v4650
          %4915 = vmatmul.bf16.gmra.mxu0 %v4199
          %v4916 = vpop.f32.mrf.mxu0
          %v4917 = vadd.f32 %v4904, %v4916
          %v4918 = vpop.f32.mrf.mxu0
          %4919 = vdwg.mxu0
          %4920 = vmatpush.bf16.msra.mxu0 %v4645
          %4921 = vmatpush.bf16.msra.mxu0 %v4639
          %4922 = vmatpush.bf16.msra.mxu0 %v4633
          %4923 = vmatpush.bf16.msra.mxu0 %v4627
          %4924 = vmatpush.bf16.msra.mxu0 %v4621
          %4925 = vmatpush.bf16.msra.mxu0 %v4615
          %4926 = vmatpush.bf16.msra.mxu0 %v4609
          %4927 = vmatpush.bf16.msra.mxu0 %v4603
          %4928 = vmatmul.bf16.gmra.mxu0 %v4198
          %v4929 = vpop.f32.mrf.mxu0
          %v4930 = vadd.f32 %v4303, %v4929
          %v4931 = vpop.f32.mrf.mxu0
          %4932 = vdwg.mxu0
          %4933 = vmatpush.bf16.msra.mxu0 %v4693
          %4934 = vmatpush.bf16.msra.mxu0 %v4687
          %4935 = vmatpush.bf16.msra.mxu0 %v4681
          %4936 = vmatpush.bf16.msra.mxu0 %v4675
          %4937 = vmatpush.bf16.msra.mxu0 %v4669
          %4938 = vmatpush.bf16.msra.mxu0 %v4663
          %4939 = vmatpush.bf16.msra.mxu0 %v4657
          %4940 = vmatpush.bf16.msra.mxu0 %v4651
          %4941 = vmatmul.bf16.gmra.mxu0 %v4199
          %v4942 = vpop.f32.mrf.mxu0
          %v4943 = vadd.f32 %v4930, %v4942
          %v4944 = vpop.f32.mrf.mxu0
          %4945 = vdwg.mxu0
          %v4946 = vxor.u32 %v4813, 2147483648
          %v4947 = vxor.u32 %v4839, 2147483648
          %v4948 = vxor.u32 %v4865, 2147483648
          %v4949 = vxor.u32 %v4891, 2147483648
          %v4950 = vxor.u32 %v4917, 2147483648
          %v4951 = vxor.u32 %v4943, 2147483648
          %v4952 = vmul.f32 %v4946, 1.442695
          %v4953 = vpow.pop %v4952
          %v4954 = vmul.f32 %v4947, 1.442695
          %v4955 = vpow.pop %v4954
          %v4956 = vmul.f32 %v4948, 1.442695
          %v4957 = vpow.pop %v4956
          %v4958 = vmul.f32 %v4949, 1.442695
          %v4959 = vpow.pop %v4958
          %v4960 = vmul.f32 %v4950, 1.442695
          %v4961 = vpow.pop %v4960
          %v4962 = vmul.f32 %v4951, 1.442695
          %v4963 = vpow.pop %v4962
          %v4964 = vadd.f32 %v4953, 1.0
          %v4965 = vadd.f32 %v4955, 1.0
          %v4966 = vadd.f32 %v4957, 1.0
          %v4967 = vadd.f32 %v4959, 1.0
          %v4968 = vadd.f32 %v4961, 1.0
          %v4969 = vadd.f32 %v4963, 1.0
          %v4970 = vrcp.pop %v4964
          %v4971 = vmul.f32 %v4964, %v4970
          %v4972 = vsub.f32 1.0, %v4971
          %v4973 = vmul.f32 %v4970, %v4972
          %v4974 = vadd.f32 %v4970, %v4973
          %vm4975 = vweird.f32 %v4964
          %vm4976 = vweird.f32 %v4970
          %vm4977 = vmor %vm4975, %vm4976
          %v4978 = vsel %vm4977, %v4970, %v4974
          %v4979 = vand.u32 2147483647, %v4964
          %vm4980 = vcmp.eq.f32.partialorder %v4979, 8.507059e+37
          %v4981 = vand.u32 %v4964, 2147483648
          %v4982 = vor.u32 1.1754944e-38, %v4981
          %v4983 = vsel %vm4980, %v4982, %v4978
          %v4984 = vmul.f32 1.0, %v4983
          %v4985 = vrcp.pop %v4965
          %v4986 = vmul.f32 %v4965, %v4985
          %v4987 = vsub.f32 1.0, %v4986
          %v4988 = vmul.f32 %v4985, %v4987
          %v4989 = vadd.f32 %v4985, %v4988
          %vm4990 = vweird.f32 %v4965
          %vm4991 = vweird.f32 %v4985
          %vm4992 = vmor %vm4990, %vm4991
          %v4993 = vsel %vm4992, %v4985, %v4989
          %v4994 = vand.u32 2147483647, %v4965
          %vm4995 = vcmp.eq.f32.partialorder %v4994, 8.507059e+37
          %v4996 = vand.u32 %v4965, 2147483648
          %v4997 = vor.u32 1.1754944e-38, %v4996
          %v4998 = vsel %vm4995, %v4997, %v4993
          %v4999 = vmul.f32 1.0, %v4998
          %v5000 = vrcp.pop %v4966
          %v5001 = vmul.f32 %v4966, %v5000
          %v5002 = vsub.f32 1.0, %v5001
          %v5003 = vmul.f32 %v5000, %v5002
          %v5004 = vadd.f32 %v5000, %v5003
          %vm5005 = vweird.f32 %v4966
          %vm5006 = vweird.f32 %v5000
          %vm5007 = vmor %vm5005, %vm5006
          %v5008 = vsel %vm5007, %v5000, %v5004
          %v5009 = vand.u32 2147483647, %v4966
          %vm5010 = vcmp.eq.f32.partialorder %v5009, 8.507059e+37
          %v5011 = vand.u32 %v4966, 2147483648
          %v5012 = vor.u32 1.1754944e-38, %v5011
          %v5013 = vsel %vm5010, %v5012, %v5008
          %v5014 = vmul.f32 1.0, %v5013
          %v5015 = vrcp.pop %v4967
          %v5016 = vmul.f32 %v4967, %v5015
          %v5017 = vsub.f32 1.0, %v5016
          %v5018 = vmul.f32 %v5015, %v5017
          %v5019 = vadd.f32 %v5015, %v5018
          %vm5020 = vweird.f32 %v4967
          %vm5021 = vweird.f32 %v5015
          %vm5022 = vmor %vm5020, %vm5021
          %v5023 = vsel %vm5022, %v5015, %v5019
          %v5024 = vand.u32 2147483647, %v4967
          %vm5025 = vcmp.eq.f32.partialorder %v5024, 8.507059e+37
          %v5026 = vand.u32 %v4967, 2147483648
          %v5027 = vor.u32 1.1754944e-38, %v5026
          %v5028 = vsel %vm5025, %v5027, %v5023
          %v5029 = vmul.f32 1.0, %v5028
          %v5030 = vrcp.pop %v4968
          %v5031 = vmul.f32 %v4968, %v5030
          %v5032 = vsub.f32 1.0, %v5031
          %v5033 = vmul.f32 %v5030, %v5032
          %v5034 = vadd.f32 %v5030, %v5033
          %vm5035 = vweird.f32 %v4968
          %vm5036 = vweird.f32 %v5030
          %vm5037 = vmor %vm5035, %vm5036
          %v5038 = vsel %vm5037, %v5030, %v5034
          %v5039 = vand.u32 2147483647, %v4968
          %vm5040 = vcmp.eq.f32.partialorder %v5039, 8.507059e+37
          %v5041 = vand.u32 %v4968, 2147483648
          %v5042 = vor.u32 1.1754944e-38, %v5041
          %v5043 = vsel %vm5040, %v5042, %v5038
          %v5044 = vmul.f32 1.0, %v5043
          %v5045 = vrcp.pop %v4969
          %v5046 = vmul.f32 %v4969, %v5045
          %v5047 = vsub.f32 1.0, %v5046
          %v5048 = vmul.f32 %v5045, %v5047
          %v5049 = vadd.f32 %v5045, %v5048
          %vm5050 = vweird.f32 %v4969
          %vm5051 = vweird.f32 %v5045
          %vm5052 = vmor %vm5050, %vm5051
          %v5053 = vsel %vm5052, %v5045, %v5049
          %v5054 = vand.u32 2147483647, %v4969
          %vm5055 = vcmp.eq.f32.partialorder %v5054, 8.507059e+37
          %v5056 = vand.u32 %v4969, 2147483648
          %v5057 = vor.u32 1.1754944e-38, %v5056
          %v5058 = vsel %vm5055, %v5057, %v5053
          %v5059 = vmul.f32 1.0, %v5058
          %v5066 = vrot.slane %v4999, 6
          %v5067 = vrot.slane %v5014, 4
          %v5068 = vrot.slane %v5029, 2
          %v5069 = vrot.slane %v5059, 6
          %v5070 = vsel %vm3622, %v4984, %v5066
          %v5071 = vsel %vm3637, %v5067, %v5068
          %v5072 = vsel %vm3639, %v5070, %v5071
          %v5073 = vsel %vm3622, %v5044, %v5069
          %5076 = vst [vmem:[%s11] sm:$0xff] %v5072
          %5077 = vst [vmem:[%s11 + $0x8] sm:$0xf] %v5073
        $region92: #{regression_model_forward.3} parent=63 // pred_fallthru
          _
        // Predicated region
        $region93: #{regression_model_forward.3} parent=63 // pred_check
          %p5078 = pneg %p276
        $region94: #{regression_model_forward.3} parent=63 // pred_check_branch
          %5080 = sbr.rel (%p5078) target = $region96
        $region95: #{regression_model_forward.3} parent=63 // pred_region
          _
        $region96: #{regression_model_forward.3} parent=63 // pred_fallthru
          _
        // Predicated region
        $region97: #{regression_model_forward.3} parent=63 // pred_check
          %p5081 = pneg %p276
        $region98: #{regression_model_forward.3} parent=63 // pred_check_branch
          %5083 = sbr.rel (%p5081) target = $region100
        $region99: #{regression_model_forward.3} parent=63 // pred_region
          _
        $region100: #{regression_model_forward.3} parent=63 // pred_fallthru
          _
      $region64: #{regression_model_forward.3} parent=5 // pred_fallthru
        _
      %p5084 = scmp.le.s32.totalorder 2, %s22
      // Predicated region
      $region101: #{regression_model_forward.3} parent=5 // pred_check
        %p5085 = pneg %p5084
      $region102: #{regression_model_forward.3} parent=5 // pred_check_branch
        %5087 = sbr.rel (%p5085) target = $region104
      $region103: #{regression_model_forward.3} parent=5 // pred_region
        %s5088 = ssub.s32 %s22, 2
      $region104: #{regression_model_forward.3} parent=5 // pred_fallthru
        _
    $region6: #{regression_model_forward.3} parent=1 // loop_footer
      %s26 = sadd.s32 1, %s22
    $region7: #{regression_model_forward.3} parent=1 // loop_footer_branch
      %21 = sbr.rel target = $region3
    $region8: #{regression_model_forward.3} parent=1 // loop_exit
      _
    %5089 = vsyncpa [#allocation4], 1
    %s5090 = scalar_lea.sflag [#allocation4], 1
    %5091 = vsyncpa %s5090, 1
    %5092 = vsyncpa [#allocation6], 1
    %5093 = vsyncpa [#allocation9], 1

</llo_original>
